<compile_context>
chip_gen: v5e
topology: v5e:2x2
jax: 0.10.0
libtpu: 0.0.40
codegen_flags: <defaults>
</compile_context>

<pallas_src>
import functools

import numpy as np

import jax
import jax.numpy as jnp
from jax import lax
from jax.experimental import pallas as pl
from jax.experimental.pallas import tpu as pltpu

# ---- module hyper-parameters (PyTorch defaults of TransformerModel) ----
INPUT_SIZE = 6
HIDDEN = 128
OUTPUT_SIZE = 6
NUM_HEADS = 4
HEAD_DIM = HIDDEN // NUM_HEADS
DIM_FF = 2048          # nn.Transformer default dim_feedforward
MAX_LEN = 50           # positional_encoding = nn.Parameter(zeros(1, 50, H))
LN_EPS = 1e-5
NEG_INF = -1e30

# ------------- packed-slab layout (all column offsets are multiples of 128) -------------
# Encoder-side K=HIDDEN weights (auto-DMA'd, needed first):
EMB_OFF = 0                      # (H, H)  zero-padded embedding (rows >= INPUT_SIZE are 0)
ESA_QKV_OFF = HIDDEN             # (H, 3H) encoder self-attn in-proj (Q pre-scaled)
ESA_WO_OFF = 4 * HIDDEN          # (H, H)  encoder self-attn out-proj
EFF_W1_OFF = 5 * HIDDEN          # (H, FF) encoder FFN up-proj
ENC_H_COLS = 5 * HIDDEN + DIM_FF

# Decoder-side K=HIDDEN weights (manually prefetched, overlapped with encoder compute):
DSA_QKV_OFF = 0
DSA_WO_OFF = 3 * HIDDEN
DCA_QKV_OFF = 4 * HIDDEN
DCA_WO_OFF = 7 * HIDDEN
DFF_W1_OFF = 8 * HIDDEN
FC_OFF = 8 * HIDDEN + DIM_FF     # (H, H) zero-padded output head
DEC_H_COLS = 9 * HIDDEN + DIM_FF

# f32 small-parameter slab: one 128-wide row per bias / LN gamma / LN beta.
_PARAM_ROW_NAMES = (
    "emb_b",
    "esa_bq", "esa_bk", "esa_bv", "esa_bo",
    "eln1_g", "eln1_b",
    "eff_b2",
    "eln2_g", "eln2_b",
    "enorm_g", "enorm_b",
    "dsa_bq", "dsa_bk", "dsa_bv", "dsa_bo",
    "dln1_g", "dln1_b",
    "dca_bq", "dca_bk", "dca_bv", "dca_bo",
    "dln2_g", "dln2_b",
    "dff_b2",
    "dln3_g", "dln3_b",
    "dnorm_g", "dnorm_b",
    "fc_b",
)
PR = {n: i for i, n in enumerate(_PARAM_ROW_NAMES)}
PARAM_SLAB_ROWS = (len(_PARAM_ROW_NAMES) + 7) // 8 * 8


# ------------------------------------ the kernel ------------------------------------
def fused_transformer_kernel(
    m,                    # static row count S*B (bound via functools.partial)
    # inputs
    data_ref,             # (3*ms+8, 128) f32: x | pos | attn-bias | pool
    param_ref,            # (PARAM_SLAB_ROWS, 128) f32 packed biases / LN params
    ffb1_ref,             # (2, DIM_FF) f32: encoder / decoder FFN up-proj biases
    w_enc_h_ref,          # (H, ENC_H_COLS) bf16 encoder-side K=H weights (VMEM)
    w_enc_f_ref,          # (FF, H) bf16 encoder FFN down-proj (VMEM)
    w_dec_h_hbm,          # (H, DEC_H_COLS) bf16 decoder-side K=H weights (HBM)
    w_dec_f_hbm,          # (FF, H) bf16 decoder FFN down-proj (HBM)
    # output
    o_ref,                # (8, 128) f32 lane-padded; wrapper slices [:B, :OUTPUT_SIZE]
    # scratch
    w_dec_h, w_dec_f, dma_sem,
):
    f32, bf16 = jnp.float32, jnp.bfloat16
    H, dh = HIDDEN, HEAD_DIM
    ms = (m + 7) // 8 * 8          # sublane-aligned section stride in the data slab

    # Prefetch the decoder-side weights (~1.3 MB bf16) behind the encoder's serial
    # compute chain instead of leaving them on the front-loaded DMA critical path.
    cp_dec_h = pltpu.make_async_copy(w_dec_h_hbm, w_dec_h, dma_sem.at[0])
    cp_dec_f = pltpu.make_async_copy(w_dec_f_hbm, w_dec_f, dma_sem.at[1])
    cp_dec_h.start()
    cp_dec_f.start()

    def prow(name):                # (1, 128) f32 row of the packed parameter slab
        i = PR[name]
        return param_ref[i:i + 1, :]

    def mm(x, w):                  # x (r, k); w (k, n) bf16 K-major; f32 accumulation
        return lax.dot_general(x.astype(w.dtype), w,
                               (((1,), (0,)), ((), ())),
                               preferred_element_type=f32)

    def layernorm(z, g, b):
        mu = jnp.mean(z, axis=-1, keepdims=True)
        var = jnp.mean(jnp.square(z - mu), axis=-1, keepdims=True)
        return (z - mu) * lax.rsqrt(var + LN_EPS) * g + b

    x = data_ref[0:m, :]                           # (m, H) f32 (lanes >= 6 ignored)
    pos = data_ref[ms:ms + m, :]                   # (m, H) positional rows (pos[i // B])
    attn_bias = data_ref[2 * ms:2 * ms + m, :m]    # (m, m) block-diag grouping mask
    pool = data_ref[3 * ms:3 * ms + 8, :m]         # (8, m) mean-over-S matrix

    def attention(xq, xkv, wqkv, bq, bk, bv, wo, bo):
        if xq is xkv:                              # self-attention: single QKV matmul
            qkv = mm(xq, wqkv)                     # (m, 3H); Q scale folded into weights
            q = qkv[:, :H] + bq
            k = qkv[:, H:2 * H] + bk
            v = qkv[:, 2 * H:] + bv
        else:                                      # cross-attention: Q from xq, KV from xkv
            q = mm(xq, wqkv[:, :H]) + bq
            k = mm(xkv, wqkv[:, H:2 * H]) + bk
            v = mm(xkv, wqkv[:, 2 * H:]) + bv
        out = None
        for h in range(NUM_HEADS):
            sl = slice(h * dh, (h + 1) * dh)
            qh = q[:, sl].astype(bf16)
            kh = k[:, sl].astype(bf16)
            vh = v[:, sl].astype(bf16)
            s = lax.dot_general(qh, kh, (((1,), (1,)), ((), ())),
                                preferred_element_type=f32)        # (m, m)
            s = s + attn_bias                      # restrict to same original-S group
            s = s - jnp.max(s, axis=-1, keepdims=True)
            p = jnp.exp(s)
            p = p / jnp.sum(p, axis=-1, keepdims=True)             # exact softmax (parity)
            ctx = lax.dot_general(p.astype(bf16), vh, (((1,), (0,)), ((), ())),
                                  preferred_element_type=f32)      # (m, dh)
            # Fold the head concat into the out-projection: the 4 extra K=32
            # matmuls are free (MXU idle at m=16) and avoid lane-concat shuffles.
            oh = lax.dot_general(ctx.astype(bf16), wo[sl, :], (((1,), (0,)), ((), ())),
                                 preferred_element_type=f32)       # (m, H)
            out = oh if out is None else out + oh
        return out + bo

    # ---- embedding + positional encoding -------------------------------------------
    h0 = mm(x, w_enc_h_ref[:, EMB_OFF:EMB_OFF + H]) + prow("emb_b") + pos

    # ---- encoder layer (post-LN) + final encoder LayerNorm --------------------------
    e_sa = attention(h0, h0,
                     w_enc_h_ref[:, ESA_QKV_OFF:ESA_QKV_OFF + 3 * H],
                     prow("esa_bq"), prow("esa_bk"), prow("esa_bv"),
                     w_enc_h_ref[:, ESA_WO_OFF:ESA_WO_OFF + H], prow("esa_bo"))
    e1 = layernorm(h0 + e_sa, prow("eln1_g"), prow("eln1_b"))
    e_h = jnp.maximum(
        mm(e1, w_enc_h_ref[:, EFF_W1_OFF:EFF_W1_OFF + DIM_FF]) + ffb1_ref[0:1, :], 0.0)
    e_ff = mm(e_h, w_enc_f_ref[...]) + prow("eff_b2")
    e2 = layernorm(e1 + e_ff, prow("eln2_g"), prow("eln2_b"))
    memory = layernorm(e2, prow("enorm_g"), prow("enorm_b"))

    # ---- decoder layer (post-LN) + final decoder LayerNorm --------------------------
    cp_dec_h.wait()                                # decoder-side weights are ready now

    d_sa = attention(h0, h0,
                     w_dec_h[:, DSA_QKV_OFF:DSA_QKV_OFF + 3 * H],
                     prow("dsa_bq"), prow("dsa_bk"), prow("dsa_bv"),
                     w_dec_h[:, DSA_WO_OFF:DSA_WO_OFF + H], prow("dsa_bo"))
    d1 = layernorm(h0 + d_sa, prow("dln1_g"), prow("dln1_b"))
    d_ca = attention(d1, memory,
                     w_dec_h[:, DCA_QKV_OFF:DCA_QKV_OFF + 3 * H],
                     prow("dca_bq"), prow("dca_bk"), prow("dca_bv"),
                     w_dec_h[:, DCA_WO_OFF:DCA_WO_OFF + H], prow("dca_bo"))
    d2 = layernorm(d1 + d_ca, prow("dln2_g"), prow("dln2_b"))
    d_h = jnp.maximum(
        mm(d2, w_dec_h[:, DFF_W1_OFF:DFF_W1_OFF + DIM_FF]) + ffb1_ref[1:2, :], 0.0)
    cp_dec_f.wait()
    d_ff = mm(d_h, w_dec_f[...]) + prow("dff_b2")
    d3 = layernorm(d2 + d_ff, prow("dln3_g"), prow("dln3_b"))
    dec_out = layernorm(d3, prow("dnorm_g"), prow("dnorm_b"))

    # ---- mean over S (torch .mean(dim=1)) + output Linear (lane-dense store) --------
    pooled = lax.dot_general(pool, dec_out, (((1,), (0,)), ((), ())),
                             preferred_element_type=f32)           # (8, H)
    o_ref[...] = mm(pooled, w_dec_h[:, FC_OFF:FC_OFF + H]) + prow("fc_b")


# ---------------------------------- parameters --------------------------------------
def init_params(key):
    """Parameters in the PyTorch module's native layout (nn.Linear: (out, in))."""
    ks = iter(jax.random.split(key, 32))
    f32 = jnp.float32

    def w(shape, scale=0.05):
        return jax.random.normal(next(ks), shape, f32) * scale

    zeros = lambda s: jnp.zeros(s, f32)
    ones = lambda s: jnp.ones(s, f32)

    def attn_p():
        return dict(ipw=w((3 * HIDDEN, HIDDEN)), ipb=zeros((3 * HIDDEN,)),
                    opw=w((HIDDEN, HIDDEN)), opb=zeros((HIDDEN,)))

    def ln_p():
        return dict(g=ones((HIDDEN,)), b=zeros((HIDDEN,)))

    def ff_p():
        return dict(l1_w=w((DIM_FF, HIDDEN)), l1_b=zeros((DIM_FF,)),
                    l2_w=w((HIDDEN, DIM_FF)), l2_b=zeros((HIDDEN,)))

    return dict(
        emb_w=w((HIDDEN, INPUT_SIZE)), emb_b=zeros((HIDDEN,)),
        # torch inits pos-enc to zeros; small random here so the add is exercised
        pos=w((1, MAX_LEN, HIDDEN), scale=0.02),
        enc=dict(sa=attn_p(), n1=ln_p(), n2=ln_p(), **ff_p()),
        enc_norm=ln_p(),
        dec=dict(sa=attn_p(), ca=attn_p(), n1=ln_p(), n2=ln_p(), n3=ln_p(), **ff_p()),
        dec_norm=ln_p(),
        fc_w=w((OUTPUT_SIZE, HIDDEN)), fc_b=zeros((OUTPUT_SIZE,)),
    )


def prepare_params(params):
    """Torch layout -> packed kernel slabs (K-major bf16 weights, f32 small params)."""
    f32, bf16 = jnp.float32, jnp.bfloat16
    H = HIDDEN
    q_scale = 1.0 / float(HEAD_DIM) ** 0.5

    def km(wt):                       # torch (N, K) -> K-major (K, N) bf16
        return jnp.transpose(wt).astype(bf16)

    def attn(p):
        wqkv = jnp.transpose(p["ipw"]).astype(f32)                 # (H, 3H)
        sc = jnp.concatenate([jnp.full((H,), q_scale, f32), jnp.ones((2 * H,), f32)])
        wqkv = (wqkv * sc[None, :]).astype(bf16)                   # fold 1/sqrt(dh) into Q
        bqkv = p["ipb"].astype(f32) * sc
        return dict(wqkv=wqkv, bq=bqkv[:H], bk=bqkv[H:2 * H], bv=bqkv[2 * H:],
                    wo=km(p["opw"]), bo=p["opb"].astype(f32))

    enc, dec = params["enc"], params["dec"]
    esa, dsa, dca = attn(enc["sa"]), attn(dec["sa"]), attn(dec["ca"])

    # zero-padded embedding / output-head weights so every matmul contracts K=H
    emb_w = jnp.zeros((H, H), f32).at[:INPUT_SIZE, :].set(
        jnp.transpose(params["emb_w"])).astype(bf16)
    fc_w = jnp.zeros((H, H), f32).at[:, :OUTPUT_SIZE].set(
        jnp.transpose(params["fc_w"])).astype(bf16)

    # bf16 weight slabs
    w_enc_h = jnp.concatenate([emb_w, esa["wqkv"], esa["wo"], km(enc["l1_w"])], axis=1)
    w_enc_f = km(enc["l2_w"])
    w_dec_h = jnp.concatenate([dsa["wqkv"], dsa["wo"], dca["wqkv"], dca["wo"],
                               km(dec["l1_w"]), fc_w], axis=1)
    w_dec_f = km(dec["l2_w"])
    assert w_enc_h.shape == (H, ENC_H_COLS) and w_dec_h.shape == (H, DEC_H_COLS)

    # f32 packed bias / LayerNorm slab (one 128-wide row per parameter)
    row_vals = {
        "emb_b": params["emb_b"],
        "esa_bq": esa["bq"], "esa_bk": esa["bk"], "esa_bv": esa["bv"], "esa_bo": esa["bo"],
        "eln1_g": enc["n1"]["g"], "eln1_b": enc["n1"]["b"],
        "eff_b2": enc["l2_b"],
        "eln2_g": enc["n2"]["g"], "eln2_b": enc["n2"]["b"],
        "enorm_g": params["enc_norm"]["g"], "enorm_b": params["enc_norm"]["b"],
        "dsa_bq": dsa["bq"], "dsa_bk": dsa["bk"], "dsa_bv": dsa["bv"], "dsa_bo": dsa["bo"],
        "dln1_g": dec["n1"]["g"], "dln1_b": dec["n1"]["b"],
        "dca_bq": dca["bq"], "dca_bk": dca["bk"], "dca_bv": dca["bv"], "dca_bo": dca["bo"],
        "dln2_g": dec["n2"]["g"], "dln2_b": dec["n2"]["b"],
        "dff_b2": dec["l2_b"],
        "dln3_g": dec["n3"]["g"], "dln3_b": dec["n3"]["b"],
        "dnorm_g": params["dec_norm"]["g"], "dnorm_b": params["dec_norm"]["b"],
        "fc_b": params["fc_b"],
    }

    def pad_row(v):
        v = jnp.asarray(v, f32).reshape(-1)
        return jnp.pad(v, (0, HIDDEN - v.shape[0]))

    rows = [pad_row(row_vals[name]) for name in _PARAM_ROW_NAMES]
    rows += [jnp.zeros((HIDDEN,), f32)] * (PARAM_SLAB_ROWS - len(rows))
    param_slab = jnp.stack(rows)

    ffb1 = jnp.stack([enc["l1_b"], dec["l1_b"]]).astype(f32)       # (2, DIM_FF)

    return dict(pos=params["pos"][0].astype(f32),
                param_slab=param_slab, ffb1=ffb1,
                w_enc_h=w_enc_h, w_enc_f=w_enc_f,
                w_dec_h=w_dec_h, w_dec_f=w_dec_f)


# ------------------------------------ forward ---------------------------------------
def transformer_forward(prep, x):
    """x: (B, S, INPUT_SIZE) f32 -> (B, 1, OUTPUT_SIZE) f32 (matches torch eval())."""
    B, S, In = x.shape
    M = S * B
    assert S <= MAX_LEN, "positional encoding only covers 50 positions"
    assert B <= 8 and M <= 128, "tiny-batch fused kernel; tile rows beyond this"
    ms = (M + 7) // 8 * 8                       # sublane-aligned section stride

    # nn.Transformer(batch_first=False): dim 0 of (B, S, H) is its sequence axis,
    # dim 1 its batch -> attention mixes the original batch axis B independently
    # per position s.  Keep activations as one (S*B, H) slab, rows ordered
    # s-major, and enforce the per-position grouping with a block-diagonal mask.
    x_rows = jnp.transpose(x, (1, 0, 2)).reshape(M, In)
    x_pad = jnp.pad(x_rows, ((0, ms - M), (0, HIDDEN - In)))
    pos_rows = jnp.repeat(prep["pos"][:S], B, axis=0)              # row i -> pos[i // B]
    pos_pad = jnp.pad(pos_rows, ((0, ms - M), (0, 0)))

    groups = np.arange(M) // B                                     # static constants
    attn_bias = np.zeros((ms, HIDDEN), np.float32)
    attn_bias[:M, :M] = np.where(groups[:, None] == groups[None, :], 0.0, NEG_INF)
    pool = np.zeros((8, HIDDEN), np.float32)
    pool[np.arange(M) % B, np.arange(M)] = 1.0 / S                 # mean over S per b

    data_slab = jnp.concatenate(
        [x_pad, pos_pad, jnp.asarray(attn_bias), jnp.asarray(pool)], axis=0)

    # Single fused, grid-less invocation: all activations + ~2.4 MB of weights are
    # VMEM-resident; keep it on one TensorCore — splitting across v7x's two cores
    # would only duplicate the weight DMAs with no compute to amortize.
    # TODO(synk): in a serving loop with fixed weights, hoist the weight slabs out
    # of the hot path entirely (cross-call prefetch / resident VMEM), and batch
    # more rows per call (up to M~256) to fill the otherwise idle MXU.
    out = pl.pallas_call(
        functools.partial(fused_transformer_kernel, M),
        out_shape=jax.ShapeDtypeStruct((8, HIDDEN), jnp.float32),
        in_specs=[pl.BlockSpec(memory_space=pltpu.MemorySpace.VMEM)] * 5
                 + [pl.BlockSpec(memory_space=pl.ANY)] * 2,
        out_specs=pl.BlockSpec(memory_space=pltpu.MemorySpace.VMEM),
        scratch_shapes=[
            pltpu.VMEM((HIDDEN, DEC_H_COLS), jnp.bfloat16),
            pltpu.VMEM((DIM_FF, HIDDEN), jnp.bfloat16),
            pltpu.SemaphoreType.DMA((2,)),
        ],
    )(data_slab, prep["param_slab"], prep["ffb1"],
      prep["w_enc_h"], prep["w_enc_f"], prep["w_dec_h"], prep["w_dec_f"])

    return out[:B, :OUTPUT_SIZE][:, None, :]                       # == .unsqueeze(1)


# -------------------------------------- main -----------------------------------------
if __name__ == "__main__":
    key = jax.random.PRNGKey(0)
    pkey, xkey = jax.random.split(key)
    params = init_params(pkey)
    prep = prepare_params(params)

    B, S = 2, 8                                                    # small shapes; S <= 50
    x = jax.random.normal(xkey, (B, S, INPUT_SIZE), jnp.float32)

    fwd = jax.jit(transformer_forward)
    y = fwd(prep, x)
    jax.block_until_ready(y)

    assert y.shape == (B, 1, OUTPUT_SIZE), y.shape
    assert bool(jnp.all(jnp.isfinite(y)))
    print("KERNEL_OK")
</pallas_src>

<mosaic_0001>
module attributes {stable_mosaic.version = 11 : i64} {
  func.func @fused_transformer_kernel(%arg0: memref<56x128xf32, #tpu.memory_space<vmem>>, %arg1: memref<32x128xf32, #tpu.memory_space<vmem>>, %arg2: memref<2x2048xf32, #tpu.memory_space<vmem>>, %arg3: memref<128x2688xbf16, #tpu.memory_space<vmem>>, %arg4: memref<2048x128xbf16, #tpu.memory_space<vmem>>, %arg5: memref<128x3200xbf16, #tpu.memory_space<any>>, %arg6: memref<2048x128xbf16, #tpu.memory_space<any>>, %arg7: memref<8x128xf32, #tpu.memory_space<vmem>>, %arg8: memref<128x3200xbf16, #tpu.memory_space<vmem>>, %arg9: memref<2048x128xbf16, #tpu.memory_space<vmem>>, %arg10: memref<2x!tpu.dma_semaphore, #tpu.memory_space<semaphore_mem>>) attributes {dimension_semantics = [], scalar_prefetch = 0 : i64, scratch_operands = 3 : i64, tpu.core_type = #tpu.core_type<tc>} {
    %c0_i32 = arith.constant 0 : i32
    %0 = tpu.memref_slice %arg10[%c0_i32] : memref<2x!tpu.dma_semaphore, #tpu.memory_space<semaphore_mem>> -> memref<1x!tpu.dma_semaphore, #tpu.memory_space<semaphore_mem>>
    %1 = tpu.memref_squeeze %0 : memref<1x!tpu.dma_semaphore, #tpu.memory_space<semaphore_mem>> -> memref<!tpu.dma_semaphore, #tpu.memory_space<semaphore_mem>>
    tpu.enqueue_dma source(%arg5 : memref<128x3200xbf16, #tpu.memory_space<any>>) target(%arg8 : memref<128x3200xbf16, #tpu.memory_space<vmem>>) target_semaphore(%1 : memref<!tpu.dma_semaphore, #tpu.memory_space<semaphore_mem>>)
    %c1_i32 = arith.constant 1 : i32
    %2 = tpu.memref_slice %arg10[%c1_i32] : memref<2x!tpu.dma_semaphore, #tpu.memory_space<semaphore_mem>> -> memref<1x!tpu.dma_semaphore, #tpu.memory_space<semaphore_mem>>
    %3 = tpu.memref_squeeze %2 : memref<1x!tpu.dma_semaphore, #tpu.memory_space<semaphore_mem>> -> memref<!tpu.dma_semaphore, #tpu.memory_space<semaphore_mem>>
    tpu.enqueue_dma source(%arg6 : memref<2048x128xbf16, #tpu.memory_space<any>>) target(%arg9 : memref<2048x128xbf16, #tpu.memory_space<vmem>>) target_semaphore(%3 : memref<!tpu.dma_semaphore, #tpu.memory_space<semaphore_mem>>)
    %c0 = arith.constant 0 : index
    %c0_0 = arith.constant 0 : index
    %4 = vector.load %arg0[%c0, %c0_0] : memref<56x128xf32, #tpu.memory_space<vmem>>, vector<16x128xf32>
    %c16 = arith.constant 16 : index
    %c0_1 = arith.constant 0 : index
    %5 = vector.load %arg0[%c16, %c0_1] : memref<56x128xf32, #tpu.memory_space<vmem>>, vector<16x128xf32>
    %c32 = arith.constant 32 : index
    %c0_2 = arith.constant 0 : index
    %6 = vector.load %arg0[%c32, %c0_2] : memref<56x128xf32, #tpu.memory_space<vmem>>, vector<16x16xf32>
    %c48 = arith.constant 48 : index
    %c0_3 = arith.constant 0 : index
    %7 = vector.load %arg0[%c48, %c0_3] : memref<56x128xf32, #tpu.memory_space<vmem>>, vector<8x16xf32>
    %c0_4 = arith.constant 0 : index
    %c0_5 = arith.constant 0 : index
    %8 = vector.load %arg3[%c0_4, %c0_5] : memref<128x2688xbf16, #tpu.memory_space<vmem>>, vector<128x128xbf16>
    %9 = arith.truncf %4 : vector<16x128xf32> to vector<16x128xbf16>
    %cst = arith.constant dense<0.000000e+00> : vector<16x128xf32>
    %10 = tpu.matmul %9, %8, %cst {dimension_numbers = #tpu.dot_dimension_numbers<[1], [0], [0], [1], [0, 0, 1, 1], [], []>} : vector<16x128xbf16>, vector<128x128xbf16>, vector<16x128xf32> -> vector<16x128xf32>
    %c0_6 = arith.constant 0 : index
    %c0_7 = arith.constant 0 : index
    %11 = vector.load %arg1[%c0_6, %c0_7] : memref<32x128xf32, #tpu.memory_space<vmem>>, vector<1x128xf32>
    %12 = vector.broadcast %11 : vector<1x128xf32> to vector<16x128xf32>
    %13 = arith.addf %10, %12 : vector<16x128xf32>
    %14 = arith.addf %13, %5 : vector<16x128xf32>
    %c0_8 = arith.constant 0 : index
    %c128 = arith.constant 128 : index
    %15 = vector.load %arg3[%c0_8, %c128] : memref<128x2688xbf16, #tpu.memory_space<vmem>>, vector<128x384xbf16>
    %c1 = arith.constant 1 : index
    %c0_9 = arith.constant 0 : index
    %16 = vector.load %arg1[%c1, %c0_9] : memref<32x128xf32, #tpu.memory_space<vmem>>, vector<1x128xf32>
    %c2 = arith.constant 2 : index
    %c0_10 = arith.constant 0 : index
    %17 = vector.load %arg1[%c2, %c0_10] : memref<32x128xf32, #tpu.memory_space<vmem>>, vector<1x128xf32>
    %c3 = arith.constant 3 : index
    %c0_11 = arith.constant 0 : index
    %18 = vector.load %arg1[%c3, %c0_11] : memref<32x128xf32, #tpu.memory_space<vmem>>, vector<1x128xf32>
    %c0_12 = arith.constant 0 : index
    %c512 = arith.constant 512 : index
    %19 = vector.load %arg3[%c0_12, %c512] : memref<128x2688xbf16, #tpu.memory_space<vmem>>, vector<128x128xbf16>
    %c4 = arith.constant 4 : index
    %c0_13 = arith.constant 0 : index
    %20 = vector.load %arg1[%c4, %c0_13] : memref<32x128xf32, #tpu.memory_space<vmem>>, vector<1x128xf32>
    %21 = arith.truncf %14 : vector<16x128xf32> to vector<16x128xbf16>
    %cst_14 = arith.constant dense<0.000000e+00> : vector<16x384xf32>
    %22 = tpu.matmul %21, %15, %cst_14 {dimension_numbers = #tpu.dot_dimension_numbers<[1], [0], [0], [1], [0, 0, 1, 1], [], []>} : vector<16x128xbf16>, vector<128x384xbf16>, vector<16x384xf32> -> vector<16x384xf32>
    %23 = vector.extract_strided_slice %22 {offsets = [0, 0], sizes = [16, 128], strides = [1, 1]} : vector<16x384xf32> to vector<16x128xf32>
    %24 = vector.broadcast %16 : vector<1x128xf32> to vector<16x128xf32>
    %25 = arith.addf %23, %24 : vector<16x128xf32>
    %26 = vector.extract_strided_slice %22 {offsets = [0, 128], sizes = [16, 128], strides = [1, 1]} : vector<16x384xf32> to vector<16x128xf32>
    %27 = vector.broadcast %17 : vector<1x128xf32> to vector<16x128xf32>
    %28 = arith.addf %26, %27 : vector<16x128xf32>
    %29 = vector.extract_strided_slice %22 {offsets = [0, 256], sizes = [16, 128], strides = [1, 1]} : vector<16x384xf32> to vector<16x128xf32>
    %30 = vector.broadcast %18 : vector<1x128xf32> to vector<16x128xf32>
    %31 = arith.addf %29, %30 : vector<16x128xf32>
    %32 = vector.extract_strided_slice %25 {offsets = [0, 0], sizes = [16, 32], strides = [1, 1]} : vector<16x128xf32> to vector<16x32xf32>
    %33 = arith.truncf %32 : vector<16x32xf32> to vector<16x32xbf16>
    %34 = vector.extract_strided_slice %28 {offsets = [0, 0], sizes = [16, 32], strides = [1, 1]} : vector<16x128xf32> to vector<16x32xf32>
    %35 = arith.truncf %34 : vector<16x32xf32> to vector<16x32xbf16>
    %36 = vector.extract_strided_slice %31 {offsets = [0, 0], sizes = [16, 32], strides = [1, 1]} : vector<16x128xf32> to vector<16x32xf32>
    %37 = arith.truncf %36 : vector<16x32xf32> to vector<16x32xbf16>
    %cst_15 = arith.constant dense<0.000000e+00> : vector<16x16xf32>
    %38 = tpu.matmul %33, %35, %cst_15 {dimension_numbers = #tpu.dot_dimension_numbers<[1], [1], [0], [0], [0, 0, 1, 0], [], []>} : vector<16x32xbf16>, vector<16x32xbf16>, vector<16x16xf32> -> vector<16x16xf32>
    %39 = arith.addf %38, %6 : vector<16x16xf32>
    %cst_16 = arith.constant dense<0xFF800000> : vector<16xf32>
    %40 = vector.multi_reduction <maximumf>, %39, %cst_16 [1] : vector<16x16xf32> to vector<16xf32>
    %41 = vector.shape_cast %40 : vector<16xf32> to vector<16x1xf32>
    %42 = vector.broadcast %41 : vector<16x1xf32> to vector<16x16xf32>
    %43 = arith.subf %39, %42 : vector<16x16xf32>
    %44 = math.exp %43 : vector<16x16xf32>
    %cst_17 = arith.constant dense<0.000000e+00> : vector<16xf32>
    %45 = vector.multi_reduction <add>, %44, %cst_17 [1] : vector<16x16xf32> to vector<16xf32>
    %46 = vector.shape_cast %45 : vector<16xf32> to vector<16x1xf32>
    %47 = vector.broadcast %46 : vector<16x1xf32> to vector<16x16xf32>
    %48 = arith.divf %44, %47 : vector<16x16xf32>
    %49 = arith.truncf %48 : vector<16x16xf32> to vector<16x16xbf16>
    %cst_18 = arith.constant dense<0.000000e+00> : vector<16x32xf32>
    %50 = tpu.matmul %49, %37, %cst_18 {dimension_numbers = #tpu.dot_dimension_numbers<[1], [0], [0], [1], [0, 0, 1, 1], [], []>} : vector<16x16xbf16>, vector<16x32xbf16>, vector<16x32xf32> -> vector<16x32xf32>
    %51 = arith.truncf %50 : vector<16x32xf32> to vector<16x32xbf16>
    %52 = vector.extract_strided_slice %19 {offsets = [0, 0], sizes = [32, 128], strides = [1, 1]} : vector<128x128xbf16> to vector<32x128xbf16>
    %cst_19 = arith.constant dense<0.000000e+00> : vector<16x128xf32>
    %53 = tpu.matmul %51, %52, %cst_19 {dimension_numbers = #tpu.dot_dimension_numbers<[1], [0], [0], [1], [0, 0, 1, 1], [], []>} : vector<16x32xbf16>, vector<32x128xbf16>, vector<16x128xf32> -> vector<16x128xf32>
    %54 = vector.extract_strided_slice %25 {offsets = [0, 32], sizes = [16, 32], strides = [1, 1]} : vector<16x128xf32> to vector<16x32xf32>
    %55 = arith.truncf %54 : vector<16x32xf32> to vector<16x32xbf16>
    %56 = vector.extract_strided_slice %28 {offsets = [0, 32], sizes = [16, 32], strides = [1, 1]} : vector<16x128xf32> to vector<16x32xf32>
    %57 = arith.truncf %56 : vector<16x32xf32> to vector<16x32xbf16>
    %58 = vector.extract_strided_slice %31 {offsets = [0, 32], sizes = [16, 32], strides = [1, 1]} : vector<16x128xf32> to vector<16x32xf32>
    %59 = arith.truncf %58 : vector<16x32xf32> to vector<16x32xbf16>
    %cst_20 = arith.constant dense<0.000000e+00> : vector<16x16xf32>
    %60 = tpu.matmul %55, %57, %cst_20 {dimension_numbers = #tpu.dot_dimension_numbers<[1], [1], [0], [0], [0, 0, 1, 0], [], []>} : vector<16x32xbf16>, vector<16x32xbf16>, vector<16x16xf32> -> vector<16x16xf32>
    %61 = arith.addf %60, %6 : vector<16x16xf32>
    %cst_21 = arith.constant dense<0xFF800000> : vector<16xf32>
    %62 = vector.multi_reduction <maximumf>, %61, %cst_21 [1] : vector<16x16xf32> to vector<16xf32>
    %63 = vector.shape_cast %62 : vector<16xf32> to vector<16x1xf32>
    %64 = vector.broadcast %63 : vector<16x1xf32> to vector<16x16xf32>
    %65 = arith.subf %61, %64 : vector<16x16xf32>
    %66 = math.exp %65 : vector<16x16xf32>
    %cst_22 = arith.constant dense<0.000000e+00> : vector<16xf32>
    %67 = vector.multi_reduction <add>, %66, %cst_22 [1] : vector<16x16xf32> to vector<16xf32>
    %68 = vector.shape_cast %67 : vector<16xf32> to vector<16x1xf32>
    %69 = vector.broadcast %68 : vector<16x1xf32> to vector<16x16xf32>
    %70 = arith.divf %66, %69 : vector<16x16xf32>
    %71 = arith.truncf %70 : vector<16x16xf32> to vector<16x16xbf16>
    %cst_23 = arith.constant dense<0.000000e+00> : vector<16x32xf32>
    %72 = tpu.matmul %71, %59, %cst_23 {dimension_numbers = #tpu.dot_dimension_numbers<[1], [0], [0], [1], [0, 0, 1, 1], [], []>} : vector<16x16xbf16>, vector<16x32xbf16>, vector<16x32xf32> -> vector<16x32xf32>
    %73 = arith.truncf %72 : vector<16x32xf32> to vector<16x32xbf16>
    %74 = vector.extract_strided_slice %19 {offsets = [32, 0], sizes = [32, 128], strides = [1, 1]} : vector<128x128xbf16> to vector<32x128xbf16>
    %cst_24 = arith.constant dense<0.000000e+00> : vector<16x128xf32>
    %75 = tpu.matmul %73, %74, %cst_24 {dimension_numbers = #tpu.dot_dimension_numbers<[1], [0], [0], [1], [0, 0, 1, 1], [], []>} : vector<16x32xbf16>, vector<32x128xbf16>, vector<16x128xf32> -> vector<16x128xf32>
    %76 = arith.addf %53, %75 : vector<16x128xf32>
    %77 = vector.extract_strided_slice %25 {offsets = [0, 64], sizes = [16, 32], strides = [1, 1]} : vector<16x128xf32> to vector<16x32xf32>
    %78 = arith.truncf %77 : vector<16x32xf32> to vector<16x32xbf16>
    %79 = vector.extract_strided_slice %28 {offsets = [0, 64], sizes = [16, 32], strides = [1, 1]} : vector<16x128xf32> to vector<16x32xf32>
    %80 = arith.truncf %79 : vector<16x32xf32> to vector<16x32xbf16>
    %81 = vector.extract_strided_slice %31 {offsets = [0, 64], sizes = [16, 32], strides = [1, 1]} : vector<16x128xf32> to vector<16x32xf32>
    %82 = arith.truncf %81 : vector<16x32xf32> to vector<16x32xbf16>
    %cst_25 = arith.constant dense<0.000000e+00> : vector<16x16xf32>
    %83 = tpu.matmul %78, %80, %cst_25 {dimension_numbers = #tpu.dot_dimension_numbers<[1], [1], [0], [0], [0, 0, 1, 0], [], []>} : vector<16x32xbf16>, vector<16x32xbf16>, vector<16x16xf32> -> vector<16x16xf32>
    %84 = arith.addf %83, %6 : vector<16x16xf32>
    %cst_26 = arith.constant dense<0xFF800000> : vector<16xf32>
    %85 = vector.multi_reduction <maximumf>, %84, %cst_26 [1] : vector<16x16xf32> to vector<16xf32>
    %86 = vector.shape_cast %85 : vector<16xf32> to vector<16x1xf32>
    %87 = vector.broadcast %86 : vector<16x1xf32> to vector<16x16xf32>
    %88 = arith.subf %84, %87 : vector<16x16xf32>
    %89 = math.exp %88 : vector<16x16xf32>
    %cst_27 = arith.constant dense<0.000000e+00> : vector<16xf32>
    %90 = vector.multi_reduction <add>, %89, %cst_27 [1] : vector<16x16xf32> to vector<16xf32>
    %91 = vector.shape_cast %90 : vector<16xf32> to vector<16x1xf32>
    %92 = vector.broadcast %91 : vector<16x1xf32> to vector<16x16xf32>
    %93 = arith.divf %89, %92 : vector<16x16xf32>
    %94 = arith.truncf %93 : vector<16x16xf32> to vector<16x16xbf16>
    %cst_28 = arith.constant dense<0.000000e+00> : vector<16x32xf32>
    %95 = tpu.matmul %94, %82, %cst_28 {dimension_numbers = #tpu.dot_dimension_numbers<[1], [0], [0], [1], [0, 0, 1, 1], [], []>} : vector<16x16xbf16>, vector<16x32xbf16>, vector<16x32xf32> -> vector<16x32xf32>
    %96 = arith.truncf %95 : vector<16x32xf32> to vector<16x32xbf16>
    %97 = vector.extract_strided_slice %19 {offsets = [64, 0], sizes = [32, 128], strides = [1, 1]} : vector<128x128xbf16> to vector<32x128xbf16>
    %cst_29 = arith.constant dense<0.000000e+00> : vector<16x128xf32>
    %98 = tpu.matmul %96, %97, %cst_29 {dimension_numbers = #tpu.dot_dimension_numbers<[1], [0], [0], [1], [0, 0, 1, 1], [], []>} : vector<16x32xbf16>, vector<32x128xbf16>, vector<16x128xf32> -> vector<16x128xf32>
    %99 = arith.addf %76, %98 : vector<16x128xf32>
    %100 = vector.extract_strided_slice %25 {offsets = [0, 96], sizes = [16, 32], strides = [1, 1]} : vector<16x128xf32> to vector<16x32xf32>
    %101 = arith.truncf %100 : vector<16x32xf32> to vector<16x32xbf16>
    %102 = vector.extract_strided_slice %28 {offsets = [0, 96], sizes = [16, 32], strides = [1, 1]} : vector<16x128xf32> to vector<16x32xf32>
    %103 = arith.truncf %102 : vector<16x32xf32> to vector<16x32xbf16>
    %104 = vector.extract_strided_slice %31 {offsets = [0, 96], sizes = [16, 32], strides = [1, 1]} : vector<16x128xf32> to vector<16x32xf32>
    %105 = arith.truncf %104 : vector<16x32xf32> to vector<16x32xbf16>
    %cst_30 = arith.constant dense<0.000000e+00> : vector<16x16xf32>
    %106 = tpu.matmul %101, %103, %cst_30 {dimension_numbers = #tpu.dot_dimension_numbers<[1], [1], [0], [0], [0, 0, 1, 0], [], []>} : vector<16x32xbf16>, vector<16x32xbf16>, vector<16x16xf32> -> vector<16x16xf32>
    %107 = arith.addf %106, %6 : vector<16x16xf32>
    %cst_31 = arith.constant dense<0xFF800000> : vector<16xf32>
    %108 = vector.multi_reduction <maximumf>, %107, %cst_31 [1] : vector<16x16xf32> to vector<16xf32>
    %109 = vector.shape_cast %108 : vector<16xf32> to vector<16x1xf32>
    %110 = vector.broadcast %109 : vector<16x1xf32> to vector<16x16xf32>
    %111 = arith.subf %107, %110 : vector<16x16xf32>
    %112 = math.exp %111 : vector<16x16xf32>
    %cst_32 = arith.constant dense<0.000000e+00> : vector<16xf32>
    %113 = vector.multi_reduction <add>, %112, %cst_32 [1] : vector<16x16xf32> to vector<16xf32>
    %114 = vector.shape_cast %113 : vector<16xf32> to vector<16x1xf32>
    %115 = vector.broadcast %114 : vector<16x1xf32> to vector<16x16xf32>
    %116 = arith.divf %112, %115 : vector<16x16xf32>
    %117 = arith.truncf %116 : vector<16x16xf32> to vector<16x16xbf16>
    %cst_33 = arith.constant dense<0.000000e+00> : vector<16x32xf32>
    %118 = tpu.matmul %117, %105, %cst_33 {dimension_numbers = #tpu.dot_dimension_numbers<[1], [0], [0], [1], [0, 0, 1, 1], [], []>} : vector<16x16xbf16>, vector<16x32xbf16>, vector<16x32xf32> -> vector<16x32xf32>
    %119 = arith.truncf %118 : vector<16x32xf32> to vector<16x32xbf16>
    %120 = vector.extract_strided_slice %19 {offsets = [96, 0], sizes = [32, 128], strides = [1, 1]} : vector<128x128xbf16> to vector<32x128xbf16>
    %cst_34 = arith.constant dense<0.000000e+00> : vector<16x128xf32>
    %121 = tpu.matmul %119, %120, %cst_34 {dimension_numbers = #tpu.dot_dimension_numbers<[1], [0], [0], [1], [0, 0, 1, 1], [], []>} : vector<16x32xbf16>, vector<32x128xbf16>, vector<16x128xf32> -> vector<16x128xf32>
    %122 = arith.addf %99, %121 : vector<16x128xf32>
    %123 = vector.broadcast %20 : vector<1x128xf32> to vector<16x128xf32>
    %124 = arith.addf %122, %123 : vector<16x128xf32>
    %125 = arith.addf %14, %124 : vector<16x128xf32>
    %c5 = arith.constant 5 : index
    %c0_35 = arith.constant 0 : index
    %126 = vector.load %arg1[%c5, %c0_35] : memref<32x128xf32, #tpu.memory_space<vmem>>, vector<1x128xf32>
    %c6 = arith.constant 6 : index
    %c0_36 = arith.constant 0 : index
    %127 = vector.load %arg1[%c6, %c0_36] : memref<32x128xf32, #tpu.memory_space<vmem>>, vector<1x128xf32>
    %cst_37 = arith.constant dense<0.000000e+00> : vector<16xf32>
    %128 = vector.multi_reduction <add>, %125, %cst_37 [1] : vector<16x128xf32> to vector<16xf32>
    %129 = vector.shape_cast %128 : vector<16xf32> to vector<16x1xf32>
    %cst_38 = arith.constant 1.280000e+02 : f32
    %130 = vector.broadcast %cst_38 : f32 to vector<16x1xf32>
    %131 = arith.divf %129, %130 : vector<16x1xf32>
    %132 = vector.broadcast %131 : vector<16x1xf32> to vector<16x128xf32>
    %133 = arith.subf %125, %132 : vector<16x128xf32>
    %134 = arith.mulf %133, %133 : vector<16x128xf32>
    %cst_39 = arith.constant dense<0.000000e+00> : vector<16xf32>
    %135 = vector.multi_reduction <add>, %134, %cst_39 [1] : vector<16x128xf32> to vector<16xf32>
    %136 = vector.shape_cast %135 : vector<16xf32> to vector<16x1xf32>
    %cst_40 = arith.constant 1.280000e+02 : f32
    %137 = vector.broadcast %cst_40 : f32 to vector<16x1xf32>
    %138 = arith.divf %136, %137 : vector<16x1xf32>
    %139 = vector.broadcast %131 : vector<16x1xf32> to vector<16x128xf32>
    %140 = arith.subf %125, %139 : vector<16x128xf32>
    %cst_41 = arith.constant 9.99999974E-6 : f32
    %141 = vector.broadcast %cst_41 : f32 to vector<16x1xf32>
    %142 = arith.addf %138, %141 : vector<16x1xf32>
    %143 = math.rsqrt %142 : vector<16x1xf32>
    %144 = vector.broadcast %143 : vector<16x1xf32> to vector<16x128xf32>
    %145 = arith.mulf %140, %144 : vector<16x128xf32>
    %146 = vector.broadcast %126 : vector<1x128xf32> to vector<16x128xf32>
    %147 = arith.mulf %145, %146 : vector<16x128xf32>
    %148 = vector.broadcast %127 : vector<1x128xf32> to vector<16x128xf32>
    %149 = arith.addf %147, %148 : vector<16x128xf32>
    %c0_42 = arith.constant 0 : index
    %c640 = arith.constant 640 : index
    %150 = vector.load %arg3[%c0_42, %c640] : memref<128x2688xbf16, #tpu.memory_space<vmem>>, vector<128x2048xbf16>
    %151 = arith.truncf %149 : vector<16x128xf32> to vector<16x128xbf16>
    %cst_43 = arith.constant dense<0.000000e+00> : vector<16x2048xf32>
    %152 = tpu.matmul %151, %150, %cst_43 {dimension_numbers = #tpu.dot_dimension_numbers<[1], [0], [0], [1], [0, 0, 1, 1], [], []>} : vector<16x128xbf16>, vector<128x2048xbf16>, vector<16x2048xf32> -> vector<16x2048xf32>
    %c0_44 = arith.constant 0 : index
    %c0_45 = arith.constant 0 : index
    %153 = vector.load %arg2[%c0_44, %c0_45] : memref<2x2048xf32, #tpu.memory_space<vmem>>, vector<1x2048xf32>
    %154 = vector.broadcast %153 : vector<1x2048xf32> to vector<16x2048xf32>
    %155 = arith.addf %152, %154 : vector<16x2048xf32>
    %cst_46 = arith.constant 0.000000e+00 : f32
    %156 = vector.broadcast %cst_46 : f32 to vector<16x2048xf32>
    %157 = arith.maximumf %155, %156 : vector<16x2048xf32>
    %c0_47 = arith.constant 0 : index
    %c0_48 = arith.constant 0 : index
    %158 = vector.load %arg4[%c0_47, %c0_48] : memref<2048x128xbf16, #tpu.memory_space<vmem>>, vector<2048x128xbf16>
    %159 = arith.truncf %157 : vector<16x2048xf32> to vector<16x2048xbf16>
    %cst_49 = arith.constant dense<0.000000e+00> : vector<16x128xf32>
    %160 = tpu.matmul %159, %158, %cst_49 {dimension_numbers = #tpu.dot_dimension_numbers<[1], [0], [0], [1], [0, 0, 1, 1], [], []>} : vector<16x2048xbf16>, vector<2048x128xbf16>, vector<16x128xf32> -> vector<16x128xf32>
    %c7 = arith.constant 7 : index
    %c0_50 = arith.constant 0 : index
    %161 = vector.load %arg1[%c7, %c0_50] : memref<32x128xf32, #tpu.memory_space<vmem>>, vector<1x128xf32>
    %162 = vector.broadcast %161 : vector<1x128xf32> to vector<16x128xf32>
    %163 = arith.addf %160, %162 : vector<16x128xf32>
    %164 = arith.addf %149, %163 : vector<16x128xf32>
    %c8 = arith.constant 8 : index
    %c0_51 = arith.constant 0 : index
    %165 = vector.load %arg1[%c8, %c0_51] : memref<32x128xf32, #tpu.memory_space<vmem>>, vector<1x128xf32>
    %c9 = arith.constant 9 : index
    %c0_52 = arith.constant 0 : index
    %166 = vector.load %arg1[%c9, %c0_52] : memref<32x128xf32, #tpu.memory_space<vmem>>, vector<1x128xf32>
    %cst_53 = arith.constant dense<0.000000e+00> : vector<16xf32>
    %167 = vector.multi_reduction <add>, %164, %cst_53 [1] : vector<16x128xf32> to vector<16xf32>
    %168 = vector.shape_cast %167 : vector<16xf32> to vector<16x1xf32>
    %cst_54 = arith.constant 1.280000e+02 : f32
    %169 = vector.broadcast %cst_54 : f32 to vector<16x1xf32>
    %170 = arith.divf %168, %169 : vector<16x1xf32>
    %171 = vector.broadcast %170 : vector<16x1xf32> to vector<16x128xf32>
    %172 = arith.subf %164, %171 : vector<16x128xf32>
    %173 = arith.mulf %172, %172 : vector<16x128xf32>
    %cst_55 = arith.constant dense<0.000000e+00> : vector<16xf32>
    %174 = vector.multi_reduction <add>, %173, %cst_55 [1] : vector<16x128xf32> to vector<16xf32>
    %175 = vector.shape_cast %174 : vector<16xf32> to vector<16x1xf32>
    %cst_56 = arith.constant 1.280000e+02 : f32
    %176 = vector.broadcast %cst_56 : f32 to vector<16x1xf32>
    %177 = arith.divf %175, %176 : vector<16x1xf32>
    %178 = vector.broadcast %170 : vector<16x1xf32> to vector<16x128xf32>
    %179 = arith.subf %164, %178 : vector<16x128xf32>
    %cst_57 = arith.constant 9.99999974E-6 : f32
    %180 = vector.broadcast %cst_57 : f32 to vector<16x1xf32>
    %181 = arith.addf %177, %180 : vector<16x1xf32>
    %182 = math.rsqrt %181 : vector<16x1xf32>
    %183 = vector.broadcast %182 : vector<16x1xf32> to vector<16x128xf32>
    %184 = arith.mulf %179, %183 : vector<16x128xf32>
    %185 = vector.broadcast %165 : vector<1x128xf32> to vector<16x128xf32>
    %186 = arith.mulf %184, %185 : vector<16x128xf32>
    %187 = vector.broadcast %166 : vector<1x128xf32> to vector<16x128xf32>
    %188 = arith.addf %186, %187 : vector<16x128xf32>
    %c10 = arith.constant 10 : index
    %c0_58 = arith.constant 0 : index
    %189 = vector.load %arg1[%c10, %c0_58] : memref<32x128xf32, #tpu.memory_space<vmem>>, vector<1x128xf32>
    %c11 = arith.constant 11 : index
    %c0_59 = arith.constant 0 : index
    %190 = vector.load %arg1[%c11, %c0_59] : memref<32x128xf32, #tpu.memory_space<vmem>>, vector<1x128xf32>
    %cst_60 = arith.constant dense<0.000000e+00> : vector<16xf32>
    %191 = vector.multi_reduction <add>, %188, %cst_60 [1] : vector<16x128xf32> to vector<16xf32>
    %192 = vector.shape_cast %191 : vector<16xf32> to vector<16x1xf32>
    %cst_61 = arith.constant 1.280000e+02 : f32
    %193 = vector.broadcast %cst_61 : f32 to vector<16x1xf32>
    %194 = arith.divf %192, %193 : vector<16x1xf32>
    %195 = vector.broadcast %194 : vector<16x1xf32> to vector<16x128xf32>
    %196 = arith.subf %188, %195 : vector<16x128xf32>
    %197 = arith.mulf %196, %196 : vector<16x128xf32>
    %cst_62 = arith.constant dense<0.000000e+00> : vector<16xf32>
    %198 = vector.multi_reduction <add>, %197, %cst_62 [1] : vector<16x128xf32> to vector<16xf32>
    %199 = vector.shape_cast %198 : vector<16xf32> to vector<16x1xf32>
    %cst_63 = arith.constant 1.280000e+02 : f32
    %200 = vector.broadcast %cst_63 : f32 to vector<16x1xf32>
    %201 = arith.divf %199, %200 : vector<16x1xf32>
    %202 = vector.broadcast %194 : vector<16x1xf32> to vector<16x128xf32>
    %203 = arith.subf %188, %202 : vector<16x128xf32>
    %cst_64 = arith.constant 9.99999974E-6 : f32
    %204 = vector.broadcast %cst_64 : f32 to vector<16x1xf32>
    %205 = arith.addf %201, %204 : vector<16x1xf32>
    %206 = math.rsqrt %205 : vector<16x1xf32>
    %207 = vector.broadcast %206 : vector<16x1xf32> to vector<16x128xf32>
    %208 = arith.mulf %203, %207 : vector<16x128xf32>
    %209 = vector.broadcast %189 : vector<1x128xf32> to vector<16x128xf32>
    %210 = arith.mulf %208, %209 : vector<16x128xf32>
    %211 = vector.broadcast %190 : vector<1x128xf32> to vector<16x128xf32>
    %212 = arith.addf %210, %211 : vector<16x128xf32>
    %c0_i32_65 = arith.constant 0 : i32
    %213 = tpu.memref_slice %arg10[%c0_i32_65] : memref<2x!tpu.dma_semaphore, #tpu.memory_space<semaphore_mem>> -> memref<1x!tpu.dma_semaphore, #tpu.memory_space<semaphore_mem>>
    %214 = tpu.memref_squeeze %213 : memref<1x!tpu.dma_semaphore, #tpu.memory_space<semaphore_mem>> -> memref<!tpu.dma_semaphore, #tpu.memory_space<semaphore_mem>>
    tpu.wait_dma2 semaphore(%214 : memref<!tpu.dma_semaphore, #tpu.memory_space<semaphore_mem>>) src(%arg5 : memref<128x3200xbf16, #tpu.memory_space<any>>) dst(%arg8 : memref<128x3200xbf16, #tpu.memory_space<vmem>>)
    %c0_66 = arith.constant 0 : index
    %c0_67 = arith.constant 0 : index
    %215 = vector.load %arg8[%c0_66, %c0_67] : memref<128x3200xbf16, #tpu.memory_space<vmem>>, vector<128x384xbf16>
    %c12 = arith.constant 12 : index
    %c0_68 = arith.constant 0 : index
    %216 = vector.load %arg1[%c12, %c0_68] : memref<32x128xf32, #tpu.memory_space<vmem>>, vector<1x128xf32>
    %c13 = arith.constant 13 : index
    %c0_69 = arith.constant 0 : index
    %217 = vector.load %arg1[%c13, %c0_69] : memref<32x128xf32, #tpu.memory_space<vmem>>, vector<1x128xf32>
    %c14 = arith.constant 14 : index
    %c0_70 = arith.constant 0 : index
    %218 = vector.load %arg1[%c14, %c0_70] : memref<32x128xf32, #tpu.memory_space<vmem>>, vector<1x128xf32>
    %c0_71 = arith.constant 0 : index
    %c384 = arith.constant 384 : index
    %219 = vector.load %arg8[%c0_71, %c384] : memref<128x3200xbf16, #tpu.memory_space<vmem>>, vector<128x128xbf16>
    %c15 = arith.constant 15 : index
    %c0_72 = arith.constant 0 : index
    %220 = vector.load %arg1[%c15, %c0_72] : memref<32x128xf32, #tpu.memory_space<vmem>>, vector<1x128xf32>
    %221 = arith.truncf %14 : vector<16x128xf32> to vector<16x128xbf16>
    %cst_73 = arith.constant dense<0.000000e+00> : vector<16x384xf32>
    %222 = tpu.matmul %221, %215, %cst_73 {dimension_numbers = #tpu.dot_dimension_numbers<[1], [0], [0], [1], [0, 0, 1, 1], [], []>} : vector<16x128xbf16>, vector<128x384xbf16>, vector<16x384xf32> -> vector<16x384xf32>
    %223 = vector.extract_strided_slice %222 {offsets = [0, 0], sizes = [16, 128], strides = [1, 1]} : vector<16x384xf32> to vector<16x128xf32>
    %224 = vector.broadcast %216 : vector<1x128xf32> to vector<16x128xf32>
    %225 = arith.addf %223, %224 : vector<16x128xf32>
    %226 = vector.extract_strided_slice %222 {offsets = [0, 128], sizes = [16, 128], strides = [1, 1]} : vector<16x384xf32> to vector<16x128xf32>
    %227 = vector.broadcast %217 : vector<1x128xf32> to vector<16x128xf32>
    %228 = arith.addf %226, %227 : vector<16x128xf32>
    %229 = vector.extract_strided_slice %222 {offsets = [0, 256], sizes = [16, 128], strides = [1, 1]} : vector<16x384xf32> to vector<16x128xf32>
    %230 = vector.broadcast %218 : vector<1x128xf32> to vector<16x128xf32>
    %231 = arith.addf %229, %230 : vector<16x128xf32>
    %232 = vector.extract_strided_slice %225 {offsets = [0, 0], sizes = [16, 32], strides = [1, 1]} : vector<16x128xf32> to vector<16x32xf32>
    %233 = arith.truncf %232 : vector<16x32xf32> to vector<16x32xbf16>
    %234 = vector.extract_strided_slice %228 {offsets = [0, 0], sizes = [16, 32], strides = [1, 1]} : vector<16x128xf32> to vector<16x32xf32>
    %235 = arith.truncf %234 : vector<16x32xf32> to vector<16x32xbf16>
    %236 = vector.extract_strided_slice %231 {offsets = [0, 0], sizes = [16, 32], strides = [1, 1]} : vector<16x128xf32> to vector<16x32xf32>
    %237 = arith.truncf %236 : vector<16x32xf32> to vector<16x32xbf16>
    %cst_74 = arith.constant dense<0.000000e+00> : vector<16x16xf32>
    %238 = tpu.matmul %233, %235, %cst_74 {dimension_numbers = #tpu.dot_dimension_numbers<[1], [1], [0], [0], [0, 0, 1, 0], [], []>} : vector<16x32xbf16>, vector<16x32xbf16>, vector<16x16xf32> -> vector<16x16xf32>
    %239 = arith.addf %238, %6 : vector<16x16xf32>
    %cst_75 = arith.constant dense<0xFF800000> : vector<16xf32>
    %240 = vector.multi_reduction <maximumf>, %239, %cst_75 [1] : vector<16x16xf32> to vector<16xf32>
    %241 = vector.shape_cast %240 : vector<16xf32> to vector<16x1xf32>
    %242 = vector.broadcast %241 : vector<16x1xf32> to vector<16x16xf32>
    %243 = arith.subf %239, %242 : vector<16x16xf32>
    %244 = math.exp %243 : vector<16x16xf32>
    %cst_76 = arith.constant dense<0.000000e+00> : vector<16xf32>
    %245 = vector.multi_reduction <add>, %244, %cst_76 [1] : vector<16x16xf32> to vector<16xf32>
    %246 = vector.shape_cast %245 : vector<16xf32> to vector<16x1xf32>
    %247 = vector.broadcast %246 : vector<16x1xf32> to vector<16x16xf32>
    %248 = arith.divf %244, %247 : vector<16x16xf32>
    %249 = arith.truncf %248 : vector<16x16xf32> to vector<16x16xbf16>
    %cst_77 = arith.constant dense<0.000000e+00> : vector<16x32xf32>
    %250 = tpu.matmul %249, %237, %cst_77 {dimension_numbers = #tpu.dot_dimension_numbers<[1], [0], [0], [1], [0, 0, 1, 1], [], []>} : vector<16x16xbf16>, vector<16x32xbf16>, vector<16x32xf32> -> vector<16x32xf32>
    %251 = arith.truncf %250 : vector<16x32xf32> to vector<16x32xbf16>
    %252 = vector.extract_strided_slice %219 {offsets = [0, 0], sizes = [32, 128], strides = [1, 1]} : vector<128x128xbf16> to vector<32x128xbf16>
    %cst_78 = arith.constant dense<0.000000e+00> : vector<16x128xf32>
    %253 = tpu.matmul %251, %252, %cst_78 {dimension_numbers = #tpu.dot_dimension_numbers<[1], [0], [0], [1], [0, 0, 1, 1], [], []>} : vector<16x32xbf16>, vector<32x128xbf16>, vector<16x128xf32> -> vector<16x128xf32>
    %254 = vector.extract_strided_slice %225 {offsets = [0, 32], sizes = [16, 32], strides = [1, 1]} : vector<16x128xf32> to vector<16x32xf32>
    %255 = arith.truncf %254 : vector<16x32xf32> to vector<16x32xbf16>
    %256 = vector.extract_strided_slice %228 {offsets = [0, 32], sizes = [16, 32], strides = [1, 1]} : vector<16x128xf32> to vector<16x32xf32>
    %257 = arith.truncf %256 : vector<16x32xf32> to vector<16x32xbf16>
    %258 = vector.extract_strided_slice %231 {offsets = [0, 32], sizes = [16, 32], strides = [1, 1]} : vector<16x128xf32> to vector<16x32xf32>
    %259 = arith.truncf %258 : vector<16x32xf32> to vector<16x32xbf16>
    %cst_79 = arith.constant dense<0.000000e+00> : vector<16x16xf32>
    %260 = tpu.matmul %255, %257, %cst_79 {dimension_numbers = #tpu.dot_dimension_numbers<[1], [1], [0], [0], [0, 0, 1, 0], [], []>} : vector<16x32xbf16>, vector<16x32xbf16>, vector<16x16xf32> -> vector<16x16xf32>
    %261 = arith.addf %260, %6 : vector<16x16xf32>
    %cst_80 = arith.constant dense<0xFF800000> : vector<16xf32>
    %262 = vector.multi_reduction <maximumf>, %261, %cst_80 [1] : vector<16x16xf32> to vector<16xf32>
    %263 = vector.shape_cast %262 : vector<16xf32> to vector<16x1xf32>
    %264 = vector.broadcast %263 : vector<16x1xf32> to vector<16x16xf32>
    %265 = arith.subf %261, %264 : vector<16x16xf32>
    %266 = math.exp %265 : vector<16x16xf32>
    %cst_81 = arith.constant dense<0.000000e+00> : vector<16xf32>
    %267 = vector.multi_reduction <add>, %266, %cst_81 [1] : vector<16x16xf32> to vector<16xf32>
    %268 = vector.shape_cast %267 : vector<16xf32> to vector<16x1xf32>
    %269 = vector.broadcast %268 : vector<16x1xf32> to vector<16x16xf32>
    %270 = arith.divf %266, %269 : vector<16x16xf32>
    %271 = arith.truncf %270 : vector<16x16xf32> to vector<16x16xbf16>
    %cst_82 = arith.constant dense<0.000000e+00> : vector<16x32xf32>
    %272 = tpu.matmul %271, %259, %cst_82 {dimension_numbers = #tpu.dot_dimension_numbers<[1], [0], [0], [1], [0, 0, 1, 1], [], []>} : vector<16x16xbf16>, vector<16x32xbf16>, vector<16x32xf32> -> vector<16x32xf32>
    %273 = arith.truncf %272 : vector<16x32xf32> to vector<16x32xbf16>
    %274 = vector.extract_strided_slice %219 {offsets = [32, 0], sizes = [32, 128], strides = [1, 1]} : vector<128x128xbf16> to vector<32x128xbf16>
    %cst_83 = arith.constant dense<0.000000e+00> : vector<16x128xf32>
    %275 = tpu.matmul %273, %274, %cst_83 {dimension_numbers = #tpu.dot_dimension_numbers<[1], [0], [0], [1], [0, 0, 1, 1], [], []>} : vector<16x32xbf16>, vector<32x128xbf16>, vector<16x128xf32> -> vector<16x128xf32>
    %276 = arith.addf %253, %275 : vector<16x128xf32>
    %277 = vector.extract_strided_slice %225 {offsets = [0, 64], sizes = [16, 32], strides = [1, 1]} : vector<16x128xf32> to vector<16x32xf32>
    %278 = arith.truncf %277 : vector<16x32xf32> to vector<16x32xbf16>
    %279 = vector.extract_strided_slice %228 {offsets = [0, 64], sizes = [16, 32], strides = [1, 1]} : vector<16x128xf32> to vector<16x32xf32>
    %280 = arith.truncf %279 : vector<16x32xf32> to vector<16x32xbf16>
    %281 = vector.extract_strided_slice %231 {offsets = [0, 64], sizes = [16, 32], strides = [1, 1]} : vector<16x128xf32> to vector<16x32xf32>
    %282 = arith.truncf %281 : vector<16x32xf32> to vector<16x32xbf16>
    %cst_84 = arith.constant dense<0.000000e+00> : vector<16x16xf32>
    %283 = tpu.matmul %278, %280, %cst_84 {dimension_numbers = #tpu.dot_dimension_numbers<[1], [1], [0], [0], [0, 0, 1, 0], [], []>} : vector<16x32xbf16>, vector<16x32xbf16>, vector<16x16xf32> -> vector<16x16xf32>
    %284 = arith.addf %283, %6 : vector<16x16xf32>
    %cst_85 = arith.constant dense<0xFF800000> : vector<16xf32>
    %285 = vector.multi_reduction <maximumf>, %284, %cst_85 [1] : vector<16x16xf32> to vector<16xf32>
    %286 = vector.shape_cast %285 : vector<16xf32> to vector<16x1xf32>
    %287 = vector.broadcast %286 : vector<16x1xf32> to vector<16x16xf32>
    %288 = arith.subf %284, %287 : vector<16x16xf32>
    %289 = math.exp %288 : vector<16x16xf32>
    %cst_86 = arith.constant dense<0.000000e+00> : vector<16xf32>
    %290 = vector.multi_reduction <add>, %289, %cst_86 [1] : vector<16x16xf32> to vector<16xf32>
    %291 = vector.shape_cast %290 : vector<16xf32> to vector<16x1xf32>
    %292 = vector.broadcast %291 : vector<16x1xf32> to vector<16x16xf32>
    %293 = arith.divf %289, %292 : vector<16x16xf32>
    %294 = arith.truncf %293 : vector<16x16xf32> to vector<16x16xbf16>
    %cst_87 = arith.constant dense<0.000000e+00> : vector<16x32xf32>
    %295 = tpu.matmul %294, %282, %cst_87 {dimension_numbers = #tpu.dot_dimension_numbers<[1], [0], [0], [1], [0, 0, 1, 1], [], []>} : vector<16x16xbf16>, vector<16x32xbf16>, vector<16x32xf32> -> vector<16x32xf32>
    %296 = arith.truncf %295 : vector<16x32xf32> to vector<16x32xbf16>
    %297 = vector.extract_strided_slice %219 {offsets = [64, 0], sizes = [32, 128], strides = [1, 1]} : vector<128x128xbf16> to vector<32x128xbf16>
    %cst_88 = arith.constant dense<0.000000e+00> : vector<16x128xf32>
    %298 = tpu.matmul %296, %297, %cst_88 {dimension_numbers = #tpu.dot_dimension_numbers<[1], [0], [0], [1], [0, 0, 1, 1], [], []>} : vector<16x32xbf16>, vector<32x128xbf16>, vector<16x128xf32> -> vector<16x128xf32>
    %299 = arith.addf %276, %298 : vector<16x128xf32>
    %300 = vector.extract_strided_slice %225 {offsets = [0, 96], sizes = [16, 32], strides = [1, 1]} : vector<16x128xf32> to vector<16x32xf32>
    %301 = arith.truncf %300 : vector<16x32xf32> to vector<16x32xbf16>
    %302 = vector.extract_strided_slice %228 {offsets = [0, 96], sizes = [16, 32], strides = [1, 1]} : vector<16x128xf32> to vector<16x32xf32>
    %303 = arith.truncf %302 : vector<16x32xf32> to vector<16x32xbf16>
    %304 = vector.extract_strided_slice %231 {offsets = [0, 96], sizes = [16, 32], strides = [1, 1]} : vector<16x128xf32> to vector<16x32xf32>
    %305 = arith.truncf %304 : vector<16x32xf32> to vector<16x32xbf16>
    %cst_89 = arith.constant dense<0.000000e+00> : vector<16x16xf32>
    %306 = tpu.matmul %301, %303, %cst_89 {dimension_numbers = #tpu.dot_dimension_numbers<[1], [1], [0], [0], [0, 0, 1, 0], [], []>} : vector<16x32xbf16>, vector<16x32xbf16>, vector<16x16xf32> -> vector<16x16xf32>
    %307 = arith.addf %306, %6 : vector<16x16xf32>
    %cst_90 = arith.constant dense<0xFF800000> : vector<16xf32>
    %308 = vector.multi_reduction <maximumf>, %307, %cst_90 [1] : vector<16x16xf32> to vector<16xf32>
    %309 = vector.shape_cast %308 : vector<16xf32> to vector<16x1xf32>
    %310 = vector.broadcast %309 : vector<16x1xf32> to vector<16x16xf32>
    %311 = arith.subf %307, %310 : vector<16x16xf32>
    %312 = math.exp %311 : vector<16x16xf32>
    %cst_91 = arith.constant dense<0.000000e+00> : vector<16xf32>
    %313 = vector.multi_reduction <add>, %312, %cst_91 [1] : vector<16x16xf32> to vector<16xf32>
    %314 = vector.shape_cast %313 : vector<16xf32> to vector<16x1xf32>
    %315 = vector.broadcast %314 : vector<16x1xf32> to vector<16x16xf32>
    %316 = arith.divf %312, %315 : vector<16x16xf32>
    %317 = arith.truncf %316 : vector<16x16xf32> to vector<16x16xbf16>
    %cst_92 = arith.constant dense<0.000000e+00> : vector<16x32xf32>
    %318 = tpu.matmul %317, %305, %cst_92 {dimension_numbers = #tpu.dot_dimension_numbers<[1], [0], [0], [1], [0, 0, 1, 1], [], []>} : vector<16x16xbf16>, vector<16x32xbf16>, vector<16x32xf32> -> vector<16x32xf32>
    %319 = arith.truncf %318 : vector<16x32xf32> to vector<16x32xbf16>
    %320 = vector.extract_strided_slice %219 {offsets = [96, 0], sizes = [32, 128], strides = [1, 1]} : vector<128x128xbf16> to vector<32x128xbf16>
    %cst_93 = arith.constant dense<0.000000e+00> : vector<16x128xf32>
    %321 = tpu.matmul %319, %320, %cst_93 {dimension_numbers = #tpu.dot_dimension_numbers<[1], [0], [0], [1], [0, 0, 1, 1], [], []>} : vector<16x32xbf16>, vector<32x128xbf16>, vector<16x128xf32> -> vector<16x128xf32>
    %322 = arith.addf %299, %321 : vector<16x128xf32>
    %323 = vector.broadcast %220 : vector<1x128xf32> to vector<16x128xf32>
    %324 = arith.addf %322, %323 : vector<16x128xf32>
    %325 = arith.addf %14, %324 : vector<16x128xf32>
    %c16_94 = arith.constant 16 : index
    %c0_95 = arith.constant 0 : index
    %326 = vector.load %arg1[%c16_94, %c0_95] : memref<32x128xf32, #tpu.memory_space<vmem>>, vector<1x128xf32>
    %c17 = arith.constant 17 : index
    %c0_96 = arith.constant 0 : index
    %327 = vector.load %arg1[%c17, %c0_96] : memref<32x128xf32, #tpu.memory_space<vmem>>, vector<1x128xf32>
    %cst_97 = arith.constant dense<0.000000e+00> : vector<16xf32>
    %328 = vector.multi_reduction <add>, %325, %cst_97 [1] : vector<16x128xf32> to vector<16xf32>
    %329 = vector.shape_cast %328 : vector<16xf32> to vector<16x1xf32>
    %cst_98 = arith.constant 1.280000e+02 : f32
    %330 = vector.broadcast %cst_98 : f32 to vector<16x1xf32>
    %331 = arith.divf %329, %330 : vector<16x1xf32>
    %332 = vector.broadcast %331 : vector<16x1xf32> to vector<16x128xf32>
    %333 = arith.subf %325, %332 : vector<16x128xf32>
    %334 = arith.mulf %333, %333 : vector<16x128xf32>
    %cst_99 = arith.constant dense<0.000000e+00> : vector<16xf32>
    %335 = vector.multi_reduction <add>, %334, %cst_99 [1] : vector<16x128xf32> to vector<16xf32>
    %336 = vector.shape_cast %335 : vector<16xf32> to vector<16x1xf32>
    %cst_100 = arith.constant 1.280000e+02 : f32
    %337 = vector.broadcast %cst_100 : f32 to vector<16x1xf32>
    %338 = arith.divf %336, %337 : vector<16x1xf32>
    %339 = vector.broadcast %331 : vector<16x1xf32> to vector<16x128xf32>
    %340 = arith.subf %325, %339 : vector<16x128xf32>
    %cst_101 = arith.constant 9.99999974E-6 : f32
    %341 = vector.broadcast %cst_101 : f32 to vector<16x1xf32>
    %342 = arith.addf %338, %341 : vector<16x1xf32>
    %343 = math.rsqrt %342 : vector<16x1xf32>
    %344 = vector.broadcast %343 : vector<16x1xf32> to vector<16x128xf32>
    %345 = arith.mulf %340, %344 : vector<16x128xf32>
    %346 = vector.broadcast %326 : vector<1x128xf32> to vector<16x128xf32>
    %347 = arith.mulf %345, %346 : vector<16x128xf32>
    %348 = vector.broadcast %327 : vector<1x128xf32> to vector<16x128xf32>
    %349 = arith.addf %347, %348 : vector<16x128xf32>
    %c0_102 = arith.constant 0 : index
    %c512_103 = arith.constant 512 : index
    %350 = vector.load %arg8[%c0_102, %c512_103] : memref<128x3200xbf16, #tpu.memory_space<vmem>>, vector<128x384xbf16>
    %c18 = arith.constant 18 : index
    %c0_104 = arith.constant 0 : index
    %351 = vector.load %arg1[%c18, %c0_104] : memref<32x128xf32, #tpu.memory_space<vmem>>, vector<1x128xf32>
    %c19 = arith.constant 19 : index
    %c0_105 = arith.constant 0 : index
    %352 = vector.load %arg1[%c19, %c0_105] : memref<32x128xf32, #tpu.memory_space<vmem>>, vector<1x128xf32>
    %c20 = arith.constant 20 : index
    %c0_106 = arith.constant 0 : index
    %353 = vector.load %arg1[%c20, %c0_106] : memref<32x128xf32, #tpu.memory_space<vmem>>, vector<1x128xf32>
    %c0_107 = arith.constant 0 : index
    %c896 = arith.constant 896 : index
    %354 = vector.load %arg8[%c0_107, %c896] : memref<128x3200xbf16, #tpu.memory_space<vmem>>, vector<128x128xbf16>
    %c21 = arith.constant 21 : index
    %c0_108 = arith.constant 0 : index
    %355 = vector.load %arg1[%c21, %c0_108] : memref<32x128xf32, #tpu.memory_space<vmem>>, vector<1x128xf32>
    %356 = vector.extract_strided_slice %350 {offsets = [0, 0], sizes = [128, 128], strides = [1, 1]} : vector<128x384xbf16> to vector<128x128xbf16>
    %357 = arith.truncf %349 : vector<16x128xf32> to vector<16x128xbf16>
    %cst_109 = arith.constant dense<0.000000e+00> : vector<16x128xf32>
    %358 = tpu.matmul %357, %356, %cst_109 {dimension_numbers = #tpu.dot_dimension_numbers<[1], [0], [0], [1], [0, 0, 1, 1], [], []>} : vector<16x128xbf16>, vector<128x128xbf16>, vector<16x128xf32> -> vector<16x128xf32>
    %359 = vector.broadcast %351 : vector<1x128xf32> to vector<16x128xf32>
    %360 = arith.addf %358, %359 : vector<16x128xf32>
    %361 = vector.extract_strided_slice %350 {offsets = [0, 128], sizes = [128, 128], strides = [1, 1]} : vector<128x384xbf16> to vector<128x128xbf16>
    %362 = arith.truncf %212 : vector<16x128xf32> to vector<16x128xbf16>
    %cst_110 = arith.constant dense<0.000000e+00> : vector<16x128xf32>
    %363 = tpu.matmul %362, %361, %cst_110 {dimension_numbers = #tpu.dot_dimension_numbers<[1], [0], [0], [1], [0, 0, 1, 1], [], []>} : vector<16x128xbf16>, vector<128x128xbf16>, vector<16x128xf32> -> vector<16x128xf32>
    %364 = vector.broadcast %352 : vector<1x128xf32> to vector<16x128xf32>
    %365 = arith.addf %363, %364 : vector<16x128xf32>
    %366 = vector.extract_strided_slice %350 {offsets = [0, 256], sizes = [128, 128], strides = [1, 1]} : vector<128x384xbf16> to vector<128x128xbf16>
    %367 = arith.truncf %212 : vector<16x128xf32> to vector<16x128xbf16>
    %cst_111 = arith.constant dense<0.000000e+00> : vector<16x128xf32>
    %368 = tpu.matmul %367, %366, %cst_111 {dimension_numbers = #tpu.dot_dimension_numbers<[1], [0], [0], [1], [0, 0, 1, 1], [], []>} : vector<16x128xbf16>, vector<128x128xbf16>, vector<16x128xf32> -> vector<16x128xf32>
    %369 = vector.broadcast %353 : vector<1x128xf32> to vector<16x128xf32>
    %370 = arith.addf %368, %369 : vector<16x128xf32>
    %371 = vector.extract_strided_slice %360 {offsets = [0, 0], sizes = [16, 32], strides = [1, 1]} : vector<16x128xf32> to vector<16x32xf32>
    %372 = arith.truncf %371 : vector<16x32xf32> to vector<16x32xbf16>
    %373 = vector.extract_strided_slice %365 {offsets = [0, 0], sizes = [16, 32], strides = [1, 1]} : vector<16x128xf32> to vector<16x32xf32>
    %374 = arith.truncf %373 : vector<16x32xf32> to vector<16x32xbf16>
    %375 = vector.extract_strided_slice %370 {offsets = [0, 0], sizes = [16, 32], strides = [1, 1]} : vector<16x128xf32> to vector<16x32xf32>
    %376 = arith.truncf %375 : vector<16x32xf32> to vector<16x32xbf16>
    %cst_112 = arith.constant dense<0.000000e+00> : vector<16x16xf32>
    %377 = tpu.matmul %372, %374, %cst_112 {dimension_numbers = #tpu.dot_dimension_numbers<[1], [1], [0], [0], [0, 0, 1, 0], [], []>} : vector<16x32xbf16>, vector<16x32xbf16>, vector<16x16xf32> -> vector<16x16xf32>
    %378 = arith.addf %377, %6 : vector<16x16xf32>
    %cst_113 = arith.constant dense<0xFF800000> : vector<16xf32>
    %379 = vector.multi_reduction <maximumf>, %378, %cst_113 [1] : vector<16x16xf32> to vector<16xf32>
    %380 = vector.shape_cast %379 : vector<16xf32> to vector<16x1xf32>
    %381 = vector.broadcast %380 : vector<16x1xf32> to vector<16x16xf32>
    %382 = arith.subf %378, %381 : vector<16x16xf32>
    %383 = math.exp %382 : vector<16x16xf32>
    %cst_114 = arith.constant dense<0.000000e+00> : vector<16xf32>
    %384 = vector.multi_reduction <add>, %383, %cst_114 [1] : vector<16x16xf32> to vector<16xf32>
    %385 = vector.shape_cast %384 : vector<16xf32> to vector<16x1xf32>
    %386 = vector.broadcast %385 : vector<16x1xf32> to vector<16x16xf32>
    %387 = arith.divf %383, %386 : vector<16x16xf32>
    %388 = arith.truncf %387 : vector<16x16xf32> to vector<16x16xbf16>
    %cst_115 = arith.constant dense<0.000000e+00> : vector<16x32xf32>
    %389 = tpu.matmul %388, %376, %cst_115 {dimension_numbers = #tpu.dot_dimension_numbers<[1], [0], [0], [1], [0, 0, 1, 1], [], []>} : vector<16x16xbf16>, vector<16x32xbf16>, vector<16x32xf32> -> vector<16x32xf32>
    %390 = arith.truncf %389 : vector<16x32xf32> to vector<16x32xbf16>
    %391 = vector.extract_strided_slice %354 {offsets = [0, 0], sizes = [32, 128], strides = [1, 1]} : vector<128x128xbf16> to vector<32x128xbf16>
    %cst_116 = arith.constant dense<0.000000e+00> : vector<16x128xf32>
    %392 = tpu.matmul %390, %391, %cst_116 {dimension_numbers = #tpu.dot_dimension_numbers<[1], [0], [0], [1], [0, 0, 1, 1], [], []>} : vector<16x32xbf16>, vector<32x128xbf16>, vector<16x128xf32> -> vector<16x128xf32>
    %393 = vector.extract_strided_slice %360 {offsets = [0, 32], sizes = [16, 32], strides = [1, 1]} : vector<16x128xf32> to vector<16x32xf32>
    %394 = arith.truncf %393 : vector<16x32xf32> to vector<16x32xbf16>
    %395 = vector.extract_strided_slice %365 {offsets = [0, 32], sizes = [16, 32], strides = [1, 1]} : vector<16x128xf32> to vector<16x32xf32>
    %396 = arith.truncf %395 : vector<16x32xf32> to vector<16x32xbf16>
    %397 = vector.extract_strided_slice %370 {offsets = [0, 32], sizes = [16, 32], strides = [1, 1]} : vector<16x128xf32> to vector<16x32xf32>
    %398 = arith.truncf %397 : vector<16x32xf32> to vector<16x32xbf16>
    %cst_117 = arith.constant dense<0.000000e+00> : vector<16x16xf32>
    %399 = tpu.matmul %394, %396, %cst_117 {dimension_numbers = #tpu.dot_dimension_numbers<[1], [1], [0], [0], [0, 0, 1, 0], [], []>} : vector<16x32xbf16>, vector<16x32xbf16>, vector<16x16xf32> -> vector<16x16xf32>
    %400 = arith.addf %399, %6 : vector<16x16xf32>
    %cst_118 = arith.constant dense<0xFF800000> : vector<16xf32>
    %401 = vector.multi_reduction <maximumf>, %400, %cst_118 [1] : vector<16x16xf32> to vector<16xf32>
    %402 = vector.shape_cast %401 : vector<16xf32> to vector<16x1xf32>
    %403 = vector.broadcast %402 : vector<16x1xf32> to vector<16x16xf32>
    %404 = arith.subf %400, %403 : vector<16x16xf32>
    %405 = math.exp %404 : vector<16x16xf32>
    %cst_119 = arith.constant dense<0.000000e+00> : vector<16xf32>
    %406 = vector.multi_reduction <add>, %405, %cst_119 [1] : vector<16x16xf32> to vector<16xf32>
    %407 = vector.shape_cast %406 : vector<16xf32> to vector<16x1xf32>
    %408 = vector.broadcast %407 : vector<16x1xf32> to vector<16x16xf32>
    %409 = arith.divf %405, %408 : vector<16x16xf32>
    %410 = arith.truncf %409 : vector<16x16xf32> to vector<16x16xbf16>
    %cst_120 = arith.constant dense<0.000000e+00> : vector<16x32xf32>
    %411 = tpu.matmul %410, %398, %cst_120 {dimension_numbers = #tpu.dot_dimension_numbers<[1], [0], [0], [1], [0, 0, 1, 1], [], []>} : vector<16x16xbf16>, vector<16x32xbf16>, vector<16x32xf32> -> vector<16x32xf32>
    %412 = arith.truncf %411 : vector<16x32xf32> to vector<16x32xbf16>
    %413 = vector.extract_strided_slice %354 {offsets = [32, 0], sizes = [32, 128], strides = [1, 1]} : vector<128x128xbf16> to vector<32x128xbf16>
    %cst_121 = arith.constant dense<0.000000e+00> : vector<16x128xf32>
    %414 = tpu.matmul %412, %413, %cst_121 {dimension_numbers = #tpu.dot_dimension_numbers<[1], [0], [0], [1], [0, 0, 1, 1], [], []>} : vector<16x32xbf16>, vector<32x128xbf16>, vector<16x128xf32> -> vector<16x128xf32>
    %415 = arith.addf %392, %414 : vector<16x128xf32>
    %416 = vector.extract_strided_slice %360 {offsets = [0, 64], sizes = [16, 32], strides = [1, 1]} : vector<16x128xf32> to vector<16x32xf32>
    %417 = arith.truncf %416 : vector<16x32xf32> to vector<16x32xbf16>
    %418 = vector.extract_strided_slice %365 {offsets = [0, 64], sizes = [16, 32], strides = [1, 1]} : vector<16x128xf32> to vector<16x32xf32>
    %419 = arith.truncf %418 : vector<16x32xf32> to vector<16x32xbf16>
    %420 = vector.extract_strided_slice %370 {offsets = [0, 64], sizes = [16, 32], strides = [1, 1]} : vector<16x128xf32> to vector<16x32xf32>
    %421 = arith.truncf %420 : vector<16x32xf32> to vector<16x32xbf16>
    %cst_122 = arith.constant dense<0.000000e+00> : vector<16x16xf32>
    %422 = tpu.matmul %417, %419, %cst_122 {dimension_numbers = #tpu.dot_dimension_numbers<[1], [1], [0], [0], [0, 0, 1, 0], [], []>} : vector<16x32xbf16>, vector<16x32xbf16>, vector<16x16xf32> -> vector<16x16xf32>
    %423 = arith.addf %422, %6 : vector<16x16xf32>
    %cst_123 = arith.constant dense<0xFF800000> : vector<16xf32>
    %424 = vector.multi_reduction <maximumf>, %423, %cst_123 [1] : vector<16x16xf32> to vector<16xf32>
    %425 = vector.shape_cast %424 : vector<16xf32> to vector<16x1xf32>
    %426 = vector.broadcast %425 : vector<16x1xf32> to vector<16x16xf32>
    %427 = arith.subf %423, %426 : vector<16x16xf32>
    %428 = math.exp %427 : vector<16x16xf32>
    %cst_124 = arith.constant dense<0.000000e+00> : vector<16xf32>
    %429 = vector.multi_reduction <add>, %428, %cst_124 [1] : vector<16x16xf32> to vector<16xf32>
    %430 = vector.shape_cast %429 : vector<16xf32> to vector<16x1xf32>
    %431 = vector.broadcast %430 : vector<16x1xf32> to vector<16x16xf32>
    %432 = arith.divf %428, %431 : vector<16x16xf32>
    %433 = arith.truncf %432 : vector<16x16xf32> to vector<16x16xbf16>
    %cst_125 = arith.constant dense<0.000000e+00> : vector<16x32xf32>
    %434 = tpu.matmul %433, %421, %cst_125 {dimension_numbers = #tpu.dot_dimension_numbers<[1], [0], [0], [1], [0, 0, 1, 1], [], []>} : vector<16x16xbf16>, vector<16x32xbf16>, vector<16x32xf32> -> vector<16x32xf32>
    %435 = arith.truncf %434 : vector<16x32xf32> to vector<16x32xbf16>
    %436 = vector.extract_strided_slice %354 {offsets = [64, 0], sizes = [32, 128], strides = [1, 1]} : vector<128x128xbf16> to vector<32x128xbf16>
    %cst_126 = arith.constant dense<0.000000e+00> : vector<16x128xf32>
    %437 = tpu.matmul %435, %436, %cst_126 {dimension_numbers = #tpu.dot_dimension_numbers<[1], [0], [0], [1], [0, 0, 1, 1], [], []>} : vector<16x32xbf16>, vector<32x128xbf16>, vector<16x128xf32> -> vector<16x128xf32>
    %438 = arith.addf %415, %437 : vector<16x128xf32>
    %439 = vector.extract_strided_slice %360 {offsets = [0, 96], sizes = [16, 32], strides = [1, 1]} : vector<16x128xf32> to vector<16x32xf32>
    %440 = arith.truncf %439 : vector<16x32xf32> to vector<16x32xbf16>
    %441 = vector.extract_strided_slice %365 {offsets = [0, 96], sizes = [16, 32], strides = [1, 1]} : vector<16x128xf32> to vector<16x32xf32>
    %442 = arith.truncf %441 : vector<16x32xf32> to vector<16x32xbf16>
    %443 = vector.extract_strided_slice %370 {offsets = [0, 96], sizes = [16, 32], strides = [1, 1]} : vector<16x128xf32> to vector<16x32xf32>
    %444 = arith.truncf %443 : vector<16x32xf32> to vector<16x32xbf16>
    %cst_127 = arith.constant dense<0.000000e+00> : vector<16x16xf32>
    %445 = tpu.matmul %440, %442, %cst_127 {dimension_numbers = #tpu.dot_dimension_numbers<[1], [1], [0], [0], [0, 0, 1, 0], [], []>} : vector<16x32xbf16>, vector<16x32xbf16>, vector<16x16xf32> -> vector<16x16xf32>
    %446 = arith.addf %445, %6 : vector<16x16xf32>
    %cst_128 = arith.constant dense<0xFF800000> : vector<16xf32>
    %447 = vector.multi_reduction <maximumf>, %446, %cst_128 [1] : vector<16x16xf32> to vector<16xf32>
    %448 = vector.shape_cast %447 : vector<16xf32> to vector<16x1xf32>
    %449 = vector.broadcast %448 : vector<16x1xf32> to vector<16x16xf32>
    %450 = arith.subf %446, %449 : vector<16x16xf32>
    %451 = math.exp %450 : vector<16x16xf32>
    %cst_129 = arith.constant dense<0.000000e+00> : vector<16xf32>
    %452 = vector.multi_reduction <add>, %451, %cst_129 [1] : vector<16x16xf32> to vector<16xf32>
    %453 = vector.shape_cast %452 : vector<16xf32> to vector<16x1xf32>
    %454 = vector.broadcast %453 : vector<16x1xf32> to vector<16x16xf32>
    %455 = arith.divf %451, %454 : vector<16x16xf32>
    %456 = arith.truncf %455 : vector<16x16xf32> to vector<16x16xbf16>
    %cst_130 = arith.constant dense<0.000000e+00> : vector<16x32xf32>
    %457 = tpu.matmul %456, %444, %cst_130 {dimension_numbers = #tpu.dot_dimension_numbers<[1], [0], [0], [1], [0, 0, 1, 1], [], []>} : vector<16x16xbf16>, vector<16x32xbf16>, vector<16x32xf32> -> vector<16x32xf32>
    %458 = arith.truncf %457 : vector<16x32xf32> to vector<16x32xbf16>
    %459 = vector.extract_strided_slice %354 {offsets = [96, 0], sizes = [32, 128], strides = [1, 1]} : vector<128x128xbf16> to vector<32x128xbf16>
    %cst_131 = arith.constant dense<0.000000e+00> : vector<16x128xf32>
    %460 = tpu.matmul %458, %459, %cst_131 {dimension_numbers = #tpu.dot_dimension_numbers<[1], [0], [0], [1], [0, 0, 1, 1], [], []>} : vector<16x32xbf16>, vector<32x128xbf16>, vector<16x128xf32> -> vector<16x128xf32>
    %461 = arith.addf %438, %460 : vector<16x128xf32>
    %462 = vector.broadcast %355 : vector<1x128xf32> to vector<16x128xf32>
    %463 = arith.addf %461, %462 : vector<16x128xf32>
    %464 = arith.addf %349, %463 : vector<16x128xf32>
    %c22 = arith.constant 22 : index
    %c0_132 = arith.constant 0 : index
    %465 = vector.load %arg1[%c22, %c0_132] : memref<32x128xf32, #tpu.memory_space<vmem>>, vector<1x128xf32>
    %c23 = arith.constant 23 : index
    %c0_133 = arith.constant 0 : index
    %466 = vector.load %arg1[%c23, %c0_133] : memref<32x128xf32, #tpu.memory_space<vmem>>, vector<1x128xf32>
    %cst_134 = arith.constant dense<0.000000e+00> : vector<16xf32>
    %467 = vector.multi_reduction <add>, %464, %cst_134 [1] : vector<16x128xf32> to vector<16xf32>
    %468 = vector.shape_cast %467 : vector<16xf32> to vector<16x1xf32>
    %cst_135 = arith.constant 1.280000e+02 : f32
    %469 = vector.broadcast %cst_135 : f32 to vector<16x1xf32>
    %470 = arith.divf %468, %469 : vector<16x1xf32>
    %471 = vector.broadcast %470 : vector<16x1xf32> to vector<16x128xf32>
    %472 = arith.subf %464, %471 : vector<16x128xf32>
    %473 = arith.mulf %472, %472 : vector<16x128xf32>
    %cst_136 = arith.constant dense<0.000000e+00> : vector<16xf32>
    %474 = vector.multi_reduction <add>, %473, %cst_136 [1] : vector<16x128xf32> to vector<16xf32>
    %475 = vector.shape_cast %474 : vector<16xf32> to vector<16x1xf32>
    %cst_137 = arith.constant 1.280000e+02 : f32
    %476 = vector.broadcast %cst_137 : f32 to vector<16x1xf32>
    %477 = arith.divf %475, %476 : vector<16x1xf32>
    %478 = vector.broadcast %470 : vector<16x1xf32> to vector<16x128xf32>
    %479 = arith.subf %464, %478 : vector<16x128xf32>
    %cst_138 = arith.constant 9.99999974E-6 : f32
    %480 = vector.broadcast %cst_138 : f32 to vector<16x1xf32>
    %481 = arith.addf %477, %480 : vector<16x1xf32>
    %482 = math.rsqrt %481 : vector<16x1xf32>
    %483 = vector.broadcast %482 : vector<16x1xf32> to vector<16x128xf32>
    %484 = arith.mulf %479, %483 : vector<16x128xf32>
    %485 = vector.broadcast %465 : vector<1x128xf32> to vector<16x128xf32>
    %486 = arith.mulf %484, %485 : vector<16x128xf32>
    %487 = vector.broadcast %466 : vector<1x128xf32> to vector<16x128xf32>
    %488 = arith.addf %486, %487 : vector<16x128xf32>
    %c0_139 = arith.constant 0 : index
    %c1024 = arith.constant 1024 : index
    %489 = vector.load %arg8[%c0_139, %c1024] : memref<128x3200xbf16, #tpu.memory_space<vmem>>, vector<128x2048xbf16>
    %490 = arith.truncf %488 : vector<16x128xf32> to vector<16x128xbf16>
    %cst_140 = arith.constant dense<0.000000e+00> : vector<16x2048xf32>
    %491 = tpu.matmul %490, %489, %cst_140 {dimension_numbers = #tpu.dot_dimension_numbers<[1], [0], [0], [1], [0, 0, 1, 1], [], []>} : vector<16x128xbf16>, vector<128x2048xbf16>, vector<16x2048xf32> -> vector<16x2048xf32>
    %c1_141 = arith.constant 1 : index
    %c0_142 = arith.constant 0 : index
    %492 = vector.load %arg2[%c1_141, %c0_142] : memref<2x2048xf32, #tpu.memory_space<vmem>>, vector<1x2048xf32>
    %493 = vector.broadcast %492 : vector<1x2048xf32> to vector<16x2048xf32>
    %494 = arith.addf %491, %493 : vector<16x2048xf32>
    %cst_143 = arith.constant 0.000000e+00 : f32
    %495 = vector.broadcast %cst_143 : f32 to vector<16x2048xf32>
    %496 = arith.maximumf %494, %495 : vector<16x2048xf32>
    %c1_i32_144 = arith.constant 1 : i32
    %497 = tpu.memref_slice %arg10[%c1_i32_144] : memref<2x!tpu.dma_semaphore, #tpu.memory_space<semaphore_mem>> -> memref<1x!tpu.dma_semaphore, #tpu.memory_space<semaphore_mem>>
    %498 = tpu.memref_squeeze %497 : memref<1x!tpu.dma_semaphore, #tpu.memory_space<semaphore_mem>> -> memref<!tpu.dma_semaphore, #tpu.memory_space<semaphore_mem>>
    tpu.wait_dma2 semaphore(%498 : memref<!tpu.dma_semaphore, #tpu.memory_space<semaphore_mem>>) src(%arg6 : memref<2048x128xbf16, #tpu.memory_space<any>>) dst(%arg9 : memref<2048x128xbf16, #tpu.memory_space<vmem>>)
    %c0_145 = arith.constant 0 : index
    %c0_146 = arith.constant 0 : index
    %499 = vector.load %arg9[%c0_145, %c0_146] : memref<2048x128xbf16, #tpu.memory_space<vmem>>, vector<2048x128xbf16>
    %500 = arith.truncf %496 : vector<16x2048xf32> to vector<16x2048xbf16>
    %cst_147 = arith.constant dense<0.000000e+00> : vector<16x128xf32>
    %501 = tpu.matmul %500, %499, %cst_147 {dimension_numbers = #tpu.dot_dimension_numbers<[1], [0], [0], [1], [0, 0, 1, 1], [], []>} : vector<16x2048xbf16>, vector<2048x128xbf16>, vector<16x128xf32> -> vector<16x128xf32>
    %c24 = arith.constant 24 : index
    %c0_148 = arith.constant 0 : index
    %502 = vector.load %arg1[%c24, %c0_148] : memref<32x128xf32, #tpu.memory_space<vmem>>, vector<1x128xf32>
    %503 = vector.broadcast %502 : vector<1x128xf32> to vector<16x128xf32>
    %504 = arith.addf %501, %503 : vector<16x128xf32>
    %505 = arith.addf %488, %504 : vector<16x128xf32>
    %c25 = arith.constant 25 : index
    %c0_149 = arith.constant 0 : index
    %506 = vector.load %arg1[%c25, %c0_149] : memref<32x128xf32, #tpu.memory_space<vmem>>, vector<1x128xf32>
    %c26 = arith.constant 26 : index
    %c0_150 = arith.constant 0 : index
    %507 = vector.load %arg1[%c26, %c0_150] : memref<32x128xf32, #tpu.memory_space<vmem>>, vector<1x128xf32>
    %cst_151 = arith.constant dense<0.000000e+00> : vector<16xf32>
    %508 = vector.multi_reduction <add>, %505, %cst_151 [1] : vector<16x128xf32> to vector<16xf32>
    %509 = vector.shape_cast %508 : vector<16xf32> to vector<16x1xf32>
    %cst_152 = arith.constant 1.280000e+02 : f32
    %510 = vector.broadcast %cst_152 : f32 to vector<16x1xf32>
    %511 = arith.divf %509, %510 : vector<16x1xf32>
    %512 = vector.broadcast %511 : vector<16x1xf32> to vector<16x128xf32>
    %513 = arith.subf %505, %512 : vector<16x128xf32>
    %514 = arith.mulf %513, %513 : vector<16x128xf32>
    %cst_153 = arith.constant dense<0.000000e+00> : vector<16xf32>
    %515 = vector.multi_reduction <add>, %514, %cst_153 [1] : vector<16x128xf32> to vector<16xf32>
    %516 = vector.shape_cast %515 : vector<16xf32> to vector<16x1xf32>
    %cst_154 = arith.constant 1.280000e+02 : f32
    %517 = vector.broadcast %cst_154 : f32 to vector<16x1xf32>
    %518 = arith.divf %516, %517 : vector<16x1xf32>
    %519 = vector.broadcast %511 : vector<16x1xf32> to vector<16x128xf32>
    %520 = arith.subf %505, %519 : vector<16x128xf32>
    %cst_155 = arith.constant 9.99999974E-6 : f32
    %521 = vector.broadcast %cst_155 : f32 to vector<16x1xf32>
    %522 = arith.addf %518, %521 : vector<16x1xf32>
    %523 = math.rsqrt %522 : vector<16x1xf32>
    %524 = vector.broadcast %523 : vector<16x1xf32> to vector<16x128xf32>
    %525 = arith.mulf %520, %524 : vector<16x128xf32>
    %526 = vector.broadcast %506 : vector<1x128xf32> to vector<16x128xf32>
    %527 = arith.mulf %525, %526 : vector<16x128xf32>
    %528 = vector.broadcast %507 : vector<1x128xf32> to vector<16x128xf32>
    %529 = arith.addf %527, %528 : vector<16x128xf32>
    %c27 = arith.constant 27 : index
    %c0_156 = arith.constant 0 : index
    %530 = vector.load %arg1[%c27, %c0_156] : memref<32x128xf32, #tpu.memory_space<vmem>>, vector<1x128xf32>
    %c28 = arith.constant 28 : index
    %c0_157 = arith.constant 0 : index
    %531 = vector.load %arg1[%c28, %c0_157] : memref<32x128xf32, #tpu.memory_space<vmem>>, vector<1x128xf32>
    %cst_158 = arith.constant dense<0.000000e+00> : vector<16xf32>
    %532 = vector.multi_reduction <add>, %529, %cst_158 [1] : vector<16x128xf32> to vector<16xf32>
    %533 = vector.shape_cast %532 : vector<16xf32> to vector<16x1xf32>
    %cst_159 = arith.constant 1.280000e+02 : f32
    %534 = vector.broadcast %cst_159 : f32 to vector<16x1xf32>
    %535 = arith.divf %533, %534 : vector<16x1xf32>
    %536 = vector.broadcast %535 : vector<16x1xf32> to vector<16x128xf32>
    %537 = arith.subf %529, %536 : vector<16x128xf32>
    %538 = arith.mulf %537, %537 : vector<16x128xf32>
    %cst_160 = arith.constant dense<0.000000e+00> : vector<16xf32>
    %539 = vector.multi_reduction <add>, %538, %cst_160 [1] : vector<16x128xf32> to vector<16xf32>
    %540 = vector.shape_cast %539 : vector<16xf32> to vector<16x1xf32>
    %cst_161 = arith.constant 1.280000e+02 : f32
    %541 = vector.broadcast %cst_161 : f32 to vector<16x1xf32>
    %542 = arith.divf %540, %541 : vector<16x1xf32>
    %543 = vector.broadcast %535 : vector<16x1xf32> to vector<16x128xf32>
    %544 = arith.subf %529, %543 : vector<16x128xf32>
    %cst_162 = arith.constant 9.99999974E-6 : f32
    %545 = vector.broadcast %cst_162 : f32 to vector<16x1xf32>
    %546 = arith.addf %542, %545 : vector<16x1xf32>
    %547 = math.rsqrt %546 : vector<16x1xf32>
    %548 = vector.broadcast %547 : vector<16x1xf32> to vector<16x128xf32>
    %549 = arith.mulf %544, %548 : vector<16x128xf32>
    %550 = vector.broadcast %530 : vector<1x128xf32> to vector<16x128xf32>
    %551 = arith.mulf %549, %550 : vector<16x128xf32>
    %552 = vector.broadcast %531 : vector<1x128xf32> to vector<16x128xf32>
    %553 = arith.addf %551, %552 : vector<16x128xf32>
    %cst_163 = arith.constant dense<0.000000e+00> : vector<8x128xf32>
    %554 = tpu.matmul %7, %553, %cst_163 {dimension_numbers = #tpu.dot_dimension_numbers<[1], [0], [0], [1], [0, 0, 1, 1], [], []>} : vector<8x16xf32>, vector<16x128xf32>, vector<8x128xf32> -> vector<8x128xf32>
    %c0_164 = arith.constant 0 : index
    %c3072 = arith.constant 3072 : index
    %555 = vector.load %arg8[%c0_164, %c3072] : memref<128x3200xbf16, #tpu.memory_space<vmem>>, vector<128x128xbf16>
    %556 = arith.truncf %554 : vector<8x128xf32> to vector<8x128xbf16>
    %cst_165 = arith.constant dense<0.000000e+00> : vector<8x128xf32>
    %557 = tpu.matmul %556, %555, %cst_165 {dimension_numbers = #tpu.dot_dimension_numbers<[1], [0], [0], [1], [0, 0, 1, 1], [], []>} : vector<8x128xbf16>, vector<128x128xbf16>, vector<8x128xf32> -> vector<8x128xf32>
    %c29 = arith.constant 29 : index
    %c0_166 = arith.constant 0 : index
    %558 = vector.load %arg1[%c29, %c0_166] : memref<32x128xf32, #tpu.memory_space<vmem>>, vector<1x128xf32>
    %559 = vector.broadcast %558 : vector<1x128xf32> to vector<8x128xf32>
    %560 = arith.addf %557, %559 : vector<8x128xf32>
    %c0_167 = arith.constant 0 : index
    %c0_168 = arith.constant 0 : index
    %561 = vector.load %arg7[%c0_167, %c0_168] : memref<8x128xf32, #tpu.memory_space<vmem>>, vector<8x128xf32>
    tpu.vector_store %arg7[%c0_167, %c0_168], %560 {strides = array<i32>} : memref<8x128xf32, #tpu.memory_space<vmem>>, vector<8x128xf32>,
    return
  }
}

</mosaic_0001>

<llo_original>
// kernel: transformer_forward.1
$region0: #{transformer_forward.1}
  #allocation0 [shape = 'u32[]', space=smem, size = 0x4, offset = 0x4, fixed_abs, tag = 'smem constant byte address 0x4 - core index']
  #allocation1 [shape = 'u32[72,128]{1,0:T(1,128)}', space=vmem, size = 0x9000, scoped, tag = 'internal scratch']
  #allocation2 [shape = 'bf16[128,3200]{1,0:T(8,128)(2,1)}', space=vmem, size = 0xc8000, scoped, tag = 'scratch operand']
  #allocation3 [shape = 'bf16[2048,128]{1,0:T(8,128)(2,1)}', space=vmem, size = 0x80000, scoped, tag = 'scratch operand']
  #allocation4 [shape = 's32[2]{0}', space=sflag, size = 0x8, scoped, tag = 'scratch operand']
  #allocation9 [shape = 's32[]', space=sflag, size = 0x4, offset = 0, fixed_abs, tag = 'sflag constant byte address 0x0 - dummy sync flag']
  #allocation10 [shape = 's32[]', space=sflag, size = 0x4, offset = 0, fixed_abs, tag = 'sflag constant byte address 0x0 - dummy sync flag']
  #allocation11 [shape = 'u32[]', space=smem, size = 0x4, offset = 0x44, fixed_abs, tag = 'smem constant byte address 0x44 - assertion arg 0']
  #allocation12 [shape = 'u32[]', space=smem, size = 0x4, offset = 0x48, fixed_abs, tag = 'smem constant byte address 0x48 - assertion arg 1']
  #allocation13 [shape = 's32[]', space=sflag, size = 0x4, offset = 0, fixed_abs, tag = 'sflag constant byte address 0x0 - dummy sync flag']
  #allocation14 [shape = 's32[]', space=sflag, size = 0x4, offset = 0, fixed_abs, tag = 'sflag constant byte address 0x0 - dummy sync flag']
  %s0 = inlined_call_operand.vmem [shape: f32[56,128], index: 0, kind: input, shape index: {}]
  %s1 = inlined_call_operand.vmem [shape: f32[32,128], index: 1, kind: input, shape index: {}]
  %s2 = inlined_call_operand.vmem [shape: f32[2,2048], index: 2, kind: input, shape index: {}]
  %s3 = inlined_call_operand.hbm [shape: bf16[128,2688], index: 3, kind: input, shape index: {}]
  %s4 = inlined_call_operand.hbm [shape: bf16[2048,128], index: 4, kind: input, shape index: {}]
  %s5 = inlined_call_operand.hbm [shape: bf16[128,3200], index: 5, kind: input, shape index: {}]
  %s6 = inlined_call_operand.hbm [shape: bf16[2048,128], index: 6, kind: input, shape index: {}]
  %s7 = inlined_call_operand.vmem [shape: f32[8,128], index: 7, kind: output, shape index: {}]
  %s8 = sld [smem:[#allocation0]]
  $region46: #{transformer_forward.1} parent=0
    _
  %s10 = ssub.s32 1, %s8
  %s11 = scalar_select 0, %s10, %s8
  $region1: #{transformer_forward.1} parent=0
    #allocation5 [shape = 'u8[688128]{0}', space=vmem, size = 0xa8000, scoped, tag = 'input window, operand 3, single buffered']
    #allocation6 [shape = 's32[1]{0}', space=sflag, size = 0x4, scoped, tag = 'scoped memory for transformer_forward.1']
    #allocation7 [shape = 'u8[524288]{0}', space=vmem, size = 0x80000, scoped, tag = 'input window, operand 4, single buffered']
    #allocation8 [shape = 's32[1]{0}', space=sflag, size = 0x4, scoped, tag = 'scoped memory for transformer_forward.1']
    %12 = vsyncpa [#allocation6], 0
    %13 = vsyncpa [#allocation8], 0
    // Predicated region
    $region2: #{transformer_forward.1} parent=1 // pred_check
      _
    $region3: #{transformer_forward.1} parent=1 // pred_check_branch
      %15 = sbr.rel (0) target = $region5
    $region4: #{transformer_forward.1} parent=1 // pred_region
      _
    $region5: #{transformer_forward.1} parent=1 // pred_fallthru
      _
    // Predicated region
    $region6: #{transformer_forward.1} parent=1 // pred_check
      _
    $region7: #{transformer_forward.1} parent=1 // pred_check_branch
      %17 = sbr.rel (0) target = $region9
    $region8: #{transformer_forward.1} parent=1 // pred_region
      _
    $region9: #{transformer_forward.1} parent=1 // pred_fallthru
      _
    // Predicated region
    $region10: #{transformer_forward.1} parent=1 // pred_check
      _
    $region11: #{transformer_forward.1} parent=1 // pred_check_branch
      %19 = sbr.rel (0) target = $region13
    $region12: #{transformer_forward.1} parent=1 // pred_region
      _
    $region13: #{transformer_forward.1} parent=1 // pred_fallthru
      _
    // Predicated region
    $region14: #{transformer_forward.1} parent=1 // pred_check
      _
    $region15: #{transformer_forward.1} parent=1 // pred_check_branch
      %21 = sbr.rel (0) target = $region17
    $region16: #{transformer_forward.1} parent=1 // pred_region
      %23 = vsyncadd [#allocation6], 0
      %s24 = sshll.u32 %s3, 4
      %s25 = int_to_ptr.hbm [resolvable:$true] %s24
      %s26 = sshll.u32 [#allocation5], 4
      %s27 = int_to_ptr.vmem [resolvable:$true] %s26
      %32 = dma.hbm_to_vmem [thread:$0]  %s25, 21504, %s27, [#allocation6], 1344, 1344, 84
    $region17: #{transformer_forward.1} parent=1 // pred_fallthru
      _
    // Predicated region
    $region18: #{transformer_forward.1} parent=1 // pred_check
      _
    $region19: #{transformer_forward.1} parent=1 // pred_check_branch
      %34 = sbr.rel (0) target = $region21
    $region20: #{transformer_forward.1} parent=1 // pred_region
      %36 = vsyncadd [#allocation8], 0
      %s37 = sshll.u32 %s4, 4
      %s38 = int_to_ptr.hbm [resolvable:$true] %s37
      %s39 = sshll.u32 [#allocation7], 4
      %s40 = int_to_ptr.vmem [resolvable:$true] %s39
      %45 = dma.hbm_to_vmem [thread:$0]  %s38, 16384, %s40, [#allocation8], 64, 64, 4
    $region21: #{transformer_forward.1} parent=1 // pred_fallthru
      _
    // Predicated region
    $region22: #{transformer_forward.1} parent=1 // pred_check
      _
    $region23: #{transformer_forward.1} parent=1 // pred_check_branch
      %47 = sbr.rel (0) target = $region25
    $region24: #{transformer_forward.1} parent=1 // pred_region
      %49 = dma.done [#allocation6], 21504
    $region25: #{transformer_forward.1} parent=1 // pred_fallthru
      _
    // Predicated region
    $region26: #{transformer_forward.1} parent=1 // pred_check
      _
    $region27: #{transformer_forward.1} parent=1 // pred_check_branch
      %51 = sbr.rel (0) target = $region29
    $region28: #{transformer_forward.1} parent=1 // pred_region
      %53 = dma.done [#allocation8], 16384
    $region29: #{transformer_forward.1} parent=1 // pred_fallthru
      _
    // Predicated region
    $region30: #{transformer_forward.1} parent=1 // pred_check
      _
    $region31: #{transformer_forward.1} parent=1 // pred_check_branch
      %56 = sbr.rel target = $region33
    $region32: #{transformer_forward.1} parent=1 // pred_region
      %57 = sst [smem:[#allocation11]] [#allocation10]
      %58 = sst [smem:[#allocation12]] [#allocation9]
    $region33: #{transformer_forward.1} parent=1 // pred_fallthru
      _
    %60 = shalt.err (0)
    %s62 = sshll.u32 %s5, 4
    %s63 = int_to_ptr.hbm [resolvable:$true] %s62
    %s64 = sshll.u32 [#allocation2], 4
    %s65 = int_to_ptr.vmem [resolvable:$true] %s64
    %67 = dma.hbm_to_vmem [thread:$0]  %s63, 25600, %s65, [#allocation4]
    %s68 = scalar_lea.sflag [#allocation4], 1
    // Predicated region
    $region34: #{transformer_forward.1} parent=1 // pred_check
      _
    $region35: #{transformer_forward.1} parent=1 // pred_check_branch
      %70 = sbr.rel target = $region37
    $region36: #{transformer_forward.1} parent=1 // pred_region
      %71 = sst [smem:[#allocation11]] [#allocation14]
      %72 = sst [smem:[#allocation12]] [#allocation13]
    $region37: #{transformer_forward.1} parent=1 // pred_fallthru
      _
    %74 = shalt.err (0)
    %s76 = sshll.u32 %s6, 4
    %s77 = int_to_ptr.hbm [resolvable:$true] %s76
    %s78 = sshll.u32 [#allocation3], 4
    %s79 = int_to_ptr.vmem [resolvable:$true] %s78
    %81 = dma.hbm_to_vmem [thread:$0]  %s77, 16384, %s79, %s68
    %v82 = vld [vmem:[%s0] sm:$0xff]
    %v83 = vld [vmem:[%s0 + $0x8] sm:$0xff]
    %v84 = vld [vmem:[%s0 + $0x10] sm:$0xff]
    %v85 = vld [vmem:[%s0 + $0x18] sm:$0xff]
    %v86 = vld [vmem:[%s0 + $0x20] sm:$0xff]
    %v87 = vld [vmem:[%s0 + $0x28] sm:$0xff]
    %v88 = vld [vmem:[%s0 + $0x30] sm:$0xff]
    %v89 = vld [vmem:[#allocation5] sm:$0xf]
    %v90 = vld [vmem:[#allocation5 + $0x54] sm:$0xf]
    %v91 = vld [vmem:[#allocation5 + $0xa8] sm:$0xf]
    %v92 = vld [vmem:[#allocation5 + $0xfc] sm:$0xf]
    %v93 = vld [vmem:[#allocation5 + $0x150] sm:$0xf]
    %v94 = vld [vmem:[#allocation5 + $0x1a4] sm:$0xf]
    %v95 = vld [vmem:[#allocation5 + $0x1f8] sm:$0xf]
    %v96 = vld [vmem:[#allocation5 + $0x24c] sm:$0xf]
    %v97 = vld [vmem:[#allocation5 + $0x2a0] sm:$0xf]
    %v98 = vld [vmem:[#allocation5 + $0x2f4] sm:$0xf]
    %v99 = vld [vmem:[#allocation5 + $0x348] sm:$0xf]
    %v100 = vld [vmem:[#allocation5 + $0x39c] sm:$0xf]
    %v101 = vld [vmem:[#allocation5 + $0x3f0] sm:$0xf]
    %v102 = vld [vmem:[#allocation5 + $0x444] sm:$0xf]
    %v103 = vld [vmem:[#allocation5 + $0x498] sm:$0xf]
    %v104 = vld [vmem:[#allocation5 + $0x4ec] sm:$0xf]
    %v105 = vpack.c.bf16 %v83, %v82
    %v106 = vld [vmem:[%s1] sm:$0x1]
    %v107 = vperm.slane %v106, 0
    %v124 = vunpack.c.l.b16 %v89
    %v125 = vunpack.c.l.b16 %v90
    %v126 = vunpack.c.l.b16 %v91
    %v127 = vunpack.c.l.b16 %v92
    %v128 = vunpack.c.l.b16 %v93
    %v129 = vunpack.c.l.b16 %v94
    %v130 = vunpack.c.l.b16 %v95
    %v131 = vunpack.c.l.b16 %v96
    %v132 = vunpack.c.l.b16 %v97
    %v133 = vunpack.c.l.b16 %v98
    %v134 = vunpack.c.l.b16 %v99
    %v135 = vunpack.c.l.b16 %v100
    %v136 = vunpack.c.l.b16 %v101
    %v137 = vunpack.c.l.b16 %v102
    %v138 = vunpack.c.l.b16 %v103
    %v139 = vunpack.c.l.b16 %v104
    %v140 = vpack.c.b16 %v125, %v124
    %v141 = vpack.c.b16 %v127, %v126
    %v142 = vpack.c.b16 %v129, %v128
    %v143 = vpack.c.b16 %v131, %v130
    %v144 = vpack.c.b16 %v133, %v132
    %v145 = vpack.c.b16 %v135, %v134
    %v146 = vpack.c.b16 %v137, %v136
    %v147 = vpack.c.b16 %v139, %v138
    %156 = vmatpush.bf16.msra.mxu0 %v147
    %157 = vmatpush.bf16.msra.mxu0 %v146
    %158 = vmatpush.bf16.msra.mxu0 %v145
    %159 = vmatpush.bf16.msra.mxu0 %v144
    %160 = vmatpush.bf16.msra.mxu0 %v143
    %161 = vmatpush.bf16.msra.mxu0 %v142
    %162 = vmatpush.bf16.msra.mxu0 %v141
    %163 = vmatpush.bf16.msra.mxu0 %v140
    %164 = vmatmul.bf16.gmra.mxu0 %v105
    %v165 = vpop.f32.mrf.mxu0
    %v166 = vadd.f32 %v107, %v165
    %v167 = vpop.f32.mrf.mxu0
    %v168 = vadd.f32 %v107, %v167
    %169 = vdwg.mxu0
    %v170 = vadd.f32 %v166, %v84
    %v171 = vadd.f32 %v168, %v85
    %v172 = vld [vmem:[#allocation5 + $0x4] sm:$0xff]
    %v173 = vld [vmem:[#allocation5 + $0xc] sm:$0xf]
    %v174 = vld [vmem:[#allocation5 + $0x58] sm:$0xff]
    %v175 = vld [vmem:[#allocation5 + $0x60] sm:$0xf]
    %v176 = vld [vmem:[#allocation5 + $0xac] sm:$0xff]
    %v177 = vld [vmem:[#allocation5 + $0xb4] sm:$0xf]
    %v178 = vld [vmem:[#allocation5 + $0x100] sm:$0xff]
    %v179 = vld [vmem:[#allocation5 + $0x108] sm:$0xf]
    %v180 = vld [vmem:[#allocation5 + $0x154] sm:$0xff]
    %v181 = vld [vmem:[#allocation5 + $0x15c] sm:$0xf]
    %v182 = vld [vmem:[#allocation5 + $0x1a8] sm:$0xff]
    %v183 = vld [vmem:[#allocation5 + $0x1b0] sm:$0xf]
    %v184 = vld [vmem:[#allocation5 + $0x1fc] sm:$0xff]
    %v185 = vld [vmem:[#allocation5 + $0x204] sm:$0xf]
    %v186 = vld [vmem:[#allocation5 + $0x250] sm:$0xff]
    %v187 = vld [vmem:[#allocation5 + $0x258] sm:$0xf]
    %v188 = vld [vmem:[#allocation5 + $0x2a4] sm:$0xff]
    %v189 = vld [vmem:[#allocation5 + $0x2ac] sm:$0xf]
    %v190 = vld [vmem:[#allocation5 + $0x2f8] sm:$0xff]
    %v191 = vld [vmem:[#allocation5 + $0x300] sm:$0xf]
    %v192 = vld [vmem:[#allocation5 + $0x34c] sm:$0xff]
    %v193 = vld [vmem:[#allocation5 + $0x354] sm:$0xf]
    %v194 = vld [vmem:[#allocation5 + $0x3a0] sm:$0xff]
    %v195 = vld [vmem:[#allocation5 + $0x3a8] sm:$0xf]
    %v196 = vld [vmem:[#allocation5 + $0x3f4] sm:$0xff]
    %v197 = vld [vmem:[#allocation5 + $0x3fc] sm:$0xf]
    %v198 = vld [vmem:[#allocation5 + $0x448] sm:$0xff]
    %v199 = vld [vmem:[#allocation5 + $0x450] sm:$0xf]
    %v200 = vld [vmem:[#allocation5 + $0x49c] sm:$0xff]
    %v201 = vld [vmem:[#allocation5 + $0x4a4] sm:$0xf]
    %v202 = vld [vmem:[#allocation5 + $0x4f0] sm:$0xff]
    %v203 = vld [vmem:[#allocation5 + $0x4f8] sm:$0xf]
    %v204 = vld [vmem:[%s1 + $0x1] sm:$0x1]
    %v205 = vld [vmem:[%s1 + $0x2] sm:$0x1]
    %v206 = vld [vmem:[%s1 + $0x3] sm:$0x1]
    %v207 = vld [vmem:[#allocation5 + $0x10] sm:$0xf]
    %v208 = vld [vmem:[#allocation5 + $0x64] sm:$0xf]
    %v209 = vld [vmem:[#allocation5 + $0xb8] sm:$0xf]
    %v210 = vld [vmem:[#allocation5 + $0x10c] sm:$0xf]
    %v211 = vld [vmem:[#allocation5 + $0x160] sm:$0xf]
    %v212 = vld [vmem:[#allocation5 + $0x1b4] sm:$0xf]
    %v213 = vld [vmem:[#allocation5 + $0x208] sm:$0xf]
    %v214 = vld [vmem:[#allocation5 + $0x25c] sm:$0xf]
    %v215 = vld [vmem:[#allocation5 + $0x2b0] sm:$0xf]
    %v216 = vld [vmem:[#allocation5 + $0x304] sm:$0xf]
    %v217 = vld [vmem:[#allocation5 + $0x358] sm:$0xf]
    %v218 = vld [vmem:[#allocation5 + $0x3ac] sm:$0xf]
    %v219 = vld [vmem:[#allocation5 + $0x400] sm:$0xf]
    %v220 = vld [vmem:[#allocation5 + $0x454] sm:$0xf]
    %v221 = vld [vmem:[#allocation5 + $0x4a8] sm:$0xf]
    %v222 = vld [vmem:[#allocation5 + $0x4fc] sm:$0xf]
    %v223 = vld [vmem:[%s1 + $0x4] sm:$0x1]
    %v224 = vpack.c.bf16 %v171, %v170
    %v257 = vunpack.c.l.b16 %v172
    %v258 = vunpack.c.h.b16 %v172
    %v259 = vunpack.c.l.b16 %v173
    %v260 = vunpack.c.l.b16 %v174
    %v261 = vunpack.c.h.b16 %v174
    %v262 = vunpack.c.l.b16 %v175
    %v263 = vunpack.c.l.b16 %v176
    %v264 = vunpack.c.h.b16 %v176
    %v265 = vunpack.c.l.b16 %v177
    %v266 = vunpack.c.l.b16 %v178
    %v267 = vunpack.c.h.b16 %v178
    %v268 = vunpack.c.l.b16 %v179
    %v269 = vunpack.c.l.b16 %v180
    %v270 = vunpack.c.h.b16 %v180
    %v271 = vunpack.c.l.b16 %v181
    %v272 = vunpack.c.l.b16 %v182
    %v273 = vunpack.c.h.b16 %v182
    %v274 = vunpack.c.l.b16 %v183
    %v275 = vunpack.c.l.b16 %v184
    %v276 = vunpack.c.h.b16 %v184
    %v277 = vunpack.c.l.b16 %v185
    %v278 = vunpack.c.l.b16 %v186
    %v279 = vunpack.c.h.b16 %v186
    %v280 = vunpack.c.l.b16 %v187
    %v281 = vunpack.c.l.b16 %v188
    %v282 = vunpack.c.h.b16 %v188
    %v283 = vunpack.c.l.b16 %v189
    %v284 = vunpack.c.l.b16 %v190
    %v285 = vunpack.c.h.b16 %v190
    %v286 = vunpack.c.l.b16 %v191
    %v287 = vunpack.c.l.b16 %v192
    %v288 = vunpack.c.h.b16 %v192
    %v289 = vunpack.c.l.b16 %v193
    %v290 = vunpack.c.l.b16 %v194
    %v291 = vunpack.c.h.b16 %v194
    %v292 = vunpack.c.l.b16 %v195
    %v293 = vunpack.c.l.b16 %v196
    %v294 = vunpack.c.h.b16 %v196
    %v295 = vunpack.c.l.b16 %v197
    %v296 = vunpack.c.l.b16 %v198
    %v297 = vunpack.c.h.b16 %v198
    %v298 = vunpack.c.l.b16 %v199
    %v299 = vunpack.c.l.b16 %v200
    %v300 = vunpack.c.h.b16 %v200
    %v301 = vunpack.c.l.b16 %v201
    %v302 = vunpack.c.l.b16 %v202
    %v303 = vunpack.c.h.b16 %v202
    %v304 = vunpack.c.l.b16 %v203
    %v305 = vpack.c.b16 %v260, %v257
    %v306 = vpack.c.b16 %v261, %v258
    %v307 = vpack.c.b16 %v262, %v259
    %v308 = vpack.c.b16 %v266, %v263
    %v309 = vpack.c.b16 %v267, %v264
    %v310 = vpack.c.b16 %v268, %v265
    %v311 = vpack.c.b16 %v272, %v269
    %v312 = vpack.c.b16 %v273, %v270
    %v313 = vpack.c.b16 %v274, %v271
    %v314 = vpack.c.b16 %v278, %v275
    %v315 = vpack.c.b16 %v279, %v276
    %v316 = vpack.c.b16 %v280, %v277
    %v317 = vpack.c.b16 %v284, %v281
    %v318 = vpack.c.b16 %v285, %v282
    %v319 = vpack.c.b16 %v286, %v283
    %v320 = vpack.c.b16 %v290, %v287
    %v321 = vpack.c.b16 %v291, %v288
    %v322 = vpack.c.b16 %v292, %v289
    %v323 = vpack.c.b16 %v296, %v293
    %v324 = vpack.c.b16 %v297, %v294
    %v325 = vpack.c.b16 %v298, %v295
    %v326 = vpack.c.b16 %v302, %v299
    %v327 = vpack.c.b16 %v303, %v300
    %v328 = vpack.c.b16 %v304, %v301
    %353 = vmatpush.bf16.msra.mxu0 %v326
    %354 = vmatpush.bf16.msra.mxu0 %v323
    %355 = vmatpush.bf16.msra.mxu0 %v320
    %356 = vmatpush.bf16.msra.mxu0 %v317
    %357 = vmatpush.bf16.msra.mxu0 %v314
    %358 = vmatpush.bf16.msra.mxu0 %v311
    %359 = vmatpush.bf16.msra.mxu0 %v308
    %360 = vmatpush.bf16.msra.mxu0 %v305
    %361 = vmatmul.bf16.gmra.mxu0 %v224
    %v362 = vpop.f32.mrf.mxu0
    %v363 = vadd.f32 0.0, %v362
    %v364 = vpop.f32.mrf.mxu0
    %v365 = vadd.f32 0.0, %v364
    %366 = vdwg.mxu0
    %367 = vmatpush.bf16.msra.mxu0 %v327
    %368 = vmatpush.bf16.msra.mxu0 %v324
    %369 = vmatpush.bf16.msra.mxu0 %v321
    %370 = vmatpush.bf16.msra.mxu0 %v318
    %371 = vmatpush.bf16.msra.mxu0 %v315
    %372 = vmatpush.bf16.msra.mxu0 %v312
    %373 = vmatpush.bf16.msra.mxu0 %v309
    %374 = vmatpush.bf16.msra.mxu0 %v306
    %375 = vmatmul.bf16.gmra.mxu0 %v224
    %v376 = vpop.f32.mrf.mxu0
    %v377 = vadd.f32 0.0, %v376
    %v378 = vpop.f32.mrf.mxu0
    %v379 = vadd.f32 0.0, %v378
    %380 = vdwg.mxu0
    %381 = vmatpush.bf16.msra.mxu0 %v328
    %382 = vmatpush.bf16.msra.mxu0 %v325
    %383 = vmatpush.bf16.msra.mxu0 %v322
    %384 = vmatpush.bf16.msra.mxu0 %v319
    %385 = vmatpush.bf16.msra.mxu0 %v316
    %386 = vmatpush.bf16.msra.mxu0 %v313
    %387 = vmatpush.bf16.msra.mxu0 %v310
    %388 = vmatpush.bf16.msra.mxu0 %v307
    %389 = vmatmul.bf16.gmra.mxu0 %v224
    %v390 = vpop.f32.mrf.mxu0
    %v391 = vadd.f32 0.0, %v390
    %v392 = vpop.f32.mrf.mxu0
    %v393 = vadd.f32 0.0, %v392
    %394 = vdwg.mxu0
    %v395 = vperm.slane %v204, 0
    %v396 = vadd.f32 %v363, %v395
    %v397 = vadd.f32 %v365, %v395
    %v398 = vperm.slane %v205, 0
    %v399 = vadd.f32 %v377, %v398
    %v400 = vadd.f32 %v379, %v398
    %v401 = vperm.slane %v206, 0
    %v402 = vadd.f32 %v391, %v401
    %v403 = vadd.f32 %v393, %v401
    %v404 = vpack.c.bf16 %v397, %v396
    %v405 = vpack.c.bf16 %v400, %v399
    %v406 = vpack.c.bf16 %v403, %v402
    %vm407 = vcmask 261120
    %v409 = vsel %vm407, %v404, 0
    %v412 = vsel %vm407, %v405, 0
    %414 = vmatpush.bf16.xpose.msra.mxu0 0
    %415 = vmatpush.bf16.xpose.msra.mxu0 0
    %416 = vmatpush.bf16.xpose.msra.mxu0 0
    %417 = vmatpush.bf16.xpose.msra.mxu0 0
    %418 = vmatpush.bf16.xpose.msra.mxu0 0
    %419 = vmatpush.bf16.xpose.msra.mxu0 0
    %420 = vmatpush.bf16.xpose.msra.mxu0 0
    %421 = vmatpush.bf16.xpose.msra.mxu0 %v412
    %422 = vmatmul.bf16.gmra.mxu0 %v409
    %v423 = vpop.f32.mrf.mxu0
    %v424 = vadd.f32 %v86, %v423
    %v425 = vpop.f32.mrf.mxu0
    %v426 = vadd.f32 %v87, %v425
    %427 = vdwg.mxu0
    %vm428 = vcmask 130048
    %v429 = vsel %vm428, %v424, -inf
    %430 = vmax.xlane.f32.xlu0 %v429
    %v431 = vpop.xlane.xlu0 %430
    %v432 = vsel %vm428, %v426, -inf
    %433 = vmax.xlane.f32.xlu0 %v432
    %v434 = vpop.xlane.xlu0 %433
    %v435 = vsub.f32 %v424, %v431
    %v436 = vsub.f32 %v426, %v434
    %v437 = vmul.f32 %v435, 1.442695
    %v438 = vpow.pop %v437
    %v439 = vmul.f32 %v436, 1.442695
    %v440 = vpow.pop %v439
    %v441 = vsel %vm428, %v438, 0.0
    %442 = vadd.xlane.f32.xlu0 %v441
    %v443 = vpop.xlane.xlu0 %442
    %v444 = vsel %vm428, %v440, 0.0
    %445 = vadd.xlane.f32.xlu0 %v444
    %v446 = vpop.xlane.xlu0 %445
    %v447 = vrcp.pop %v443
    %v448 = vmul.f32 %v443, %v447
    %v449 = vsub.f32 1.0, %v448
    %v450 = vmul.f32 %v447, %v449
    %v451 = vadd.f32 %v447, %v450
    %vm452 = vweird.f32 %v443
    %vm453 = vweird.f32 %v447
    %vm454 = vmor %vm452, %vm453
    %v455 = vsel %vm454, %v447, %v451
    %v456 = vand.u32 2147483647, %v443
    %vm457 = vcmp.eq.f32.partialorder %v456, 8.507059e+37
    %v458 = vand.u32 %v443, 2147483648
    %v459 = vor.u32 1.1754944e-38, %v458
    %v460 = vsel %vm457, %v459, %v455
    %v461 = vmul.f32 %v438, %v460
    %v462 = vrcp.pop %v446
    %v463 = vmul.f32 %v446, %v462
    %v464 = vsub.f32 1.0, %v463
    %v465 = vmul.f32 %v462, %v464
    %v466 = vadd.f32 %v462, %v465
    %vm467 = vweird.f32 %v446
    %vm468 = vweird.f32 %v462
    %vm469 = vmor %vm467, %vm468
    %v470 = vsel %vm469, %v462, %v466
    %v471 = vand.u32 2147483647, %v446
    %vm472 = vcmp.eq.f32.partialorder %v471, 8.507059e+37
    %v473 = vand.u32 %v446, 2147483648
    %v474 = vor.u32 1.1754944e-38, %v473
    %v475 = vsel %vm472, %v474, %v470
    %v476 = vmul.f32 %v440, %v475
    %v477 = vpack.c.bf16 %v476, %v461
    %v479 = vsel %vm428, %v477, 0
    %481 = vmatpush.bf16.msra.mxu0 0
    %482 = vmatpush.bf16.msra.mxu0 0
    %483 = vmatpush.bf16.msra.mxu0 0
    %484 = vmatpush.bf16.msra.mxu0 0
    %485 = vmatpush.bf16.msra.mxu0 0
    %486 = vmatpush.bf16.msra.mxu0 0
    %487 = vmatpush.bf16.msra.mxu0 0
    %488 = vmatpush.bf16.msra.mxu0 %v406
    %489 = vmatmul.bf16.gmra.mxu0 %v479
    %v490 = vpop.f32.mrf.mxu0
    %v491 = vadd.f32 0.0, %v490
    %v492 = vpop.f32.mrf.mxu0
    %v493 = vadd.f32 0.0, %v492
    %494 = vdwg.mxu0
    %v495 = vpack.c.bf16 %v493, %v491
    %497 = vrot.lane.b32.xlu0 %v404, 96
    %v498 = vpop.permute.xlu0 %497
    %500 = vrot.lane.b32.xlu0 %v405, 96
    %v501 = vpop.permute.xlu0 %500
    %v503 = vsel %vm407, %v498, 0
    %v506 = vsel %vm407, %v501, 0
    %508 = vmatpush.bf16.xpose.msra.mxu0 0
    %509 = vmatpush.bf16.xpose.msra.mxu0 0
    %510 = vmatpush.bf16.xpose.msra.mxu0 0
    %511 = vmatpush.bf16.xpose.msra.mxu0 0
    %512 = vmatpush.bf16.xpose.msra.mxu0 0
    %513 = vmatpush.bf16.xpose.msra.mxu0 0
    %514 = vmatpush.bf16.xpose.msra.mxu0 0
    %515 = vmatpush.bf16.xpose.msra.mxu0 %v506
    %516 = vmatmul.bf16.gmra.mxu0 %v503
    %v517 = vpop.f32.mrf.mxu0
    %v518 = vadd.f32 %v86, %v517
    %v519 = vpop.f32.mrf.mxu0
    %v520 = vadd.f32 %v87, %v519
    %521 = vdwg.mxu0
    %v522 = vsel %vm428, %v518, -inf
    %523 = vmax.xlane.f32.xlu0 %v522
    %v524 = vpop.xlane.xlu0 %523
    %v525 = vsel %vm428, %v520, -inf
    %526 = vmax.xlane.f32.xlu0 %v525
    %v527 = vpop.xlane.xlu0 %526
    %v528 = vsub.f32 %v518, %v524
    %v529 = vsub.f32 %v520, %v527
    %v530 = vmul.f32 %v528, 1.442695
    %v531 = vpow.pop %v530
    %v532 = vmul.f32 %v529, 1.442695
    %v533 = vpow.pop %v532
    %v534 = vsel %vm428, %v531, 0.0
    %535 = vadd.xlane.f32.xlu0 %v534
    %v536 = vpop.xlane.xlu0 %535
    %v537 = vsel %vm428, %v533, 0.0
    %538 = vadd.xlane.f32.xlu0 %v537
    %v539 = vpop.xlane.xlu0 %538
    %v540 = vrcp.pop %v536
    %v541 = vmul.f32 %v536, %v540
    %v542 = vsub.f32 1.0, %v541
    %v543 = vmul.f32 %v540, %v542
    %v544 = vadd.f32 %v540, %v543
    %vm545 = vweird.f32 %v536
    %vm546 = vweird.f32 %v540
    %vm547 = vmor %vm545, %vm546
    %v548 = vsel %vm547, %v540, %v544
    %v549 = vand.u32 2147483647, %v536
    %vm550 = vcmp.eq.f32.partialorder %v549, 8.507059e+37
    %v551 = vand.u32 %v536, 2147483648
    %v552 = vor.u32 1.1754944e-38, %v551
    %v553 = vsel %vm550, %v552, %v548
    %v554 = vmul.f32 %v531, %v553
    %v555 = vrcp.pop %v539
    %v556 = vmul.f32 %v539, %v555
    %v557 = vsub.f32 1.0, %v556
    %v558 = vmul.f32 %v555, %v557
    %v559 = vadd.f32 %v555, %v558
    %vm560 = vweird.f32 %v539
    %vm561 = vweird.f32 %v555
    %vm562 = vmor %vm560, %vm561
    %v563 = vsel %vm562, %v555, %v559
    %v564 = vand.u32 2147483647, %v539
    %vm565 = vcmp.eq.f32.partialorder %v564, 8.507059e+37
    %v566 = vand.u32 %v539, 2147483648
    %v567 = vor.u32 1.1754944e-38, %v566
    %v568 = vsel %vm565, %v567, %v563
    %v569 = vmul.f32 %v533, %v568
    %v570 = vpack.c.bf16 %v569, %v554
    %572 = vrot.lane.b32.xlu0 %v406, 96
    %v573 = vpop.permute.xlu0 %572
    %v576 = vsel %vm428, %v570, 0
    %578 = vmatpush.bf16.msra.mxu0 0
    %579 = vmatpush.bf16.msra.mxu0 0
    %580 = vmatpush.bf16.msra.mxu0 0
    %581 = vmatpush.bf16.msra.mxu0 0
    %582 = vmatpush.bf16.msra.mxu0 0
    %583 = vmatpush.bf16.msra.mxu0 0
    %584 = vmatpush.bf16.msra.mxu0 0
    %585 = vmatpush.bf16.msra.mxu0 %v573
    %586 = vmatmul.bf16.gmra.mxu0 %v576
    %v587 = vpop.f32.mrf.mxu0
    %v588 = vadd.f32 0.0, %v587
    %v589 = vpop.f32.mrf.mxu0
    %v590 = vadd.f32 0.0, %v589
    %591 = vdwg.mxu0
    %v592 = vpack.c.bf16 %v590, %v588
    %v597 = vunpack.c.l.b16 %v211
    %v598 = vunpack.c.l.b16 %v212
    %v599 = vunpack.c.l.b16 %v213
    %v600 = vunpack.c.l.b16 %v214
    %v601 = vpack.c.b16 %v598, %v597
    %v602 = vpack.c.b16 %v600, %v599
    %v606 = vsel %vm407, %v592, 0
    %608 = vmatpush.bf16.msra.mxu0 0
    %609 = vmatpush.bf16.msra.mxu0 0
    %610 = vmatpush.bf16.msra.mxu0 0
    %611 = vmatpush.bf16.msra.mxu0 0
    %612 = vmatpush.bf16.msra.mxu0 0
    %613 = vmatpush.bf16.msra.mxu0 0
    %614 = vmatpush.bf16.msra.mxu0 %v602
    %615 = vmatpush.bf16.msra.mxu0 %v601
    %616 = vmatmul.bf16.gmra.mxu0 %v606
    %v617 = vpop.f32.mrf.mxu0
    %v618 = vadd.f32 0.0, %v617
    %v619 = vpop.f32.mrf.mxu0
    %v620 = vadd.f32 0.0, %v619
    %621 = vdwg.mxu0
    %v626 = vunpack.c.l.b16 %v207
    %v627 = vunpack.c.l.b16 %v208
    %v628 = vunpack.c.l.b16 %v209
    %v629 = vunpack.c.l.b16 %v210
    %v630 = vpack.c.b16 %v627, %v626
    %v631 = vpack.c.b16 %v629, %v628
    %v635 = vsel %vm407, %v495, 0
    %637 = vmatpush.bf16.msra.mxu0 0
    %638 = vmatpush.bf16.msra.mxu0 0
    %639 = vmatpush.bf16.msra.mxu0 0
    %640 = vmatpush.bf16.msra.mxu0 0
    %641 = vmatpush.bf16.msra.mxu0 0
    %642 = vmatpush.bf16.msra.mxu0 0
    %643 = vmatpush.bf16.msra.mxu0 %v631
    %644 = vmatpush.bf16.msra.mxu0 %v630
    %645 = vmatmul.bf16.gmra.mxu0 %v635
    %v646 = vpop.f32.mrf.mxu0
    %v647 = vadd.f32 %v618, %v646
    %v648 = vpop.f32.mrf.mxu0
    %v649 = vadd.f32 %v620, %v648
    %650 = vdwg.mxu0
    %651 = vrot.lane.b32.xlu0 %v404, 64
    %v652 = vpop.permute.xlu0 %651
    %653 = vrot.lane.b32.xlu0 %v405, 64
    %v654 = vpop.permute.xlu0 %653
    %v656 = vsel %vm407, %v652, 0
    %v659 = vsel %vm407, %v654, 0
    %661 = vmatpush.bf16.xpose.msra.mxu0 0
    %662 = vmatpush.bf16.xpose.msra.mxu0 0
    %663 = vmatpush.bf16.xpose.msra.mxu0 0
    %664 = vmatpush.bf16.xpose.msra.mxu0 0
    %665 = vmatpush.bf16.xpose.msra.mxu0 0
    %666 = vmatpush.bf16.xpose.msra.mxu0 0
    %667 = vmatpush.bf16.xpose.msra.mxu0 0
    %668 = vmatpush.bf16.xpose.msra.mxu0 %v659
    %669 = vmatmul.bf16.gmra.mxu0 %v656
    %v670 = vpop.f32.mrf.mxu0
    %v671 = vadd.f32 %v86, %v670
    %v672 = vpop.f32.mrf.mxu0
    %v673 = vadd.f32 %v87, %v672
    %674 = vdwg.mxu0
    %v675 = vsel %vm428, %v671, -inf
    %676 = vmax.xlane.f32.xlu0 %v675
    %v677 = vpop.xlane.xlu0 %676
    %v678 = vsel %vm428, %v673, -inf
    %679 = vmax.xlane.f32.xlu0 %v678
    %v680 = vpop.xlane.xlu0 %679
    %v681 = vsub.f32 %v671, %v677
    %v682 = vsub.f32 %v673, %v680
    %v683 = vmul.f32 %v681, 1.442695
    %v684 = vpow.pop %v683
    %v685 = vmul.f32 %v682, 1.442695
    %v686 = vpow.pop %v685
    %v687 = vsel %vm428, %v684, 0.0
    %688 = vadd.xlane.f32.xlu0 %v687
    %v689 = vpop.xlane.xlu0 %688
    %v690 = vsel %vm428, %v686, 0.0
    %691 = vadd.xlane.f32.xlu0 %v690
    %v692 = vpop.xlane.xlu0 %691
    %v693 = vrcp.pop %v689
    %v694 = vmul.f32 %v689, %v693
    %v695 = vsub.f32 1.0, %v694
    %v696 = vmul.f32 %v693, %v695
    %v697 = vadd.f32 %v693, %v696
    %vm698 = vweird.f32 %v689
    %vm699 = vweird.f32 %v693
    %vm700 = vmor %vm698, %vm699
    %v701 = vsel %vm700, %v693, %v697
    %v702 = vand.u32 2147483647, %v689
    %vm703 = vcmp.eq.f32.partialorder %v702, 8.507059e+37
    %v704 = vand.u32 %v689, 2147483648
    %v705 = vor.u32 1.1754944e-38, %v704
    %v706 = vsel %vm703, %v705, %v701
    %v707 = vmul.f32 %v684, %v706
    %v708 = vrcp.pop %v692
    %v709 = vmul.f32 %v692, %v708
    %v710 = vsub.f32 1.0, %v709
    %v711 = vmul.f32 %v708, %v710
    %v712 = vadd.f32 %v708, %v711
    %vm713 = vweird.f32 %v692
    %vm714 = vweird.f32 %v708
    %vm715 = vmor %vm713, %vm714
    %v716 = vsel %vm715, %v708, %v712
    %v717 = vand.u32 2147483647, %v692
    %vm718 = vcmp.eq.f32.partialorder %v717, 8.507059e+37
    %v719 = vand.u32 %v692, 2147483648
    %v720 = vor.u32 1.1754944e-38, %v719
    %v721 = vsel %vm718, %v720, %v716
    %v722 = vmul.f32 %v686, %v721
    %v723 = vpack.c.bf16 %v722, %v707
    %724 = vrot.lane.b32.xlu0 %v406, 64
    %v725 = vpop.permute.xlu0 %724
    %v728 = vsel %vm428, %v723, 0
    %730 = vmatpush.bf16.msra.mxu0 0
    %731 = vmatpush.bf16.msra.mxu0 0
    %732 = vmatpush.bf16.msra.mxu0 0
    %733 = vmatpush.bf16.msra.mxu0 0
    %734 = vmatpush.bf16.msra.mxu0 0
    %735 = vmatpush.bf16.msra.mxu0 0
    %736 = vmatpush.bf16.msra.mxu0 0
    %737 = vmatpush.bf16.msra.mxu0 %v725
    %738 = vmatmul.bf16.gmra.mxu0 %v728
    %v739 = vpop.f32.mrf.mxu0
    %v740 = vadd.f32 0.0, %v739
    %v741 = vpop.f32.mrf.mxu0
    %v742 = vadd.f32 0.0, %v741
    %743 = vdwg.mxu0
    %v744 = vpack.c.bf16 %v742, %v740
    %v749 = vunpack.c.l.b16 %v215
    %v750 = vunpack.c.l.b16 %v216
    %v751 = vunpack.c.l.b16 %v217
    %v752 = vunpack.c.l.b16 %v218
    %v753 = vpack.c.b16 %v750, %v749
    %v754 = vpack.c.b16 %v752, %v751
    %v758 = vsel %vm407, %v744, 0
    %760 = vmatpush.bf16.msra.mxu0 0
    %761 = vmatpush.bf16.msra.mxu0 0
    %762 = vmatpush.bf16.msra.mxu0 0
    %763 = vmatpush.bf16.msra.mxu0 0
    %764 = vmatpush.bf16.msra.mxu0 0
    %765 = vmatpush.bf16.msra.mxu0 0
    %766 = vmatpush.bf16.msra.mxu0 %v754
    %767 = vmatpush.bf16.msra.mxu0 %v753
    %768 = vmatmul.bf16.gmra.mxu0 %v758
    %v769 = vpop.f32.mrf.mxu0
    %v770 = vadd.f32 0.0, %v769
    %v771 = vpop.f32.mrf.mxu0
    %v772 = vadd.f32 0.0, %v771
    %773 = vdwg.mxu0
    %v774 = vadd.f32 %v647, %v770
    %v775 = vadd.f32 %v649, %v772
    %776 = vrot.lane.b32.xlu0 %v404, 32
    %v777 = vpop.permute.xlu0 %776
    %778 = vrot.lane.b32.xlu0 %v405, 32
    %v779 = vpop.permute.xlu0 %778
    %v781 = vsel %vm407, %v777, 0
    %v784 = vsel %vm407, %v779, 0
    %786 = vmatpush.bf16.xpose.msra.mxu0 0
    %787 = vmatpush.bf16.xpose.msra.mxu0 0
    %788 = vmatpush.bf16.xpose.msra.mxu0 0
    %789 = vmatpush.bf16.xpose.msra.mxu0 0
    %790 = vmatpush.bf16.xpose.msra.mxu0 0
    %791 = vmatpush.bf16.xpose.msra.mxu0 0
    %792 = vmatpush.bf16.xpose.msra.mxu0 0
    %793 = vmatpush.bf16.xpose.msra.mxu0 %v784
    %794 = vmatmul.bf16.gmra.mxu0 %v781
    %v795 = vpop.f32.mrf.mxu0
    %v796 = vadd.f32 %v86, %v795
    %v797 = vpop.f32.mrf.mxu0
    %v798 = vadd.f32 %v87, %v797
    %799 = vdwg.mxu0
    %v800 = vsel %vm428, %v796, -inf
    %801 = vmax.xlane.f32.xlu0 %v800
    %v802 = vpop.xlane.xlu0 %801
    %v803 = vsel %vm428, %v798, -inf
    %804 = vmax.xlane.f32.xlu0 %v803
    %v805 = vpop.xlane.xlu0 %804
    %v806 = vsub.f32 %v796, %v802
    %v807 = vsub.f32 %v798, %v805
    %v808 = vmul.f32 %v806, 1.442695
    %v809 = vpow.pop %v808
    %v810 = vmul.f32 %v807, 1.442695
    %v811 = vpow.pop %v810
    %v812 = vsel %vm428, %v809, 0.0
    %813 = vadd.xlane.f32.xlu0 %v812
    %v814 = vpop.xlane.xlu0 %813
    %v815 = vsel %vm428, %v811, 0.0
    %816 = vadd.xlane.f32.xlu0 %v815
    %v817 = vpop.xlane.xlu0 %816
    %v818 = vrcp.pop %v814
    %v819 = vmul.f32 %v814, %v818
    %v820 = vsub.f32 1.0, %v819
    %v821 = vmul.f32 %v818, %v820
    %v822 = vadd.f32 %v818, %v821
    %vm823 = vweird.f32 %v814
    %vm824 = vweird.f32 %v818
    %vm825 = vmor %vm823, %vm824
    %v826 = vsel %vm825, %v818, %v822
    %v827 = vand.u32 2147483647, %v814
    %vm828 = vcmp.eq.f32.partialorder %v827, 8.507059e+37
    %v829 = vand.u32 %v814, 2147483648
    %v830 = vor.u32 1.1754944e-38, %v829
    %v831 = vsel %vm828, %v830, %v826
    %v832 = vmul.f32 %v809, %v831
    %v833 = vrcp.pop %v817
    %v834 = vmul.f32 %v817, %v833
    %v835 = vsub.f32 1.0, %v834
    %v836 = vmul.f32 %v833, %v835
    %v837 = vadd.f32 %v833, %v836
    %vm838 = vweird.f32 %v817
    %vm839 = vweird.f32 %v833
    %vm840 = vmor %vm838, %vm839
    %v841 = vsel %vm840, %v833, %v837
    %v842 = vand.u32 2147483647, %v817
    %vm843 = vcmp.eq.f32.partialorder %v842, 8.507059e+37
    %v844 = vand.u32 %v817, 2147483648
    %v845 = vor.u32 1.1754944e-38, %v844
    %v846 = vsel %vm843, %v845, %v841
    %v847 = vmul.f32 %v811, %v846
    %v848 = vpack.c.bf16 %v847, %v832
    %849 = vrot.lane.b32.xlu0 %v406, 32
    %v850 = vpop.permute.xlu0 %849
    %v853 = vsel %vm428, %v848, 0
    %855 = vmatpush.bf16.msra.mxu0 0
    %856 = vmatpush.bf16.msra.mxu0 0
    %857 = vmatpush.bf16.msra.mxu0 0
    %858 = vmatpush.bf16.msra.mxu0 0
    %859 = vmatpush.bf16.msra.mxu0 0
    %860 = vmatpush.bf16.msra.mxu0 0
    %861 = vmatpush.bf16.msra.mxu0 0
    %862 = vmatpush.bf16.msra.mxu0 %v850
    %863 = vmatmul.bf16.gmra.mxu0 %v853
    %v864 = vpop.f32.mrf.mxu0
    %v865 = vadd.f32 0.0, %v864
    %v866 = vpop.f32.mrf.mxu0
    %v867 = vadd.f32 0.0, %v866
    %868 = vdwg.mxu0
    %v869 = vpack.c.bf16 %v867, %v865
    %v874 = vunpack.c.l.b16 %v219
    %v875 = vunpack.c.l.b16 %v220
    %v876 = vunpack.c.l.b16 %v221
    %v877 = vunpack.c.l.b16 %v222
    %v878 = vpack.c.b16 %v875, %v874
    %v879 = vpack.c.b16 %v877, %v876
    %v883 = vsel %vm407, %v869, 0
    %885 = vmatpush.bf16.msra.mxu0 0
    %886 = vmatpush.bf16.msra.mxu0 0
    %887 = vmatpush.bf16.msra.mxu0 0
    %888 = vmatpush.bf16.msra.mxu0 0
    %889 = vmatpush.bf16.msra.mxu0 0
    %890 = vmatpush.bf16.msra.mxu0 0
    %891 = vmatpush.bf16.msra.mxu0 %v879
    %892 = vmatpush.bf16.msra.mxu0 %v878
    %893 = vmatmul.bf16.gmra.mxu0 %v883
    %v894 = vpop.f32.mrf.mxu0
    %v895 = vadd.f32 0.0, %v894
    %v896 = vpop.f32.mrf.mxu0
    %v897 = vadd.f32 0.0, %v896
    %898 = vdwg.mxu0
    %v899 = vadd.f32 %v774, %v895
    %v900 = vadd.f32 %v775, %v897
    %v901 = vperm.slane %v223, 0
    %v902 = vadd.f32 %v899, %v901
    %v903 = vadd.f32 %v900, %v901
    %v904 = vadd.f32 %v170, %v902
    %v905 = vadd.f32 %v171, %v903
    %v906 = vld [vmem:[%s1 + $0x5] sm:$0x1]
    %v907 = vld [vmem:[%s1 + $0x6] sm:$0x1]
    %908 = vadd.xlane.f32.xlu0 %v904
    %v909 = vpop.xlane.xlu0 %908
    %910 = vadd.xlane.f32.xlu0 %v905
    %v911 = vpop.xlane.xlu0 %910
    %v912 = vrcp.pop 128.0
    %v913 = vmul.f32 128.0, %v912
    %v914 = vsub.f32 1.0, %v913
    %v915 = vmul.f32 %v912, %v914
    %v916 = vadd.f32 %v912, %v915
    %vm917 = vweird.f32 %v912
    %v918 = vsel %vm917, %v912, %v916
    %v919 = vmul.f32 %v909, %v918
    %v920 = vmul.f32 %v911, %v918
    %v921 = vsub.f32 %v904, %v919
    %v922 = vsub.f32 %v905, %v920
    %v923 = vmul.f32 %v921, %v921
    %v924 = vmul.f32 %v922, %v922
    %925 = vadd.xlane.f32.xlu0 %v923
    %v926 = vpop.xlane.xlu0 %925
    %927 = vadd.xlane.f32.xlu0 %v924
    %v928 = vpop.xlane.xlu0 %927
    %v929 = vmul.f32 %v926, %v918
    %v930 = vmul.f32 %v928, %v918
    %v931 = vadd.f32 %v929, 1e-05
    %v932 = vadd.f32 %v930, 1e-05
    %v933 = vrsqrt.pop %v931
    %v934 = vmul.f32 %v933, %v931
    %v935 = vmul.f32 %v934, %v933
    %v936 = vmul.f32 0.5, %v935
    %v937 = vsub.f32 1.5, %v936
    %v938 = vmul.f32 %v933, %v937
    %vm939 = vweird.f32 %v931
    %vm940 = vweird.f32 %v933
    %vm941 = vmor %vm939, %vm940
    %v942 = vsel %vm941, %v933, %v938
    %v943 = vrsqrt.pop %v932
    %v944 = vmul.f32 %v943, %v932
    %v945 = vmul.f32 %v944, %v943
    %v946 = vmul.f32 0.5, %v945
    %v947 = vsub.f32 1.5, %v946
    %v948 = vmul.f32 %v943, %v947
    %vm949 = vweird.f32 %v932
    %vm950 = vweird.f32 %v943
    %vm951 = vmor %vm949, %vm950
    %v952 = vsel %vm951, %v943, %v948
    %v953 = vmul.f32 %v921, %v942
    %v954 = vmul.f32 %v922, %v952
    %v955 = vperm.slane %v906, 0
    %v956 = vmul.f32 %v953, %v955
    %v957 = vmul.f32 %v954, %v955
    %v958 = vperm.slane %v907, 0
    %v959 = vadd.f32 %v956, %v958
    %v960 = vadd.f32 %v957, %v958
    %v961 = vld [vmem:[#allocation5 + $0x14] sm:$0xff]
    %v962 = vld [vmem:[#allocation5 + $0x1c] sm:$0xff]
    %v963 = vld [vmem:[#allocation5 + $0x24] sm:$0xff]
    %v964 = vld [vmem:[#allocation5 + $0x2c] sm:$0xff]
    %v965 = vld [vmem:[#allocation5 + $0x34] sm:$0xff]
    %v966 = vld [vmem:[#allocation5 + $0x3c] sm:$0xff]
    %v967 = vld [vmem:[#allocation5 + $0x44] sm:$0xff]
    %v968 = vld [vmem:[#allocation5 + $0x4c] sm:$0xff]
    %v969 = vld [vmem:[#allocation5 + $0x68] sm:$0xff]
    %v970 = vld [vmem:[#allocation5 + $0x70] sm:$0xff]
    %v971 = vld [vmem:[#allocation5 + $0x78] sm:$0xff]
    %v972 = vld [vmem:[#allocation5 + $0x80] sm:$0xff]
    %v973 = vld [vmem:[#allocation5 + $0x88] sm:$0xff]
    %v974 = vld [vmem:[#allocation5 + $0x90] sm:$0xff]
    %v975 = vld [vmem:[#allocation5 + $0x98] sm:$0xff]
    %v976 = vld [vmem:[#allocation5 + $0xa0] sm:$0xff]
    %v977 = vld [vmem:[#allocation5 + $0xbc] sm:$0xff]
    %v978 = vld [vmem:[#allocation5 + $0xc4] sm:$0xff]
    %v979 = vld [vmem:[#allocation5 + $0xcc] sm:$0xff]
    %v980 = vld [vmem:[#allocation5 + $0xd4] sm:$0xff]
    %v981 = vld [vmem:[#allocation5 + $0xdc] sm:$0xff]
    %v982 = vld [vmem:[#allocation5 + $0xe4] sm:$0xff]
    %v983 = vld [vmem:[#allocation5 + $0xec] sm:$0xff]
    %v984 = vld [vmem:[#allocation5 + $0xf4] sm:$0xff]
    %v985 = vld [vmem:[#allocation5 + $0x110] sm:$0xff]
    %v986 = vld [vmem:[#allocation5 + $0x118] sm:$0xff]
    %v987 = vld [vmem:[#allocation5 + $0x120] sm:$0xff]
    %v988 = vld [vmem:[#allocation5 + $0x128] sm:$0xff]
    %v989 = vld [vmem:[#allocation5 + $0x130] sm:$0xff]
    %v990 = vld [vmem:[#allocation5 + $0x138] sm:$0xff]
    %v991 = vld [vmem:[#allocation5 + $0x140] sm:$0xff]
    %v992 = vld [vmem:[#allocation5 + $0x148] sm:$0xff]
    %v993 = vld [vmem:[#allocation5 + $0x164] sm:$0xff]
    %v994 = vld [vmem:[#allocation5 + $0x16c] sm:$0xff]
    %v995 = vld [vmem:[#allocation5 + $0x174] sm:$0xff]
    %v996 = vld [vmem:[#allocation5 + $0x17c] sm:$0xff]
    %v997 = vld [vmem:[#allocation5 + $0x184] sm:$0xff]
    %v998 = vld [vmem:[#allocation5 + $0x18c] sm:$0xff]
    %v999 = vld [vmem:[#allocation5 + $0x194] sm:$0xff]
    %v1000 = vld [vmem:[#allocation5 + $0x19c] sm:$0xff]
    %v1001 = vld [vmem:[#allocation5 + $0x1b8] sm:$0xff]
    %v1002 = vld [vmem:[#allocation5 + $0x1c0] sm:$0xff]
    %v1003 = vld [vmem:[#allocation5 + $0x1c8] sm:$0xff]
    %v1004 = vld [vmem:[#allocation5 + $0x1d0] sm:$0xff]
    %v1005 = vld [vmem:[#allocation5 + $0x1d8] sm:$0xff]
    %v1006 = vld [vmem:[#allocation5 + $0x1e0] sm:$0xff]
    %v1007 = vld [vmem:[#allocation5 + $0x1e8] sm:$0xff]
    %v1008 = vld [vmem:[#allocation5 + $0x1f0] sm:$0xff]
    %v1009 = vld [vmem:[#allocation5 + $0x20c] sm:$0xff]
    %v1010 = vld [vmem:[#allocation5 + $0x214] sm:$0xff]
    %v1011 = vld [vmem:[#allocation5 + $0x21c] sm:$0xff]
    %v1012 = vld [vmem:[#allocation5 + $0x224] sm:$0xff]
    %v1013 = vld [vmem:[#allocation5 + $0x22c] sm:$0xff]
    %v1014 = vld [vmem:[#allocation5 + $0x234] sm:$0xff]
    %v1015 = vld [vmem:[#allocation5 + $0x23c] sm:$0xff]
    %v1016 = vld [vmem:[#allocation5 + $0x244] sm:$0xff]
    %v1017 = vld [vmem:[#allocation5 + $0x260] sm:$0xff]
    %v1018 = vld [vmem:[#allocation5 + $0x268] sm:$0xff]
    %v1019 = vld [vmem:[#allocation5 + $0x270] sm:$0xff]
    %v1020 = vld [vmem:[#allocation5 + $0x278] sm:$0xff]
    %v1021 = vld [vmem:[#allocation5 + $0x280] sm:$0xff]
    %v1022 = vld [vmem:[#allocation5 + $0x288] sm:$0xff]
    %v1023 = vld [vmem:[#allocation5 + $0x290] sm:$0xff]
    %v1024 = vld [vmem:[#allocation5 + $0x298] sm:$0xff]
    %v1025 = vld [vmem:[#allocation5 + $0x2b4] sm:$0xff]
    %v1026 = vld [vmem:[#allocation5 + $0x2bc] sm:$0xff]
    %v1027 = vld [vmem:[#allocation5 + $0x2c4] sm:$0xff]
    %v1028 = vld [vmem:[#allocation5 + $0x2cc] sm:$0xff]
    %v1029 = vld [vmem:[#allocation5 + $0x2d4] sm:$0xff]
    %v1030 = vld [vmem:[#allocation5 + $0x2dc] sm:$0xff]
    %v1031 = vld [vmem:[#allocation5 + $0x2e4] sm:$0xff]
    %v1032 = vld [vmem:[#allocation5 + $0x2ec] sm:$0xff]
    %v1033 = vld [vmem:[#allocation5 + $0x308] sm:$0xff]
    %v1034 = vld [vmem:[#allocation5 + $0x310] sm:$0xff]
    %v1035 = vld [vmem:[#allocation5 + $0x318] sm:$0xff]
    %v1036 = vld [vmem:[#allocation5 + $0x320] sm:$0xff]
    %v1037 = vld [vmem:[#allocation5 + $0x328] sm:$0xff]
    %v1038 = vld [vmem:[#allocation5 + $0x330] sm:$0xff]
    %v1039 = vld [vmem:[#allocation5 + $0x338] sm:$0xff]
    %v1040 = vld [vmem:[#allocation5 + $0x340] sm:$0xff]
    %v1041 = vld [vmem:[#allocation5 + $0x35c] sm:$0xff]
    %v1042 = vld [vmem:[#allocation5 + $0x364] sm:$0xff]
    %v1043 = vld [vmem:[#allocation5 + $0x36c] sm:$0xff]
    %v1044 = vld [vmem:[#allocation5 + $0x374] sm:$0xff]
    %v1045 = vld [vmem:[#allocation5 + $0x37c] sm:$0xff]
    %v1046 = vld [vmem:[#allocation5 + $0x384] sm:$0xff]
    %v1047 = vld [vmem:[#allocation5 + $0x38c] sm:$0xff]
    %v1048 = vld [vmem:[#allocation5 + $0x394] sm:$0xff]
    %v1049 = vld [vmem:[#allocation5 + $0x3b0] sm:$0xff]
    %v1050 = vld [vmem:[#allocation5 + $0x3b8] sm:$0xff]
    %v1051 = vld [vmem:[#allocation5 + $0x3c0] sm:$0xff]
    %v1052 = vld [vmem:[#allocation5 + $0x3c8] sm:$0xff]
    %v1053 = vld [vmem:[#allocation5 + $0x3d0] sm:$0xff]
    %v1054 = vld [vmem:[#allocation5 + $0x3d8] sm:$0xff]
    %v1055 = vld [vmem:[#allocation5 + $0x3e0] sm:$0xff]
    %v1056 = vld [vmem:[#allocation5 + $0x3e8] sm:$0xff]
    %v1057 = vld [vmem:[#allocation5 + $0x404] sm:$0xff]
    %v1058 = vld [vmem:[#allocation5 + $0x40c] sm:$0xff]
    %v1059 = vld [vmem:[#allocation5 + $0x414] sm:$0xff]
    %v1060 = vld [vmem:[#allocation5 + $0x41c] sm:$0xff]
    %v1061 = vld [vmem:[#allocation5 + $0x424] sm:$0xff]
    %v1062 = vld [vmem:[#allocation5 + $0x42c] sm:$0xff]
    %v1063 = vld [vmem:[#allocation5 + $0x434] sm:$0xff]
    %v1064 = vld [vmem:[#allocation5 + $0x43c] sm:$0xff]
    %v1065 = vld [vmem:[#allocation5 + $0x458] sm:$0xff]
    %v1066 = vld [vmem:[#allocation5 + $0x460] sm:$0xff]
    %v1067 = vld [vmem:[#allocation5 + $0x468] sm:$0xff]
    %v1068 = vld [vmem:[#allocation5 + $0x470] sm:$0xff]
    %v1069 = vld [vmem:[#allocation5 + $0x478] sm:$0xff]
    %v1070 = vld [vmem:[#allocation5 + $0x480] sm:$0xff]
    %v1071 = vld [vmem:[#allocation5 + $0x488] sm:$0xff]
    %v1072 = vld [vmem:[#allocation5 + $0x490] sm:$0xff]
    %v1073 = vld [vmem:[#allocation5 + $0x4ac] sm:$0xff]
    %v1074 = vld [vmem:[#allocation5 + $0x4b4] sm:$0xff]
    %v1075 = vld [vmem:[#allocation5 + $0x4bc] sm:$0xff]
    %v1076 = vld [vmem:[#allocation5 + $0x4c4] sm:$0xff]
    %v1077 = vld [vmem:[#allocation5 + $0x4cc] sm:$0xff]
    %v1078 = vld [vmem:[#allocation5 + $0x4d4] sm:$0xff]
    %v1079 = vld [vmem:[#allocation5 + $0x4dc] sm:$0xff]
    %v1080 = vld [vmem:[#allocation5 + $0x4e4] sm:$0xff]
    %v1081 = vld [vmem:[#allocation5 + $0x500] sm:$0xff]
    %v1082 = vld [vmem:[#allocation5 + $0x508] sm:$0xff]
    %v1083 = vld [vmem:[#allocation5 + $0x510] sm:$0xff]
    %v1084 = vld [vmem:[#allocation5 + $0x518] sm:$0xff]
    %v1085 = vld [vmem:[#allocation5 + $0x520] sm:$0xff]
    %v1086 = vld [vmem:[#allocation5 + $0x528] sm:$0xff]
    %v1087 = vld [vmem:[#allocation5 + $0x530] sm:$0xff]
    %v1088 = vld [vmem:[#allocation5 + $0x538] sm:$0xff]
    %v1089 = vpack.c.bf16 %v960, %v959
    %v1090 = vld [vmem:[%s2] ss:$2 sm:$0xff]
    %s1091 = scalar_lea.vmem %s2, 16
    %v1092 = vld [vmem:[%s1091] ss:$2 sm:$0xff]
    %v1095 = vperm.slane %v1090, 0
    %v1096 = vperm.slane %v1090, 1
    %v1097 = vperm.slane %v1090, 2
    %v1098 = vperm.slane %v1090, 3
    %v1099 = vperm.slane %v1090, 4
    %v1100 = vperm.slane %v1090, 5
    %v1101 = vperm.slane %v1090, 6
    %v1102 = vperm.slane %v1090, 7
    %v1103 = vperm.slane %v1092, 0
    %v1104 = vperm.slane %v1092, 1
    %v1105 = vperm.slane %v1092, 2
    %v1106 = vperm.slane %v1092, 3
    %v1107 = vperm.slane %v1092, 4
    %v1108 = vperm.slane %v1092, 5
    %v1109 = vperm.slane %v1092, 6
    %v1110 = vperm.slane %v1092, 7
    %v1255 = vunpack.c.l.b16 %v961
    %v1256 = vunpack.c.h.b16 %v961
    %v1257 = vunpack.c.l.b16 %v962
    %v1258 = vunpack.c.h.b16 %v962
    %v1259 = vunpack.c.l.b16 %v963
    %v1260 = vunpack.c.h.b16 %v963
    %v1261 = vunpack.c.l.b16 %v964
    %v1262 = vunpack.c.h.b16 %v964
    %v1263 = vunpack.c.l.b16 %v965
    %v1264 = vunpack.c.h.b16 %v965
    %v1265 = vunpack.c.l.b16 %v966
    %v1266 = vunpack.c.h.b16 %v966
    %v1267 = vunpack.c.l.b16 %v967
    %v1268 = vunpack.c.h.b16 %v967
    %v1269 = vunpack.c.l.b16 %v968
    %v1270 = vunpack.c.h.b16 %v968
    %v1271 = vunpack.c.l.b16 %v969
    %v1272 = vunpack.c.h.b16 %v969
    %v1273 = vunpack.c.l.b16 %v970
    %v1274 = vunpack.c.h.b16 %v970
    %v1275 = vunpack.c.l.b16 %v971
    %v1276 = vunpack.c.h.b16 %v971
    %v1277 = vunpack.c.l.b16 %v972
    %v1278 = vunpack.c.h.b16 %v972
    %v1279 = vunpack.c.l.b16 %v973
    %v1280 = vunpack.c.h.b16 %v973
    %v1281 = vunpack.c.l.b16 %v974
    %v1282 = vunpack.c.h.b16 %v974
    %v1283 = vunpack.c.l.b16 %v975
    %v1284 = vunpack.c.h.b16 %v975
    %v1285 = vunpack.c.l.b16 %v976
    %v1286 = vunpack.c.h.b16 %v976
    %v1287 = vunpack.c.l.b16 %v977
    %v1288 = vunpack.c.h.b16 %v977
    %v1289 = vunpack.c.l.b16 %v978
    %v1290 = vunpack.c.h.b16 %v978
    %v1291 = vunpack.c.l.b16 %v979
    %v1292 = vunpack.c.h.b16 %v979
    %v1293 = vunpack.c.l.b16 %v980
    %v1294 = vunpack.c.h.b16 %v980
    %v1295 = vunpack.c.l.b16 %v981
    %v1296 = vunpack.c.h.b16 %v981
    %v1297 = vunpack.c.l.b16 %v982
    %v1298 = vunpack.c.h.b16 %v982
    %v1299 = vunpack.c.l.b16 %v983
    %v1300 = vunpack.c.h.b16 %v983
    %v1301 = vunpack.c.l.b16 %v984
    %v1302 = vunpack.c.h.b16 %v984
    %v1303 = vunpack.c.l.b16 %v985
    %v1304 = vunpack.c.h.b16 %v985
    %v1305 = vunpack.c.l.b16 %v986
    %v1306 = vunpack.c.h.b16 %v986
    %v1307 = vunpack.c.l.b16 %v987
    %v1308 = vunpack.c.h.b16 %v987
    %v1309 = vunpack.c.l.b16 %v988
    %v1310 = vunpack.c.h.b16 %v988
    %v1311 = vunpack.c.l.b16 %v989
    %v1312 = vunpack.c.h.b16 %v989
    %v1313 = vunpack.c.l.b16 %v990
    %v1314 = vunpack.c.h.b16 %v990
    %v1315 = vunpack.c.l.b16 %v991
    %v1316 = vunpack.c.h.b16 %v991
    %v1317 = vunpack.c.l.b16 %v992
    %v1318 = vunpack.c.h.b16 %v992
    %v1319 = vunpack.c.l.b16 %v993
    %v1320 = vunpack.c.h.b16 %v993
    %v1321 = vunpack.c.l.b16 %v994
    %v1322 = vunpack.c.h.b16 %v994
    %v1323 = vunpack.c.l.b16 %v995
    %v1324 = vunpack.c.h.b16 %v995
    %v1325 = vunpack.c.l.b16 %v996
    %v1326 = vunpack.c.h.b16 %v996
    %v1327 = vunpack.c.l.b16 %v997
    %v1328 = vunpack.c.h.b16 %v997
    %v1329 = vunpack.c.l.b16 %v998
    %v1330 = vunpack.c.h.b16 %v998
    %v1331 = vunpack.c.l.b16 %v999
    %v1332 = vunpack.c.h.b16 %v999
    %v1333 = vunpack.c.l.b16 %v1000
    %v1334 = vunpack.c.h.b16 %v1000
    %v1335 = vunpack.c.l.b16 %v1001
    %v1336 = vunpack.c.h.b16 %v1001
    %v1337 = vunpack.c.l.b16 %v1002
    %v1338 = vunpack.c.h.b16 %v1002
    %v1339 = vunpack.c.l.b16 %v1003
    %v1340 = vunpack.c.h.b16 %v1003
    %v1341 = vunpack.c.l.b16 %v1004
    %v1342 = vunpack.c.h.b16 %v1004
    %v1343 = vunpack.c.l.b16 %v1005
    %v1344 = vunpack.c.h.b16 %v1005
    %v1345 = vunpack.c.l.b16 %v1006
    %v1346 = vunpack.c.h.b16 %v1006
    %v1347 = vunpack.c.l.b16 %v1007
    %v1348 = vunpack.c.h.b16 %v1007
    %v1349 = vunpack.c.l.b16 %v1008
    %v1350 = vunpack.c.h.b16 %v1008
    %v1351 = vunpack.c.l.b16 %v1009
    %v1352 = vunpack.c.h.b16 %v1009
    %v1353 = vunpack.c.l.b16 %v1010
    %v1354 = vunpack.c.h.b16 %v1010
    %v1355 = vunpack.c.l.b16 %v1011
    %v1356 = vunpack.c.h.b16 %v1011
    %v1357 = vunpack.c.l.b16 %v1012
    %v1358 = vunpack.c.h.b16 %v1012
    %v1359 = vunpack.c.l.b16 %v1013
    %v1360 = vunpack.c.h.b16 %v1013
    %v1361 = vunpack.c.l.b16 %v1014
    %v1362 = vunpack.c.h.b16 %v1014
    %v1363 = vunpack.c.l.b16 %v1015
    %v1364 = vunpack.c.h.b16 %v1015
    %v1365 = vunpack.c.l.b16 %v1016
    %v1366 = vunpack.c.h.b16 %v1016
    %v1367 = vunpack.c.l.b16 %v1017
    %v1368 = vunpack.c.h.b16 %v1017
    %v1369 = vunpack.c.l.b16 %v1018
    %v1370 = vunpack.c.h.b16 %v1018
    %v1371 = vunpack.c.l.b16 %v1019
    %v1372 = vunpack.c.h.b16 %v1019
    %v1373 = vunpack.c.l.b16 %v1020
    %v1374 = vunpack.c.h.b16 %v1020
    %v1375 = vunpack.c.l.b16 %v1021
    %v1376 = vunpack.c.h.b16 %v1021
    %v1377 = vunpack.c.l.b16 %v1022
    %v1378 = vunpack.c.h.b16 %v1022
    %v1379 = vunpack.c.l.b16 %v1023
    %v1380 = vunpack.c.h.b16 %v1023
    %v1381 = vunpack.c.l.b16 %v1024
    %v1382 = vunpack.c.h.b16 %v1024
    %v1383 = vunpack.c.l.b16 %v1025
    %v1384 = vunpack.c.h.b16 %v1025
    %v1385 = vunpack.c.l.b16 %v1026
    %v1386 = vunpack.c.h.b16 %v1026
    %v1387 = vunpack.c.l.b16 %v1027
    %v1388 = vunpack.c.h.b16 %v1027
    %v1389 = vunpack.c.l.b16 %v1028
    %v1390 = vunpack.c.h.b16 %v1028
    %v1391 = vunpack.c.l.b16 %v1029
    %v1392 = vunpack.c.h.b16 %v1029
    %v1393 = vunpack.c.l.b16 %v1030
    %v1394 = vunpack.c.h.b16 %v1030
    %v1395 = vunpack.c.l.b16 %v1031
    %v1396 = vunpack.c.h.b16 %v1031
    %v1397 = vunpack.c.l.b16 %v1032
    %v1398 = vunpack.c.h.b16 %v1032
    %v1399 = vunpack.c.l.b16 %v1033
    %v1400 = vunpack.c.h.b16 %v1033
    %v1401 = vunpack.c.l.b16 %v1034
    %v1402 = vunpack.c.h.b16 %v1034
    %v1403 = vunpack.c.l.b16 %v1035
    %v1404 = vunpack.c.h.b16 %v1035
    %v1405 = vunpack.c.l.b16 %v1036
    %v1406 = vunpack.c.h.b16 %v1036
    %v1407 = vunpack.c.l.b16 %v1037
    %v1408 = vunpack.c.h.b16 %v1037
    %v1409 = vunpack.c.l.b16 %v1038
    %v1410 = vunpack.c.h.b16 %v1038
    %v1411 = vunpack.c.l.b16 %v1039
    %v1412 = vunpack.c.h.b16 %v1039
    %v1413 = vunpack.c.l.b16 %v1040
    %v1414 = vunpack.c.h.b16 %v1040
    %v1415 = vunpack.c.l.b16 %v1041
    %v1416 = vunpack.c.h.b16 %v1041
    %v1417 = vunpack.c.l.b16 %v1042
    %v1418 = vunpack.c.h.b16 %v1042
    %v1419 = vunpack.c.l.b16 %v1043
    %v1420 = vunpack.c.h.b16 %v1043
    %v1421 = vunpack.c.l.b16 %v1044
    %v1422 = vunpack.c.h.b16 %v1044
    %v1423 = vunpack.c.l.b16 %v1045
    %v1424 = vunpack.c.h.b16 %v1045
    %v1425 = vunpack.c.l.b16 %v1046
    %v1426 = vunpack.c.h.b16 %v1046
    %v1427 = vunpack.c.l.b16 %v1047
    %v1428 = vunpack.c.h.b16 %v1047
    %v1429 = vunpack.c.l.b16 %v1048
    %v1430 = vunpack.c.h.b16 %v1048
    %v1431 = vunpack.c.l.b16 %v1049
    %v1432 = vunpack.c.h.b16 %v1049
    %v1433 = vunpack.c.l.b16 %v1050
    %v1434 = vunpack.c.h.b16 %v1050
    %v1435 = vunpack.c.l.b16 %v1051
    %v1436 = vunpack.c.h.b16 %v1051
    %v1437 = vunpack.c.l.b16 %v1052
    %v1438 = vunpack.c.h.b16 %v1052
    %v1439 = vunpack.c.l.b16 %v1053
    %v1440 = vunpack.c.h.b16 %v1053
    %v1441 = vunpack.c.l.b16 %v1054
    %v1442 = vunpack.c.h.b16 %v1054
    %v1443 = vunpack.c.l.b16 %v1055
    %v1444 = vunpack.c.h.b16 %v1055
    %v1445 = vunpack.c.l.b16 %v1056
    %v1446 = vunpack.c.h.b16 %v1056
    %v1447 = vunpack.c.l.b16 %v1057
    %v1448 = vunpack.c.h.b16 %v1057
    %v1449 = vunpack.c.l.b16 %v1058
    %v1450 = vunpack.c.h.b16 %v1058
    %v1451 = vunpack.c.l.b16 %v1059
    %v1452 = vunpack.c.h.b16 %v1059
    %v1453 = vunpack.c.l.b16 %v1060
    %v1454 = vunpack.c.h.b16 %v1060
    %v1455 = vunpack.c.l.b16 %v1061
    %v1456 = vunpack.c.h.b16 %v1061
    %v1457 = vunpack.c.l.b16 %v1062
    %v1458 = vunpack.c.h.b16 %v1062
    %v1459 = vunpack.c.l.b16 %v1063
    %v1460 = vunpack.c.h.b16 %v1063
    %v1461 = vunpack.c.l.b16 %v1064
    %v1462 = vunpack.c.h.b16 %v1064
    %v1463 = vunpack.c.l.b16 %v1065
    %v1464 = vunpack.c.h.b16 %v1065
    %v1465 = vunpack.c.l.b16 %v1066
    %v1466 = vunpack.c.h.b16 %v1066
    %v1467 = vunpack.c.l.b16 %v1067
    %v1468 = vunpack.c.h.b16 %v1067
    %v1469 = vunpack.c.l.b16 %v1068
    %v1470 = vunpack.c.h.b16 %v1068
    %v1471 = vunpack.c.l.b16 %v1069
    %v1472 = vunpack.c.h.b16 %v1069
    %v1473 = vunpack.c.l.b16 %v1070
    %v1474 = vunpack.c.h.b16 %v1070
    %v1475 = vunpack.c.l.b16 %v1071
    %v1476 = vunpack.c.h.b16 %v1071
    %v1477 = vunpack.c.l.b16 %v1072
    %v1478 = vunpack.c.h.b16 %v1072
    %v1479 = vunpack.c.l.b16 %v1073
    %v1480 = vunpack.c.h.b16 %v1073
    %v1481 = vunpack.c.l.b16 %v1074
    %v1482 = vunpack.c.h.b16 %v1074
    %v1483 = vunpack.c.l.b16 %v1075
    %v1484 = vunpack.c.h.b16 %v1075
    %v1485 = vunpack.c.l.b16 %v1076
    %v1486 = vunpack.c.h.b16 %v1076
    %v1487 = vunpack.c.l.b16 %v1077
    %v1488 = vunpack.c.h.b16 %v1077
    %v1489 = vunpack.c.l.b16 %v1078
    %v1490 = vunpack.c.h.b16 %v1078
    %v1491 = vunpack.c.l.b16 %v1079
    %v1492 = vunpack.c.h.b16 %v1079
    %v1493 = vunpack.c.l.b16 %v1080
    %v1494 = vunpack.c.h.b16 %v1080
    %v1495 = vunpack.c.l.b16 %v1081
    %v1496 = vunpack.c.h.b16 %v1081
    %v1497 = vunpack.c.l.b16 %v1082
    %v1498 = vunpack.c.h.b16 %v1082
    %v1499 = vunpack.c.l.b16 %v1083
    %v1500 = vunpack.c.h.b16 %v1083
    %v1501 = vunpack.c.l.b16 %v1084
    %v1502 = vunpack.c.h.b16 %v1084
    %v1503 = vunpack.c.l.b16 %v1085
    %v1504 = vunpack.c.h.b16 %v1085
    %v1505 = vunpack.c.l.b16 %v1086
    %v1506 = vunpack.c.h.b16 %v1086
    %v1507 = vunpack.c.l.b16 %v1087
    %v1508 = vunpack.c.h.b16 %v1087
    %v1509 = vunpack.c.l.b16 %v1088
    %v1510 = vunpack.c.h.b16 %v1088
    %v1511 = vpack.c.b16 %v1271, %v1255
    %v1512 = vpack.c.b16 %v1272, %v1256
    %v1513 = vpack.c.b16 %v1273, %v1257
    %v1514 = vpack.c.b16 %v1274, %v1258
    %v1515 = vpack.c.b16 %v1275, %v1259
    %v1516 = vpack.c.b16 %v1276, %v1260
    %v1517 = vpack.c.b16 %v1277, %v1261
    %v1518 = vpack.c.b16 %v1278, %v1262
    %v1519 = vpack.c.b16 %v1279, %v1263
    %v1520 = vpack.c.b16 %v1280, %v1264
    %v1521 = vpack.c.b16 %v1281, %v1265
    %v1522 = vpack.c.b16 %v1282, %v1266
    %v1523 = vpack.c.b16 %v1283, %v1267
    %v1524 = vpack.c.b16 %v1284, %v1268
    %v1525 = vpack.c.b16 %v1285, %v1269
    %v1526 = vpack.c.b16 %v1286, %v1270
    %v1527 = vpack.c.b16 %v1303, %v1287
    %v1528 = vpack.c.b16 %v1304, %v1288
    %v1529 = vpack.c.b16 %v1305, %v1289
    %v1530 = vpack.c.b16 %v1306, %v1290
    %v1531 = vpack.c.b16 %v1307, %v1291
    %v1532 = vpack.c.b16 %v1308, %v1292
    %v1533 = vpack.c.b16 %v1309, %v1293
    %v1534 = vpack.c.b16 %v1310, %v1294
    %v1535 = vpack.c.b16 %v1311, %v1295
    %v1536 = vpack.c.b16 %v1312, %v1296
    %v1537 = vpack.c.b16 %v1313, %v1297
    %v1538 = vpack.c.b16 %v1314, %v1298
    %v1539 = vpack.c.b16 %v1315, %v1299
    %v1540 = vpack.c.b16 %v1316, %v1300
    %v1541 = vpack.c.b16 %v1317, %v1301
    %v1542 = vpack.c.b16 %v1318, %v1302
    %v1543 = vpack.c.b16 %v1335, %v1319
    %v1544 = vpack.c.b16 %v1336, %v1320
    %v1545 = vpack.c.b16 %v1337, %v1321
    %v1546 = vpack.c.b16 %v1338, %v1322
    %v1547 = vpack.c.b16 %v1339, %v1323
    %v1548 = vpack.c.b16 %v1340, %v1324
    %v1549 = vpack.c.b16 %v1341, %v1325
    %v1550 = vpack.c.b16 %v1342, %v1326
    %v1551 = vpack.c.b16 %v1343, %v1327
    %v1552 = vpack.c.b16 %v1344, %v1328
    %v1553 = vpack.c.b16 %v1345, %v1329
    %v1554 = vpack.c.b16 %v1346, %v1330
    %v1555 = vpack.c.b16 %v1347, %v1331
    %v1556 = vpack.c.b16 %v1348, %v1332
    %v1557 = vpack.c.b16 %v1349, %v1333
    %v1558 = vpack.c.b16 %v1350, %v1334
    %v1559 = vpack.c.b16 %v1367, %v1351
    %v1560 = vpack.c.b16 %v1368, %v1352
    %v1561 = vpack.c.b16 %v1369, %v1353
    %v1562 = vpack.c.b16 %v1370, %v1354
    %v1563 = vpack.c.b16 %v1371, %v1355
    %v1564 = vpack.c.b16 %v1372, %v1356
    %v1565 = vpack.c.b16 %v1373, %v1357
    %v1566 = vpack.c.b16 %v1374, %v1358
    %v1567 = vpack.c.b16 %v1375, %v1359
    %v1568 = vpack.c.b16 %v1376, %v1360
    %v1569 = vpack.c.b16 %v1377, %v1361
    %v1570 = vpack.c.b16 %v1378, %v1362
    %v1571 = vpack.c.b16 %v1379, %v1363
    %v1572 = vpack.c.b16 %v1380, %v1364
    %v1573 = vpack.c.b16 %v1381, %v1365
    %v1574 = vpack.c.b16 %v1382, %v1366
    %v1575 = vpack.c.b16 %v1399, %v1383
    %v1576 = vpack.c.b16 %v1400, %v1384
    %v1577 = vpack.c.b16 %v1401, %v1385
    %v1578 = vpack.c.b16 %v1402, %v1386
    %v1579 = vpack.c.b16 %v1403, %v1387
    %v1580 = vpack.c.b16 %v1404, %v1388
    %v1581 = vpack.c.b16 %v1405, %v1389
    %v1582 = vpack.c.b16 %v1406, %v1390
    %v1583 = vpack.c.b16 %v1407, %v1391
    %v1584 = vpack.c.b16 %v1408, %v1392
    %v1585 = vpack.c.b16 %v1409, %v1393
    %v1586 = vpack.c.b16 %v1410, %v1394
    %v1587 = vpack.c.b16 %v1411, %v1395
    %v1588 = vpack.c.b16 %v1412, %v1396
    %v1589 = vpack.c.b16 %v1413, %v1397
    %v1590 = vpack.c.b16 %v1414, %v1398
    %v1591 = vpack.c.b16 %v1431, %v1415
    %v1592 = vpack.c.b16 %v1432, %v1416
    %v1593 = vpack.c.b16 %v1433, %v1417
    %v1594 = vpack.c.b16 %v1434, %v1418
    %v1595 = vpack.c.b16 %v1435, %v1419
    %v1596 = vpack.c.b16 %v1436, %v1420
    %v1597 = vpack.c.b16 %v1437, %v1421
    %v1598 = vpack.c.b16 %v1438, %v1422
    %v1599 = vpack.c.b16 %v1439, %v1423
    %v1600 = vpack.c.b16 %v1440, %v1424
    %v1601 = vpack.c.b16 %v1441, %v1425
    %v1602 = vpack.c.b16 %v1442, %v1426
    %v1603 = vpack.c.b16 %v1443, %v1427
    %v1604 = vpack.c.b16 %v1444, %v1428
    %v1605 = vpack.c.b16 %v1445, %v1429
    %v1606 = vpack.c.b16 %v1446, %v1430
    %v1607 = vpack.c.b16 %v1463, %v1447
    %v1608 = vpack.c.b16 %v1464, %v1448
    %v1609 = vpack.c.b16 %v1465, %v1449
    %v1610 = vpack.c.b16 %v1466, %v1450
    %v1611 = vpack.c.b16 %v1467, %v1451
    %v1612 = vpack.c.b16 %v1468, %v1452
    %v1613 = vpack.c.b16 %v1469, %v1453
    %v1614 = vpack.c.b16 %v1470, %v1454
    %v1615 = vpack.c.b16 %v1471, %v1455
    %v1616 = vpack.c.b16 %v1472, %v1456
    %v1617 = vpack.c.b16 %v1473, %v1457
    %v1618 = vpack.c.b16 %v1474, %v1458
    %v1619 = vpack.c.b16 %v1475, %v1459
    %v1620 = vpack.c.b16 %v1476, %v1460
    %v1621 = vpack.c.b16 %v1477, %v1461
    %v1622 = vpack.c.b16 %v1478, %v1462
    %v1623 = vpack.c.b16 %v1495, %v1479
    %v1624 = vpack.c.b16 %v1496, %v1480
    %v1625 = vpack.c.b16 %v1497, %v1481
    %v1626 = vpack.c.b16 %v1498, %v1482
    %v1627 = vpack.c.b16 %v1499, %v1483
    %v1628 = vpack.c.b16 %v1500, %v1484
    %v1629 = vpack.c.b16 %v1501, %v1485
    %v1630 = vpack.c.b16 %v1502, %v1486
    %v1631 = vpack.c.b16 %v1503, %v1487
    %v1632 = vpack.c.b16 %v1504, %v1488
    %v1633 = vpack.c.b16 %v1505, %v1489
    %v1634 = vpack.c.b16 %v1506, %v1490
    %v1635 = vpack.c.b16 %v1507, %v1491
    %v1636 = vpack.c.b16 %v1508, %v1492
    %v1637 = vpack.c.b16 %v1509, %v1493
    %v1638 = vpack.c.b16 %v1510, %v1494
    %1767 = vmatpush.bf16.msra.mxu0 %v1623
    %1768 = vmatpush.bf16.msra.mxu0 %v1607
    %1769 = vmatpush.bf16.msra.mxu0 %v1591
    %1770 = vmatpush.bf16.msra.mxu0 %v1575
    %1771 = vmatpush.bf16.msra.mxu0 %v1559
    %1772 = vmatpush.bf16.msra.mxu0 %v1543
    %1773 = vmatpush.bf16.msra.mxu0 %v1527
    %1774 = vmatpush.bf16.msra.mxu0 %v1511
    %1775 = vmatmul.bf16.gmra.mxu0 %v1089
    %v1776 = vpop.f32.mrf.mxu0
    %v1777 = vadd.f32 %v1095, %v1776
    %v1778 = vpop.f32.mrf.mxu0
    %v1779 = vadd.f32 %v1095, %v1778
    %1780 = vdwg.mxu0
    %1781 = vmatpush.bf16.msra.mxu0 %v1624
    %1782 = vmatpush.bf16.msra.mxu0 %v1608
    %1783 = vmatpush.bf16.msra.mxu0 %v1592
    %1784 = vmatpush.bf16.msra.mxu0 %v1576
    %1785 = vmatpush.bf16.msra.mxu0 %v1560
    %1786 = vmatpush.bf16.msra.mxu0 %v1544
    %1787 = vmatpush.bf16.msra.mxu0 %v1528
    %1788 = vmatpush.bf16.msra.mxu0 %v1512
    %1789 = vmatmul.bf16.gmra.mxu0 %v1089
    %v1790 = vpop.f32.mrf.mxu0
    %v1791 = vadd.f32 %v1096, %v1790
    %v1792 = vpop.f32.mrf.mxu0
    %v1793 = vadd.f32 %v1096, %v1792
    %1794 = vdwg.mxu0
    %1795 = vmatpush.bf16.msra.mxu0 %v1625
    %1796 = vmatpush.bf16.msra.mxu0 %v1609
    %1797 = vmatpush.bf16.msra.mxu0 %v1593
    %1798 = vmatpush.bf16.msra.mxu0 %v1577
    %1799 = vmatpush.bf16.msra.mxu0 %v1561
    %1800 = vmatpush.bf16.msra.mxu0 %v1545
    %1801 = vmatpush.bf16.msra.mxu0 %v1529
    %1802 = vmatpush.bf16.msra.mxu0 %v1513
    %1803 = vmatmul.bf16.gmra.mxu0 %v1089
    %v1804 = vpop.f32.mrf.mxu0
    %v1805 = vadd.f32 %v1097, %v1804
    %v1806 = vpop.f32.mrf.mxu0
    %v1807 = vadd.f32 %v1097, %v1806
    %1808 = vdwg.mxu0
    %1809 = vmatpush.bf16.msra.mxu0 %v1626
    %1810 = vmatpush.bf16.msra.mxu0 %v1610
    %1811 = vmatpush.bf16.msra.mxu0 %v1594
    %1812 = vmatpush.bf16.msra.mxu0 %v1578
    %1813 = vmatpush.bf16.msra.mxu0 %v1562
    %1814 = vmatpush.bf16.msra.mxu0 %v1546
    %1815 = vmatpush.bf16.msra.mxu0 %v1530
    %1816 = vmatpush.bf16.msra.mxu0 %v1514
    %1817 = vmatmul.bf16.gmra.mxu0 %v1089
    %v1818 = vpop.f32.mrf.mxu0
    %v1819 = vadd.f32 %v1098, %v1818
    %v1820 = vpop.f32.mrf.mxu0
    %v1821 = vadd.f32 %v1098, %v1820
    %1822 = vdwg.mxu0
    %1823 = vmatpush.bf16.msra.mxu0 %v1627
    %1824 = vmatpush.bf16.msra.mxu0 %v1611
    %1825 = vmatpush.bf16.msra.mxu0 %v1595
    %1826 = vmatpush.bf16.msra.mxu0 %v1579
    %1827 = vmatpush.bf16.msra.mxu0 %v1563
    %1828 = vmatpush.bf16.msra.mxu0 %v1547
    %1829 = vmatpush.bf16.msra.mxu0 %v1531
    %1830 = vmatpush.bf16.msra.mxu0 %v1515
    %1831 = vmatmul.bf16.gmra.mxu0 %v1089
    %v1832 = vpop.f32.mrf.mxu0
    %v1833 = vadd.f32 %v1099, %v1832
    %v1834 = vpop.f32.mrf.mxu0
    %v1835 = vadd.f32 %v1099, %v1834
    %1836 = vdwg.mxu0
    %1837 = vmatpush.bf16.msra.mxu0 %v1628
    %1838 = vmatpush.bf16.msra.mxu0 %v1612
    %1839 = vmatpush.bf16.msra.mxu0 %v1596
    %1840 = vmatpush.bf16.msra.mxu0 %v1580
    %1841 = vmatpush.bf16.msra.mxu0 %v1564
    %1842 = vmatpush.bf16.msra.mxu0 %v1548
    %1843 = vmatpush.bf16.msra.mxu0 %v1532
    %1844 = vmatpush.bf16.msra.mxu0 %v1516
    %1845 = vmatmul.bf16.gmra.mxu0 %v1089
    %v1846 = vpop.f32.mrf.mxu0
    %v1847 = vadd.f32 %v1100, %v1846
    %v1848 = vpop.f32.mrf.mxu0
    %v1849 = vadd.f32 %v1100, %v1848
    %1850 = vdwg.mxu0
    %1851 = vmatpush.bf16.msra.mxu0 %v1629
    %1852 = vmatpush.bf16.msra.mxu0 %v1613
    %1853 = vmatpush.bf16.msra.mxu0 %v1597
    %1854 = vmatpush.bf16.msra.mxu0 %v1581
    %1855 = vmatpush.bf16.msra.mxu0 %v1565
    %1856 = vmatpush.bf16.msra.mxu0 %v1549
    %1857 = vmatpush.bf16.msra.mxu0 %v1533
    %1858 = vmatpush.bf16.msra.mxu0 %v1517
    %1859 = vmatmul.bf16.gmra.mxu0 %v1089
    %v1860 = vpop.f32.mrf.mxu0
    %v1861 = vadd.f32 %v1101, %v1860
    %v1862 = vpop.f32.mrf.mxu0
    %v1863 = vadd.f32 %v1101, %v1862
    %1864 = vdwg.mxu0
    %1865 = vmatpush.bf16.msra.mxu0 %v1630
    %1866 = vmatpush.bf16.msra.mxu0 %v1614
    %1867 = vmatpush.bf16.msra.mxu0 %v1598
    %1868 = vmatpush.bf16.msra.mxu0 %v1582
    %1869 = vmatpush.bf16.msra.mxu0 %v1566
    %1870 = vmatpush.bf16.msra.mxu0 %v1550
    %1871 = vmatpush.bf16.msra.mxu0 %v1534
    %1872 = vmatpush.bf16.msra.mxu0 %v1518
    %1873 = vmatmul.bf16.gmra.mxu0 %v1089
    %v1874 = vpop.f32.mrf.mxu0
    %v1875 = vadd.f32 %v1102, %v1874
    %v1876 = vpop.f32.mrf.mxu0
    %v1877 = vadd.f32 %v1102, %v1876
    %1878 = vdwg.mxu0
    %1879 = vmatpush.bf16.msra.mxu0 %v1631
    %1880 = vmatpush.bf16.msra.mxu0 %v1615
    %1881 = vmatpush.bf16.msra.mxu0 %v1599
    %1882 = vmatpush.bf16.msra.mxu0 %v1583
    %1883 = vmatpush.bf16.msra.mxu0 %v1567
    %1884 = vmatpush.bf16.msra.mxu0 %v1551
    %1885 = vmatpush.bf16.msra.mxu0 %v1535
    %1886 = vmatpush.bf16.msra.mxu0 %v1519
    %1887 = vmatmul.bf16.gmra.mxu0 %v1089
    %v1888 = vpop.f32.mrf.mxu0
    %v1889 = vadd.f32 %v1103, %v1888
    %v1890 = vpop.f32.mrf.mxu0
    %v1891 = vadd.f32 %v1103, %v1890
    %1892 = vdwg.mxu0
    %1893 = vmatpush.bf16.msra.mxu0 %v1632
    %1894 = vmatpush.bf16.msra.mxu0 %v1616
    %1895 = vmatpush.bf16.msra.mxu0 %v1600
    %1896 = vmatpush.bf16.msra.mxu0 %v1584
    %1897 = vmatpush.bf16.msra.mxu0 %v1568
    %1898 = vmatpush.bf16.msra.mxu0 %v1552
    %1899 = vmatpush.bf16.msra.mxu0 %v1536
    %1900 = vmatpush.bf16.msra.mxu0 %v1520
    %1901 = vmatmul.bf16.gmra.mxu0 %v1089
    %v1902 = vpop.f32.mrf.mxu0
    %v1903 = vadd.f32 %v1104, %v1902
    %v1904 = vpop.f32.mrf.mxu0
    %v1905 = vadd.f32 %v1104, %v1904
    %1906 = vdwg.mxu0
    %1907 = vmatpush.bf16.msra.mxu0 %v1633
    %1908 = vmatpush.bf16.msra.mxu0 %v1617
    %1909 = vmatpush.bf16.msra.mxu0 %v1601
    %1910 = vmatpush.bf16.msra.mxu0 %v1585
    %1911 = vmatpush.bf16.msra.mxu0 %v1569
    %1912 = vmatpush.bf16.msra.mxu0 %v1553
    %1913 = vmatpush.bf16.msra.mxu0 %v1537
    %1914 = vmatpush.bf16.msra.mxu0 %v1521
    %1915 = vmatmul.bf16.gmra.mxu0 %v1089
    %v1916 = vpop.f32.mrf.mxu0
    %v1917 = vadd.f32 %v1105, %v1916
    %v1918 = vpop.f32.mrf.mxu0
    %v1919 = vadd.f32 %v1105, %v1918
    %1920 = vdwg.mxu0
    %1921 = vmatpush.bf16.msra.mxu0 %v1634
    %1922 = vmatpush.bf16.msra.mxu0 %v1618
    %1923 = vmatpush.bf16.msra.mxu0 %v1602
    %1924 = vmatpush.bf16.msra.mxu0 %v1586
    %1925 = vmatpush.bf16.msra.mxu0 %v1570
    %1926 = vmatpush.bf16.msra.mxu0 %v1554
    %1927 = vmatpush.bf16.msra.mxu0 %v1538
    %1928 = vmatpush.bf16.msra.mxu0 %v1522
    %1929 = vmatmul.bf16.gmra.mxu0 %v1089
    %v1930 = vpop.f32.mrf.mxu0
    %v1931 = vadd.f32 %v1106, %v1930
    %v1932 = vpop.f32.mrf.mxu0
    %v1933 = vadd.f32 %v1106, %v1932
    %1934 = vdwg.mxu0
    %1935 = vmatpush.bf16.msra.mxu0 %v1635
    %1936 = vmatpush.bf16.msra.mxu0 %v1619
    %1937 = vmatpush.bf16.msra.mxu0 %v1603
    %1938 = vmatpush.bf16.msra.mxu0 %v1587
    %1939 = vmatpush.bf16.msra.mxu0 %v1571
    %1940 = vmatpush.bf16.msra.mxu0 %v1555
    %1941 = vmatpush.bf16.msra.mxu0 %v1539
    %1942 = vmatpush.bf16.msra.mxu0 %v1523
    %1943 = vmatmul.bf16.gmra.mxu0 %v1089
    %v1944 = vpop.f32.mrf.mxu0
    %v1945 = vadd.f32 %v1107, %v1944
    %v1946 = vpop.f32.mrf.mxu0
    %v1947 = vadd.f32 %v1107, %v1946
    %1948 = vdwg.mxu0
    %1949 = vmatpush.bf16.msra.mxu0 %v1636
    %1950 = vmatpush.bf16.msra.mxu0 %v1620
    %1951 = vmatpush.bf16.msra.mxu0 %v1604
    %1952 = vmatpush.bf16.msra.mxu0 %v1588
    %1953 = vmatpush.bf16.msra.mxu0 %v1572
    %1954 = vmatpush.bf16.msra.mxu0 %v1556
    %1955 = vmatpush.bf16.msra.mxu0 %v1540
    %1956 = vmatpush.bf16.msra.mxu0 %v1524
    %1957 = vmatmul.bf16.gmra.mxu0 %v1089
    %v1958 = vpop.f32.mrf.mxu0
    %v1959 = vadd.f32 %v1108, %v1958
    %v1960 = vpop.f32.mrf.mxu0
    %v1961 = vadd.f32 %v1108, %v1960
    %1962 = vdwg.mxu0
    %1963 = vmatpush.bf16.msra.mxu0 %v1637
    %1964 = vmatpush.bf16.msra.mxu0 %v1621
    %1965 = vmatpush.bf16.msra.mxu0 %v1605
    %1966 = vmatpush.bf16.msra.mxu0 %v1589
    %1967 = vmatpush.bf16.msra.mxu0 %v1573
    %1968 = vmatpush.bf16.msra.mxu0 %v1557
    %1969 = vmatpush.bf16.msra.mxu0 %v1541
    %1970 = vmatpush.bf16.msra.mxu0 %v1525
    %1971 = vmatmul.bf16.gmra.mxu0 %v1089
    %v1972 = vpop.f32.mrf.mxu0
    %v1973 = vadd.f32 %v1109, %v1972
    %v1974 = vpop.f32.mrf.mxu0
    %v1975 = vadd.f32 %v1109, %v1974
    %1976 = vdwg.mxu0
    %1977 = vmatpush.bf16.msra.mxu0 %v1638
    %1978 = vmatpush.bf16.msra.mxu0 %v1622
    %1979 = vmatpush.bf16.msra.mxu0 %v1606
    %1980 = vmatpush.bf16.msra.mxu0 %v1590
    %1981 = vmatpush.bf16.msra.mxu0 %v1574
    %1982 = vmatpush.bf16.msra.mxu0 %v1558
    %1983 = vmatpush.bf16.msra.mxu0 %v1542
    %1984 = vmatpush.bf16.msra.mxu0 %v1526
    %1985 = vmatmul.bf16.gmra.mxu0 %v1089
    %v1986 = vpop.f32.mrf.mxu0
    %v1987 = vadd.f32 %v1110, %v1986
    %v1988 = vpop.f32.mrf.mxu0
    %v1989 = vadd.f32 %v1110, %v1988
    %1990 = vdwg.mxu0
    %v1991 = vmax.f32 %v1777, 0.0
    %v1992 = vmax.f32 %v1791, 0.0
    %v1993 = vmax.f32 %v1805, 0.0
    %v1994 = vmax.f32 %v1819, 0.0
    %v1995 = vmax.f32 %v1833, 0.0
    %v1996 = vmax.f32 %v1847, 0.0
    %v1997 = vmax.f32 %v1861, 0.0
    %v1998 = vmax.f32 %v1875, 0.0
    %v1999 = vmax.f32 %v1889, 0.0
    %v2000 = vmax.f32 %v1903, 0.0
    %v2001 = vmax.f32 %v1917, 0.0
    %v2002 = vmax.f32 %v1931, 0.0
    %v2003 = vmax.f32 %v1945, 0.0
    %v2004 = vmax.f32 %v1959, 0.0
    %v2005 = vmax.f32 %v1973, 0.0
    %v2006 = vmax.f32 %v1987, 0.0
    %v2007 = vmax.f32 %v1779, 0.0
    %v2008 = vmax.f32 %v1793, 0.0
    %v2009 = vmax.f32 %v1807, 0.0
    %v2010 = vmax.f32 %v1821, 0.0
    %v2011 = vmax.f32 %v1835, 0.0
    %v2012 = vmax.f32 %v1849, 0.0
    %v2013 = vmax.f32 %v1863, 0.0
    %v2014 = vmax.f32 %v1877, 0.0
    %v2015 = vmax.f32 %v1891, 0.0
    %v2016 = vmax.f32 %v1905, 0.0
    %v2017 = vmax.f32 %v1919, 0.0
    %v2018 = vmax.f32 %v1933, 0.0
    %v2019 = vmax.f32 %v1947, 0.0
    %v2020 = vmax.f32 %v1961, 0.0
    %v2021 = vmax.f32 %v1975, 0.0
    %v2022 = vmax.f32 %v1989, 0.0
    %v2023 = vld [vmem:[#allocation7] sm:$0xf]
    %v2024 = vld [vmem:[#allocation7 + $0x4] sm:$0xf]
    %v2025 = vld [vmem:[#allocation7 + $0x8] sm:$0xf]
    %v2026 = vld [vmem:[#allocation7 + $0xc] sm:$0xf]
    %v2027 = vld [vmem:[#allocation7 + $0x10] sm:$0xf]
    %v2028 = vld [vmem:[#allocation7 + $0x14] sm:$0xf]
    %v2029 = vld [vmem:[#allocation7 + $0x18] sm:$0xf]
    %v2030 = vld [vmem:[#allocation7 + $0x1c] sm:$0xf]
    %v2031 = vld [vmem:[#allocation7 + $0x20] sm:$0xf]
    %v2032 = vld [vmem:[#allocation7 + $0x24] sm:$0xf]
    %v2033 = vld [vmem:[#allocation7 + $0x28] sm:$0xf]
    %v2034 = vld [vmem:[#allocation7 + $0x2c] sm:$0xf]
    %v2035 = vld [vmem:[#allocation7 + $0x30] sm:$0xf]
    %v2036 = vld [vmem:[#allocation7 + $0x34] sm:$0xf]
    %v2037 = vld [vmem:[#allocation7 + $0x38] sm:$0xf]
    %v2038 = vld [vmem:[#allocation7 + $0x3c] sm:$0xf]
    %v2039 = vld [vmem:[#allocation7 + $0x40] sm:$0xf]
    %v2040 = vld [vmem:[#allocation7 + $0x44] sm:$0xf]
    %v2041 = vld [vmem:[#allocation7 + $0x48] sm:$0xf]
    %v2042 = vld [vmem:[#allocation7 + $0x4c] sm:$0xf]
    %v2043 = vld [vmem:[#allocation7 + $0x50] sm:$0xf]
    %v2044 = vld [vmem:[#allocation7 + $0x54] sm:$0xf]
    %v2045 = vld [vmem:[#allocation7 + $0x58] sm:$0xf]
    %v2046 = vld [vmem:[#allocation7 + $0x5c] sm:$0xf]
    %v2047 = vld [vmem:[#allocation7 + $0x60] sm:$0xf]
    %v2048 = vld [vmem:[#allocation7 + $0x64] sm:$0xf]
    %v2049 = vld [vmem:[#allocation7 + $0x68] sm:$0xf]
    %v2050 = vld [vmem:[#allocation7 + $0x6c] sm:$0xf]
    %v2051 = vld [vmem:[#allocation7 + $0x70] sm:$0xf]
    %v2052 = vld [vmem:[#allocation7 + $0x74] sm:$0xf]
    %v2053 = vld [vmem:[#allocation7 + $0x78] sm:$0xf]
    %v2054 = vld [vmem:[#allocation7 + $0x7c] sm:$0xf]
    %v2055 = vld [vmem:[#allocation7 + $0x80] sm:$0xf]
    %v2056 = vld [vmem:[#allocation7 + $0x84] sm:$0xf]
    %v2057 = vld [vmem:[#allocation7 + $0x88] sm:$0xf]
    %v2058 = vld [vmem:[#allocation7 + $0x8c] sm:$0xf]
    %v2059 = vld [vmem:[#allocation7 + $0x90] sm:$0xf]
    %v2060 = vld [vmem:[#allocation7 + $0x94] sm:$0xf]
    %v2061 = vld [vmem:[#allocation7 + $0x98] sm:$0xf]
    %v2062 = vld [vmem:[#allocation7 + $0x9c] sm:$0xf]
    %v2063 = vld [vmem:[#allocation7 + $0xa0] sm:$0xf]
    %v2064 = vld [vmem:[#allocation7 + $0xa4] sm:$0xf]
    %v2065 = vld [vmem:[#allocation7 + $0xa8] sm:$0xf]
    %v2066 = vld [vmem:[#allocation7 + $0xac] sm:$0xf]
    %v2067 = vld [vmem:[#allocation7 + $0xb0] sm:$0xf]
    %v2068 = vld [vmem:[#allocation7 + $0xb4] sm:$0xf]
    %v2069 = vld [vmem:[#allocation7 + $0xb8] sm:$0xf]
    %v2070 = vld [vmem:[#allocation7 + $0xbc] sm:$0xf]
    %v2071 = vld [vmem:[#allocation7 + $0xc0] sm:$0xf]
    %v2072 = vld [vmem:[#allocation7 + $0xc4] sm:$0xf]
    %v2073 = vld [vmem:[#allocation7 + $0xc8] sm:$0xf]
    %v2074 = vld [vmem:[#allocation7 + $0xcc] sm:$0xf]
    %v2075 = vld [vmem:[#allocation7 + $0xd0] sm:$0xf]
    %v2076 = vld [vmem:[#allocation7 + $0xd4] sm:$0xf]
    %v2077 = vld [vmem:[#allocation7 + $0xd8] sm:$0xf]
    %v2078 = vld [vmem:[#allocation7 + $0xdc] sm:$0xf]
    %v2079 = vld [vmem:[#allocation7 + $0xe0] sm:$0xf]
    %v2080 = vld [vmem:[#allocation7 + $0xe4] sm:$0xf]
    %v2081 = vld [vmem:[#allocation7 + $0xe8] sm:$0xf]
    %v2082 = vld [vmem:[#allocation7 + $0xec] sm:$0xf]
    %v2083 = vld [vmem:[#allocation7 + $0xf0] sm:$0xf]
    %v2084 = vld [vmem:[#allocation7 + $0xf4] sm:$0xf]
    %v2085 = vld [vmem:[#allocation7 + $0xf8] sm:$0xf]
    %v2086 = vld [vmem:[#allocation7 + $0xfc] sm:$0xf]
    %v2087 = vld [vmem:[#allocation7 + $0x100] sm:$0xf]
    %v2088 = vld [vmem:[#allocation7 + $0x104] sm:$0xf]
    %v2089 = vld [vmem:[#allocation7 + $0x108] sm:$0xf]
    %v2090 = vld [vmem:[#allocation7 + $0x10c] sm:$0xf]
    %v2091 = vld [vmem:[#allocation7 + $0x110] sm:$0xf]
    %v2092 = vld [vmem:[#allocation7 + $0x114] sm:$0xf]
    %v2093 = vld [vmem:[#allocation7 + $0x118] sm:$0xf]
    %v2094 = vld [vmem:[#allocation7 + $0x11c] sm:$0xf]
    %v2095 = vld [vmem:[#allocation7 + $0x120] sm:$0xf]
    %v2096 = vld [vmem:[#allocation7 + $0x124] sm:$0xf]
    %v2097 = vld [vmem:[#allocation7 + $0x128] sm:$0xf]
    %v2098 = vld [vmem:[#allocation7 + $0x12c] sm:$0xf]
    %v2099 = vld [vmem:[#allocation7 + $0x130] sm:$0xf]
    %v2100 = vld [vmem:[#allocation7 + $0x134] sm:$0xf]
    %v2101 = vld [vmem:[#allocation7 + $0x138] sm:$0xf]
    %v2102 = vld [vmem:[#allocation7 + $0x13c] sm:$0xf]
    %v2103 = vld [vmem:[#allocation7 + $0x140] sm:$0xf]
    %v2104 = vld [vmem:[#allocation7 + $0x144] sm:$0xf]
    %v2105 = vld [vmem:[#allocation7 + $0x148] sm:$0xf]
    %v2106 = vld [vmem:[#allocation7 + $0x14c] sm:$0xf]
    %v2107 = vld [vmem:[#allocation7 + $0x150] sm:$0xf]
    %v2108 = vld [vmem:[#allocation7 + $0x154] sm:$0xf]
    %v2109 = vld [vmem:[#allocation7 + $0x158] sm:$0xf]
    %v2110 = vld [vmem:[#allocation7 + $0x15c] sm:$0xf]
    %v2111 = vld [vmem:[#allocation7 + $0x160] sm:$0xf]
    %v2112 = vld [vmem:[#allocation7 + $0x164] sm:$0xf]
    %v2113 = vld [vmem:[#allocation7 + $0x168] sm:$0xf]
    %v2114 = vld [vmem:[#allocation7 + $0x16c] sm:$0xf]
    %v2115 = vld [vmem:[#allocation7 + $0x170] sm:$0xf]
    %v2116 = vld [vmem:[#allocation7 + $0x174] sm:$0xf]
    %v2117 = vld [vmem:[#allocation7 + $0x178] sm:$0xf]
    %v2118 = vld [vmem:[#allocation7 + $0x17c] sm:$0xf]
    %v2119 = vld [vmem:[#allocation7 + $0x180] sm:$0xf]
    %v2120 = vld [vmem:[#allocation7 + $0x184] sm:$0xf]
    %v2121 = vld [vmem:[#allocation7 + $0x188] sm:$0xf]
    %v2122 = vld [vmem:[#allocation7 + $0x18c] sm:$0xf]
    %v2123 = vld [vmem:[#allocation7 + $0x190] sm:$0xf]
    %v2124 = vld [vmem:[#allocation7 + $0x194] sm:$0xf]
    %v2125 = vld [vmem:[#allocation7 + $0x198] sm:$0xf]
    %v2126 = vld [vmem:[#allocation7 + $0x19c] sm:$0xf]
    %v2127 = vld [vmem:[#allocation7 + $0x1a0] sm:$0xf]
    %v2128 = vld [vmem:[#allocation7 + $0x1a4] sm:$0xf]
    %v2129 = vld [vmem:[#allocation7 + $0x1a8] sm:$0xf]
    %v2130 = vld [vmem:[#allocation7 + $0x1ac] sm:$0xf]
    %v2131 = vld [vmem:[#allocation7 + $0x1b0] sm:$0xf]
    %v2132 = vld [vmem:[#allocation7 + $0x1b4] sm:$0xf]
    %v2133 = vld [vmem:[#allocation7 + $0x1b8] sm:$0xf]
    %v2134 = vld [vmem:[#allocation7 + $0x1bc] sm:$0xf]
    %v2135 = vld [vmem:[#allocation7 + $0x1c0] sm:$0xf]
    %v2136 = vld [vmem:[#allocation7 + $0x1c4] sm:$0xf]
    %v2137 = vld [vmem:[#allocation7 + $0x1c8] sm:$0xf]
    %v2138 = vld [vmem:[#allocation7 + $0x1cc] sm:$0xf]
    %v2139 = vld [vmem:[#allocation7 + $0x1d0] sm:$0xf]
    %v2140 = vld [vmem:[#allocation7 + $0x1d4] sm:$0xf]
    %v2141 = vld [vmem:[#allocation7 + $0x1d8] sm:$0xf]
    %v2142 = vld [vmem:[#allocation7 + $0x1dc] sm:$0xf]
    %v2143 = vld [vmem:[#allocation7 + $0x1e0] sm:$0xf]
    %v2144 = vld [vmem:[#allocation7 + $0x1e4] sm:$0xf]
    %v2145 = vld [vmem:[#allocation7 + $0x1e8] sm:$0xf]
    %v2146 = vld [vmem:[#allocation7 + $0x1ec] sm:$0xf]
    %v2147 = vld [vmem:[#allocation7 + $0x1f0] sm:$0xf]
    %v2148 = vld [vmem:[#allocation7 + $0x1f4] sm:$0xf]
    %v2149 = vld [vmem:[#allocation7 + $0x1f8] sm:$0xf]
    %v2150 = vld [vmem:[#allocation7 + $0x1fc] sm:$0xf]
    %v2151 = vld [vmem:[#allocation7 + $0x200] sm:$0xf]
    %v2152 = vld [vmem:[#allocation7 + $0x204] sm:$0xf]
    %v2153 = vld [vmem:[#allocation7 + $0x208] sm:$0xf]
    %v2154 = vld [vmem:[#allocation7 + $0x20c] sm:$0xf]
    %v2155 = vld [vmem:[#allocation7 + $0x210] sm:$0xf]
    %v2156 = vld [vmem:[#allocation7 + $0x214] sm:$0xf]
    %v2157 = vld [vmem:[#allocation7 + $0x218] sm:$0xf]
    %v2158 = vld [vmem:[#allocation7 + $0x21c] sm:$0xf]
    %v2159 = vld [vmem:[#allocation7 + $0x220] sm:$0xf]
    %v2160 = vld [vmem:[#allocation7 + $0x224] sm:$0xf]
    %v2161 = vld [vmem:[#allocation7 + $0x228] sm:$0xf]
    %v2162 = vld [vmem:[#allocation7 + $0x22c] sm:$0xf]
    %v2163 = vld [vmem:[#allocation7 + $0x230] sm:$0xf]
    %v2164 = vld [vmem:[#allocation7 + $0x234] sm:$0xf]
    %v2165 = vld [vmem:[#allocation7 + $0x238] sm:$0xf]
    %v2166 = vld [vmem:[#allocation7 + $0x23c] sm:$0xf]
    %v2167 = vld [vmem:[#allocation7 + $0x240] sm:$0xf]
    %v2168 = vld [vmem:[#allocation7 + $0x244] sm:$0xf]
    %v2169 = vld [vmem:[#allocation7 + $0x248] sm:$0xf]
    %v2170 = vld [vmem:[#allocation7 + $0x24c] sm:$0xf]
    %v2171 = vld [vmem:[#allocation7 + $0x250] sm:$0xf]
    %v2172 = vld [vmem:[#allocation7 + $0x254] sm:$0xf]
    %v2173 = vld [vmem:[#allocation7 + $0x258] sm:$0xf]
    %v2174 = vld [vmem:[#allocation7 + $0x25c] sm:$0xf]
    %v2175 = vld [vmem:[#allocation7 + $0x260] sm:$0xf]
    %v2176 = vld [vmem:[#allocation7 + $0x264] sm:$0xf]
    %v2177 = vld [vmem:[#allocation7 + $0x268] sm:$0xf]
    %v2178 = vld [vmem:[#allocation7 + $0x26c] sm:$0xf]
    %v2179 = vld [vmem:[#allocation7 + $0x270] sm:$0xf]
    %v2180 = vld [vmem:[#allocation7 + $0x274] sm:$0xf]
    %v2181 = vld [vmem:[#allocation7 + $0x278] sm:$0xf]
    %v2182 = vld [vmem:[#allocation7 + $0x27c] sm:$0xf]
    %v2183 = vld [vmem:[#allocation7 + $0x280] sm:$0xf]
    %v2184 = vld [vmem:[#allocation7 + $0x284] sm:$0xf]
    %v2185 = vld [vmem:[#allocation7 + $0x288] sm:$0xf]
    %v2186 = vld [vmem:[#allocation7 + $0x28c] sm:$0xf]
    %v2187 = vld [vmem:[#allocation7 + $0x290] sm:$0xf]
    %v2188 = vld [vmem:[#allocation7 + $0x294] sm:$0xf]
    %v2189 = vld [vmem:[#allocation7 + $0x298] sm:$0xf]
    %v2190 = vld [vmem:[#allocation7 + $0x29c] sm:$0xf]
    %v2191 = vld [vmem:[#allocation7 + $0x2a0] sm:$0xf]
    %v2192 = vld [vmem:[#allocation7 + $0x2a4] sm:$0xf]
    %v2193 = vld [vmem:[#allocation7 + $0x2a8] sm:$0xf]
    %v2194 = vld [vmem:[#allocation7 + $0x2ac] sm:$0xf]
    %v2195 = vld [vmem:[#allocation7 + $0x2b0] sm:$0xf]
    %v2196 = vld [vmem:[#allocation7 + $0x2b4] sm:$0xf]
    %v2197 = vld [vmem:[#allocation7 + $0x2b8] sm:$0xf]
    %v2198 = vld [vmem:[#allocation7 + $0x2bc] sm:$0xf]
    %v2199 = vld [vmem:[#allocation7 + $0x2c0] sm:$0xf]
    %v2200 = vld [vmem:[#allocation7 + $0x2c4] sm:$0xf]
    %v2201 = vld [vmem:[#allocation7 + $0x2c8] sm:$0xf]
    %v2202 = vld [vmem:[#allocation7 + $0x2cc] sm:$0xf]
    %v2203 = vld [vmem:[#allocation7 + $0x2d0] sm:$0xf]
    %v2204 = vld [vmem:[#allocation7 + $0x2d4] sm:$0xf]
    %v2205 = vld [vmem:[#allocation7 + $0x2d8] sm:$0xf]
    %v2206 = vld [vmem:[#allocation7 + $0x2dc] sm:$0xf]
    %v2207 = vld [vmem:[#allocation7 + $0x2e0] sm:$0xf]
    %v2208 = vld [vmem:[#allocation7 + $0x2e4] sm:$0xf]
    %v2209 = vld [vmem:[#allocation7 + $0x2e8] sm:$0xf]
    %v2210 = vld [vmem:[#allocation7 + $0x2ec] sm:$0xf]
    %v2211 = vld [vmem:[#allocation7 + $0x2f0] sm:$0xf]
    %v2212 = vld [vmem:[#allocation7 + $0x2f4] sm:$0xf]
    %v2213 = vld [vmem:[#allocation7 + $0x2f8] sm:$0xf]
    %v2214 = vld [vmem:[#allocation7 + $0x2fc] sm:$0xf]
    %v2215 = vld [vmem:[#allocation7 + $0x300] sm:$0xf]
    %v2216 = vld [vmem:[#allocation7 + $0x304] sm:$0xf]
    %v2217 = vld [vmem:[#allocation7 + $0x308] sm:$0xf]
    %v2218 = vld [vmem:[#allocation7 + $0x30c] sm:$0xf]
    %v2219 = vld [vmem:[#allocation7 + $0x310] sm:$0xf]
    %v2220 = vld [vmem:[#allocation7 + $0x314] sm:$0xf]
    %v2221 = vld [vmem:[#allocation7 + $0x318] sm:$0xf]
    %v2222 = vld [vmem:[#allocation7 + $0x31c] sm:$0xf]
    %v2223 = vld [vmem:[#allocation7 + $0x320] sm:$0xf]
    %v2224 = vld [vmem:[#allocation7 + $0x324] sm:$0xf]
    %v2225 = vld [vmem:[#allocation7 + $0x328] sm:$0xf]
    %v2226 = vld [vmem:[#allocation7 + $0x32c] sm:$0xf]
    %v2227 = vld [vmem:[#allocation7 + $0x330] sm:$0xf]
    %v2228 = vld [vmem:[#allocation7 + $0x334] sm:$0xf]
    %v2229 = vld [vmem:[#allocation7 + $0x338] sm:$0xf]
    %v2230 = vld [vmem:[#allocation7 + $0x33c] sm:$0xf]
    %v2231 = vld [vmem:[#allocation7 + $0x340] sm:$0xf]
    %v2232 = vld [vmem:[#allocation7 + $0x344] sm:$0xf]
    %v2233 = vld [vmem:[#allocation7 + $0x348] sm:$0xf]
    %v2234 = vld [vmem:[#allocation7 + $0x34c] sm:$0xf]
    %v2235 = vld [vmem:[#allocation7 + $0x350] sm:$0xf]
    %v2236 = vld [vmem:[#allocation7 + $0x354] sm:$0xf]
    %v2237 = vld [vmem:[#allocation7 + $0x358] sm:$0xf]
    %v2238 = vld [vmem:[#allocation7 + $0x35c] sm:$0xf]
    %v2239 = vld [vmem:[#allocation7 + $0x360] sm:$0xf]
    %v2240 = vld [vmem:[#allocation7 + $0x364] sm:$0xf]
    %v2241 = vld [vmem:[#allocation7 + $0x368] sm:$0xf]
    %v2242 = vld [vmem:[#allocation7 + $0x36c] sm:$0xf]
    %v2243 = vld [vmem:[#allocation7 + $0x370] sm:$0xf]
    %v2244 = vld [vmem:[#allocation7 + $0x374] sm:$0xf]
    %v2245 = vld [vmem:[#allocation7 + $0x378] sm:$0xf]
    %v2246 = vld [vmem:[#allocation7 + $0x37c] sm:$0xf]
    %v2247 = vld [vmem:[#allocation7 + $0x380] sm:$0xf]
    %v2248 = vld [vmem:[#allocation7 + $0x384] sm:$0xf]
    %v2249 = vld [vmem:[#allocation7 + $0x388] sm:$0xf]
    %v2250 = vld [vmem:[#allocation7 + $0x38c] sm:$0xf]
    %v2251 = vld [vmem:[#allocation7 + $0x390] sm:$0xf]
    %v2252 = vld [vmem:[#allocation7 + $0x394] sm:$0xf]
    %v2253 = vld [vmem:[#allocation7 + $0x398] sm:$0xf]
    %v2254 = vld [vmem:[#allocation7 + $0x39c] sm:$0xf]
    %v2255 = vld [vmem:[#allocation7 + $0x3a0] sm:$0xf]
    %v2256 = vld [vmem:[#allocation7 + $0x3a4] sm:$0xf]
    %v2257 = vld [vmem:[#allocation7 + $0x3a8] sm:$0xf]
    %v2258 = vld [vmem:[#allocation7 + $0x3ac] sm:$0xf]
    %v2259 = vld [vmem:[#allocation7 + $0x3b0] sm:$0xf]
    %v2260 = vld [vmem:[#allocation7 + $0x3b4] sm:$0xf]
    %v2261 = vld [vmem:[#allocation7 + $0x3b8] sm:$0xf]
    %v2262 = vld [vmem:[#allocation7 + $0x3bc] sm:$0xf]
    %v2263 = vld [vmem:[#allocation7 + $0x3c0] sm:$0xf]
    %v2264 = vld [vmem:[#allocation7 + $0x3c4] sm:$0xf]
    %v2265 = vld [vmem:[#allocation7 + $0x3c8] sm:$0xf]
    %v2266 = vld [vmem:[#allocation7 + $0x3cc] sm:$0xf]
    %v2267 = vld [vmem:[#allocation7 + $0x3d0] sm:$0xf]
    %v2268 = vld [vmem:[#allocation7 + $0x3d4] sm:$0xf]
    %v2269 = vld [vmem:[#allocation7 + $0x3d8] sm:$0xf]
    %v2270 = vld [vmem:[#allocation7 + $0x3dc] sm:$0xf]
    %v2271 = vld [vmem:[#allocation7 + $0x3e0] sm:$0xf]
    %v2272 = vld [vmem:[#allocation7 + $0x3e4] sm:$0xf]
    %v2273 = vld [vmem:[#allocation7 + $0x3e8] sm:$0xf]
    %v2274 = vld [vmem:[#allocation7 + $0x3ec] sm:$0xf]
    %v2275 = vld [vmem:[#allocation7 + $0x3f0] sm:$0xf]
    %v2276 = vld [vmem:[#allocation7 + $0x3f4] sm:$0xf]
    %v2277 = vld [vmem:[#allocation7 + $0x3f8] sm:$0xf]
    %v2278 = vld [vmem:[#allocation7 + $0x3fc] sm:$0xf]
    %v2279 = vpack.c.bf16 %v2007, %v1991
    %v2280 = vpack.c.bf16 %v2008, %v1992
    %v2281 = vpack.c.bf16 %v2009, %v1993
    %v2282 = vpack.c.bf16 %v2010, %v1994
    %v2283 = vpack.c.bf16 %v2011, %v1995
    %v2284 = vpack.c.bf16 %v2012, %v1996
    %v2285 = vpack.c.bf16 %v2013, %v1997
    %v2286 = vpack.c.bf16 %v2014, %v1998
    %v2287 = vpack.c.bf16 %v2015, %v1999
    %v2288 = vpack.c.bf16 %v2016, %v2000
    %v2289 = vpack.c.bf16 %v2017, %v2001
    %v2290 = vpack.c.bf16 %v2018, %v2002
    %v2291 = vpack.c.bf16 %v2019, %v2003
    %v2292 = vpack.c.bf16 %v2020, %v2004
    %v2293 = vpack.c.bf16 %v2021, %v2005
    %v2294 = vpack.c.bf16 %v2022, %v2006
    %v2295 = vld [vmem:[%s1 + $0x7] sm:$0x1]
    %v2296 = vperm.slane %v2295, 0
    %v2553 = vunpack.c.l.b16 %v2023
    %v2554 = vunpack.c.l.b16 %v2024
    %v2555 = vunpack.c.l.b16 %v2025
    %v2556 = vunpack.c.l.b16 %v2026
    %v2557 = vunpack.c.l.b16 %v2027
    %v2558 = vunpack.c.l.b16 %v2028
    %v2559 = vunpack.c.l.b16 %v2029
    %v2560 = vunpack.c.l.b16 %v2030
    %v2561 = vunpack.c.l.b16 %v2031
    %v2562 = vunpack.c.l.b16 %v2032
    %v2563 = vunpack.c.l.b16 %v2033
    %v2564 = vunpack.c.l.b16 %v2034
    %v2565 = vunpack.c.l.b16 %v2035
    %v2566 = vunpack.c.l.b16 %v2036
    %v2567 = vunpack.c.l.b16 %v2037
    %v2568 = vunpack.c.l.b16 %v2038
    %v2569 = vunpack.c.l.b16 %v2039
    %v2570 = vunpack.c.l.b16 %v2040
    %v2571 = vunpack.c.l.b16 %v2041
    %v2572 = vunpack.c.l.b16 %v2042
    %v2573 = vunpack.c.l.b16 %v2043
    %v2574 = vunpack.c.l.b16 %v2044
    %v2575 = vunpack.c.l.b16 %v2045
    %v2576 = vunpack.c.l.b16 %v2046
    %v2577 = vunpack.c.l.b16 %v2047
    %v2578 = vunpack.c.l.b16 %v2048
    %v2579 = vunpack.c.l.b16 %v2049
    %v2580 = vunpack.c.l.b16 %v2050
    %v2581 = vunpack.c.l.b16 %v2051
    %v2582 = vunpack.c.l.b16 %v2052
    %v2583 = vunpack.c.l.b16 %v2053
    %v2584 = vunpack.c.l.b16 %v2054
    %v2585 = vunpack.c.l.b16 %v2055
    %v2586 = vunpack.c.l.b16 %v2056
    %v2587 = vunpack.c.l.b16 %v2057
    %v2588 = vunpack.c.l.b16 %v2058
    %v2589 = vunpack.c.l.b16 %v2059
    %v2590 = vunpack.c.l.b16 %v2060
    %v2591 = vunpack.c.l.b16 %v2061
    %v2592 = vunpack.c.l.b16 %v2062
    %v2593 = vunpack.c.l.b16 %v2063
    %v2594 = vunpack.c.l.b16 %v2064
    %v2595 = vunpack.c.l.b16 %v2065
    %v2596 = vunpack.c.l.b16 %v2066
    %v2597 = vunpack.c.l.b16 %v2067
    %v2598 = vunpack.c.l.b16 %v2068
    %v2599 = vunpack.c.l.b16 %v2069
    %v2600 = vunpack.c.l.b16 %v2070
    %v2601 = vunpack.c.l.b16 %v2071
    %v2602 = vunpack.c.l.b16 %v2072
    %v2603 = vunpack.c.l.b16 %v2073
    %v2604 = vunpack.c.l.b16 %v2074
    %v2605 = vunpack.c.l.b16 %v2075
    %v2606 = vunpack.c.l.b16 %v2076
    %v2607 = vunpack.c.l.b16 %v2077
    %v2608 = vunpack.c.l.b16 %v2078
    %v2609 = vunpack.c.l.b16 %v2079
    %v2610 = vunpack.c.l.b16 %v2080
    %v2611 = vunpack.c.l.b16 %v2081
    %v2612 = vunpack.c.l.b16 %v2082
    %v2613 = vunpack.c.l.b16 %v2083
    %v2614 = vunpack.c.l.b16 %v2084
    %v2615 = vunpack.c.l.b16 %v2085
    %v2616 = vunpack.c.l.b16 %v2086
    %v2617 = vunpack.c.l.b16 %v2087
    %v2618 = vunpack.c.l.b16 %v2088
    %v2619 = vunpack.c.l.b16 %v2089
    %v2620 = vunpack.c.l.b16 %v2090
    %v2621 = vunpack.c.l.b16 %v2091
    %v2622 = vunpack.c.l.b16 %v2092
    %v2623 = vunpack.c.l.b16 %v2093
    %v2624 = vunpack.c.l.b16 %v2094
    %v2625 = vunpack.c.l.b16 %v2095
    %v2626 = vunpack.c.l.b16 %v2096
    %v2627 = vunpack.c.l.b16 %v2097
    %v2628 = vunpack.c.l.b16 %v2098
    %v2629 = vunpack.c.l.b16 %v2099
    %v2630 = vunpack.c.l.b16 %v2100
    %v2631 = vunpack.c.l.b16 %v2101
    %v2632 = vunpack.c.l.b16 %v2102
    %v2633 = vunpack.c.l.b16 %v2103
    %v2634 = vunpack.c.l.b16 %v2104
    %v2635 = vunpack.c.l.b16 %v2105
    %v2636 = vunpack.c.l.b16 %v2106
    %v2637 = vunpack.c.l.b16 %v2107
    %v2638 = vunpack.c.l.b16 %v2108
    %v2639 = vunpack.c.l.b16 %v2109
    %v2640 = vunpack.c.l.b16 %v2110
    %v2641 = vunpack.c.l.b16 %v2111
    %v2642 = vunpack.c.l.b16 %v2112
    %v2643 = vunpack.c.l.b16 %v2113
    %v2644 = vunpack.c.l.b16 %v2114
    %v2645 = vunpack.c.l.b16 %v2115
    %v2646 = vunpack.c.l.b16 %v2116
    %v2647 = vunpack.c.l.b16 %v2117
    %v2648 = vunpack.c.l.b16 %v2118
    %v2649 = vunpack.c.l.b16 %v2119
    %v2650 = vunpack.c.l.b16 %v2120
    %v2651 = vunpack.c.l.b16 %v2121
    %v2652 = vunpack.c.l.b16 %v2122
    %v2653 = vunpack.c.l.b16 %v2123
    %v2654 = vunpack.c.l.b16 %v2124
    %v2655 = vunpack.c.l.b16 %v2125
    %v2656 = vunpack.c.l.b16 %v2126
    %v2657 = vunpack.c.l.b16 %v2127
    %v2658 = vunpack.c.l.b16 %v2128
    %v2659 = vunpack.c.l.b16 %v2129
    %v2660 = vunpack.c.l.b16 %v2130
    %v2661 = vunpack.c.l.b16 %v2131
    %v2662 = vunpack.c.l.b16 %v2132
    %v2663 = vunpack.c.l.b16 %v2133
    %v2664 = vunpack.c.l.b16 %v2134
    %v2665 = vunpack.c.l.b16 %v2135
    %v2666 = vunpack.c.l.b16 %v2136
    %v2667 = vunpack.c.l.b16 %v2137
    %v2668 = vunpack.c.l.b16 %v2138
    %v2669 = vunpack.c.l.b16 %v2139
    %v2670 = vunpack.c.l.b16 %v2140
    %v2671 = vunpack.c.l.b16 %v2141
    %v2672 = vunpack.c.l.b16 %v2142
    %v2673 = vunpack.c.l.b16 %v2143
    %v2674 = vunpack.c.l.b16 %v2144
    %v2675 = vunpack.c.l.b16 %v2145
    %v2676 = vunpack.c.l.b16 %v2146
    %v2677 = vunpack.c.l.b16 %v2147
    %v2678 = vunpack.c.l.b16 %v2148
    %v2679 = vunpack.c.l.b16 %v2149
    %v2680 = vunpack.c.l.b16 %v2150
    %v2681 = vunpack.c.l.b16 %v2151
    %v2682 = vunpack.c.l.b16 %v2152
    %v2683 = vunpack.c.l.b16 %v2153
    %v2684 = vunpack.c.l.b16 %v2154
    %v2685 = vunpack.c.l.b16 %v2155
    %v2686 = vunpack.c.l.b16 %v2156
    %v2687 = vunpack.c.l.b16 %v2157
    %v2688 = vunpack.c.l.b16 %v2158
    %v2689 = vunpack.c.l.b16 %v2159
    %v2690 = vunpack.c.l.b16 %v2160
    %v2691 = vunpack.c.l.b16 %v2161
    %v2692 = vunpack.c.l.b16 %v2162
    %v2693 = vunpack.c.l.b16 %v2163
    %v2694 = vunpack.c.l.b16 %v2164
    %v2695 = vunpack.c.l.b16 %v2165
    %v2696 = vunpack.c.l.b16 %v2166
    %v2697 = vunpack.c.l.b16 %v2167
    %v2698 = vunpack.c.l.b16 %v2168
    %v2699 = vunpack.c.l.b16 %v2169
    %v2700 = vunpack.c.l.b16 %v2170
    %v2701 = vunpack.c.l.b16 %v2171
    %v2702 = vunpack.c.l.b16 %v2172
    %v2703 = vunpack.c.l.b16 %v2173
    %v2704 = vunpack.c.l.b16 %v2174
    %v2705 = vunpack.c.l.b16 %v2175
    %v2706 = vunpack.c.l.b16 %v2176
    %v2707 = vunpack.c.l.b16 %v2177
    %v2708 = vunpack.c.l.b16 %v2178
    %v2709 = vunpack.c.l.b16 %v2179
    %v2710 = vunpack.c.l.b16 %v2180
    %v2711 = vunpack.c.l.b16 %v2181
    %v2712 = vunpack.c.l.b16 %v2182
    %v2713 = vunpack.c.l.b16 %v2183
    %v2714 = vunpack.c.l.b16 %v2184
    %v2715 = vunpack.c.l.b16 %v2185
    %v2716 = vunpack.c.l.b16 %v2186
    %v2717 = vunpack.c.l.b16 %v2187
    %v2718 = vunpack.c.l.b16 %v2188
    %v2719 = vunpack.c.l.b16 %v2189
    %v2720 = vunpack.c.l.b16 %v2190
    %v2721 = vunpack.c.l.b16 %v2191
    %v2722 = vunpack.c.l.b16 %v2192
    %v2723 = vunpack.c.l.b16 %v2193
    %v2724 = vunpack.c.l.b16 %v2194
    %v2725 = vunpack.c.l.b16 %v2195
    %v2726 = vunpack.c.l.b16 %v2196
    %v2727 = vunpack.c.l.b16 %v2197
    %v2728 = vunpack.c.l.b16 %v2198
    %v2729 = vunpack.c.l.b16 %v2199
    %v2730 = vunpack.c.l.b16 %v2200
    %v2731 = vunpack.c.l.b16 %v2201
    %v2732 = vunpack.c.l.b16 %v2202
    %v2733 = vunpack.c.l.b16 %v2203
    %v2734 = vunpack.c.l.b16 %v2204
    %v2735 = vunpack.c.l.b16 %v2205
    %v2736 = vunpack.c.l.b16 %v2206
    %v2737 = vunpack.c.l.b16 %v2207
    %v2738 = vunpack.c.l.b16 %v2208
    %v2739 = vunpack.c.l.b16 %v2209
    %v2740 = vunpack.c.l.b16 %v2210
    %v2741 = vunpack.c.l.b16 %v2211
    %v2742 = vunpack.c.l.b16 %v2212
    %v2743 = vunpack.c.l.b16 %v2213
    %v2744 = vunpack.c.l.b16 %v2214
    %v2745 = vunpack.c.l.b16 %v2215
    %v2746 = vunpack.c.l.b16 %v2216
    %v2747 = vunpack.c.l.b16 %v2217
    %v2748 = vunpack.c.l.b16 %v2218
    %v2749 = vunpack.c.l.b16 %v2219
    %v2750 = vunpack.c.l.b16 %v2220
    %v2751 = vunpack.c.l.b16 %v2221
    %v2752 = vunpack.c.l.b16 %v2222
    %v2753 = vunpack.c.l.b16 %v2223
    %v2754 = vunpack.c.l.b16 %v2224
    %v2755 = vunpack.c.l.b16 %v2225
    %v2756 = vunpack.c.l.b16 %v2226
    %v2757 = vunpack.c.l.b16 %v2227
    %v2758 = vunpack.c.l.b16 %v2228
    %v2759 = vunpack.c.l.b16 %v2229
    %v2760 = vunpack.c.l.b16 %v2230
    %v2761 = vunpack.c.l.b16 %v2231
    %v2762 = vunpack.c.l.b16 %v2232
    %v2763 = vunpack.c.l.b16 %v2233
    %v2764 = vunpack.c.l.b16 %v2234
    %v2765 = vunpack.c.l.b16 %v2235
    %v2766 = vunpack.c.l.b16 %v2236
    %v2767 = vunpack.c.l.b16 %v2237
    %v2768 = vunpack.c.l.b16 %v2238
    %v2769 = vunpack.c.l.b16 %v2239
    %v2770 = vunpack.c.l.b16 %v2240
    %v2771 = vunpack.c.l.b16 %v2241
    %v2772 = vunpack.c.l.b16 %v2242
    %v2773 = vunpack.c.l.b16 %v2243
    %v2774 = vunpack.c.l.b16 %v2244
    %v2775 = vunpack.c.l.b16 %v2245
    %v2776 = vunpack.c.l.b16 %v2246
    %v2777 = vunpack.c.l.b16 %v2247
    %v2778 = vunpack.c.l.b16 %v2248
    %v2779 = vunpack.c.l.b16 %v2249
    %v2780 = vunpack.c.l.b16 %v2250
    %v2781 = vunpack.c.l.b16 %v2251
    %v2782 = vunpack.c.l.b16 %v2252
    %v2783 = vunpack.c.l.b16 %v2253
    %v2784 = vunpack.c.l.b16 %v2254
    %v2785 = vunpack.c.l.b16 %v2255
    %v2786 = vunpack.c.l.b16 %v2256
    %v2787 = vunpack.c.l.b16 %v2257
    %v2788 = vunpack.c.l.b16 %v2258
    %v2789 = vunpack.c.l.b16 %v2259
    %v2790 = vunpack.c.l.b16 %v2260
    %v2791 = vunpack.c.l.b16 %v2261
    %v2792 = vunpack.c.l.b16 %v2262
    %v2793 = vunpack.c.l.b16 %v2263
    %v2794 = vunpack.c.l.b16 %v2264
    %v2795 = vunpack.c.l.b16 %v2265
    %v2796 = vunpack.c.l.b16 %v2266
    %v2797 = vunpack.c.l.b16 %v2267
    %v2798 = vunpack.c.l.b16 %v2268
    %v2799 = vunpack.c.l.b16 %v2269
    %v2800 = vunpack.c.l.b16 %v2270
    %v2801 = vunpack.c.l.b16 %v2271
    %v2802 = vunpack.c.l.b16 %v2272
    %v2803 = vunpack.c.l.b16 %v2273
    %v2804 = vunpack.c.l.b16 %v2274
    %v2805 = vunpack.c.l.b16 %v2275
    %v2806 = vunpack.c.l.b16 %v2276
    %v2807 = vunpack.c.l.b16 %v2277
    %v2808 = vunpack.c.l.b16 %v2278
    %v2809 = vpack.c.b16 %v2554, %v2553
    %v2810 = vpack.c.b16 %v2556, %v2555
    %v2811 = vpack.c.b16 %v2558, %v2557
    %v2812 = vpack.c.b16 %v2560, %v2559
    %v2813 = vpack.c.b16 %v2562, %v2561
    %v2814 = vpack.c.b16 %v2564, %v2563
    %v2815 = vpack.c.b16 %v2566, %v2565
    %v2816 = vpack.c.b16 %v2568, %v2567
    %v2817 = vpack.c.b16 %v2570, %v2569
    %v2818 = vpack.c.b16 %v2572, %v2571
    %v2819 = vpack.c.b16 %v2574, %v2573
    %v2820 = vpack.c.b16 %v2576, %v2575
    %v2821 = vpack.c.b16 %v2578, %v2577
    %v2822 = vpack.c.b16 %v2580, %v2579
    %v2823 = vpack.c.b16 %v2582, %v2581
    %v2824 = vpack.c.b16 %v2584, %v2583
    %v2825 = vpack.c.b16 %v2586, %v2585
    %v2826 = vpack.c.b16 %v2588, %v2587
    %v2827 = vpack.c.b16 %v2590, %v2589
    %v2828 = vpack.c.b16 %v2592, %v2591
    %v2829 = vpack.c.b16 %v2594, %v2593
    %v2830 = vpack.c.b16 %v2596, %v2595
    %v2831 = vpack.c.b16 %v2598, %v2597
    %v2832 = vpack.c.b16 %v2600, %v2599
    %v2833 = vpack.c.b16 %v2602, %v2601
    %v2834 = vpack.c.b16 %v2604, %v2603
    %v2835 = vpack.c.b16 %v2606, %v2605
    %v2836 = vpack.c.b16 %v2608, %v2607
    %v2837 = vpack.c.b16 %v2610, %v2609
    %v2838 = vpack.c.b16 %v2612, %v2611
    %v2839 = vpack.c.b16 %v2614, %v2613
    %v2840 = vpack.c.b16 %v2616, %v2615
    %v2841 = vpack.c.b16 %v2618, %v2617
    %v2842 = vpack.c.b16 %v2620, %v2619
    %v2843 = vpack.c.b16 %v2622, %v2621
    %v2844 = vpack.c.b16 %v2624, %v2623
    %v2845 = vpack.c.b16 %v2626, %v2625
    %v2846 = vpack.c.b16 %v2628, %v2627
    %v2847 = vpack.c.b16 %v2630, %v2629
    %v2848 = vpack.c.b16 %v2632, %v2631
    %v2849 = vpack.c.b16 %v2634, %v2633
    %v2850 = vpack.c.b16 %v2636, %v2635
    %v2851 = vpack.c.b16 %v2638, %v2637
    %v2852 = vpack.c.b16 %v2640, %v2639
    %v2853 = vpack.c.b16 %v2642, %v2641
    %v2854 = vpack.c.b16 %v2644, %v2643
    %v2855 = vpack.c.b16 %v2646, %v2645
    %v2856 = vpack.c.b16 %v2648, %v2647
    %v2857 = vpack.c.b16 %v2650, %v2649
    %v2858 = vpack.c.b16 %v2652, %v2651
    %v2859 = vpack.c.b16 %v2654, %v2653
    %v2860 = vpack.c.b16 %v2656, %v2655
    %v2861 = vpack.c.b16 %v2658, %v2657
    %v2862 = vpack.c.b16 %v2660, %v2659
    %v2863 = vpack.c.b16 %v2662, %v2661
    %v2864 = vpack.c.b16 %v2664, %v2663
    %v2865 = vpack.c.b16 %v2666, %v2665
    %v2866 = vpack.c.b16 %v2668, %v2667
    %v2867 = vpack.c.b16 %v2670, %v2669
    %v2868 = vpack.c.b16 %v2672, %v2671
    %v2869 = vpack.c.b16 %v2674, %v2673
    %v2870 = vpack.c.b16 %v2676, %v2675
    %v2871 = vpack.c.b16 %v2678, %v2677
    %v2872 = vpack.c.b16 %v2680, %v2679
    %v2873 = vpack.c.b16 %v2682, %v2681
    %v2874 = vpack.c.b16 %v2684, %v2683
    %v2875 = vpack.c.b16 %v2686, %v2685
    %v2876 = vpack.c.b16 %v2688, %v2687
    %v2877 = vpack.c.b16 %v2690, %v2689
    %v2878 = vpack.c.b16 %v2692, %v2691
    %v2879 = vpack.c.b16 %v2694, %v2693
    %v2880 = vpack.c.b16 %v2696, %v2695
    %v2881 = vpack.c.b16 %v2698, %v2697
    %v2882 = vpack.c.b16 %v2700, %v2699
    %v2883 = vpack.c.b16 %v2702, %v2701
    %v2884 = vpack.c.b16 %v2704, %v2703
    %v2885 = vpack.c.b16 %v2706, %v2705
    %v2886 = vpack.c.b16 %v2708, %v2707
    %v2887 = vpack.c.b16 %v2710, %v2709
    %v2888 = vpack.c.b16 %v2712, %v2711
    %v2889 = vpack.c.b16 %v2714, %v2713
    %v2890 = vpack.c.b16 %v2716, %v2715
    %v2891 = vpack.c.b16 %v2718, %v2717
    %v2892 = vpack.c.b16 %v2720, %v2719
    %v2893 = vpack.c.b16 %v2722, %v2721
    %v2894 = vpack.c.b16 %v2724, %v2723
    %v2895 = vpack.c.b16 %v2726, %v2725
    %v2896 = vpack.c.b16 %v2728, %v2727
    %v2897 = vpack.c.b16 %v2730, %v2729
    %v2898 = vpack.c.b16 %v2732, %v2731
    %v2899 = vpack.c.b16 %v2734, %v2733
    %v2900 = vpack.c.b16 %v2736, %v2735
    %v2901 = vpack.c.b16 %v2738, %v2737
    %v2902 = vpack.c.b16 %v2740, %v2739
    %v2903 = vpack.c.b16 %v2742, %v2741
    %v2904 = vpack.c.b16 %v2744, %v2743
    %v2905 = vpack.c.b16 %v2746, %v2745
    %v2906 = vpack.c.b16 %v2748, %v2747
    %v2907 = vpack.c.b16 %v2750, %v2749
    %v2908 = vpack.c.b16 %v2752, %v2751
    %v2909 = vpack.c.b16 %v2754, %v2753
    %v2910 = vpack.c.b16 %v2756, %v2755
    %v2911 = vpack.c.b16 %v2758, %v2757
    %v2912 = vpack.c.b16 %v2760, %v2759
    %v2913 = vpack.c.b16 %v2762, %v2761
    %v2914 = vpack.c.b16 %v2764, %v2763
    %v2915 = vpack.c.b16 %v2766, %v2765
    %v2916 = vpack.c.b16 %v2768, %v2767
    %v2917 = vpack.c.b16 %v2770, %v2769
    %v2918 = vpack.c.b16 %v2772, %v2771
    %v2919 = vpack.c.b16 %v2774, %v2773
    %v2920 = vpack.c.b16 %v2776, %v2775
    %v2921 = vpack.c.b16 %v2778, %v2777
    %v2922 = vpack.c.b16 %v2780, %v2779
    %v2923 = vpack.c.b16 %v2782, %v2781
    %v2924 = vpack.c.b16 %v2784, %v2783
    %v2925 = vpack.c.b16 %v2786, %v2785
    %v2926 = vpack.c.b16 %v2788, %v2787
    %v2927 = vpack.c.b16 %v2790, %v2789
    %v2928 = vpack.c.b16 %v2792, %v2791
    %v2929 = vpack.c.b16 %v2794, %v2793
    %v2930 = vpack.c.b16 %v2796, %v2795
    %v2931 = vpack.c.b16 %v2798, %v2797
    %v2932 = vpack.c.b16 %v2800, %v2799
    %v2933 = vpack.c.b16 %v2802, %v2801
    %v2934 = vpack.c.b16 %v2804, %v2803
    %v2935 = vpack.c.b16 %v2806, %v2805
    %v2936 = vpack.c.b16 %v2808, %v2807
    %3065 = vmatpush.bf16.msra.mxu0 %v2816
    %3066 = vmatpush.bf16.msra.mxu0 %v2815
    %3067 = vmatpush.bf16.msra.mxu0 %v2814
    %3068 = vmatpush.bf16.msra.mxu0 %v2813
    %3069 = vmatpush.bf16.msra.mxu0 %v2812
    %3070 = vmatpush.bf16.msra.mxu0 %v2811
    %3071 = vmatpush.bf16.msra.mxu0 %v2810
    %3072 = vmatpush.bf16.msra.mxu0 %v2809
    %3073 = vmatmul.bf16.gmra.mxu0 %v2279
    %v3074 = vpop.f32.mrf.mxu0
    %v3075 = vadd.f32 %v2296, %v3074
    %v3076 = vpop.f32.mrf.mxu0
    %v3077 = vadd.f32 %v2296, %v3076
    %3078 = vdwg.mxu0
    %3079 = vmatpush.bf16.msra.mxu0 %v2824
    %3080 = vmatpush.bf16.msra.mxu0 %v2823
    %3081 = vmatpush.bf16.msra.mxu0 %v2822
    %3082 = vmatpush.bf16.msra.mxu0 %v2821
    %3083 = vmatpush.bf16.msra.mxu0 %v2820
    %3084 = vmatpush.bf16.msra.mxu0 %v2819
    %3085 = vmatpush.bf16.msra.mxu0 %v2818
    %3086 = vmatpush.bf16.msra.mxu0 %v2817
    %3087 = vmatmul.bf16.gmra.mxu0 %v2280
    %v3088 = vpop.f32.mrf.mxu0
    %v3089 = vadd.f32 %v3075, %v3088
    %v3090 = vpop.f32.mrf.mxu0
    %v3091 = vadd.f32 %v3077, %v3090
    %3092 = vdwg.mxu0
    %3093 = vmatpush.bf16.msra.mxu0 %v2832
    %3094 = vmatpush.bf16.msra.mxu0 %v2831
    %3095 = vmatpush.bf16.msra.mxu0 %v2830
    %3096 = vmatpush.bf16.msra.mxu0 %v2829
    %3097 = vmatpush.bf16.msra.mxu0 %v2828
    %3098 = vmatpush.bf16.msra.mxu0 %v2827
    %3099 = vmatpush.bf16.msra.mxu0 %v2826
    %3100 = vmatpush.bf16.msra.mxu0 %v2825
    %3101 = vmatmul.bf16.gmra.mxu0 %v2281
    %v3102 = vpop.f32.mrf.mxu0
    %v3103 = vadd.f32 %v3089, %v3102
    %v3104 = vpop.f32.mrf.mxu0
    %v3105 = vadd.f32 %v3091, %v3104
    %3106 = vdwg.mxu0
    %3107 = vmatpush.bf16.msra.mxu0 %v2840
    %3108 = vmatpush.bf16.msra.mxu0 %v2839
    %3109 = vmatpush.bf16.msra.mxu0 %v2838
    %3110 = vmatpush.bf16.msra.mxu0 %v2837
    %3111 = vmatpush.bf16.msra.mxu0 %v2836
    %3112 = vmatpush.bf16.msra.mxu0 %v2835
    %3113 = vmatpush.bf16.msra.mxu0 %v2834
    %3114 = vmatpush.bf16.msra.mxu0 %v2833
    %3115 = vmatmul.bf16.gmra.mxu0 %v2282
    %v3116 = vpop.f32.mrf.mxu0
    %v3117 = vadd.f32 %v3103, %v3116
    %v3118 = vpop.f32.mrf.mxu0
    %v3119 = vadd.f32 %v3105, %v3118
    %3120 = vdwg.mxu0
    %3121 = vmatpush.bf16.msra.mxu0 %v2848
    %3122 = vmatpush.bf16.msra.mxu0 %v2847
    %3123 = vmatpush.bf16.msra.mxu0 %v2846
    %3124 = vmatpush.bf16.msra.mxu0 %v2845
    %3125 = vmatpush.bf16.msra.mxu0 %v2844
    %3126 = vmatpush.bf16.msra.mxu0 %v2843
    %3127 = vmatpush.bf16.msra.mxu0 %v2842
    %3128 = vmatpush.bf16.msra.mxu0 %v2841
    %3129 = vmatmul.bf16.gmra.mxu0 %v2283
    %v3130 = vpop.f32.mrf.mxu0
    %v3131 = vadd.f32 %v3117, %v3130
    %v3132 = vpop.f32.mrf.mxu0
    %v3133 = vadd.f32 %v3119, %v3132
    %3134 = vdwg.mxu0
    %3135 = vmatpush.bf16.msra.mxu0 %v2856
    %3136 = vmatpush.bf16.msra.mxu0 %v2855
    %3137 = vmatpush.bf16.msra.mxu0 %v2854
    %3138 = vmatpush.bf16.msra.mxu0 %v2853
    %3139 = vmatpush.bf16.msra.mxu0 %v2852
    %3140 = vmatpush.bf16.msra.mxu0 %v2851
    %3141 = vmatpush.bf16.msra.mxu0 %v2850
    %3142 = vmatpush.bf16.msra.mxu0 %v2849
    %3143 = vmatmul.bf16.gmra.mxu0 %v2284
    %v3144 = vpop.f32.mrf.mxu0
    %v3145 = vadd.f32 %v3131, %v3144
    %v3146 = vpop.f32.mrf.mxu0
    %v3147 = vadd.f32 %v3133, %v3146
    %3148 = vdwg.mxu0
    %3149 = vmatpush.bf16.msra.mxu0 %v2864
    %3150 = vmatpush.bf16.msra.mxu0 %v2863
    %3151 = vmatpush.bf16.msra.mxu0 %v2862
    %3152 = vmatpush.bf16.msra.mxu0 %v2861
    %3153 = vmatpush.bf16.msra.mxu0 %v2860
    %3154 = vmatpush.bf16.msra.mxu0 %v2859
    %3155 = vmatpush.bf16.msra.mxu0 %v2858
    %3156 = vmatpush.bf16.msra.mxu0 %v2857
    %3157 = vmatmul.bf16.gmra.mxu0 %v2285
    %v3158 = vpop.f32.mrf.mxu0
    %v3159 = vadd.f32 %v3145, %v3158
    %v3160 = vpop.f32.mrf.mxu0
    %v3161 = vadd.f32 %v3147, %v3160
    %3162 = vdwg.mxu0
    %3163 = vmatpush.bf16.msra.mxu0 %v2872
    %3164 = vmatpush.bf16.msra.mxu0 %v2871
    %3165 = vmatpush.bf16.msra.mxu0 %v2870
    %3166 = vmatpush.bf16.msra.mxu0 %v2869
    %3167 = vmatpush.bf16.msra.mxu0 %v2868
    %3168 = vmatpush.bf16.msra.mxu0 %v2867
    %3169 = vmatpush.bf16.msra.mxu0 %v2866
    %3170 = vmatpush.bf16.msra.mxu0 %v2865
    %3171 = vmatmul.bf16.gmra.mxu0 %v2286
    %v3172 = vpop.f32.mrf.mxu0
    %v3173 = vadd.f32 %v3159, %v3172
    %v3174 = vpop.f32.mrf.mxu0
    %v3175 = vadd.f32 %v3161, %v3174
    %3176 = vdwg.mxu0
    %3177 = vmatpush.bf16.msra.mxu0 %v2880
    %3178 = vmatpush.bf16.msra.mxu0 %v2879
    %3179 = vmatpush.bf16.msra.mxu0 %v2878
    %3180 = vmatpush.bf16.msra.mxu0 %v2877
    %3181 = vmatpush.bf16.msra.mxu0 %v2876
    %3182 = vmatpush.bf16.msra.mxu0 %v2875
    %3183 = vmatpush.bf16.msra.mxu0 %v2874
    %3184 = vmatpush.bf16.msra.mxu0 %v2873
    %3185 = vmatmul.bf16.gmra.mxu0 %v2287
    %v3186 = vpop.f32.mrf.mxu0
    %v3187 = vadd.f32 %v3173, %v3186
    %v3188 = vpop.f32.mrf.mxu0
    %v3189 = vadd.f32 %v3175, %v3188
    %3190 = vdwg.mxu0
    %3191 = vmatpush.bf16.msra.mxu0 %v2888
    %3192 = vmatpush.bf16.msra.mxu0 %v2887
    %3193 = vmatpush.bf16.msra.mxu0 %v2886
    %3194 = vmatpush.bf16.msra.mxu0 %v2885
    %3195 = vmatpush.bf16.msra.mxu0 %v2884
    %3196 = vmatpush.bf16.msra.mxu0 %v2883
    %3197 = vmatpush.bf16.msra.mxu0 %v2882
    %3198 = vmatpush.bf16.msra.mxu0 %v2881
    %3199 = vmatmul.bf16.gmra.mxu0 %v2288
    %v3200 = vpop.f32.mrf.mxu0
    %v3201 = vadd.f32 %v3187, %v3200
    %v3202 = vpop.f32.mrf.mxu0
    %v3203 = vadd.f32 %v3189, %v3202
    %3204 = vdwg.mxu0
    %3205 = vmatpush.bf16.msra.mxu0 %v2896
    %3206 = vmatpush.bf16.msra.mxu0 %v2895
    %3207 = vmatpush.bf16.msra.mxu0 %v2894
    %3208 = vmatpush.bf16.msra.mxu0 %v2893
    %3209 = vmatpush.bf16.msra.mxu0 %v2892
    %3210 = vmatpush.bf16.msra.mxu0 %v2891
    %3211 = vmatpush.bf16.msra.mxu0 %v2890
    %3212 = vmatpush.bf16.msra.mxu0 %v2889
    %3213 = vmatmul.bf16.gmra.mxu0 %v2289
    %v3214 = vpop.f32.mrf.mxu0
    %v3215 = vadd.f32 %v3201, %v3214
    %v3216 = vpop.f32.mrf.mxu0
    %v3217 = vadd.f32 %v3203, %v3216
    %3218 = vdwg.mxu0
    %3219 = vmatpush.bf16.msra.mxu0 %v2904
    %3220 = vmatpush.bf16.msra.mxu0 %v2903
    %3221 = vmatpush.bf16.msra.mxu0 %v2902
    %3222 = vmatpush.bf16.msra.mxu0 %v2901
    %3223 = vmatpush.bf16.msra.mxu0 %v2900
    %3224 = vmatpush.bf16.msra.mxu0 %v2899
    %3225 = vmatpush.bf16.msra.mxu0 %v2898
    %3226 = vmatpush.bf16.msra.mxu0 %v2897
    %3227 = vmatmul.bf16.gmra.mxu0 %v2290
    %v3228 = vpop.f32.mrf.mxu0
    %v3229 = vadd.f32 %v3215, %v3228
    %v3230 = vpop.f32.mrf.mxu0
    %v3231 = vadd.f32 %v3217, %v3230
    %3232 = vdwg.mxu0
    %3233 = vmatpush.bf16.msra.mxu0 %v2912
    %3234 = vmatpush.bf16.msra.mxu0 %v2911
    %3235 = vmatpush.bf16.msra.mxu0 %v2910
    %3236 = vmatpush.bf16.msra.mxu0 %v2909
    %3237 = vmatpush.bf16.msra.mxu0 %v2908
    %3238 = vmatpush.bf16.msra.mxu0 %v2907
    %3239 = vmatpush.bf16.msra.mxu0 %v2906
    %3240 = vmatpush.bf16.msra.mxu0 %v2905
    %3241 = vmatmul.bf16.gmra.mxu0 %v2291
    %v3242 = vpop.f32.mrf.mxu0
    %v3243 = vadd.f32 %v3229, %v3242
    %v3244 = vpop.f32.mrf.mxu0
    %v3245 = vadd.f32 %v3231, %v3244
    %3246 = vdwg.mxu0
    %3247 = vmatpush.bf16.msra.mxu0 %v2920
    %3248 = vmatpush.bf16.msra.mxu0 %v2919
    %3249 = vmatpush.bf16.msra.mxu0 %v2918
    %3250 = vmatpush.bf16.msra.mxu0 %v2917
    %3251 = vmatpush.bf16.msra.mxu0 %v2916
    %3252 = vmatpush.bf16.msra.mxu0 %v2915
    %3253 = vmatpush.bf16.msra.mxu0 %v2914
    %3254 = vmatpush.bf16.msra.mxu0 %v2913
    %3255 = vmatmul.bf16.gmra.mxu0 %v2292
    %v3256 = vpop.f32.mrf.mxu0
    %v3257 = vadd.f32 %v3243, %v3256
    %v3258 = vpop.f32.mrf.mxu0
    %v3259 = vadd.f32 %v3245, %v3258
    %3260 = vdwg.mxu0
    %3261 = vmatpush.bf16.msra.mxu0 %v2928
    %3262 = vmatpush.bf16.msra.mxu0 %v2927
    %3263 = vmatpush.bf16.msra.mxu0 %v2926
    %3264 = vmatpush.bf16.msra.mxu0 %v2925
    %3265 = vmatpush.bf16.msra.mxu0 %v2924
    %3266 = vmatpush.bf16.msra.mxu0 %v2923
    %3267 = vmatpush.bf16.msra.mxu0 %v2922
    %3268 = vmatpush.bf16.msra.mxu0 %v2921
    %3269 = vmatmul.bf16.gmra.mxu0 %v2293
    %v3270 = vpop.f32.mrf.mxu0
    %v3271 = vadd.f32 %v3257, %v3270
    %v3272 = vpop.f32.mrf.mxu0
    %v3273 = vadd.f32 %v3259, %v3272
    %3274 = vdwg.mxu0
    %3275 = vmatpush.bf16.msra.mxu0 %v2936
    %3276 = vmatpush.bf16.msra.mxu0 %v2935
    %3277 = vmatpush.bf16.msra.mxu0 %v2934
    %3278 = vmatpush.bf16.msra.mxu0 %v2933
    %3279 = vmatpush.bf16.msra.mxu0 %v2932
    %3280 = vmatpush.bf16.msra.mxu0 %v2931
    %3281 = vmatpush.bf16.msra.mxu0 %v2930
    %3282 = vmatpush.bf16.msra.mxu0 %v2929
    %3283 = vmatmul.bf16.gmra.mxu0 %v2294
    %v3284 = vpop.f32.mrf.mxu0
    %v3285 = vadd.f32 %v3271, %v3284
    %v3286 = vpop.f32.mrf.mxu0
    %v3287 = vadd.f32 %v3273, %v3286
    %3288 = vdwg.mxu0
    %v3289 = vadd.f32 %v959, %v3285
    %v3290 = vadd.f32 %v960, %v3287
    %v3291 = vld [vmem:[%s1 + $0x8] sm:$0x1]
    %v3292 = vld [vmem:[%s1 + $0x9] sm:$0x1]
    %3293 = vadd.xlane.f32.xlu0 %v3289
    %v3294 = vpop.xlane.xlu0 %3293
    %3295 = vadd.xlane.f32.xlu0 %v3290
    %v3296 = vpop.xlane.xlu0 %3295
    %v3297 = vmul.f32 %v3294, %v918
    %v3298 = vmul.f32 %v3296, %v918
    %v3299 = vsub.f32 %v3289, %v3297
    %v3300 = vsub.f32 %v3290, %v3298
    %v3301 = vmul.f32 %v3299, %v3299
    %v3302 = vmul.f32 %v3300, %v3300
    %3303 = vadd.xlane.f32.xlu0 %v3301
    %v3304 = vpop.xlane.xlu0 %3303
    %3305 = vadd.xlane.f32.xlu0 %v3302
    %v3306 = vpop.xlane.xlu0 %3305
    %v3307 = vmul.f32 %v3304, %v918
    %v3308 = vmul.f32 %v3306, %v918
    %v3309 = vadd.f32 %v3307, 1e-05
    %v3310 = vadd.f32 %v3308, 1e-05
    %v3311 = vrsqrt.pop %v3309
    %v3312 = vmul.f32 %v3311, %v3309
    %v3313 = vmul.f32 %v3312, %v3311
    %v3314 = vmul.f32 0.5, %v3313
    %v3315 = vsub.f32 1.5, %v3314
    %v3316 = vmul.f32 %v3311, %v3315
    %vm3317 = vweird.f32 %v3309
    %vm3318 = vweird.f32 %v3311
    %vm3319 = vmor %vm3317, %vm3318
    %v3320 = vsel %vm3319, %v3311, %v3316
    %v3321 = vrsqrt.pop %v3310
    %v3322 = vmul.f32 %v3321, %v3310
    %v3323 = vmul.f32 %v3322, %v3321
    %v3324 = vmul.f32 0.5, %v3323
    %v3325 = vsub.f32 1.5, %v3324
    %v3326 = vmul.f32 %v3321, %v3325
    %vm3327 = vweird.f32 %v3310
    %vm3328 = vweird.f32 %v3321
    %vm3329 = vmor %vm3327, %vm3328
    %v3330 = vsel %vm3329, %v3321, %v3326
    %v3331 = vmul.f32 %v3299, %v3320
    %v3332 = vmul.f32 %v3300, %v3330
    %v3333 = vperm.slane %v3291, 0
    %v3334 = vmul.f32 %v3331, %v3333
    %v3335 = vmul.f32 %v3332, %v3333
    %v3336 = vperm.slane %v3292, 0
    %v3337 = vadd.f32 %v3334, %v3336
    %v3338 = vadd.f32 %v3335, %v3336
    %v3339 = vld [vmem:[%s1 + $0xa] sm:$0x1]
    %v3340 = vld [vmem:[%s1 + $0xb] sm:$0x1]
    %3341 = vadd.xlane.f32.xlu0 %v3337
    %v3342 = vpop.xlane.xlu0 %3341
    %3343 = vadd.xlane.f32.xlu0 %v3338
    %v3344 = vpop.xlane.xlu0 %3343
    %v3345 = vmul.f32 %v3342, %v918
    %v3346 = vmul.f32 %v3344, %v918
    %v3347 = vsub.f32 %v3337, %v3345
    %v3348 = vsub.f32 %v3338, %v3346
    %v3349 = vmul.f32 %v3347, %v3347
    %v3350 = vmul.f32 %v3348, %v3348
    %3351 = vadd.xlane.f32.xlu0 %v3349
    %v3352 = vpop.xlane.xlu0 %3351
    %3353 = vadd.xlane.f32.xlu0 %v3350
    %v3354 = vpop.xlane.xlu0 %3353
    %v3355 = vmul.f32 %v3352, %v918
    %v3356 = vmul.f32 %v3354, %v918
    %v3357 = vadd.f32 %v3355, 1e-05
    %v3358 = vadd.f32 %v3356, 1e-05
    %v3359 = vrsqrt.pop %v3357
    %v3360 = vmul.f32 %v3359, %v3357
    %v3361 = vmul.f32 %v3360, %v3359
    %v3362 = vmul.f32 0.5, %v3361
    %v3363 = vsub.f32 1.5, %v3362
    %v3364 = vmul.f32 %v3359, %v3363
    %vm3365 = vweird.f32 %v3357
    %vm3366 = vweird.f32 %v3359
    %vm3367 = vmor %vm3365, %vm3366
    %v3368 = vsel %vm3367, %v3359, %v3364
    %v3369 = vrsqrt.pop %v3358
    %v3370 = vmul.f32 %v3369, %v3358
    %v3371 = vmul.f32 %v3370, %v3369
    %v3372 = vmul.f32 0.5, %v3371
    %v3373 = vsub.f32 1.5, %v3372
    %v3374 = vmul.f32 %v3369, %v3373
    %vm3375 = vweird.f32 %v3358
    %vm3376 = vweird.f32 %v3369
    %vm3377 = vmor %vm3375, %vm3376
    %v3378 = vsel %vm3377, %v3369, %v3374
    %v3379 = vmul.f32 %v3347, %v3368
    %v3380 = vmul.f32 %v3348, %v3378
    %v3381 = vperm.slane %v3339, 0
    %v3382 = vmul.f32 %v3379, %v3381
    %v3383 = vmul.f32 %v3380, %v3381
    %v3384 = vperm.slane %v3340, 0
    %v3385 = vadd.f32 %v3382, %v3384
    %v3386 = vadd.f32 %v3383, %v3384
    %s3387 = smul.u32 4, 16
    %s3388 = smul.u32 %s3387, 25
    %s3389 = sshll.u32 %s3388, 4
    %3390 = dma.done [#allocation4], %s3389
    %v3391 = vld [vmem:[#allocation2] sm:$0xff]
    %v3392 = vld [vmem:[#allocation2 + $0x8] sm:$0xf]
    %v3393 = vld [vmem:[#allocation2 + $0x64] sm:$0xff]
    %v3394 = vld [vmem:[#allocation2 + $0x6c] sm:$0xf]
    %v3395 = vld [vmem:[#allocation2 + $0xc8] sm:$0xff]
    %v3396 = vld [vmem:[#allocation2 + $0xd0] sm:$0xf]
    %v3397 = vld [vmem:[#allocation2 + $0x12c] sm:$0xff]
    %v3398 = vld [vmem:[#allocation2 + $0x134] sm:$0xf]
    %v3399 = vld [vmem:[#allocation2 + $0x190] sm:$0xff]
    %v3400 = vld [vmem:[#allocation2 + $0x198] sm:$0xf]
    %v3401 = vld [vmem:[#allocation2 + $0x1f4] sm:$0xff]
    %v3402 = vld [vmem:[#allocation2 + $0x1fc] sm:$0xf]
    %v3403 = vld [vmem:[#allocation2 + $0x258] sm:$0xff]
    %v3404 = vld [vmem:[#allocation2 + $0x260] sm:$0xf]
    %v3405 = vld [vmem:[#allocation2 + $0x2bc] sm:$0xff]
    %v3406 = vld [vmem:[#allocation2 + $0x2c4] sm:$0xf]
    %v3407 = vld [vmem:[#allocation2 + $0x320] sm:$0xff]
    %v3408 = vld [vmem:[#allocation2 + $0x328] sm:$0xf]
    %v3409 = vld [vmem:[#allocation2 + $0x384] sm:$0xff]
    %v3410 = vld [vmem:[#allocation2 + $0x38c] sm:$0xf]
    %v3411 = vld [vmem:[#allocation2 + $0x3e8] sm:$0xff]
    %v3412 = vld [vmem:[#allocation2 + $0x3f0] sm:$0xf]
    %v3413 = vld [vmem:[#allocation2 + $0x44c] sm:$0xff]
    %v3414 = vld [vmem:[#allocation2 + $0x454] sm:$0xf]
    %v3415 = vld [vmem:[#allocation2 + $0x4b0] sm:$0xff]
    %v3416 = vld [vmem:[#allocation2 + $0x4b8] sm:$0xf]
    %v3417 = vld [vmem:[#allocation2 + $0x514] sm:$0xff]
    %v3418 = vld [vmem:[#allocation2 + $0x51c] sm:$0xf]
    %v3419 = vld [vmem:[#allocation2 + $0x578] sm:$0xff]
    %v3420 = vld [vmem:[#allocation2 + $0x580] sm:$0xf]
    %v3421 = vld [vmem:[#allocation2 + $0x5dc] sm:$0xff]
    %v3422 = vld [vmem:[#allocation2 + $0x5e4] sm:$0xf]
    %v3423 = vld [vmem:[%s1 + $0xc] sm:$0x1]
    %v3424 = vld [vmem:[%s1 + $0xd] sm:$0x1]
    %v3425 = vld [vmem:[%s1 + $0xe] sm:$0x1]
    %v3426 = vld [vmem:[#allocation2 + $0xc] sm:$0xf]
    %v3427 = vld [vmem:[#allocation2 + $0x70] sm:$0xf]
    %v3428 = vld [vmem:[#allocation2 + $0xd4] sm:$0xf]
    %v3429 = vld [vmem:[#allocation2 + $0x138] sm:$0xf]
    %v3430 = vld [vmem:[#allocation2 + $0x19c] sm:$0xf]
    %v3431 = vld [vmem:[#allocation2 + $0x200] sm:$0xf]
    %v3432 = vld [vmem:[#allocation2 + $0x264] sm:$0xf]
    %v3433 = vld [vmem:[#allocation2 + $0x2c8] sm:$0xf]
    %v3434 = vld [vmem:[#allocation2 + $0x32c] sm:$0xf]
    %v3435 = vld [vmem:[#allocation2 + $0x390] sm:$0xf]
    %v3436 = vld [vmem:[#allocation2 + $0x3f4] sm:$0xf]
    %v3437 = vld [vmem:[#allocation2 + $0x458] sm:$0xf]
    %v3438 = vld [vmem:[#allocation2 + $0x4bc] sm:$0xf]
    %v3439 = vld [vmem:[#allocation2 + $0x520] sm:$0xf]
    %v3440 = vld [vmem:[#allocation2 + $0x584] sm:$0xf]
    %v3441 = vld [vmem:[#allocation2 + $0x5e8] sm:$0xf]
    %v3442 = vld [vmem:[%s1 + $0xf] sm:$0x1]
    %v3475 = vunpack.c.l.b16 %v3391
    %v3476 = vunpack.c.h.b16 %v3391
    %v3477 = vunpack.c.l.b16 %v3392
    %v3478 = vunpack.c.l.b16 %v3393
    %v3479 = vunpack.c.h.b16 %v3393
    %v3480 = vunpack.c.l.b16 %v3394
    %v3481 = vunpack.c.l.b16 %v3395
    %v3482 = vunpack.c.h.b16 %v3395
    %v3483 = vunpack.c.l.b16 %v3396
    %v3484 = vunpack.c.l.b16 %v3397
    %v3485 = vunpack.c.h.b16 %v3397
    %v3486 = vunpack.c.l.b16 %v3398
    %v3487 = vunpack.c.l.b16 %v3399
    %v3488 = vunpack.c.h.b16 %v3399
    %v3489 = vunpack.c.l.b16 %v3400
    %v3490 = vunpack.c.l.b16 %v3401
    %v3491 = vunpack.c.h.b16 %v3401
    %v3492 = vunpack.c.l.b16 %v3402
    %v3493 = vunpack.c.l.b16 %v3403
    %v3494 = vunpack.c.h.b16 %v3403
    %v3495 = vunpack.c.l.b16 %v3404
    %v3496 = vunpack.c.l.b16 %v3405
    %v3497 = vunpack.c.h.b16 %v3405
    %v3498 = vunpack.c.l.b16 %v3406
    %v3499 = vunpack.c.l.b16 %v3407
    %v3500 = vunpack.c.h.b16 %v3407
    %v3501 = vunpack.c.l.b16 %v3408
    %v3502 = vunpack.c.l.b16 %v3409
    %v3503 = vunpack.c.h.b16 %v3409
    %v3504 = vunpack.c.l.b16 %v3410
    %v3505 = vunpack.c.l.b16 %v3411
    %v3506 = vunpack.c.h.b16 %v3411
    %v3507 = vunpack.c.l.b16 %v3412
    %v3508 = vunpack.c.l.b16 %v3413
    %v3509 = vunpack.c.h.b16 %v3413
    %v3510 = vunpack.c.l.b16 %v3414
    %v3511 = vunpack.c.l.b16 %v3415
    %v3512 = vunpack.c.h.b16 %v3415
    %v3513 = vunpack.c.l.b16 %v3416
    %v3514 = vunpack.c.l.b16 %v3417
    %v3515 = vunpack.c.h.b16 %v3417
    %v3516 = vunpack.c.l.b16 %v3418
    %v3517 = vunpack.c.l.b16 %v3419
    %v3518 = vunpack.c.h.b16 %v3419
    %v3519 = vunpack.c.l.b16 %v3420
    %v3520 = vunpack.c.l.b16 %v3421
    %v3521 = vunpack.c.h.b16 %v3421
    %v3522 = vunpack.c.l.b16 %v3422
    %v3523 = vpack.c.b16 %v3478, %v3475
    %v3524 = vpack.c.b16 %v3479, %v3476
    %v3525 = vpack.c.b16 %v3480, %v3477
    %v3526 = vpack.c.b16 %v3484, %v3481
    %v3527 = vpack.c.b16 %v3485, %v3482
    %v3528 = vpack.c.b16 %v3486, %v3483
    %v3529 = vpack.c.b16 %v3490, %v3487
    %v3530 = vpack.c.b16 %v3491, %v3488
    %v3531 = vpack.c.b16 %v3492, %v3489
    %v3532 = vpack.c.b16 %v3496, %v3493
    %v3533 = vpack.c.b16 %v3497, %v3494
    %v3534 = vpack.c.b16 %v3498, %v3495
    %v3535 = vpack.c.b16 %v3502, %v3499
    %v3536 = vpack.c.b16 %v3503, %v3500
    %v3537 = vpack.c.b16 %v3504, %v3501
    %v3538 = vpack.c.b16 %v3508, %v3505
    %v3539 = vpack.c.b16 %v3509, %v3506
    %v3540 = vpack.c.b16 %v3510, %v3507
    %v3541 = vpack.c.b16 %v3514, %v3511
    %v3542 = vpack.c.b16 %v3515, %v3512
    %v3543 = vpack.c.b16 %v3516, %v3513
    %v3544 = vpack.c.b16 %v3520, %v3517
    %v3545 = vpack.c.b16 %v3521, %v3518
    %v3546 = vpack.c.b16 %v3522, %v3519
    %3571 = vmatpush.bf16.msra.mxu0 %v3544
    %3572 = vmatpush.bf16.msra.mxu0 %v3541
    %3573 = vmatpush.bf16.msra.mxu0 %v3538
    %3574 = vmatpush.bf16.msra.mxu0 %v3535
    %3575 = vmatpush.bf16.msra.mxu0 %v3532
    %3576 = vmatpush.bf16.msra.mxu0 %v3529
    %3577 = vmatpush.bf16.msra.mxu0 %v3526
    %3578 = vmatpush.bf16.msra.mxu0 %v3523
    %3579 = vmatmul.bf16.gmra.mxu0 %v224
    %v3580 = vpop.f32.mrf.mxu0
    %v3581 = vadd.f32 0.0, %v3580
    %v3582 = vpop.f32.mrf.mxu0
    %v3583 = vadd.f32 0.0, %v3582
    %3584 = vdwg.mxu0
    %3585 = vmatpush.bf16.msra.mxu0 %v3545
    %3586 = vmatpush.bf16.msra.mxu0 %v3542
    %3587 = vmatpush.bf16.msra.mxu0 %v3539
    %3588 = vmatpush.bf16.msra.mxu0 %v3536
    %3589 = vmatpush.bf16.msra.mxu0 %v3533
    %3590 = vmatpush.bf16.msra.mxu0 %v3530
    %3591 = vmatpush.bf16.msra.mxu0 %v3527
    %3592 = vmatpush.bf16.msra.mxu0 %v3524
    %3593 = vmatmul.bf16.gmra.mxu0 %v224
    %v3594 = vpop.f32.mrf.mxu0
    %v3595 = vadd.f32 0.0, %v3594
    %v3596 = vpop.f32.mrf.mxu0
    %v3597 = vadd.f32 0.0, %v3596
    %3598 = vdwg.mxu0
    %3599 = vmatpush.bf16.msra.mxu0 %v3546
    %3600 = vmatpush.bf16.msra.mxu0 %v3543
    %3601 = vmatpush.bf16.msra.mxu0 %v3540
    %3602 = vmatpush.bf16.msra.mxu0 %v3537
    %3603 = vmatpush.bf16.msra.mxu0 %v3534
    %3604 = vmatpush.bf16.msra.mxu0 %v3531
    %3605 = vmatpush.bf16.msra.mxu0 %v3528
    %3606 = vmatpush.bf16.msra.mxu0 %v3525
    %3607 = vmatmul.bf16.gmra.mxu0 %v224
    %v3608 = vpop.f32.mrf.mxu0
    %v3609 = vadd.f32 0.0, %v3608
    %v3610 = vpop.f32.mrf.mxu0
    %v3611 = vadd.f32 0.0, %v3610
    %3612 = vdwg.mxu0
    %v3613 = vperm.slane %v3423, 0
    %v3614 = vadd.f32 %v3581, %v3613
    %v3615 = vadd.f32 %v3583, %v3613
    %v3616 = vperm.slane %v3424, 0
    %v3617 = vadd.f32 %v3595, %v3616
    %v3618 = vadd.f32 %v3597, %v3616
    %v3619 = vperm.slane %v3425, 0
    %v3620 = vadd.f32 %v3609, %v3619
    %v3621 = vadd.f32 %v3611, %v3619
    %v3622 = vpack.c.bf16 %v3615, %v3614
    %v3623 = vpack.c.bf16 %v3618, %v3617
    %v3624 = vpack.c.bf16 %v3621, %v3620
    %v3626 = vsel %vm407, %v3622, 0
    %v3629 = vsel %vm407, %v3623, 0
    %3631 = vmatpush.bf16.xpose.msra.mxu0 0
    %3632 = vmatpush.bf16.xpose.msra.mxu0 0
    %3633 = vmatpush.bf16.xpose.msra.mxu0 0
    %3634 = vmatpush.bf16.xpose.msra.mxu0 0
    %3635 = vmatpush.bf16.xpose.msra.mxu0 0
    %3636 = vmatpush.bf16.xpose.msra.mxu0 0
    %3637 = vmatpush.bf16.xpose.msra.mxu0 0
    %3638 = vmatpush.bf16.xpose.msra.mxu0 %v3629
    %3639 = vmatmul.bf16.gmra.mxu0 %v3626
    %v3640 = vpop.f32.mrf.mxu0
    %v3641 = vadd.f32 %v86, %v3640
    %v3642 = vpop.f32.mrf.mxu0
    %v3643 = vadd.f32 %v87, %v3642
    %3644 = vdwg.mxu0
    %v3645 = vsel %vm428, %v3641, -inf
    %3646 = vmax.xlane.f32.xlu0 %v3645
    %v3647 = vpop.xlane.xlu0 %3646
    %v3648 = vsel %vm428, %v3643, -inf
    %3649 = vmax.xlane.f32.xlu0 %v3648
    %v3650 = vpop.xlane.xlu0 %3649
    %v3651 = vsub.f32 %v3641, %v3647
    %v3652 = vsub.f32 %v3643, %v3650
    %v3653 = vmul.f32 %v3651, 1.442695
    %v3654 = vpow.pop %v3653
    %v3655 = vmul.f32 %v3652, 1.442695
    %v3656 = vpow.pop %v3655
    %v3657 = vsel %vm428, %v3654, 0.0
    %3658 = vadd.xlane.f32.xlu0 %v3657
    %v3659 = vpop.xlane.xlu0 %3658
    %v3660 = vsel %vm428, %v3656, 0.0
    %3661 = vadd.xlane.f32.xlu0 %v3660
    %v3662 = vpop.xlane.xlu0 %3661
    %v3663 = vrcp.pop %v3659
    %v3664 = vmul.f32 %v3659, %v3663
    %v3665 = vsub.f32 1.0, %v3664
    %v3666 = vmul.f32 %v3663, %v3665
    %v3667 = vadd.f32 %v3663, %v3666
    %vm3668 = vweird.f32 %v3659
    %vm3669 = vweird.f32 %v3663
    %vm3670 = vmor %vm3668, %vm3669
    %v3671 = vsel %vm3670, %v3663, %v3667
    %v3672 = vand.u32 2147483647, %v3659
    %vm3673 = vcmp.eq.f32.partialorder %v3672, 8.507059e+37
    %v3674 = vand.u32 %v3659, 2147483648
    %v3675 = vor.u32 1.1754944e-38, %v3674
    %v3676 = vsel %vm3673, %v3675, %v3671
    %v3677 = vmul.f32 %v3654, %v3676
    %v3678 = vrcp.pop %v3662
    %v3679 = vmul.f32 %v3662, %v3678
    %v3680 = vsub.f32 1.0, %v3679
    %v3681 = vmul.f32 %v3678, %v3680
    %v3682 = vadd.f32 %v3678, %v3681
    %vm3683 = vweird.f32 %v3662
    %vm3684 = vweird.f32 %v3678
    %vm3685 = vmor %vm3683, %vm3684
    %v3686 = vsel %vm3685, %v3678, %v3682
    %v3687 = vand.u32 2147483647, %v3662
    %vm3688 = vcmp.eq.f32.partialorder %v3687, 8.507059e+37
    %v3689 = vand.u32 %v3662, 2147483648
    %v3690 = vor.u32 1.1754944e-38, %v3689
    %v3691 = vsel %vm3688, %v3690, %v3686
    %v3692 = vmul.f32 %v3656, %v3691
    %v3693 = vpack.c.bf16 %v3692, %v3677
    %v3695 = vsel %vm428, %v3693, 0
    %3697 = vmatpush.bf16.msra.mxu0 0
    %3698 = vmatpush.bf16.msra.mxu0 0
    %3699 = vmatpush.bf16.msra.mxu0 0
    %3700 = vmatpush.bf16.msra.mxu0 0
    %3701 = vmatpush.bf16.msra.mxu0 0
    %3702 = vmatpush.bf16.msra.mxu0 0
    %3703 = vmatpush.bf16.msra.mxu0 0
    %3704 = vmatpush.bf16.msra.mxu0 %v3624
    %3705 = vmatmul.bf16.gmra.mxu0 %v3695
    %v3706 = vpop.f32.mrf.mxu0
    %v3707 = vadd.f32 0.0, %v3706
    %v3708 = vpop.f32.mrf.mxu0
    %v3709 = vadd.f32 0.0, %v3708
    %3710 = vdwg.mxu0
    %v3711 = vpack.c.bf16 %v3709, %v3707
    %3713 = vrot.lane.b32.xlu0 %v3622, 96
    %v3714 = vpop.permute.xlu0 %3713
    %3716 = vrot.lane.b32.xlu0 %v3623, 96
    %v3717 = vpop.permute.xlu0 %3716
    %v3719 = vsel %vm407, %v3714, 0
    %v3722 = vsel %vm407, %v3717, 0
    %3724 = vmatpush.bf16.xpose.msra.mxu0 0
    %3725 = vmatpush.bf16.xpose.msra.mxu0 0
    %3726 = vmatpush.bf16.xpose.msra.mxu0 0
    %3727 = vmatpush.bf16.xpose.msra.mxu0 0
    %3728 = vmatpush.bf16.xpose.msra.mxu0 0
    %3729 = vmatpush.bf16.xpose.msra.mxu0 0
    %3730 = vmatpush.bf16.xpose.msra.mxu0 0
    %3731 = vmatpush.bf16.xpose.msra.mxu0 %v3722
    %3732 = vmatmul.bf16.gmra.mxu0 %v3719
    %v3733 = vpop.f32.mrf.mxu0
    %v3734 = vadd.f32 %v86, %v3733
    %v3735 = vpop.f32.mrf.mxu0
    %v3736 = vadd.f32 %v87, %v3735
    %3737 = vdwg.mxu0
    %v3738 = vsel %vm428, %v3734, -inf
    %3739 = vmax.xlane.f32.xlu0 %v3738
    %v3740 = vpop.xlane.xlu0 %3739
    %v3741 = vsel %vm428, %v3736, -inf
    %3742 = vmax.xlane.f32.xlu0 %v3741
    %v3743 = vpop.xlane.xlu0 %3742
    %v3744 = vsub.f32 %v3734, %v3740
    %v3745 = vsub.f32 %v3736, %v3743
    %v3746 = vmul.f32 %v3744, 1.442695
    %v3747 = vpow.pop %v3746
    %v3748 = vmul.f32 %v3745, 1.442695
    %v3749 = vpow.pop %v3748
    %v3750 = vsel %vm428, %v3747, 0.0
    %3751 = vadd.xlane.f32.xlu0 %v3750
    %v3752 = vpop.xlane.xlu0 %3751
    %v3753 = vsel %vm428, %v3749, 0.0
    %3754 = vadd.xlane.f32.xlu0 %v3753
    %v3755 = vpop.xlane.xlu0 %3754
    %v3756 = vrcp.pop %v3752
    %v3757 = vmul.f32 %v3752, %v3756
    %v3758 = vsub.f32 1.0, %v3757
    %v3759 = vmul.f32 %v3756, %v3758
    %v3760 = vadd.f32 %v3756, %v3759
    %vm3761 = vweird.f32 %v3752
    %vm3762 = vweird.f32 %v3756
    %vm3763 = vmor %vm3761, %vm3762
    %v3764 = vsel %vm3763, %v3756, %v3760
    %v3765 = vand.u32 2147483647, %v3752
    %vm3766 = vcmp.eq.f32.partialorder %v3765, 8.507059e+37
    %v3767 = vand.u32 %v3752, 2147483648
    %v3768 = vor.u32 1.1754944e-38, %v3767
    %v3769 = vsel %vm3766, %v3768, %v3764
    %v3770 = vmul.f32 %v3747, %v3769
    %v3771 = vrcp.pop %v3755
    %v3772 = vmul.f32 %v3755, %v3771
    %v3773 = vsub.f32 1.0, %v3772
    %v3774 = vmul.f32 %v3771, %v3773
    %v3775 = vadd.f32 %v3771, %v3774
    %vm3776 = vweird.f32 %v3755
    %vm3777 = vweird.f32 %v3771
    %vm3778 = vmor %vm3776, %vm3777
    %v3779 = vsel %vm3778, %v3771, %v3775
    %v3780 = vand.u32 2147483647, %v3755
    %vm3781 = vcmp.eq.f32.partialorder %v3780, 8.507059e+37
    %v3782 = vand.u32 %v3755, 2147483648
    %v3783 = vor.u32 1.1754944e-38, %v3782
    %v3784 = vsel %vm3781, %v3783, %v3779
    %v3785 = vmul.f32 %v3749, %v3784
    %v3786 = vpack.c.bf16 %v3785, %v3770
    %3788 = vrot.lane.b32.xlu0 %v3624, 96
    %v3789 = vpop.permute.xlu0 %3788
    %v3792 = vsel %vm428, %v3786, 0
    %3794 = vmatpush.bf16.msra.mxu0 0
    %3795 = vmatpush.bf16.msra.mxu0 0
    %3796 = vmatpush.bf16.msra.mxu0 0
    %3797 = vmatpush.bf16.msra.mxu0 0
    %3798 = vmatpush.bf16.msra.mxu0 0
    %3799 = vmatpush.bf16.msra.mxu0 0
    %3800 = vmatpush.bf16.msra.mxu0 0
    %3801 = vmatpush.bf16.msra.mxu0 %v3789
    %3802 = vmatmul.bf16.gmra.mxu0 %v3792
    %v3803 = vpop.f32.mrf.mxu0
    %v3804 = vadd.f32 0.0, %v3803
    %v3805 = vpop.f32.mrf.mxu0
    %v3806 = vadd.f32 0.0, %v3805
    %3807 = vdwg.mxu0
    %v3808 = vpack.c.bf16 %v3806, %v3804
    %v3813 = vunpack.c.l.b16 %v3430
    %v3814 = vunpack.c.l.b16 %v3431
    %v3815 = vunpack.c.l.b16 %v3432
    %v3816 = vunpack.c.l.b16 %v3433
    %v3817 = vpack.c.b16 %v3814, %v3813
    %v3818 = vpack.c.b16 %v3816, %v3815
    %v3822 = vsel %vm407, %v3808, 0
    %3824 = vmatpush.bf16.msra.mxu0 0
    %3825 = vmatpush.bf16.msra.mxu0 0
    %3826 = vmatpush.bf16.msra.mxu0 0
    %3827 = vmatpush.bf16.msra.mxu0 0
    %3828 = vmatpush.bf16.msra.mxu0 0
    %3829 = vmatpush.bf16.msra.mxu0 0
    %3830 = vmatpush.bf16.msra.mxu0 %v3818
    %3831 = vmatpush.bf16.msra.mxu0 %v3817
    %3832 = vmatmul.bf16.gmra.mxu0 %v3822
    %v3833 = vpop.f32.mrf.mxu0
    %v3834 = vadd.f32 0.0, %v3833
    %v3835 = vpop.f32.mrf.mxu0
    %v3836 = vadd.f32 0.0, %v3835
    %3837 = vdwg.mxu0
    %v3842 = vunpack.c.l.b16 %v3426
    %v3843 = vunpack.c.l.b16 %v3427
    %v3844 = vunpack.c.l.b16 %v3428
    %v3845 = vunpack.c.l.b16 %v3429
    %v3846 = vpack.c.b16 %v3843, %v3842
    %v3847 = vpack.c.b16 %v3845, %v3844
    %v3851 = vsel %vm407, %v3711, 0
    %3853 = vmatpush.bf16.msra.mxu0 0
    %3854 = vmatpush.bf16.msra.mxu0 0
    %3855 = vmatpush.bf16.msra.mxu0 0
    %3856 = vmatpush.bf16.msra.mxu0 0
    %3857 = vmatpush.bf16.msra.mxu0 0
    %3858 = vmatpush.bf16.msra.mxu0 0
    %3859 = vmatpush.bf16.msra.mxu0 %v3847
    %3860 = vmatpush.bf16.msra.mxu0 %v3846
    %3861 = vmatmul.bf16.gmra.mxu0 %v3851
    %v3862 = vpop.f32.mrf.mxu0
    %v3863 = vadd.f32 %v3834, %v3862
    %v3864 = vpop.f32.mrf.mxu0
    %v3865 = vadd.f32 %v3836, %v3864
    %3866 = vdwg.mxu0
    %3867 = vrot.lane.b32.xlu0 %v3622, 64
    %v3868 = vpop.permute.xlu0 %3867
    %3869 = vrot.lane.b32.xlu0 %v3623, 64
    %v3870 = vpop.permute.xlu0 %3869
    %v3872 = vsel %vm407, %v3868, 0
    %v3875 = vsel %vm407, %v3870, 0
    %3877 = vmatpush.bf16.xpose.msra.mxu0 0
    %3878 = vmatpush.bf16.xpose.msra.mxu0 0
    %3879 = vmatpush.bf16.xpose.msra.mxu0 0
    %3880 = vmatpush.bf16.xpose.msra.mxu0 0
    %3881 = vmatpush.bf16.xpose.msra.mxu0 0
    %3882 = vmatpush.bf16.xpose.msra.mxu0 0
    %3883 = vmatpush.bf16.xpose.msra.mxu0 0
    %3884 = vmatpush.bf16.xpose.msra.mxu0 %v3875
    %3885 = vmatmul.bf16.gmra.mxu0 %v3872
    %v3886 = vpop.f32.mrf.mxu0
    %v3887 = vadd.f32 %v86, %v3886
    %v3888 = vpop.f32.mrf.mxu0
    %v3889 = vadd.f32 %v87, %v3888
    %3890 = vdwg.mxu0
    %v3891 = vsel %vm428, %v3887, -inf
    %3892 = vmax.xlane.f32.xlu0 %v3891
    %v3893 = vpop.xlane.xlu0 %3892
    %v3894 = vsel %vm428, %v3889, -inf
    %3895 = vmax.xlane.f32.xlu0 %v3894
    %v3896 = vpop.xlane.xlu0 %3895
    %v3897 = vsub.f32 %v3887, %v3893
    %v3898 = vsub.f32 %v3889, %v3896
    %v3899 = vmul.f32 %v3897, 1.442695
    %v3900 = vpow.pop %v3899
    %v3901 = vmul.f32 %v3898, 1.442695
    %v3902 = vpow.pop %v3901
    %v3903 = vsel %vm428, %v3900, 0.0
    %3904 = vadd.xlane.f32.xlu0 %v3903
    %v3905 = vpop.xlane.xlu0 %3904
    %v3906 = vsel %vm428, %v3902, 0.0
    %3907 = vadd.xlane.f32.xlu0 %v3906
    %v3908 = vpop.xlane.xlu0 %3907
    %v3909 = vrcp.pop %v3905
    %v3910 = vmul.f32 %v3905, %v3909
    %v3911 = vsub.f32 1.0, %v3910
    %v3912 = vmul.f32 %v3909, %v3911
    %v3913 = vadd.f32 %v3909, %v3912
    %vm3914 = vweird.f32 %v3905
    %vm3915 = vweird.f32 %v3909
    %vm3916 = vmor %vm3914, %vm3915
    %v3917 = vsel %vm3916, %v3909, %v3913
    %v3918 = vand.u32 2147483647, %v3905
    %vm3919 = vcmp.eq.f32.partialorder %v3918, 8.507059e+37
    %v3920 = vand.u32 %v3905, 2147483648
    %v3921 = vor.u32 1.1754944e-38, %v3920
    %v3922 = vsel %vm3919, %v3921, %v3917
    %v3923 = vmul.f32 %v3900, %v3922
    %v3924 = vrcp.pop %v3908
    %v3925 = vmul.f32 %v3908, %v3924
    %v3926 = vsub.f32 1.0, %v3925
    %v3927 = vmul.f32 %v3924, %v3926
    %v3928 = vadd.f32 %v3924, %v3927
    %vm3929 = vweird.f32 %v3908
    %vm3930 = vweird.f32 %v3924
    %vm3931 = vmor %vm3929, %vm3930
    %v3932 = vsel %vm3931, %v3924, %v3928
    %v3933 = vand.u32 2147483647, %v3908
    %vm3934 = vcmp.eq.f32.partialorder %v3933, 8.507059e+37
    %v3935 = vand.u32 %v3908, 2147483648
    %v3936 = vor.u32 1.1754944e-38, %v3935
    %v3937 = vsel %vm3934, %v3936, %v3932
    %v3938 = vmul.f32 %v3902, %v3937
    %v3939 = vpack.c.bf16 %v3938, %v3923
    %3940 = vrot.lane.b32.xlu0 %v3624, 64
    %v3941 = vpop.permute.xlu0 %3940
    %v3944 = vsel %vm428, %v3939, 0
    %3946 = vmatpush.bf16.msra.mxu0 0
    %3947 = vmatpush.bf16.msra.mxu0 0
    %3948 = vmatpush.bf16.msra.mxu0 0
    %3949 = vmatpush.bf16.msra.mxu0 0
    %3950 = vmatpush.bf16.msra.mxu0 0
    %3951 = vmatpush.bf16.msra.mxu0 0
    %3952 = vmatpush.bf16.msra.mxu0 0
    %3953 = vmatpush.bf16.msra.mxu0 %v3941
    %3954 = vmatmul.bf16.gmra.mxu0 %v3944
    %v3955 = vpop.f32.mrf.mxu0
    %v3956 = vadd.f32 0.0, %v3955
    %v3957 = vpop.f32.mrf.mxu0
    %v3958 = vadd.f32 0.0, %v3957
    %3959 = vdwg.mxu0
    %v3960 = vpack.c.bf16 %v3958, %v3956
    %v3965 = vunpack.c.l.b16 %v3434
    %v3966 = vunpack.c.l.b16 %v3435
    %v3967 = vunpack.c.l.b16 %v3436
    %v3968 = vunpack.c.l.b16 %v3437
    %v3969 = vpack.c.b16 %v3966, %v3965
    %v3970 = vpack.c.b16 %v3968, %v3967
    %v3974 = vsel %vm407, %v3960, 0
    %3976 = vmatpush.bf16.msra.mxu0 0
    %3977 = vmatpush.bf16.msra.mxu0 0
    %3978 = vmatpush.bf16.msra.mxu0 0
    %3979 = vmatpush.bf16.msra.mxu0 0
    %3980 = vmatpush.bf16.msra.mxu0 0
    %3981 = vmatpush.bf16.msra.mxu0 0
    %3982 = vmatpush.bf16.msra.mxu0 %v3970
    %3983 = vmatpush.bf16.msra.mxu0 %v3969
    %3984 = vmatmul.bf16.gmra.mxu0 %v3974
    %v3985 = vpop.f32.mrf.mxu0
    %v3986 = vadd.f32 0.0, %v3985
    %v3987 = vpop.f32.mrf.mxu0
    %v3988 = vadd.f32 0.0, %v3987
    %3989 = vdwg.mxu0
    %v3990 = vadd.f32 %v3863, %v3986
    %v3991 = vadd.f32 %v3865, %v3988
    %3992 = vrot.lane.b32.xlu0 %v3622, 32
    %v3993 = vpop.permute.xlu0 %3992
    %3994 = vrot.lane.b32.xlu0 %v3623, 32
    %v3995 = vpop.permute.xlu0 %3994
    %v3997 = vsel %vm407, %v3993, 0
    %v4000 = vsel %vm407, %v3995, 0
    %4002 = vmatpush.bf16.xpose.msra.mxu0 0
    %4003 = vmatpush.bf16.xpose.msra.mxu0 0
    %4004 = vmatpush.bf16.xpose.msra.mxu0 0
    %4005 = vmatpush.bf16.xpose.msra.mxu0 0
    %4006 = vmatpush.bf16.xpose.msra.mxu0 0
    %4007 = vmatpush.bf16.xpose.msra.mxu0 0
    %4008 = vmatpush.bf16.xpose.msra.mxu0 0
    %4009 = vmatpush.bf16.xpose.msra.mxu0 %v4000
    %4010 = vmatmul.bf16.gmra.mxu0 %v3997
    %v4011 = vpop.f32.mrf.mxu0
    %v4012 = vadd.f32 %v86, %v4011
    %v4013 = vpop.f32.mrf.mxu0
    %v4014 = vadd.f32 %v87, %v4013
    %4015 = vdwg.mxu0
    %v4016 = vsel %vm428, %v4012, -inf
    %4017 = vmax.xlane.f32.xlu0 %v4016
    %v4018 = vpop.xlane.xlu0 %4017
    %v4019 = vsel %vm428, %v4014, -inf
    %4020 = vmax.xlane.f32.xlu0 %v4019
    %v4021 = vpop.xlane.xlu0 %4020
    %v4022 = vsub.f32 %v4012, %v4018
    %v4023 = vsub.f32 %v4014, %v4021
    %v4024 = vmul.f32 %v4022, 1.442695
    %v4025 = vpow.pop %v4024
    %v4026 = vmul.f32 %v4023, 1.442695
    %v4027 = vpow.pop %v4026
    %v4028 = vsel %vm428, %v4025, 0.0
    %4029 = vadd.xlane.f32.xlu0 %v4028
    %v4030 = vpop.xlane.xlu0 %4029
    %v4031 = vsel %vm428, %v4027, 0.0
    %4032 = vadd.xlane.f32.xlu0 %v4031
    %v4033 = vpop.xlane.xlu0 %4032
    %v4034 = vrcp.pop %v4030
    %v4035 = vmul.f32 %v4030, %v4034
    %v4036 = vsub.f32 1.0, %v4035
    %v4037 = vmul.f32 %v4034, %v4036
    %v4038 = vadd.f32 %v4034, %v4037
    %vm4039 = vweird.f32 %v4030
    %vm4040 = vweird.f32 %v4034
    %vm4041 = vmor %vm4039, %vm4040
    %v4042 = vsel %vm4041, %v4034, %v4038
    %v4043 = vand.u32 2147483647, %v4030
    %vm4044 = vcmp.eq.f32.partialorder %v4043, 8.507059e+37
    %v4045 = vand.u32 %v4030, 2147483648
    %v4046 = vor.u32 1.1754944e-38, %v4045
    %v4047 = vsel %vm4044, %v4046, %v4042
    %v4048 = vmul.f32 %v4025, %v4047
    %v4049 = vrcp.pop %v4033
    %v4050 = vmul.f32 %v4033, %v4049
    %v4051 = vsub.f32 1.0, %v4050
    %v4052 = vmul.f32 %v4049, %v4051
    %v4053 = vadd.f32 %v4049, %v4052
    %vm4054 = vweird.f32 %v4033
    %vm4055 = vweird.f32 %v4049
    %vm4056 = vmor %vm4054, %vm4055
    %v4057 = vsel %vm4056, %v4049, %v4053
    %v4058 = vand.u32 2147483647, %v4033
    %vm4059 = vcmp.eq.f32.partialorder %v4058, 8.507059e+37
    %v4060 = vand.u32 %v4033, 2147483648
    %v4061 = vor.u32 1.1754944e-38, %v4060
    %v4062 = vsel %vm4059, %v4061, %v4057
    %v4063 = vmul.f32 %v4027, %v4062
    %v4064 = vpack.c.bf16 %v4063, %v4048
    %4065 = vrot.lane.b32.xlu0 %v3624, 32
    %v4066 = vpop.permute.xlu0 %4065
    %v4069 = vsel %vm428, %v4064, 0
    %4071 = vmatpush.bf16.msra.mxu0 0
    %4072 = vmatpush.bf16.msra.mxu0 0
    %4073 = vmatpush.bf16.msra.mxu0 0
    %4074 = vmatpush.bf16.msra.mxu0 0
    %4075 = vmatpush.bf16.msra.mxu0 0
    %4076 = vmatpush.bf16.msra.mxu0 0
    %4077 = vmatpush.bf16.msra.mxu0 0
    %4078 = vmatpush.bf16.msra.mxu0 %v4066
    %4079 = vmatmul.bf16.gmra.mxu0 %v4069
    %v4080 = vpop.f32.mrf.mxu0
    %v4081 = vadd.f32 0.0, %v4080
    %v4082 = vpop.f32.mrf.mxu0
    %v4083 = vadd.f32 0.0, %v4082
    %4084 = vdwg.mxu0
    %v4085 = vpack.c.bf16 %v4083, %v4081
    %v4090 = vunpack.c.l.b16 %v3438
    %v4091 = vunpack.c.l.b16 %v3439
    %v4092 = vunpack.c.l.b16 %v3440
    %v4093 = vunpack.c.l.b16 %v3441
    %v4094 = vpack.c.b16 %v4091, %v4090
    %v4095 = vpack.c.b16 %v4093, %v4092
    %v4099 = vsel %vm407, %v4085, 0
    %4101 = vmatpush.bf16.msra.mxu0 0
    %4102 = vmatpush.bf16.msra.mxu0 0
    %4103 = vmatpush.bf16.msra.mxu0 0
    %4104 = vmatpush.bf16.msra.mxu0 0
    %4105 = vmatpush.bf16.msra.mxu0 0
    %4106 = vmatpush.bf16.msra.mxu0 0
    %4107 = vmatpush.bf16.msra.mxu0 %v4095
    %4108 = vmatpush.bf16.msra.mxu0 %v4094
    %4109 = vmatmul.bf16.gmra.mxu0 %v4099
    %v4110 = vpop.f32.mrf.mxu0
    %v4111 = vadd.f32 0.0, %v4110
    %v4112 = vpop.f32.mrf.mxu0
    %v4113 = vadd.f32 0.0, %v4112
    %4114 = vdwg.mxu0
    %v4115 = vadd.f32 %v3990, %v4111
    %v4116 = vadd.f32 %v3991, %v4113
    %v4117 = vperm.slane %v3442, 0
    %v4118 = vadd.f32 %v4115, %v4117
    %v4119 = vadd.f32 %v4116, %v4117
    %v4120 = vadd.f32 %v170, %v4118
    %v4121 = vadd.f32 %v171, %v4119
    %v4122 = vld [vmem:[%s1 + $0x10] sm:$0x1]
    %v4123 = vld [vmem:[%s1 + $0x11] sm:$0x1]
    %4124 = vadd.xlane.f32.xlu0 %v4120
    %v4125 = vpop.xlane.xlu0 %4124
    %4126 = vadd.xlane.f32.xlu0 %v4121
    %v4127 = vpop.xlane.xlu0 %4126
    %v4128 = vmul.f32 %v4125, %v918
    %v4129 = vmul.f32 %v4127, %v918
    %v4130 = vsub.f32 %v4120, %v4128
    %v4131 = vsub.f32 %v4121, %v4129
    %v4132 = vmul.f32 %v4130, %v4130
    %v4133 = vmul.f32 %v4131, %v4131
    %4134 = vadd.xlane.f32.xlu0 %v4132
    %v4135 = vpop.xlane.xlu0 %4134
    %4136 = vadd.xlane.f32.xlu0 %v4133
    %v4137 = vpop.xlane.xlu0 %4136
    %v4138 = vmul.f32 %v4135, %v918
    %v4139 = vmul.f32 %v4137, %v918
    %v4140 = vadd.f32 %v4138, 1e-05
    %v4141 = vadd.f32 %v4139, 1e-05
    %v4142 = vrsqrt.pop %v4140
    %v4143 = vmul.f32 %v4142, %v4140
    %v4144 = vmul.f32 %v4143, %v4142
    %v4145 = vmul.f32 0.5, %v4144
    %v4146 = vsub.f32 1.5, %v4145
    %v4147 = vmul.f32 %v4142, %v4146
    %vm4148 = vweird.f32 %v4140
    %vm4149 = vweird.f32 %v4142
    %vm4150 = vmor %vm4148, %vm4149
    %v4151 = vsel %vm4150, %v4142, %v4147
    %v4152 = vrsqrt.pop %v4141
    %v4153 = vmul.f32 %v4152, %v4141
    %v4154 = vmul.f32 %v4153, %v4152
    %v4155 = vmul.f32 0.5, %v4154
    %v4156 = vsub.f32 1.5, %v4155
    %v4157 = vmul.f32 %v4152, %v4156
    %vm4158 = vweird.f32 %v4141
    %vm4159 = vweird.f32 %v4152
    %vm4160 = vmor %vm4158, %vm4159
    %v4161 = vsel %vm4160, %v4152, %v4157
    %v4162 = vmul.f32 %v4130, %v4151
    %v4163 = vmul.f32 %v4131, %v4161
    %v4164 = vperm.slane %v4122, 0
    %v4165 = vmul.f32 %v4162, %v4164
    %v4166 = vmul.f32 %v4163, %v4164
    %v4167 = vperm.slane %v4123, 0
    %v4168 = vadd.f32 %v4165, %v4167
    %v4169 = vadd.f32 %v4166, %v4167
    %v4170 = vld [vmem:[#allocation2 + $0x10] sm:$0xff]
    %v4171 = vld [vmem:[#allocation2 + $0x18] sm:$0xf]
    %v4172 = vld [vmem:[#allocation2 + $0x74] sm:$0xff]
    %v4173 = vld [vmem:[#allocation2 + $0x7c] sm:$0xf]
    %v4174 = vld [vmem:[#allocation2 + $0xd8] sm:$0xff]
    %v4175 = vld [vmem:[#allocation2 + $0xe0] sm:$0xf]
    %v4176 = vld [vmem:[#allocation2 + $0x13c] sm:$0xff]
    %v4177 = vld [vmem:[#allocation2 + $0x144] sm:$0xf]
    %v4178 = vld [vmem:[#allocation2 + $0x1a0] sm:$0xff]
    %v4179 = vld [vmem:[#allocation2 + $0x1a8] sm:$0xf]
    %v4180 = vld [vmem:[#allocation2 + $0x204] sm:$0xff]
    %v4181 = vld [vmem:[#allocation2 + $0x20c] sm:$0xf]
    %v4182 = vld [vmem:[#allocation2 + $0x268] sm:$0xff]
    %v4183 = vld [vmem:[#allocation2 + $0x270] sm:$0xf]
    %v4184 = vld [vmem:[#allocation2 + $0x2cc] sm:$0xff]
    %v4185 = vld [vmem:[#allocation2 + $0x2d4] sm:$0xf]
    %v4186 = vld [vmem:[#allocation2 + $0x330] sm:$0xff]
    %v4187 = vld [vmem:[#allocation2 + $0x338] sm:$0xf]
    %v4188 = vld [vmem:[#allocation2 + $0x394] sm:$0xff]
    %v4189 = vld [vmem:[#allocation2 + $0x39c] sm:$0xf]
    %v4190 = vld [vmem:[#allocation2 + $0x3f8] sm:$0xff]
    %v4191 = vld [vmem:[#allocation2 + $0x400] sm:$0xf]
    %v4192 = vld [vmem:[#allocation2 + $0x45c] sm:$0xff]
    %v4193 = vld [vmem:[#allocation2 + $0x464] sm:$0xf]
    %v4194 = vld [vmem:[#allocation2 + $0x4c0] sm:$0xff]
    %v4195 = vld [vmem:[#allocation2 + $0x4c8] sm:$0xf]
    %v4196 = vld [vmem:[#allocation2 + $0x524] sm:$0xff]
    %v4197 = vld [vmem:[#allocation2 + $0x52c] sm:$0xf]
    %v4198 = vld [vmem:[#allocation2 + $0x588] sm:$0xff]
    %v4199 = vld [vmem:[#allocation2 + $0x590] sm:$0xf]
    %v4200 = vld [vmem:[#allocation2 + $0x5ec] sm:$0xff]
    %v4201 = vld [vmem:[#allocation2 + $0x5f4] sm:$0xf]
    %v4202 = vld [vmem:[%s1 + $0x12] sm:$0x1]
    %v4203 = vld [vmem:[%s1 + $0x13] sm:$0x1]
    %v4204 = vld [vmem:[%s1 + $0x14] sm:$0x1]
    %v4205 = vld [vmem:[#allocation2 + $0x1c] sm:$0xf]
    %v4206 = vld [vmem:[#allocation2 + $0x80] sm:$0xf]
    %v4207 = vld [vmem:[#allocation2 + $0xe4] sm:$0xf]
    %v4208 = vld [vmem:[#allocation2 + $0x148] sm:$0xf]
    %v4209 = vld [vmem:[#allocation2 + $0x1ac] sm:$0xf]
    %v4210 = vld [vmem:[#allocation2 + $0x210] sm:$0xf]
    %v4211 = vld [vmem:[#allocation2 + $0x274] sm:$0xf]
    %v4212 = vld [vmem:[#allocation2 + $0x2d8] sm:$0xf]
    %v4213 = vld [vmem:[#allocation2 + $0x33c] sm:$0xf]
    %v4214 = vld [vmem:[#allocation2 + $0x3a0] sm:$0xf]
    %v4215 = vld [vmem:[#allocation2 + $0x404] sm:$0xf]
    %v4216 = vld [vmem:[#allocation2 + $0x468] sm:$0xf]
    %v4217 = vld [vmem:[#allocation2 + $0x4cc] sm:$0xf]
    %v4218 = vld [vmem:[#allocation2 + $0x530] sm:$0xf]
    %v4219 = vld [vmem:[#allocation2 + $0x594] sm:$0xf]
    %v4220 = vld [vmem:[#allocation2 + $0x5f8] sm:$0xf]
    %v4221 = vld [vmem:[%s1 + $0x15] sm:$0x1]
    %v4222 = vpack.c.bf16 %v4169, %v4168
    %v4223 = vperm.slane %v4202, 0
    %v4240 = vunpack.c.l.b16 %v4170
    %v4241 = vunpack.c.l.b16 %v4172
    %v4242 = vunpack.c.l.b16 %v4174
    %v4243 = vunpack.c.l.b16 %v4176
    %v4244 = vunpack.c.l.b16 %v4178
    %v4245 = vunpack.c.l.b16 %v4180
    %v4246 = vunpack.c.l.b16 %v4182
    %v4247 = vunpack.c.l.b16 %v4184
    %v4248 = vunpack.c.l.b16 %v4186
    %v4249 = vunpack.c.l.b16 %v4188
    %v4250 = vunpack.c.l.b16 %v4190
    %v4251 = vunpack.c.l.b16 %v4192
    %v4252 = vunpack.c.l.b16 %v4194
    %v4253 = vunpack.c.l.b16 %v4196
    %v4254 = vunpack.c.l.b16 %v4198
    %v4255 = vunpack.c.l.b16 %v4200
    %v4256 = vpack.c.b16 %v4241, %v4240
    %v4257 = vpack.c.b16 %v4243, %v4242
    %v4258 = vpack.c.b16 %v4245, %v4244
    %v4259 = vpack.c.b16 %v4247, %v4246
    %v4260 = vpack.c.b16 %v4249, %v4248
    %v4261 = vpack.c.b16 %v4251, %v4250
    %v4262 = vpack.c.b16 %v4253, %v4252
    %v4263 = vpack.c.b16 %v4255, %v4254
    %4272 = vmatpush.bf16.msra.mxu0 %v4263
    %4273 = vmatpush.bf16.msra.mxu0 %v4262
    %4274 = vmatpush.bf16.msra.mxu0 %v4261
    %4275 = vmatpush.bf16.msra.mxu0 %v4260
    %4276 = vmatpush.bf16.msra.mxu0 %v4259
    %4277 = vmatpush.bf16.msra.mxu0 %v4258
    %4278 = vmatpush.bf16.msra.mxu0 %v4257
    %4279 = vmatpush.bf16.msra.mxu0 %v4256
    %4280 = vmatmul.bf16.gmra.mxu0 %v4222
    %v4281 = vpop.f32.mrf.mxu0
    %v4282 = vadd.f32 %v4223, %v4281
    %v4283 = vpop.f32.mrf.mxu0
    %v4284 = vadd.f32 %v4223, %v4283
    %4285 = vdwg.mxu0
    %v4286 = vpack.c.bf16 %v3386, %v3385
    %v4287 = vperm.slane %v4203, 0
    %v4288 = vunpack.c.h.b16 %v4170
    %v4289 = vunpack.c.h.b16 %v4172
    %v4290 = vunpack.c.h.b16 %v4174
    %v4291 = vunpack.c.h.b16 %v4176
    %v4292 = vunpack.c.h.b16 %v4178
    %v4293 = vunpack.c.h.b16 %v4180
    %v4294 = vunpack.c.h.b16 %v4182
    %v4295 = vunpack.c.h.b16 %v4184
    %v4296 = vunpack.c.h.b16 %v4186
    %v4297 = vunpack.c.h.b16 %v4188
    %v4298 = vunpack.c.h.b16 %v4190
    %v4299 = vunpack.c.h.b16 %v4192
    %v4300 = vunpack.c.h.b16 %v4194
    %v4301 = vunpack.c.h.b16 %v4196
    %v4302 = vunpack.c.h.b16 %v4198
    %v4303 = vunpack.c.h.b16 %v4200
    %v4304 = vpack.c.b16 %v4289, %v4288
    %v4305 = vpack.c.b16 %v4291, %v4290
    %v4306 = vpack.c.b16 %v4293, %v4292
    %v4307 = vpack.c.b16 %v4295, %v4294
    %v4308 = vpack.c.b16 %v4297, %v4296
    %v4309 = vpack.c.b16 %v4299, %v4298
    %v4310 = vpack.c.b16 %v4301, %v4300
    %v4311 = vpack.c.b16 %v4303, %v4302
    %4320 = vmatpush.bf16.msra.mxu0 %v4311
    %4321 = vmatpush.bf16.msra.mxu0 %v4310
    %4322 = vmatpush.bf16.msra.mxu0 %v4309
    %4323 = vmatpush.bf16.msra.mxu0 %v4308
    %4324 = vmatpush.bf16.msra.mxu0 %v4307
    %4325 = vmatpush.bf16.msra.mxu0 %v4306
    %4326 = vmatpush.bf16.msra.mxu0 %v4305
    %4327 = vmatpush.bf16.msra.mxu0 %v4304
    %4328 = vmatmul.bf16.gmra.mxu0 %v4286
    %v4329 = vpop.f32.mrf.mxu0
    %v4330 = vadd.f32 %v4287, %v4329
    %v4331 = vpop.f32.mrf.mxu0
    %v4332 = vadd.f32 %v4287, %v4331
    %4333 = vdwg.mxu0
    %v4334 = vperm.slane %v4204, 0
    %v4351 = vunpack.c.l.b16 %v4171
    %v4352 = vunpack.c.l.b16 %v4173
    %v4353 = vunpack.c.l.b16 %v4175
    %v4354 = vunpack.c.l.b16 %v4177
    %v4355 = vunpack.c.l.b16 %v4179
    %v4356 = vunpack.c.l.b16 %v4181
    %v4357 = vunpack.c.l.b16 %v4183
    %v4358 = vunpack.c.l.b16 %v4185
    %v4359 = vunpack.c.l.b16 %v4187
    %v4360 = vunpack.c.l.b16 %v4189
    %v4361 = vunpack.c.l.b16 %v4191
    %v4362 = vunpack.c.l.b16 %v4193
    %v4363 = vunpack.c.l.b16 %v4195
    %v4364 = vunpack.c.l.b16 %v4197
    %v4365 = vunpack.c.l.b16 %v4199
    %v4366 = vunpack.c.l.b16 %v4201
    %v4367 = vpack.c.b16 %v4352, %v4351
    %v4368 = vpack.c.b16 %v4354, %v4353
    %v4369 = vpack.c.b16 %v4356, %v4355
    %v4370 = vpack.c.b16 %v4358, %v4357
    %v4371 = vpack.c.b16 %v4360, %v4359
    %v4372 = vpack.c.b16 %v4362, %v4361
    %v4373 = vpack.c.b16 %v4364, %v4363
    %v4374 = vpack.c.b16 %v4366, %v4365
    %4383 = vmatpush.bf16.msra.mxu0 %v4374
    %4384 = vmatpush.bf16.msra.mxu0 %v4373
    %4385 = vmatpush.bf16.msra.mxu0 %v4372
    %4386 = vmatpush.bf16.msra.mxu0 %v4371
    %4387 = vmatpush.bf16.msra.mxu0 %v4370
    %4388 = vmatpush.bf16.msra.mxu0 %v4369
    %4389 = vmatpush.bf16.msra.mxu0 %v4368
    %4390 = vmatpush.bf16.msra.mxu0 %v4367
    %4391 = vmatmul.bf16.gmra.mxu0 %v4286
    %v4392 = vpop.f32.mrf.mxu0
    %v4393 = vadd.f32 %v4334, %v4392
    %v4394 = vpop.f32.mrf.mxu0
    %v4395 = vadd.f32 %v4334, %v4394
    %4396 = vdwg.mxu0
    %v4397 = vpack.c.bf16 %v4284, %v4282
    %v4398 = vpack.c.bf16 %v4332, %v4330
    %v4399 = vpack.c.bf16 %v4395, %v4393
    %v4401 = vsel %vm407, %v4397, 0
    %v4404 = vsel %vm407, %v4398, 0
    %4406 = vmatpush.bf16.xpose.msra.mxu0 0
    %4407 = vmatpush.bf16.xpose.msra.mxu0 0
    %4408 = vmatpush.bf16.xpose.msra.mxu0 0
    %4409 = vmatpush.bf16.xpose.msra.mxu0 0
    %4410 = vmatpush.bf16.xpose.msra.mxu0 0
    %4411 = vmatpush.bf16.xpose.msra.mxu0 0
    %4412 = vmatpush.bf16.xpose.msra.mxu0 0
    %4413 = vmatpush.bf16.xpose.msra.mxu0 %v4404
    %4414 = vmatmul.bf16.gmra.mxu0 %v4401
    %v4415 = vpop.f32.mrf.mxu0
    %v4416 = vadd.f32 %v86, %v4415
    %v4417 = vpop.f32.mrf.mxu0
    %v4418 = vadd.f32 %v87, %v4417
    %4419 = vdwg.mxu0
    %v4420 = vsel %vm428, %v4416, -inf
    %4421 = vmax.xlane.f32.xlu0 %v4420
    %v4422 = vpop.xlane.xlu0 %4421
    %v4423 = vsel %vm428, %v4418, -inf
    %4424 = vmax.xlane.f32.xlu0 %v4423
    %v4425 = vpop.xlane.xlu0 %4424
    %v4426 = vsub.f32 %v4416, %v4422
    %v4427 = vsub.f32 %v4418, %v4425
    %v4428 = vmul.f32 %v4426, 1.442695
    %v4429 = vpow.pop %v4428
    %v4430 = vmul.f32 %v4427, 1.442695
    %v4431 = vpow.pop %v4430
    %v4432 = vsel %vm428, %v4429, 0.0
    %4433 = vadd.xlane.f32.xlu0 %v4432
    %v4434 = vpop.xlane.xlu0 %4433
    %v4435 = vsel %vm428, %v4431, 0.0
    %4436 = vadd.xlane.f32.xlu0 %v4435
    %v4437 = vpop.xlane.xlu0 %4436
    %v4438 = vrcp.pop %v4434
    %v4439 = vmul.f32 %v4434, %v4438
    %v4440 = vsub.f32 1.0, %v4439
    %v4441 = vmul.f32 %v4438, %v4440
    %v4442 = vadd.f32 %v4438, %v4441
    %vm4443 = vweird.f32 %v4434
    %vm4444 = vweird.f32 %v4438
    %vm4445 = vmor %vm4443, %vm4444
    %v4446 = vsel %vm4445, %v4438, %v4442
    %v4447 = vand.u32 2147483647, %v4434
    %vm4448 = vcmp.eq.f32.partialorder %v4447, 8.507059e+37
    %v4449 = vand.u32 %v4434, 2147483648
    %v4450 = vor.u32 1.1754944e-38, %v4449
    %v4451 = vsel %vm4448, %v4450, %v4446
    %v4452 = vmul.f32 %v4429, %v4451
    %v4453 = vrcp.pop %v4437
    %v4454 = vmul.f32 %v4437, %v4453
    %v4455 = vsub.f32 1.0, %v4454
    %v4456 = vmul.f32 %v4453, %v4455
    %v4457 = vadd.f32 %v4453, %v4456
    %vm4458 = vweird.f32 %v4437
    %vm4459 = vweird.f32 %v4453
    %vm4460 = vmor %vm4458, %vm4459
    %v4461 = vsel %vm4460, %v4453, %v4457
    %v4462 = vand.u32 2147483647, %v4437
    %vm4463 = vcmp.eq.f32.partialorder %v4462, 8.507059e+37
    %v4464 = vand.u32 %v4437, 2147483648
    %v4465 = vor.u32 1.1754944e-38, %v4464
    %v4466 = vsel %vm4463, %v4465, %v4461
    %v4467 = vmul.f32 %v4431, %v4466
    %v4468 = vpack.c.bf16 %v4467, %v4452
    %v4470 = vsel %vm428, %v4468, 0
    %4472 = vmatpush.bf16.msra.mxu0 0
    %4473 = vmatpush.bf16.msra.mxu0 0
    %4474 = vmatpush.bf16.msra.mxu0 0
    %4475 = vmatpush.bf16.msra.mxu0 0
    %4476 = vmatpush.bf16.msra.mxu0 0
    %4477 = vmatpush.bf16.msra.mxu0 0
    %4478 = vmatpush.bf16.msra.mxu0 0
    %4479 = vmatpush.bf16.msra.mxu0 %v4399
    %4480 = vmatmul.bf16.gmra.mxu0 %v4470
    %v4481 = vpop.f32.mrf.mxu0
    %v4482 = vadd.f32 0.0, %v4481
    %v4483 = vpop.f32.mrf.mxu0
    %v4484 = vadd.f32 0.0, %v4483
    %4485 = vdwg.mxu0
    %v4486 = vpack.c.bf16 %v4484, %v4482
    %4488 = vrot.lane.b32.xlu0 %v4397, 96
    %v4489 = vpop.permute.xlu0 %4488
    %4491 = vrot.lane.b32.xlu0 %v4398, 96
    %v4492 = vpop.permute.xlu0 %4491
    %v4494 = vsel %vm407, %v4489, 0
    %v4497 = vsel %vm407, %v4492, 0
    %4499 = vmatpush.bf16.xpose.msra.mxu0 0
    %4500 = vmatpush.bf16.xpose.msra.mxu0 0
    %4501 = vmatpush.bf16.xpose.msra.mxu0 0
    %4502 = vmatpush.bf16.xpose.msra.mxu0 0
    %4503 = vmatpush.bf16.xpose.msra.mxu0 0
    %4504 = vmatpush.bf16.xpose.msra.mxu0 0
    %4505 = vmatpush.bf16.xpose.msra.mxu0 0
    %4506 = vmatpush.bf16.xpose.msra.mxu0 %v4497
    %4507 = vmatmul.bf16.gmra.mxu0 %v4494
    %v4508 = vpop.f32.mrf.mxu0
    %v4509 = vadd.f32 %v86, %v4508
    %v4510 = vpop.f32.mrf.mxu0
    %v4511 = vadd.f32 %v87, %v4510
    %4512 = vdwg.mxu0
    %v4513 = vsel %vm428, %v4509, -inf
    %4514 = vmax.xlane.f32.xlu0 %v4513
    %v4515 = vpop.xlane.xlu0 %4514
    %v4516 = vsel %vm428, %v4511, -inf
    %4517 = vmax.xlane.f32.xlu0 %v4516
    %v4518 = vpop.xlane.xlu0 %4517
    %v4519 = vsub.f32 %v4509, %v4515
    %v4520 = vsub.f32 %v4511, %v4518
    %v4521 = vmul.f32 %v4519, 1.442695
    %v4522 = vpow.pop %v4521
    %v4523 = vmul.f32 %v4520, 1.442695
    %v4524 = vpow.pop %v4523
    %v4525 = vsel %vm428, %v4522, 0.0
    %4526 = vadd.xlane.f32.xlu0 %v4525
    %v4527 = vpop.xlane.xlu0 %4526
    %v4528 = vsel %vm428, %v4524, 0.0
    %4529 = vadd.xlane.f32.xlu0 %v4528
    %v4530 = vpop.xlane.xlu0 %4529
    %v4531 = vrcp.pop %v4527
    %v4532 = vmul.f32 %v4527, %v4531
    %v4533 = vsub.f32 1.0, %v4532
    %v4534 = vmul.f32 %v4531, %v4533
    %v4535 = vadd.f32 %v4531, %v4534
    %vm4536 = vweird.f32 %v4527
    %vm4537 = vweird.f32 %v4531
    %vm4538 = vmor %vm4536, %vm4537
    %v4539 = vsel %vm4538, %v4531, %v4535
    %v4540 = vand.u32 2147483647, %v4527
    %vm4541 = vcmp.eq.f32.partialorder %v4540, 8.507059e+37
    %v4542 = vand.u32 %v4527, 2147483648
    %v4543 = vor.u32 1.1754944e-38, %v4542
    %v4544 = vsel %vm4541, %v4543, %v4539
    %v4545 = vmul.f32 %v4522, %v4544
    %v4546 = vrcp.pop %v4530
    %v4547 = vmul.f32 %v4530, %v4546
    %v4548 = vsub.f32 1.0, %v4547
    %v4549 = vmul.f32 %v4546, %v4548
    %v4550 = vadd.f32 %v4546, %v4549
    %vm4551 = vweird.f32 %v4530
    %vm4552 = vweird.f32 %v4546
    %vm4553 = vmor %vm4551, %vm4552
    %v4554 = vsel %vm4553, %v4546, %v4550
    %v4555 = vand.u32 2147483647, %v4530
    %vm4556 = vcmp.eq.f32.partialorder %v4555, 8.507059e+37
    %v4557 = vand.u32 %v4530, 2147483648
    %v4558 = vor.u32 1.1754944e-38, %v4557
    %v4559 = vsel %vm4556, %v4558, %v4554
    %v4560 = vmul.f32 %v4524, %v4559
    %v4561 = vpack.c.bf16 %v4560, %v4545
    %4563 = vrot.lane.b32.xlu0 %v4399, 96
    %v4564 = vpop.permute.xlu0 %4563
    %v4567 = vsel %vm428, %v4561, 0
    %4569 = vmatpush.bf16.msra.mxu0 0
    %4570 = vmatpush.bf16.msra.mxu0 0
    %4571 = vmatpush.bf16.msra.mxu0 0
    %4572 = vmatpush.bf16.msra.mxu0 0
    %4573 = vmatpush.bf16.msra.mxu0 0
    %4574 = vmatpush.bf16.msra.mxu0 0
    %4575 = vmatpush.bf16.msra.mxu0 0
    %4576 = vmatpush.bf16.msra.mxu0 %v4564
    %4577 = vmatmul.bf16.gmra.mxu0 %v4567
    %v4578 = vpop.f32.mrf.mxu0
    %v4579 = vadd.f32 0.0, %v4578
    %v4580 = vpop.f32.mrf.mxu0
    %v4581 = vadd.f32 0.0, %v4580
    %4582 = vdwg.mxu0
    %v4583 = vpack.c.bf16 %v4581, %v4579
    %v4588 = vunpack.c.l.b16 %v4209
    %v4589 = vunpack.c.l.b16 %v4210
    %v4590 = vunpack.c.l.b16 %v4211
    %v4591 = vunpack.c.l.b16 %v4212
    %v4592 = vpack.c.b16 %v4589, %v4588
    %v4593 = vpack.c.b16 %v4591, %v4590
    %v4597 = vsel %vm407, %v4583, 0
    %4599 = vmatpush.bf16.msra.mxu0 0
    %4600 = vmatpush.bf16.msra.mxu0 0
    %4601 = vmatpush.bf16.msra.mxu0 0
    %4602 = vmatpush.bf16.msra.mxu0 0
    %4603 = vmatpush.bf16.msra.mxu0 0
    %4604 = vmatpush.bf16.msra.mxu0 0
    %4605 = vmatpush.bf16.msra.mxu0 %v4593
    %4606 = vmatpush.bf16.msra.mxu0 %v4592
    %4607 = vmatmul.bf16.gmra.mxu0 %v4597
    %v4608 = vpop.f32.mrf.mxu0
    %v4609 = vadd.f32 0.0, %v4608
    %v4610 = vpop.f32.mrf.mxu0
    %v4611 = vadd.f32 0.0, %v4610
    %4612 = vdwg.mxu0
    %v4617 = vunpack.c.l.b16 %v4205
    %v4618 = vunpack.c.l.b16 %v4206
    %v4619 = vunpack.c.l.b16 %v4207
    %v4620 = vunpack.c.l.b16 %v4208
    %v4621 = vpack.c.b16 %v4618, %v4617
    %v4622 = vpack.c.b16 %v4620, %v4619
    %v4626 = vsel %vm407, %v4486, 0
    %4628 = vmatpush.bf16.msra.mxu0 0
    %4629 = vmatpush.bf16.msra.mxu0 0
    %4630 = vmatpush.bf16.msra.mxu0 0
    %4631 = vmatpush.bf16.msra.mxu0 0
    %4632 = vmatpush.bf16.msra.mxu0 0
    %4633 = vmatpush.bf16.msra.mxu0 0
    %4634 = vmatpush.bf16.msra.mxu0 %v4622
    %4635 = vmatpush.bf16.msra.mxu0 %v4621
    %4636 = vmatmul.bf16.gmra.mxu0 %v4626
    %v4637 = vpop.f32.mrf.mxu0
    %v4638 = vadd.f32 %v4609, %v4637
    %v4639 = vpop.f32.mrf.mxu0
    %v4640 = vadd.f32 %v4611, %v4639
    %4641 = vdwg.mxu0
    %4642 = vrot.lane.b32.xlu0 %v4397, 64
    %v4643 = vpop.permute.xlu0 %4642
    %4644 = vrot.lane.b32.xlu0 %v4398, 64
    %v4645 = vpop.permute.xlu0 %4644
    %v4647 = vsel %vm407, %v4643, 0
    %v4650 = vsel %vm407, %v4645, 0
    %4652 = vmatpush.bf16.xpose.msra.mxu0 0
    %4653 = vmatpush.bf16.xpose.msra.mxu0 0
    %4654 = vmatpush.bf16.xpose.msra.mxu0 0
    %4655 = vmatpush.bf16.xpose.msra.mxu0 0
    %4656 = vmatpush.bf16.xpose.msra.mxu0 0
    %4657 = vmatpush.bf16.xpose.msra.mxu0 0
    %4658 = vmatpush.bf16.xpose.msra.mxu0 0
    %4659 = vmatpush.bf16.xpose.msra.mxu0 %v4650
    %4660 = vmatmul.bf16.gmra.mxu0 %v4647
    %v4661 = vpop.f32.mrf.mxu0
    %v4662 = vadd.f32 %v86, %v4661
    %v4663 = vpop.f32.mrf.mxu0
    %v4664 = vadd.f32 %v87, %v4663
    %4665 = vdwg.mxu0
    %v4666 = vsel %vm428, %v4662, -inf
    %4667 = vmax.xlane.f32.xlu0 %v4666
    %v4668 = vpop.xlane.xlu0 %4667
    %v4669 = vsel %vm428, %v4664, -inf
    %4670 = vmax.xlane.f32.xlu0 %v4669
    %v4671 = vpop.xlane.xlu0 %4670
    %v4672 = vsub.f32 %v4662, %v4668
    %v4673 = vsub.f32 %v4664, %v4671
    %v4674 = vmul.f32 %v4672, 1.442695
    %v4675 = vpow.pop %v4674
    %v4676 = vmul.f32 %v4673, 1.442695
    %v4677 = vpow.pop %v4676
    %v4678 = vsel %vm428, %v4675, 0.0
    %4679 = vadd.xlane.f32.xlu0 %v4678
    %v4680 = vpop.xlane.xlu0 %4679
    %v4681 = vsel %vm428, %v4677, 0.0
    %4682 = vadd.xlane.f32.xlu0 %v4681
    %v4683 = vpop.xlane.xlu0 %4682
    %v4684 = vrcp.pop %v4680
    %v4685 = vmul.f32 %v4680, %v4684
    %v4686 = vsub.f32 1.0, %v4685
    %v4687 = vmul.f32 %v4684, %v4686
    %v4688 = vadd.f32 %v4684, %v4687
    %vm4689 = vweird.f32 %v4680
    %vm4690 = vweird.f32 %v4684
    %vm4691 = vmor %vm4689, %vm4690
    %v4692 = vsel %vm4691, %v4684, %v4688
    %v4693 = vand.u32 2147483647, %v4680
    %vm4694 = vcmp.eq.f32.partialorder %v4693, 8.507059e+37
    %v4695 = vand.u32 %v4680, 2147483648
    %v4696 = vor.u32 1.1754944e-38, %v4695
    %v4697 = vsel %vm4694, %v4696, %v4692
    %v4698 = vmul.f32 %v4675, %v4697
    %v4699 = vrcp.pop %v4683
    %v4700 = vmul.f32 %v4683, %v4699
    %v4701 = vsub.f32 1.0, %v4700
    %v4702 = vmul.f32 %v4699, %v4701
    %v4703 = vadd.f32 %v4699, %v4702
    %vm4704 = vweird.f32 %v4683
    %vm4705 = vweird.f32 %v4699
    %vm4706 = vmor %vm4704, %vm4705
    %v4707 = vsel %vm4706, %v4699, %v4703
    %v4708 = vand.u32 2147483647, %v4683
    %vm4709 = vcmp.eq.f32.partialorder %v4708, 8.507059e+37
    %v4710 = vand.u32 %v4683, 2147483648
    %v4711 = vor.u32 1.1754944e-38, %v4710
    %v4712 = vsel %vm4709, %v4711, %v4707
    %v4713 = vmul.f32 %v4677, %v4712
    %v4714 = vpack.c.bf16 %v4713, %v4698
    %4715 = vrot.lane.b32.xlu0 %v4399, 64
    %v4716 = vpop.permute.xlu0 %4715
    %v4719 = vsel %vm428, %v4714, 0
    %4721 = vmatpush.bf16.msra.mxu0 0
    %4722 = vmatpush.bf16.msra.mxu0 0
    %4723 = vmatpush.bf16.msra.mxu0 0
    %4724 = vmatpush.bf16.msra.mxu0 0
    %4725 = vmatpush.bf16.msra.mxu0 0
    %4726 = vmatpush.bf16.msra.mxu0 0
    %4727 = vmatpush.bf16.msra.mxu0 0
    %4728 = vmatpush.bf16.msra.mxu0 %v4716
    %4729 = vmatmul.bf16.gmra.mxu0 %v4719
    %v4730 = vpop.f32.mrf.mxu0
    %v4731 = vadd.f32 0.0, %v4730
    %v4732 = vpop.f32.mrf.mxu0
    %v4733 = vadd.f32 0.0, %v4732
    %4734 = vdwg.mxu0
    %v4735 = vpack.c.bf16 %v4733, %v4731
    %v4740 = vunpack.c.l.b16 %v4213
    %v4741 = vunpack.c.l.b16 %v4214
    %v4742 = vunpack.c.l.b16 %v4215
    %v4743 = vunpack.c.l.b16 %v4216
    %v4744 = vpack.c.b16 %v4741, %v4740
    %v4745 = vpack.c.b16 %v4743, %v4742
    %v4749 = vsel %vm407, %v4735, 0
    %4751 = vmatpush.bf16.msra.mxu0 0
    %4752 = vmatpush.bf16.msra.mxu0 0
    %4753 = vmatpush.bf16.msra.mxu0 0
    %4754 = vmatpush.bf16.msra.mxu0 0
    %4755 = vmatpush.bf16.msra.mxu0 0
    %4756 = vmatpush.bf16.msra.mxu0 0
    %4757 = vmatpush.bf16.msra.mxu0 %v4745
    %4758 = vmatpush.bf16.msra.mxu0 %v4744
    %4759 = vmatmul.bf16.gmra.mxu0 %v4749
    %v4760 = vpop.f32.mrf.mxu0
    %v4761 = vadd.f32 0.0, %v4760
    %v4762 = vpop.f32.mrf.mxu0
    %v4763 = vadd.f32 0.0, %v4762
    %4764 = vdwg.mxu0
    %v4765 = vadd.f32 %v4638, %v4761
    %v4766 = vadd.f32 %v4640, %v4763
    %4767 = vrot.lane.b32.xlu0 %v4397, 32
    %v4768 = vpop.permute.xlu0 %4767
    %4769 = vrot.lane.b32.xlu0 %v4398, 32
    %v4770 = vpop.permute.xlu0 %4769
    %v4772 = vsel %vm407, %v4768, 0
    %v4775 = vsel %vm407, %v4770, 0
    %4777 = vmatpush.bf16.xpose.msra.mxu0 0
    %4778 = vmatpush.bf16.xpose.msra.mxu0 0
    %4779 = vmatpush.bf16.xpose.msra.mxu0 0
    %4780 = vmatpush.bf16.xpose.msra.mxu0 0
    %4781 = vmatpush.bf16.xpose.msra.mxu0 0
    %4782 = vmatpush.bf16.xpose.msra.mxu0 0
    %4783 = vmatpush.bf16.xpose.msra.mxu0 0
    %4784 = vmatpush.bf16.xpose.msra.mxu0 %v4775
    %4785 = vmatmul.bf16.gmra.mxu0 %v4772
    %v4786 = vpop.f32.mrf.mxu0
    %v4787 = vadd.f32 %v86, %v4786
    %v4788 = vpop.f32.mrf.mxu0
    %v4789 = vadd.f32 %v87, %v4788
    %4790 = vdwg.mxu0
    %v4791 = vsel %vm428, %v4787, -inf
    %4792 = vmax.xlane.f32.xlu0 %v4791
    %v4793 = vpop.xlane.xlu0 %4792
    %v4794 = vsel %vm428, %v4789, -inf
    %4795 = vmax.xlane.f32.xlu0 %v4794
    %v4796 = vpop.xlane.xlu0 %4795
    %v4797 = vsub.f32 %v4787, %v4793
    %v4798 = vsub.f32 %v4789, %v4796
    %v4799 = vmul.f32 %v4797, 1.442695
    %v4800 = vpow.pop %v4799
    %v4801 = vmul.f32 %v4798, 1.442695
    %v4802 = vpow.pop %v4801
    %v4803 = vsel %vm428, %v4800, 0.0
    %4804 = vadd.xlane.f32.xlu0 %v4803
    %v4805 = vpop.xlane.xlu0 %4804
    %v4806 = vsel %vm428, %v4802, 0.0
    %4807 = vadd.xlane.f32.xlu0 %v4806
    %v4808 = vpop.xlane.xlu0 %4807
    %v4809 = vrcp.pop %v4805
    %v4810 = vmul.f32 %v4805, %v4809
    %v4811 = vsub.f32 1.0, %v4810
    %v4812 = vmul.f32 %v4809, %v4811
    %v4813 = vadd.f32 %v4809, %v4812
    %vm4814 = vweird.f32 %v4805
    %vm4815 = vweird.f32 %v4809
    %vm4816 = vmor %vm4814, %vm4815
    %v4817 = vsel %vm4816, %v4809, %v4813
    %v4818 = vand.u32 2147483647, %v4805
    %vm4819 = vcmp.eq.f32.partialorder %v4818, 8.507059e+37
    %v4820 = vand.u32 %v4805, 2147483648
    %v4821 = vor.u32 1.1754944e-38, %v4820
    %v4822 = vsel %vm4819, %v4821, %v4817
    %v4823 = vmul.f32 %v4800, %v4822
    %v4824 = vrcp.pop %v4808
    %v4825 = vmul.f32 %v4808, %v4824
    %v4826 = vsub.f32 1.0, %v4825
    %v4827 = vmul.f32 %v4824, %v4826
    %v4828 = vadd.f32 %v4824, %v4827
    %vm4829 = vweird.f32 %v4808
    %vm4830 = vweird.f32 %v4824
    %vm4831 = vmor %vm4829, %vm4830
    %v4832 = vsel %vm4831, %v4824, %v4828
    %v4833 = vand.u32 2147483647, %v4808
    %vm4834 = vcmp.eq.f32.partialorder %v4833, 8.507059e+37
    %v4835 = vand.u32 %v4808, 2147483648
    %v4836 = vor.u32 1.1754944e-38, %v4835
    %v4837 = vsel %vm4834, %v4836, %v4832
    %v4838 = vmul.f32 %v4802, %v4837
    %v4839 = vpack.c.bf16 %v4838, %v4823
    %4840 = vrot.lane.b32.xlu0 %v4399, 32
    %v4841 = vpop.permute.xlu0 %4840
    %v4844 = vsel %vm428, %v4839, 0
    %4846 = vmatpush.bf16.msra.mxu0 0
    %4847 = vmatpush.bf16.msra.mxu0 0
    %4848 = vmatpush.bf16.msra.mxu0 0
    %4849 = vmatpush.bf16.msra.mxu0 0
    %4850 = vmatpush.bf16.msra.mxu0 0
    %4851 = vmatpush.bf16.msra.mxu0 0
    %4852 = vmatpush.bf16.msra.mxu0 0
    %4853 = vmatpush.bf16.msra.mxu0 %v4841
    %4854 = vmatmul.bf16.gmra.mxu0 %v4844
    %v4855 = vpop.f32.mrf.mxu0
    %v4856 = vadd.f32 0.0, %v4855
    %v4857 = vpop.f32.mrf.mxu0
    %v4858 = vadd.f32 0.0, %v4857
    %4859 = vdwg.mxu0
    %v4860 = vpack.c.bf16 %v4858, %v4856
    %v4865 = vunpack.c.l.b16 %v4217
    %v4866 = vunpack.c.l.b16 %v4218
    %v4867 = vunpack.c.l.b16 %v4219
    %v4868 = vunpack.c.l.b16 %v4220
    %v4869 = vpack.c.b16 %v4866, %v4865
    %v4870 = vpack.c.b16 %v4868, %v4867
    %v4874 = vsel %vm407, %v4860, 0
    %4876 = vmatpush.bf16.msra.mxu0 0
    %4877 = vmatpush.bf16.msra.mxu0 0
    %4878 = vmatpush.bf16.msra.mxu0 0
    %4879 = vmatpush.bf16.msra.mxu0 0
    %4880 = vmatpush.bf16.msra.mxu0 0
    %4881 = vmatpush.bf16.msra.mxu0 0
    %4882 = vmatpush.bf16.msra.mxu0 %v4870
    %4883 = vmatpush.bf16.msra.mxu0 %v4869
    %4884 = vmatmul.bf16.gmra.mxu0 %v4874
    %v4885 = vpop.f32.mrf.mxu0
    %v4886 = vadd.f32 0.0, %v4885
    %v4887 = vpop.f32.mrf.mxu0
    %v4888 = vadd.f32 0.0, %v4887
    %4889 = vdwg.mxu0
    %v4890 = vadd.f32 %v4765, %v4886
    %v4891 = vadd.f32 %v4766, %v4888
    %v4892 = vperm.slane %v4221, 0
    %v4893 = vadd.f32 %v4890, %v4892
    %v4894 = vadd.f32 %v4891, %v4892
    %v4895 = vadd.f32 %v4168, %v4893
    %v4896 = vadd.f32 %v4169, %v4894
    %v4897 = vld [vmem:[%s1 + $0x16] sm:$0x1]
    %v4898 = vld [vmem:[%s1 + $0x17] sm:$0x1]
    %4899 = vadd.xlane.f32.xlu0 %v4895
    %v4900 = vpop.xlane.xlu0 %4899
    %4901 = vadd.xlane.f32.xlu0 %v4896
    %v4902 = vpop.xlane.xlu0 %4901
    %v4903 = vmul.f32 %v4900, %v918
    %v4904 = vmul.f32 %v4902, %v918
    %v4905 = vsub.f32 %v4895, %v4903
    %v4906 = vsub.f32 %v4896, %v4904
    %v4907 = vmul.f32 %v4905, %v4905
    %v4908 = vmul.f32 %v4906, %v4906
    %4909 = vadd.xlane.f32.xlu0 %v4907
    %v4910 = vpop.xlane.xlu0 %4909
    %4911 = vadd.xlane.f32.xlu0 %v4908
    %v4912 = vpop.xlane.xlu0 %4911
    %v4913 = vmul.f32 %v4910, %v918
    %v4914 = vmul.f32 %v4912, %v918
    %v4915 = vadd.f32 %v4913, 1e-05
    %v4916 = vadd.f32 %v4914, 1e-05
    %v4917 = vrsqrt.pop %v4915
    %v4918 = vmul.f32 %v4917, %v4915
    %v4919 = vmul.f32 %v4918, %v4917
    %v4920 = vmul.f32 0.5, %v4919
    %v4921 = vsub.f32 1.5, %v4920
    %v4922 = vmul.f32 %v4917, %v4921
    %vm4923 = vweird.f32 %v4915
    %vm4924 = vweird.f32 %v4917
    %vm4925 = vmor %vm4923, %vm4924
    %v4926 = vsel %vm4925, %v4917, %v4922
    %v4927 = vrsqrt.pop %v4916
    %v4928 = vmul.f32 %v4927, %v4916
    %v4929 = vmul.f32 %v4928, %v4927
    %v4930 = vmul.f32 0.5, %v4929
    %v4931 = vsub.f32 1.5, %v4930
    %v4932 = vmul.f32 %v4927, %v4931
    %vm4933 = vweird.f32 %v4916
    %vm4934 = vweird.f32 %v4927
    %vm4935 = vmor %vm4933, %vm4934
    %v4936 = vsel %vm4935, %v4927, %v4932
    %v4937 = vmul.f32 %v4905, %v4926
    %v4938 = vmul.f32 %v4906, %v4936
    %v4939 = vperm.slane %v4897, 0
    %v4940 = vmul.f32 %v4937, %v4939
    %v4941 = vmul.f32 %v4938, %v4939
    %v4942 = vperm.slane %v4898, 0
    %v4943 = vadd.f32 %v4940, %v4942
    %v4944 = vadd.f32 %v4941, %v4942
    %v4945 = vld [vmem:[#allocation2 + $0x20] sm:$0xff]
    %v4946 = vld [vmem:[#allocation2 + $0x28] sm:$0xff]
    %v4947 = vld [vmem:[#allocation2 + $0x30] sm:$0xff]
    %v4948 = vld [vmem:[#allocation2 + $0x38] sm:$0xff]
    %v4949 = vld [vmem:[#allocation2 + $0x40] sm:$0xff]
    %v4950 = vld [vmem:[#allocation2 + $0x48] sm:$0xff]
    %v4951 = vld [vmem:[#allocation2 + $0x50] sm:$0xff]
    %v4952 = vld [vmem:[#allocation2 + $0x58] sm:$0xff]
    %v4953 = vld [vmem:[#allocation2 + $0x84] sm:$0xff]
    %v4954 = vld [vmem:[#allocation2 + $0x8c] sm:$0xff]
    %v4955 = vld [vmem:[#allocation2 + $0x94] sm:$0xff]
    %v4956 = vld [vmem:[#allocation2 + $0x9c] sm:$0xff]
    %v4957 = vld [vmem:[#allocation2 + $0xa4] sm:$0xff]
    %v4958 = vld [vmem:[#allocation2 + $0xac] sm:$0xff]
    %v4959 = vld [vmem:[#allocation2 + $0xb4] sm:$0xff]
    %v4960 = vld [vmem:[#allocation2 + $0xbc] sm:$0xff]
    %v4961 = vld [vmem:[#allocation2 + $0xe8] sm:$0xff]
    %v4962 = vld [vmem:[#allocation2 + $0xf0] sm:$0xff]
    %v4963 = vld [vmem:[#allocation2 + $0xf8] sm:$0xff]
    %v4964 = vld [vmem:[#allocation2 + $0x100] sm:$0xff]
    %v4965 = vld [vmem:[#allocation2 + $0x108] sm:$0xff]
    %v4966 = vld [vmem:[#allocation2 + $0x110] sm:$0xff]
    %v4967 = vld [vmem:[#allocation2 + $0x118] sm:$0xff]
    %v4968 = vld [vmem:[#allocation2 + $0x120] sm:$0xff]
    %v4969 = vld [vmem:[#allocation2 + $0x14c] sm:$0xff]
    %v4970 = vld [vmem:[#allocation2 + $0x154] sm:$0xff]
    %v4971 = vld [vmem:[#allocation2 + $0x15c] sm:$0xff]
    %v4972 = vld [vmem:[#allocation2 + $0x164] sm:$0xff]
    %v4973 = vld [vmem:[#allocation2 + $0x16c] sm:$0xff]
    %v4974 = vld [vmem:[#allocation2 + $0x174] sm:$0xff]
    %v4975 = vld [vmem:[#allocation2 + $0x17c] sm:$0xff]
    %v4976 = vld [vmem:[#allocation2 + $0x184] sm:$0xff]
    %v4977 = vld [vmem:[#allocation2 + $0x1b0] sm:$0xff]
    %v4978 = vld [vmem:[#allocation2 + $0x1b8] sm:$0xff]
    %v4979 = vld [vmem:[#allocation2 + $0x1c0] sm:$0xff]
    %v4980 = vld [vmem:[#allocation2 + $0x1c8] sm:$0xff]
    %v4981 = vld [vmem:[#allocation2 + $0x1d0] sm:$0xff]
    %v4982 = vld [vmem:[#allocation2 + $0x1d8] sm:$0xff]
    %v4983 = vld [vmem:[#allocation2 + $0x1e0] sm:$0xff]
    %v4984 = vld [vmem:[#allocation2 + $0x1e8] sm:$0xff]
    %v4985 = vld [vmem:[#allocation2 + $0x214] sm:$0xff]
    %v4986 = vld [vmem:[#allocation2 + $0x21c] sm:$0xff]
    %v4987 = vld [vmem:[#allocation2 + $0x224] sm:$0xff]
    %v4988 = vld [vmem:[#allocation2 + $0x22c] sm:$0xff]
    %v4989 = vld [vmem:[#allocation2 + $0x234] sm:$0xff]
    %v4990 = vld [vmem:[#allocation2 + $0x23c] sm:$0xff]
    %v4991 = vld [vmem:[#allocation2 + $0x244] sm:$0xff]
    %v4992 = vld [vmem:[#allocation2 + $0x24c] sm:$0xff]
    %v4993 = vld [vmem:[#allocation2 + $0x278] sm:$0xff]
    %v4994 = vld [vmem:[#allocation2 + $0x280] sm:$0xff]
    %v4995 = vld [vmem:[#allocation2 + $0x288] sm:$0xff]
    %v4996 = vld [vmem:[#allocation2 + $0x290] sm:$0xff]
    %v4997 = vld [vmem:[#allocation2 + $0x298] sm:$0xff]
    %v4998 = vld [vmem:[#allocation2 + $0x2a0] sm:$0xff]
    %v4999 = vld [vmem:[#allocation2 + $0x2a8] sm:$0xff]
    %v5000 = vld [vmem:[#allocation2 + $0x2b0] sm:$0xff]
    %v5001 = vld [vmem:[#allocation2 + $0x2dc] sm:$0xff]
    %v5002 = vld [vmem:[#allocation2 + $0x2e4] sm:$0xff]
    %v5003 = vld [vmem:[#allocation2 + $0x2ec] sm:$0xff]
    %v5004 = vld [vmem:[#allocation2 + $0x2f4] sm:$0xff]
    %v5005 = vld [vmem:[#allocation2 + $0x2fc] sm:$0xff]
    %v5006 = vld [vmem:[#allocation2 + $0x304] sm:$0xff]
    %v5007 = vld [vmem:[#allocation2 + $0x30c] sm:$0xff]
    %v5008 = vld [vmem:[#allocation2 + $0x314] sm:$0xff]
    %v5009 = vld [vmem:[#allocation2 + $0x340] sm:$0xff]
    %v5010 = vld [vmem:[#allocation2 + $0x348] sm:$0xff]
    %v5011 = vld [vmem:[#allocation2 + $0x350] sm:$0xff]
    %v5012 = vld [vmem:[#allocation2 + $0x358] sm:$0xff]
    %v5013 = vld [vmem:[#allocation2 + $0x360] sm:$0xff]
    %v5014 = vld [vmem:[#allocation2 + $0x368] sm:$0xff]
    %v5015 = vld [vmem:[#allocation2 + $0x370] sm:$0xff]
    %v5016 = vld [vmem:[#allocation2 + $0x378] sm:$0xff]
    %v5017 = vld [vmem:[#allocation2 + $0x3a4] sm:$0xff]
    %v5018 = vld [vmem:[#allocation2 + $0x3ac] sm:$0xff]
    %v5019 = vld [vmem:[#allocation2 + $0x3b4] sm:$0xff]
    %v5020 = vld [vmem:[#allocation2 + $0x3bc] sm:$0xff]
    %v5021 = vld [vmem:[#allocation2 + $0x3c4] sm:$0xff]
    %v5022 = vld [vmem:[#allocation2 + $0x3cc] sm:$0xff]
    %v5023 = vld [vmem:[#allocation2 + $0x3d4] sm:$0xff]
    %v5024 = vld [vmem:[#allocation2 + $0x3dc] sm:$0xff]
    %v5025 = vld [vmem:[#allocation2 + $0x408] sm:$0xff]
    %v5026 = vld [vmem:[#allocation2 + $0x410] sm:$0xff]
    %v5027 = vld [vmem:[#allocation2 + $0x418] sm:$0xff]
    %v5028 = vld [vmem:[#allocation2 + $0x420] sm:$0xff]
    %v5029 = vld [vmem:[#allocation2 + $0x428] sm:$0xff]
    %v5030 = vld [vmem:[#allocation2 + $0x430] sm:$0xff]
    %v5031 = vld [vmem:[#allocation2 + $0x438] sm:$0xff]
    %v5032 = vld [vmem:[#allocation2 + $0x440] sm:$0xff]
    %v5033 = vld [vmem:[#allocation2 + $0x46c] sm:$0xff]
    %v5034 = vld [vmem:[#allocation2 + $0x474] sm:$0xff]
    %v5035 = vld [vmem:[#allocation2 + $0x47c] sm:$0xff]
    %v5036 = vld [vmem:[#allocation2 + $0x484] sm:$0xff]
    %v5037 = vld [vmem:[#allocation2 + $0x48c] sm:$0xff]
    %v5038 = vld [vmem:[#allocation2 + $0x494] sm:$0xff]
    %v5039 = vld [vmem:[#allocation2 + $0x49c] sm:$0xff]
    %v5040 = vld [vmem:[#allocation2 + $0x4a4] sm:$0xff]
    %v5041 = vld [vmem:[#allocation2 + $0x4d0] sm:$0xff]
    %v5042 = vld [vmem:[#allocation2 + $0x4d8] sm:$0xff]
    %v5043 = vld [vmem:[#allocation2 + $0x4e0] sm:$0xff]
    %v5044 = vld [vmem:[#allocation2 + $0x4e8] sm:$0xff]
    %v5045 = vld [vmem:[#allocation2 + $0x4f0] sm:$0xff]
    %v5046 = vld [vmem:[#allocation2 + $0x4f8] sm:$0xff]
    %v5047 = vld [vmem:[#allocation2 + $0x500] sm:$0xff]
    %v5048 = vld [vmem:[#allocation2 + $0x508] sm:$0xff]
    %v5049 = vld [vmem:[#allocation2 + $0x534] sm:$0xff]
    %v5050 = vld [vmem:[#allocation2 + $0x53c] sm:$0xff]
    %v5051 = vld [vmem:[#allocation2 + $0x544] sm:$0xff]
    %v5052 = vld [vmem:[#allocation2 + $0x54c] sm:$0xff]
    %v5053 = vld [vmem:[#allocation2 + $0x554] sm:$0xff]
    %v5054 = vld [vmem:[#allocation2 + $0x55c] sm:$0xff]
    %v5055 = vld [vmem:[#allocation2 + $0x564] sm:$0xff]
    %v5056 = vld [vmem:[#allocation2 + $0x56c] sm:$0xff]
    %v5057 = vld [vmem:[#allocation2 + $0x598] sm:$0xff]
    %v5058 = vld [vmem:[#allocation2 + $0x5a0] sm:$0xff]
    %v5059 = vld [vmem:[#allocation2 + $0x5a8] sm:$0xff]
    %v5060 = vld [vmem:[#allocation2 + $0x5b0] sm:$0xff]
    %v5061 = vld [vmem:[#allocation2 + $0x5b8] sm:$0xff]
    %v5062 = vld [vmem:[#allocation2 + $0x5c0] sm:$0xff]
    %v5063 = vld [vmem:[#allocation2 + $0x5c8] sm:$0xff]
    %v5064 = vld [vmem:[#allocation2 + $0x5d0] sm:$0xff]
    %v5065 = vld [vmem:[#allocation2 + $0x5fc] sm:$0xff]
    %v5066 = vld [vmem:[#allocation2 + $0x604] sm:$0xff]
    %v5067 = vld [vmem:[#allocation2 + $0x60c] sm:$0xff]
    %v5068 = vld [vmem:[#allocation2 + $0x614] sm:$0xff]
    %v5069 = vld [vmem:[#allocation2 + $0x61c] sm:$0xff]
    %v5070 = vld [vmem:[#allocation2 + $0x624] sm:$0xff]
    %v5071 = vld [vmem:[#allocation2 + $0x62c] sm:$0xff]
    %v5072 = vld [vmem:[#allocation2 + $0x634] sm:$0xff]
    %v5073 = vpack.c.bf16 %v4944, %v4943
    %s5074 = scalar_lea.vmem %s2, 1
    %v5075 = vld [vmem:[%s5074] ss:$2 sm:$0xff]
    %s5076 = scalar_lea.vmem %s2, 17
    %v5077 = vld [vmem:[%s5076] ss:$2 sm:$0xff]
    %v5080 = vperm.slane %v5075, 0
    %v5081 = vperm.slane %v5075, 1
    %v5082 = vperm.slane %v5075, 2
    %v5083 = vperm.slane %v5075, 3
    %v5084 = vperm.slane %v5075, 4
    %v5085 = vperm.slane %v5075, 5
    %v5086 = vperm.slane %v5075, 6
    %v5087 = vperm.slane %v5075, 7
    %v5088 = vperm.slane %v5077, 0
    %v5089 = vperm.slane %v5077, 1
    %v5090 = vperm.slane %v5077, 2
    %v5091 = vperm.slane %v5077, 3
    %v5092 = vperm.slane %v5077, 4
    %v5093 = vperm.slane %v5077, 5
    %v5094 = vperm.slane %v5077, 6
    %v5095 = vperm.slane %v5077, 7
    %v5240 = vunpack.c.l.b16 %v4945
    %v5241 = vunpack.c.h.b16 %v4945
    %v5242 = vunpack.c.l.b16 %v4946
    %v5243 = vunpack.c.h.b16 %v4946
    %v5244 = vunpack.c.l.b16 %v4947
    %v5245 = vunpack.c.h.b16 %v4947
    %v5246 = vunpack.c.l.b16 %v4948
    %v5247 = vunpack.c.h.b16 %v4948
    %v5248 = vunpack.c.l.b16 %v4949
    %v5249 = vunpack.c.h.b16 %v4949
    %v5250 = vunpack.c.l.b16 %v4950
    %v5251 = vunpack.c.h.b16 %v4950
    %v5252 = vunpack.c.l.b16 %v4951
    %v5253 = vunpack.c.h.b16 %v4951
    %v5254 = vunpack.c.l.b16 %v4952
    %v5255 = vunpack.c.h.b16 %v4952
    %v5256 = vunpack.c.l.b16 %v4953
    %v5257 = vunpack.c.h.b16 %v4953
    %v5258 = vunpack.c.l.b16 %v4954
    %v5259 = vunpack.c.h.b16 %v4954
    %v5260 = vunpack.c.l.b16 %v4955
    %v5261 = vunpack.c.h.b16 %v4955
    %v5262 = vunpack.c.l.b16 %v4956
    %v5263 = vunpack.c.h.b16 %v4956
    %v5264 = vunpack.c.l.b16 %v4957
    %v5265 = vunpack.c.h.b16 %v4957
    %v5266 = vunpack.c.l.b16 %v4958
    %v5267 = vunpack.c.h.b16 %v4958
    %v5268 = vunpack.c.l.b16 %v4959
    %v5269 = vunpack.c.h.b16 %v4959
    %v5270 = vunpack.c.l.b16 %v4960
    %v5271 = vunpack.c.h.b16 %v4960
    %v5272 = vunpack.c.l.b16 %v4961
    %v5273 = vunpack.c.h.b16 %v4961
    %v5274 = vunpack.c.l.b16 %v4962
    %v5275 = vunpack.c.h.b16 %v4962
    %v5276 = vunpack.c.l.b16 %v4963
    %v5277 = vunpack.c.h.b16 %v4963
    %v5278 = vunpack.c.l.b16 %v4964
    %v5279 = vunpack.c.h.b16 %v4964
    %v5280 = vunpack.c.l.b16 %v4965
    %v5281 = vunpack.c.h.b16 %v4965
    %v5282 = vunpack.c.l.b16 %v4966
    %v5283 = vunpack.c.h.b16 %v4966
    %v5284 = vunpack.c.l.b16 %v4967
    %v5285 = vunpack.c.h.b16 %v4967
    %v5286 = vunpack.c.l.b16 %v4968
    %v5287 = vunpack.c.h.b16 %v4968
    %v5288 = vunpack.c.l.b16 %v4969
    %v5289 = vunpack.c.h.b16 %v4969
    %v5290 = vunpack.c.l.b16 %v4970
    %v5291 = vunpack.c.h.b16 %v4970
    %v5292 = vunpack.c.l.b16 %v4971
    %v5293 = vunpack.c.h.b16 %v4971
    %v5294 = vunpack.c.l.b16 %v4972
    %v5295 = vunpack.c.h.b16 %v4972
    %v5296 = vunpack.c.l.b16 %v4973
    %v5297 = vunpack.c.h.b16 %v4973
    %v5298 = vunpack.c.l.b16 %v4974
    %v5299 = vunpack.c.h.b16 %v4974
    %v5300 = vunpack.c.l.b16 %v4975
    %v5301 = vunpack.c.h.b16 %v4975
    %v5302 = vunpack.c.l.b16 %v4976
    %v5303 = vunpack.c.h.b16 %v4976
    %v5304 = vunpack.c.l.b16 %v4977
    %v5305 = vunpack.c.h.b16 %v4977
    %v5306 = vunpack.c.l.b16 %v4978
    %v5307 = vunpack.c.h.b16 %v4978
    %v5308 = vunpack.c.l.b16 %v4979
    %v5309 = vunpack.c.h.b16 %v4979
    %v5310 = vunpack.c.l.b16 %v4980
    %v5311 = vunpack.c.h.b16 %v4980
    %v5312 = vunpack.c.l.b16 %v4981
    %v5313 = vunpack.c.h.b16 %v4981
    %v5314 = vunpack.c.l.b16 %v4982
    %v5315 = vunpack.c.h.b16 %v4982
    %v5316 = vunpack.c.l.b16 %v4983
    %v5317 = vunpack.c.h.b16 %v4983
    %v5318 = vunpack.c.l.b16 %v4984
    %v5319 = vunpack.c.h.b16 %v4984
    %v5320 = vunpack.c.l.b16 %v4985
    %v5321 = vunpack.c.h.b16 %v4985
    %v5322 = vunpack.c.l.b16 %v4986
    %v5323 = vunpack.c.h.b16 %v4986
    %v5324 = vunpack.c.l.b16 %v4987
    %v5325 = vunpack.c.h.b16 %v4987
    %v5326 = vunpack.c.l.b16 %v4988
    %v5327 = vunpack.c.h.b16 %v4988
    %v5328 = vunpack.c.l.b16 %v4989
    %v5329 = vunpack.c.h.b16 %v4989
    %v5330 = vunpack.c.l.b16 %v4990
    %v5331 = vunpack.c.h.b16 %v4990
    %v5332 = vunpack.c.l.b16 %v4991
    %v5333 = vunpack.c.h.b16 %v4991
    %v5334 = vunpack.c.l.b16 %v4992
    %v5335 = vunpack.c.h.b16 %v4992
    %v5336 = vunpack.c.l.b16 %v4993
    %v5337 = vunpack.c.h.b16 %v4993
    %v5338 = vunpack.c.l.b16 %v4994
    %v5339 = vunpack.c.h.b16 %v4994
    %v5340 = vunpack.c.l.b16 %v4995
    %v5341 = vunpack.c.h.b16 %v4995
    %v5342 = vunpack.c.l.b16 %v4996
    %v5343 = vunpack.c.h.b16 %v4996
    %v5344 = vunpack.c.l.b16 %v4997
    %v5345 = vunpack.c.h.b16 %v4997
    %v5346 = vunpack.c.l.b16 %v4998
    %v5347 = vunpack.c.h.b16 %v4998
    %v5348 = vunpack.c.l.b16 %v4999
    %v5349 = vunpack.c.h.b16 %v4999
    %v5350 = vunpack.c.l.b16 %v5000
    %v5351 = vunpack.c.h.b16 %v5000
    %v5352 = vunpack.c.l.b16 %v5001
    %v5353 = vunpack.c.h.b16 %v5001
    %v5354 = vunpack.c.l.b16 %v5002
    %v5355 = vunpack.c.h.b16 %v5002
    %v5356 = vunpack.c.l.b16 %v5003
    %v5357 = vunpack.c.h.b16 %v5003
    %v5358 = vunpack.c.l.b16 %v5004
    %v5359 = vunpack.c.h.b16 %v5004
    %v5360 = vunpack.c.l.b16 %v5005
    %v5361 = vunpack.c.h.b16 %v5005
    %v5362 = vunpack.c.l.b16 %v5006
    %v5363 = vunpack.c.h.b16 %v5006
    %v5364 = vunpack.c.l.b16 %v5007
    %v5365 = vunpack.c.h.b16 %v5007
    %v5366 = vunpack.c.l.b16 %v5008
    %v5367 = vunpack.c.h.b16 %v5008
    %v5368 = vunpack.c.l.b16 %v5009
    %v5369 = vunpack.c.h.b16 %v5009
    %v5370 = vunpack.c.l.b16 %v5010
    %v5371 = vunpack.c.h.b16 %v5010
    %v5372 = vunpack.c.l.b16 %v5011
    %v5373 = vunpack.c.h.b16 %v5011
    %v5374 = vunpack.c.l.b16 %v5012
    %v5375 = vunpack.c.h.b16 %v5012
    %v5376 = vunpack.c.l.b16 %v5013
    %v5377 = vunpack.c.h.b16 %v5013
    %v5378 = vunpack.c.l.b16 %v5014
    %v5379 = vunpack.c.h.b16 %v5014
    %v5380 = vunpack.c.l.b16 %v5015
    %v5381 = vunpack.c.h.b16 %v5015
    %v5382 = vunpack.c.l.b16 %v5016
    %v5383 = vunpack.c.h.b16 %v5016
    %v5384 = vunpack.c.l.b16 %v5017
    %v5385 = vunpack.c.h.b16 %v5017
    %v5386 = vunpack.c.l.b16 %v5018
    %v5387 = vunpack.c.h.b16 %v5018
    %v5388 = vunpack.c.l.b16 %v5019
    %v5389 = vunpack.c.h.b16 %v5019
    %v5390 = vunpack.c.l.b16 %v5020
    %v5391 = vunpack.c.h.b16 %v5020
    %v5392 = vunpack.c.l.b16 %v5021
    %v5393 = vunpack.c.h.b16 %v5021
    %v5394 = vunpack.c.l.b16 %v5022
    %v5395 = vunpack.c.h.b16 %v5022
    %v5396 = vunpack.c.l.b16 %v5023
    %v5397 = vunpack.c.h.b16 %v5023
    %v5398 = vunpack.c.l.b16 %v5024
    %v5399 = vunpack.c.h.b16 %v5024
    %v5400 = vunpack.c.l.b16 %v5025
    %v5401 = vunpack.c.h.b16 %v5025
    %v5402 = vunpack.c.l.b16 %v5026
    %v5403 = vunpack.c.h.b16 %v5026
    %v5404 = vunpack.c.l.b16 %v5027
    %v5405 = vunpack.c.h.b16 %v5027
    %v5406 = vunpack.c.l.b16 %v5028
    %v5407 = vunpack.c.h.b16 %v5028
    %v5408 = vunpack.c.l.b16 %v5029
    %v5409 = vunpack.c.h.b16 %v5029
    %v5410 = vunpack.c.l.b16 %v5030
    %v5411 = vunpack.c.h.b16 %v5030
    %v5412 = vunpack.c.l.b16 %v5031
    %v5413 = vunpack.c.h.b16 %v5031
    %v5414 = vunpack.c.l.b16 %v5032
    %v5415 = vunpack.c.h.b16 %v5032
    %v5416 = vunpack.c.l.b16 %v5033
    %v5417 = vunpack.c.h.b16 %v5033
    %v5418 = vunpack.c.l.b16 %v5034
    %v5419 = vunpack.c.h.b16 %v5034
    %v5420 = vunpack.c.l.b16 %v5035
    %v5421 = vunpack.c.h.b16 %v5035
    %v5422 = vunpack.c.l.b16 %v5036
    %v5423 = vunpack.c.h.b16 %v5036
    %v5424 = vunpack.c.l.b16 %v5037
    %v5425 = vunpack.c.h.b16 %v5037
    %v5426 = vunpack.c.l.b16 %v5038
    %v5427 = vunpack.c.h.b16 %v5038
    %v5428 = vunpack.c.l.b16 %v5039
    %v5429 = vunpack.c.h.b16 %v5039
    %v5430 = vunpack.c.l.b16 %v5040
    %v5431 = vunpack.c.h.b16 %v5040
    %v5432 = vunpack.c.l.b16 %v5041
    %v5433 = vunpack.c.h.b16 %v5041
    %v5434 = vunpack.c.l.b16 %v5042
    %v5435 = vunpack.c.h.b16 %v5042
    %v5436 = vunpack.c.l.b16 %v5043
    %v5437 = vunpack.c.h.b16 %v5043
    %v5438 = vunpack.c.l.b16 %v5044
    %v5439 = vunpack.c.h.b16 %v5044
    %v5440 = vunpack.c.l.b16 %v5045
    %v5441 = vunpack.c.h.b16 %v5045
    %v5442 = vunpack.c.l.b16 %v5046
    %v5443 = vunpack.c.h.b16 %v5046
    %v5444 = vunpack.c.l.b16 %v5047
    %v5445 = vunpack.c.h.b16 %v5047
    %v5446 = vunpack.c.l.b16 %v5048
    %v5447 = vunpack.c.h.b16 %v5048
    %v5448 = vunpack.c.l.b16 %v5049
    %v5449 = vunpack.c.h.b16 %v5049
    %v5450 = vunpack.c.l.b16 %v5050
    %v5451 = vunpack.c.h.b16 %v5050
    %v5452 = vunpack.c.l.b16 %v5051
    %v5453 = vunpack.c.h.b16 %v5051
    %v5454 = vunpack.c.l.b16 %v5052
    %v5455 = vunpack.c.h.b16 %v5052
    %v5456 = vunpack.c.l.b16 %v5053
    %v5457 = vunpack.c.h.b16 %v5053
    %v5458 = vunpack.c.l.b16 %v5054
    %v5459 = vunpack.c.h.b16 %v5054
    %v5460 = vunpack.c.l.b16 %v5055
    %v5461 = vunpack.c.h.b16 %v5055
    %v5462 = vunpack.c.l.b16 %v5056
    %v5463 = vunpack.c.h.b16 %v5056
    %v5464 = vunpack.c.l.b16 %v5057
    %v5465 = vunpack.c.h.b16 %v5057
    %v5466 = vunpack.c.l.b16 %v5058
    %v5467 = vunpack.c.h.b16 %v5058
    %v5468 = vunpack.c.l.b16 %v5059
    %v5469 = vunpack.c.h.b16 %v5059
    %v5470 = vunpack.c.l.b16 %v5060
    %v5471 = vunpack.c.h.b16 %v5060
    %v5472 = vunpack.c.l.b16 %v5061
    %v5473 = vunpack.c.h.b16 %v5061
    %v5474 = vunpack.c.l.b16 %v5062
    %v5475 = vunpack.c.h.b16 %v5062
    %v5476 = vunpack.c.l.b16 %v5063
    %v5477 = vunpack.c.h.b16 %v5063
    %v5478 = vunpack.c.l.b16 %v5064
    %v5479 = vunpack.c.h.b16 %v5064
    %v5480 = vunpack.c.l.b16 %v5065
    %v5481 = vunpack.c.h.b16 %v5065
    %v5482 = vunpack.c.l.b16 %v5066
    %v5483 = vunpack.c.h.b16 %v5066
    %v5484 = vunpack.c.l.b16 %v5067
    %v5485 = vunpack.c.h.b16 %v5067
    %v5486 = vunpack.c.l.b16 %v5068
    %v5487 = vunpack.c.h.b16 %v5068
    %v5488 = vunpack.c.l.b16 %v5069
    %v5489 = vunpack.c.h.b16 %v5069
    %v5490 = vunpack.c.l.b16 %v5070
    %v5491 = vunpack.c.h.b16 %v5070
    %v5492 = vunpack.c.l.b16 %v5071
    %v5493 = vunpack.c.h.b16 %v5071
    %v5494 = vunpack.c.l.b16 %v5072
    %v5495 = vunpack.c.h.b16 %v5072
    %v5496 = vpack.c.b16 %v5256, %v5240
    %v5497 = vpack.c.b16 %v5257, %v5241
    %v5498 = vpack.c.b16 %v5258, %v5242
    %v5499 = vpack.c.b16 %v5259, %v5243
    %v5500 = vpack.c.b16 %v5260, %v5244
    %v5501 = vpack.c.b16 %v5261, %v5245
    %v5502 = vpack.c.b16 %v5262, %v5246
    %v5503 = vpack.c.b16 %v5263, %v5247
    %v5504 = vpack.c.b16 %v5264, %v5248
    %v5505 = vpack.c.b16 %v5265, %v5249
    %v5506 = vpack.c.b16 %v5266, %v5250
    %v5507 = vpack.c.b16 %v5267, %v5251
    %v5508 = vpack.c.b16 %v5268, %v5252
    %v5509 = vpack.c.b16 %v5269, %v5253
    %v5510 = vpack.c.b16 %v5270, %v5254
    %v5511 = vpack.c.b16 %v5271, %v5255
    %v5512 = vpack.c.b16 %v5288, %v5272
    %v5513 = vpack.c.b16 %v5289, %v5273
    %v5514 = vpack.c.b16 %v5290, %v5274
    %v5515 = vpack.c.b16 %v5291, %v5275
    %v5516 = vpack.c.b16 %v5292, %v5276
    %v5517 = vpack.c.b16 %v5293, %v5277
    %v5518 = vpack.c.b16 %v5294, %v5278
    %v5519 = vpack.c.b16 %v5295, %v5279
    %v5520 = vpack.c.b16 %v5296, %v5280
    %v5521 = vpack.c.b16 %v5297, %v5281
    %v5522 = vpack.c.b16 %v5298, %v5282
    %v5523 = vpack.c.b16 %v5299, %v5283
    %v5524 = vpack.c.b16 %v5300, %v5284
    %v5525 = vpack.c.b16 %v5301, %v5285
    %v5526 = vpack.c.b16 %v5302, %v5286
    %v5527 = vpack.c.b16 %v5303, %v5287
    %v5528 = vpack.c.b16 %v5320, %v5304
    %v5529 = vpack.c.b16 %v5321, %v5305
    %v5530 = vpack.c.b16 %v5322, %v5306
    %v5531 = vpack.c.b16 %v5323, %v5307
    %v5532 = vpack.c.b16 %v5324, %v5308
    %v5533 = vpack.c.b16 %v5325, %v5309
    %v5534 = vpack.c.b16 %v5326, %v5310
    %v5535 = vpack.c.b16 %v5327, %v5311
    %v5536 = vpack.c.b16 %v5328, %v5312
    %v5537 = vpack.c.b16 %v5329, %v5313
    %v5538 = vpack.c.b16 %v5330, %v5314
    %v5539 = vpack.c.b16 %v5331, %v5315
    %v5540 = vpack.c.b16 %v5332, %v5316
    %v5541 = vpack.c.b16 %v5333, %v5317
    %v5542 = vpack.c.b16 %v5334, %v5318
    %v5543 = vpack.c.b16 %v5335, %v5319
    %v5544 = vpack.c.b16 %v5352, %v5336
    %v5545 = vpack.c.b16 %v5353, %v5337
    %v5546 = vpack.c.b16 %v5354, %v5338
    %v5547 = vpack.c.b16 %v5355, %v5339
    %v5548 = vpack.c.b16 %v5356, %v5340
    %v5549 = vpack.c.b16 %v5357, %v5341
    %v5550 = vpack.c.b16 %v5358, %v5342
    %v5551 = vpack.c.b16 %v5359, %v5343
    %v5552 = vpack.c.b16 %v5360, %v5344
    %v5553 = vpack.c.b16 %v5361, %v5345
    %v5554 = vpack.c.b16 %v5362, %v5346
    %v5555 = vpack.c.b16 %v5363, %v5347
    %v5556 = vpack.c.b16 %v5364, %v5348
    %v5557 = vpack.c.b16 %v5365, %v5349
    %v5558 = vpack.c.b16 %v5366, %v5350
    %v5559 = vpack.c.b16 %v5367, %v5351
    %v5560 = vpack.c.b16 %v5384, %v5368
    %v5561 = vpack.c.b16 %v5385, %v5369
    %v5562 = vpack.c.b16 %v5386, %v5370
    %v5563 = vpack.c.b16 %v5387, %v5371
    %v5564 = vpack.c.b16 %v5388, %v5372
    %v5565 = vpack.c.b16 %v5389, %v5373
    %v5566 = vpack.c.b16 %v5390, %v5374
    %v5567 = vpack.c.b16 %v5391, %v5375
    %v5568 = vpack.c.b16 %v5392, %v5376
    %v5569 = vpack.c.b16 %v5393, %v5377
    %v5570 = vpack.c.b16 %v5394, %v5378
    %v5571 = vpack.c.b16 %v5395, %v5379
    %v5572 = vpack.c.b16 %v5396, %v5380
    %v5573 = vpack.c.b16 %v5397, %v5381
    %v5574 = vpack.c.b16 %v5398, %v5382
    %v5575 = vpack.c.b16 %v5399, %v5383
    %v5576 = vpack.c.b16 %v5416, %v5400
    %v5577 = vpack.c.b16 %v5417, %v5401
    %v5578 = vpack.c.b16 %v5418, %v5402
    %v5579 = vpack.c.b16 %v5419, %v5403
    %v5580 = vpack.c.b16 %v5420, %v5404
    %v5581 = vpack.c.b16 %v5421, %v5405
    %v5582 = vpack.c.b16 %v5422, %v5406
    %v5583 = vpack.c.b16 %v5423, %v5407
    %v5584 = vpack.c.b16 %v5424, %v5408
    %v5585 = vpack.c.b16 %v5425, %v5409
    %v5586 = vpack.c.b16 %v5426, %v5410
    %v5587 = vpack.c.b16 %v5427, %v5411
    %v5588 = vpack.c.b16 %v5428, %v5412
    %v5589 = vpack.c.b16 %v5429, %v5413
    %v5590 = vpack.c.b16 %v5430, %v5414
    %v5591 = vpack.c.b16 %v5431, %v5415
    %v5592 = vpack.c.b16 %v5448, %v5432
    %v5593 = vpack.c.b16 %v5449, %v5433
    %v5594 = vpack.c.b16 %v5450, %v5434
    %v5595 = vpack.c.b16 %v5451, %v5435
    %v5596 = vpack.c.b16 %v5452, %v5436
    %v5597 = vpack.c.b16 %v5453, %v5437
    %v5598 = vpack.c.b16 %v5454, %v5438
    %v5599 = vpack.c.b16 %v5455, %v5439
    %v5600 = vpack.c.b16 %v5456, %v5440
    %v5601 = vpack.c.b16 %v5457, %v5441
    %v5602 = vpack.c.b16 %v5458, %v5442
    %v5603 = vpack.c.b16 %v5459, %v5443
    %v5604 = vpack.c.b16 %v5460, %v5444
    %v5605 = vpack.c.b16 %v5461, %v5445
    %v5606 = vpack.c.b16 %v5462, %v5446
    %v5607 = vpack.c.b16 %v5463, %v5447
    %v5608 = vpack.c.b16 %v5480, %v5464
    %v5609 = vpack.c.b16 %v5481, %v5465
    %v5610 = vpack.c.b16 %v5482, %v5466
    %v5611 = vpack.c.b16 %v5483, %v5467
    %v5612 = vpack.c.b16 %v5484, %v5468
    %v5613 = vpack.c.b16 %v5485, %v5469
    %v5614 = vpack.c.b16 %v5486, %v5470
    %v5615 = vpack.c.b16 %v5487, %v5471
    %v5616 = vpack.c.b16 %v5488, %v5472
    %v5617 = vpack.c.b16 %v5489, %v5473
    %v5618 = vpack.c.b16 %v5490, %v5474
    %v5619 = vpack.c.b16 %v5491, %v5475
    %v5620 = vpack.c.b16 %v5492, %v5476
    %v5621 = vpack.c.b16 %v5493, %v5477
    %v5622 = vpack.c.b16 %v5494, %v5478
    %v5623 = vpack.c.b16 %v5495, %v5479
    %5752 = vmatpush.bf16.msra.mxu0 %v5608
    %5753 = vmatpush.bf16.msra.mxu0 %v5592
    %5754 = vmatpush.bf16.msra.mxu0 %v5576
    %5755 = vmatpush.bf16.msra.mxu0 %v5560
    %5756 = vmatpush.bf16.msra.mxu0 %v5544
    %5757 = vmatpush.bf16.msra.mxu0 %v5528
    %5758 = vmatpush.bf16.msra.mxu0 %v5512
    %5759 = vmatpush.bf16.msra.mxu0 %v5496
    %5760 = vmatmul.bf16.gmra.mxu0 %v5073
    %v5761 = vpop.f32.mrf.mxu0
    %v5762 = vadd.f32 %v5080, %v5761
    %v5763 = vpop.f32.mrf.mxu0
    %v5764 = vadd.f32 %v5080, %v5763
    %5765 = vdwg.mxu0
    %5766 = vmatpush.bf16.msra.mxu0 %v5609
    %5767 = vmatpush.bf16.msra.mxu0 %v5593
    %5768 = vmatpush.bf16.msra.mxu0 %v5577
    %5769 = vmatpush.bf16.msra.mxu0 %v5561
    %5770 = vmatpush.bf16.msra.mxu0 %v5545
    %5771 = vmatpush.bf16.msra.mxu0 %v5529
    %5772 = vmatpush.bf16.msra.mxu0 %v5513
    %5773 = vmatpush.bf16.msra.mxu0 %v5497
    %5774 = vmatmul.bf16.gmra.mxu0 %v5073
    %v5775 = vpop.f32.mrf.mxu0
    %v5776 = vadd.f32 %v5081, %v5775
    %v5777 = vpop.f32.mrf.mxu0
    %v5778 = vadd.f32 %v5081, %v5777
    %5779 = vdwg.mxu0
    %5780 = vmatpush.bf16.msra.mxu0 %v5610
    %5781 = vmatpush.bf16.msra.mxu0 %v5594
    %5782 = vmatpush.bf16.msra.mxu0 %v5578
    %5783 = vmatpush.bf16.msra.mxu0 %v5562
    %5784 = vmatpush.bf16.msra.mxu0 %v5546
    %5785 = vmatpush.bf16.msra.mxu0 %v5530
    %5786 = vmatpush.bf16.msra.mxu0 %v5514
    %5787 = vmatpush.bf16.msra.mxu0 %v5498
    %5788 = vmatmul.bf16.gmra.mxu0 %v5073
    %v5789 = vpop.f32.mrf.mxu0
    %v5790 = vadd.f32 %v5082, %v5789
    %v5791 = vpop.f32.mrf.mxu0
    %v5792 = vadd.f32 %v5082, %v5791
    %5793 = vdwg.mxu0
    %5794 = vmatpush.bf16.msra.mxu0 %v5611
    %5795 = vmatpush.bf16.msra.mxu0 %v5595
    %5796 = vmatpush.bf16.msra.mxu0 %v5579
    %5797 = vmatpush.bf16.msra.mxu0 %v5563
    %5798 = vmatpush.bf16.msra.mxu0 %v5547
    %5799 = vmatpush.bf16.msra.mxu0 %v5531
    %5800 = vmatpush.bf16.msra.mxu0 %v5515
    %5801 = vmatpush.bf16.msra.mxu0 %v5499
    %5802 = vmatmul.bf16.gmra.mxu0 %v5073
    %v5803 = vpop.f32.mrf.mxu0
    %v5804 = vadd.f32 %v5083, %v5803
    %v5805 = vpop.f32.mrf.mxu0
    %v5806 = vadd.f32 %v5083, %v5805
    %5807 = vdwg.mxu0
    %5808 = vmatpush.bf16.msra.mxu0 %v5612
    %5809 = vmatpush.bf16.msra.mxu0 %v5596
    %5810 = vmatpush.bf16.msra.mxu0 %v5580
    %5811 = vmatpush.bf16.msra.mxu0 %v5564
    %5812 = vmatpush.bf16.msra.mxu0 %v5548
    %5813 = vmatpush.bf16.msra.mxu0 %v5532
    %5814 = vmatpush.bf16.msra.mxu0 %v5516
    %5815 = vmatpush.bf16.msra.mxu0 %v5500
    %5816 = vmatmul.bf16.gmra.mxu0 %v5073
    %v5817 = vpop.f32.mrf.mxu0
    %v5818 = vadd.f32 %v5084, %v5817
    %v5819 = vpop.f32.mrf.mxu0
    %v5820 = vadd.f32 %v5084, %v5819
    %5821 = vdwg.mxu0
    %5822 = vmatpush.bf16.msra.mxu0 %v5613
    %5823 = vmatpush.bf16.msra.mxu0 %v5597
    %5824 = vmatpush.bf16.msra.mxu0 %v5581
    %5825 = vmatpush.bf16.msra.mxu0 %v5565
    %5826 = vmatpush.bf16.msra.mxu0 %v5549
    %5827 = vmatpush.bf16.msra.mxu0 %v5533
    %5828 = vmatpush.bf16.msra.mxu0 %v5517
    %5829 = vmatpush.bf16.msra.mxu0 %v5501
    %5830 = vmatmul.bf16.gmra.mxu0 %v5073
    %v5831 = vpop.f32.mrf.mxu0
    %v5832 = vadd.f32 %v5085, %v5831
    %v5833 = vpop.f32.mrf.mxu0
    %v5834 = vadd.f32 %v5085, %v5833
    %5835 = vdwg.mxu0
    %5836 = vmatpush.bf16.msra.mxu0 %v5614
    %5837 = vmatpush.bf16.msra.mxu0 %v5598
    %5838 = vmatpush.bf16.msra.mxu0 %v5582
    %5839 = vmatpush.bf16.msra.mxu0 %v5566
    %5840 = vmatpush.bf16.msra.mxu0 %v5550
    %5841 = vmatpush.bf16.msra.mxu0 %v5534
    %5842 = vmatpush.bf16.msra.mxu0 %v5518
    %5843 = vmatpush.bf16.msra.mxu0 %v5502
    %5844 = vmatmul.bf16.gmra.mxu0 %v5073
    %v5845 = vpop.f32.mrf.mxu0
    %v5846 = vadd.f32 %v5086, %v5845
    %v5847 = vpop.f32.mrf.mxu0
    %v5848 = vadd.f32 %v5086, %v5847
    %5849 = vdwg.mxu0
    %5850 = vmatpush.bf16.msra.mxu0 %v5615
    %5851 = vmatpush.bf16.msra.mxu0 %v5599
    %5852 = vmatpush.bf16.msra.mxu0 %v5583
    %5853 = vmatpush.bf16.msra.mxu0 %v5567
    %5854 = vmatpush.bf16.msra.mxu0 %v5551
    %5855 = vmatpush.bf16.msra.mxu0 %v5535
    %5856 = vmatpush.bf16.msra.mxu0 %v5519
    %5857 = vmatpush.bf16.msra.mxu0 %v5503
    %5858 = vmatmul.bf16.gmra.mxu0 %v5073
    %v5859 = vpop.f32.mrf.mxu0
    %v5860 = vadd.f32 %v5087, %v5859
    %v5861 = vpop.f32.mrf.mxu0
    %v5862 = vadd.f32 %v5087, %v5861
    %5863 = vdwg.mxu0
    %5864 = vmatpush.bf16.msra.mxu0 %v5616
    %5865 = vmatpush.bf16.msra.mxu0 %v5600
    %5866 = vmatpush.bf16.msra.mxu0 %v5584
    %5867 = vmatpush.bf16.msra.mxu0 %v5568
    %5868 = vmatpush.bf16.msra.mxu0 %v5552
    %5869 = vmatpush.bf16.msra.mxu0 %v5536
    %5870 = vmatpush.bf16.msra.mxu0 %v5520
    %5871 = vmatpush.bf16.msra.mxu0 %v5504
    %5872 = vmatmul.bf16.gmra.mxu0 %v5073
    %v5873 = vpop.f32.mrf.mxu0
    %v5874 = vadd.f32 %v5088, %v5873
    %v5875 = vpop.f32.mrf.mxu0
    %v5876 = vadd.f32 %v5088, %v5875
    %5877 = vdwg.mxu0
    %5878 = vmatpush.bf16.msra.mxu0 %v5617
    %5879 = vmatpush.bf16.msra.mxu0 %v5601
    %5880 = vmatpush.bf16.msra.mxu0 %v5585
    %5881 = vmatpush.bf16.msra.mxu0 %v5569
    %5882 = vmatpush.bf16.msra.mxu0 %v5553
    %5883 = vmatpush.bf16.msra.mxu0 %v5537
    %5884 = vmatpush.bf16.msra.mxu0 %v5521
    %5885 = vmatpush.bf16.msra.mxu0 %v5505
    %5886 = vmatmul.bf16.gmra.mxu0 %v5073
    %v5887 = vpop.f32.mrf.mxu0
    %v5888 = vadd.f32 %v5089, %v5887
    %v5889 = vpop.f32.mrf.mxu0
    %v5890 = vadd.f32 %v5089, %v5889
    %5891 = vdwg.mxu0
    %5892 = vmatpush.bf16.msra.mxu0 %v5618
    %5893 = vmatpush.bf16.msra.mxu0 %v5602
    %5894 = vmatpush.bf16.msra.mxu0 %v5586
    %5895 = vmatpush.bf16.msra.mxu0 %v5570
    %5896 = vmatpush.bf16.msra.mxu0 %v5554
    %5897 = vmatpush.bf16.msra.mxu0 %v5538
    %5898 = vmatpush.bf16.msra.mxu0 %v5522
    %5899 = vmatpush.bf16.msra.mxu0 %v5506
    %5900 = vmatmul.bf16.gmra.mxu0 %v5073
    %v5901 = vpop.f32.mrf.mxu0
    %v5902 = vadd.f32 %v5090, %v5901
    %v5903 = vpop.f32.mrf.mxu0
    %v5904 = vadd.f32 %v5090, %v5903
    %5905 = vdwg.mxu0
    %5906 = vmatpush.bf16.msra.mxu0 %v5619
    %5907 = vmatpush.bf16.msra.mxu0 %v5603
    %5908 = vmatpush.bf16.msra.mxu0 %v5587
    %5909 = vmatpush.bf16.msra.mxu0 %v5571
    %5910 = vmatpush.bf16.msra.mxu0 %v5555
    %5911 = vmatpush.bf16.msra.mxu0 %v5539
    %5912 = vmatpush.bf16.msra.mxu0 %v5523
    %5913 = vmatpush.bf16.msra.mxu0 %v5507
    %5914 = vmatmul.bf16.gmra.mxu0 %v5073
    %v5915 = vpop.f32.mrf.mxu0
    %v5916 = vadd.f32 %v5091, %v5915
    %v5917 = vpop.f32.mrf.mxu0
    %v5918 = vadd.f32 %v5091, %v5917
    %5919 = vdwg.mxu0
    %5920 = vmatpush.bf16.msra.mxu0 %v5620
    %5921 = vmatpush.bf16.msra.mxu0 %v5604
    %5922 = vmatpush.bf16.msra.mxu0 %v5588
    %5923 = vmatpush.bf16.msra.mxu0 %v5572
    %5924 = vmatpush.bf16.msra.mxu0 %v5556
    %5925 = vmatpush.bf16.msra.mxu0 %v5540
    %5926 = vmatpush.bf16.msra.mxu0 %v5524
    %5927 = vmatpush.bf16.msra.mxu0 %v5508
    %5928 = vmatmul.bf16.gmra.mxu0 %v5073
    %v5929 = vpop.f32.mrf.mxu0
    %v5930 = vadd.f32 %v5092, %v5929
    %v5931 = vpop.f32.mrf.mxu0
    %v5932 = vadd.f32 %v5092, %v5931
    %5933 = vdwg.mxu0
    %5934 = vmatpush.bf16.msra.mxu0 %v5621
    %5935 = vmatpush.bf16.msra.mxu0 %v5605
    %5936 = vmatpush.bf16.msra.mxu0 %v5589
    %5937 = vmatpush.bf16.msra.mxu0 %v5573
    %5938 = vmatpush.bf16.msra.mxu0 %v5557
    %5939 = vmatpush.bf16.msra.mxu0 %v5541
    %5940 = vmatpush.bf16.msra.mxu0 %v5525
    %5941 = vmatpush.bf16.msra.mxu0 %v5509
    %5942 = vmatmul.bf16.gmra.mxu0 %v5073
    %v5943 = vpop.f32.mrf.mxu0
    %v5944 = vadd.f32 %v5093, %v5943
    %v5945 = vpop.f32.mrf.mxu0
    %v5946 = vadd.f32 %v5093, %v5945
    %5947 = vdwg.mxu0
    %5948 = vmatpush.bf16.msra.mxu0 %v5622
    %5949 = vmatpush.bf16.msra.mxu0 %v5606
    %5950 = vmatpush.bf16.msra.mxu0 %v5590
    %5951 = vmatpush.bf16.msra.mxu0 %v5574
    %5952 = vmatpush.bf16.msra.mxu0 %v5558
    %5953 = vmatpush.bf16.msra.mxu0 %v5542
    %5954 = vmatpush.bf16.msra.mxu0 %v5526
    %5955 = vmatpush.bf16.msra.mxu0 %v5510
    %5956 = vmatmul.bf16.gmra.mxu0 %v5073
    %v5957 = vpop.f32.mrf.mxu0
    %v5958 = vadd.f32 %v5094, %v5957
    %v5959 = vpop.f32.mrf.mxu0
    %v5960 = vadd.f32 %v5094, %v5959
    %5961 = vdwg.mxu0
    %5962 = vmatpush.bf16.msra.mxu0 %v5623
    %5963 = vmatpush.bf16.msra.mxu0 %v5607
    %5964 = vmatpush.bf16.msra.mxu0 %v5591
    %5965 = vmatpush.bf16.msra.mxu0 %v5575
    %5966 = vmatpush.bf16.msra.mxu0 %v5559
    %5967 = vmatpush.bf16.msra.mxu0 %v5543
    %5968 = vmatpush.bf16.msra.mxu0 %v5527
    %5969 = vmatpush.bf16.msra.mxu0 %v5511
    %5970 = vmatmul.bf16.gmra.mxu0 %v5073
    %v5971 = vpop.f32.mrf.mxu0
    %v5972 = vadd.f32 %v5095, %v5971
    %v5973 = vpop.f32.mrf.mxu0
    %v5974 = vadd.f32 %v5095, %v5973
    %5975 = vdwg.mxu0
    %v5976 = vmax.f32 %v5762, 0.0
    %v5977 = vmax.f32 %v5776, 0.0
    %v5978 = vmax.f32 %v5790, 0.0
    %v5979 = vmax.f32 %v5804, 0.0
    %v5980 = vmax.f32 %v5818, 0.0
    %v5981 = vmax.f32 %v5832, 0.0
    %v5982 = vmax.f32 %v5846, 0.0
    %v5983 = vmax.f32 %v5860, 0.0
    %v5984 = vmax.f32 %v5874, 0.0
    %v5985 = vmax.f32 %v5888, 0.0
    %v5986 = vmax.f32 %v5902, 0.0
    %v5987 = vmax.f32 %v5916, 0.0
    %v5988 = vmax.f32 %v5930, 0.0
    %v5989 = vmax.f32 %v5944, 0.0
    %v5990 = vmax.f32 %v5958, 0.0
    %v5991 = vmax.f32 %v5972, 0.0
    %v5992 = vmax.f32 %v5764, 0.0
    %v5993 = vmax.f32 %v5778, 0.0
    %v5994 = vmax.f32 %v5792, 0.0
    %v5995 = vmax.f32 %v5806, 0.0
    %v5996 = vmax.f32 %v5820, 0.0
    %v5997 = vmax.f32 %v5834, 0.0
    %v5998 = vmax.f32 %v5848, 0.0
    %v5999 = vmax.f32 %v5862, 0.0
    %v6000 = vmax.f32 %v5876, 0.0
    %v6001 = vmax.f32 %v5890, 0.0
    %v6002 = vmax.f32 %v5904, 0.0
    %v6003 = vmax.f32 %v5918, 0.0
    %v6004 = vmax.f32 %v5932, 0.0
    %v6005 = vmax.f32 %v5946, 0.0
    %v6006 = vmax.f32 %v5960, 0.0
    %v6007 = vmax.f32 %v5974, 0.0
    %s6008 = smul.u32 4, 256
    %s6009 = smul.u32 %s6008, 1
    %s6010 = sshll.u32 %s6009, 4
    %6011 = dma.done %s68, %s6010
    %v6012 = vld [vmem:[#allocation3] sm:$0xf]
    %v6013 = vld [vmem:[#allocation3 + $0x4] sm:$0xf]
    %v6014 = vld [vmem:[#allocation3 + $0x8] sm:$0xf]
    %v6015 = vld [vmem:[#allocation3 + $0xc] sm:$0xf]
    %v6016 = vld [vmem:[#allocation3 + $0x10] sm:$0xf]
    %v6017 = vld [vmem:[#allocation3 + $0x14] sm:$0xf]
    %v6018 = vld [vmem:[#allocation3 + $0x18] sm:$0xf]
    %v6019 = vld [vmem:[#allocation3 + $0x1c] sm:$0xf]
    %v6020 = vld [vmem:[#allocation3 + $0x20] sm:$0xf]
    %v6021 = vld [vmem:[#allocation3 + $0x24] sm:$0xf]
    %v6022 = vld [vmem:[#allocation3 + $0x28] sm:$0xf]
    %v6023 = vld [vmem:[#allocation3 + $0x2c] sm:$0xf]
    %v6024 = vld [vmem:[#allocation3 + $0x30] sm:$0xf]
    %v6025 = vld [vmem:[#allocation3 + $0x34] sm:$0xf]
    %v6026 = vld [vmem:[#allocation3 + $0x38] sm:$0xf]
    %v6027 = vld [vmem:[#allocation3 + $0x3c] sm:$0xf]
    %v6028 = vld [vmem:[#allocation3 + $0x40] sm:$0xf]
    %v6029 = vld [vmem:[#allocation3 + $0x44] sm:$0xf]
    %v6030 = vld [vmem:[#allocation3 + $0x48] sm:$0xf]
    %v6031 = vld [vmem:[#allocation3 + $0x4c] sm:$0xf]
    %v6032 = vld [vmem:[#allocation3 + $0x50] sm:$0xf]
    %v6033 = vld [vmem:[#allocation3 + $0x54] sm:$0xf]
    %v6034 = vld [vmem:[#allocation3 + $0x58] sm:$0xf]
    %v6035 = vld [vmem:[#allocation3 + $0x5c] sm:$0xf]
    %v6036 = vld [vmem:[#allocation3 + $0x60] sm:$0xf]
    %v6037 = vld [vmem:[#allocation3 + $0x64] sm:$0xf]
    %v6038 = vld [vmem:[#allocation3 + $0x68] sm:$0xf]
    %v6039 = vld [vmem:[#allocation3 + $0x6c] sm:$0xf]
    %v6040 = vld [vmem:[#allocation3 + $0x70] sm:$0xf]
    %v6041 = vld [vmem:[#allocation3 + $0x74] sm:$0xf]
    %v6042 = vld [vmem:[#allocation3 + $0x78] sm:$0xf]
    %v6043 = vld [vmem:[#allocation3 + $0x7c] sm:$0xf]
    %v6044 = vld [vmem:[#allocation3 + $0x80] sm:$0xf]
    %v6045 = vld [vmem:[#allocation3 + $0x84] sm:$0xf]
    %v6046 = vld [vmem:[#allocation3 + $0x88] sm:$0xf]
    %v6047 = vld [vmem:[#allocation3 + $0x8c] sm:$0xf]
    %v6048 = vld [vmem:[#allocation3 + $0x90] sm:$0xf]
    %v6049 = vld [vmem:[#allocation3 + $0x94] sm:$0xf]
    %v6050 = vld [vmem:[#allocation3 + $0x98] sm:$0xf]
    %v6051 = vld [vmem:[#allocation3 + $0x9c] sm:$0xf]
    %v6052 = vld [vmem:[#allocation3 + $0xa0] sm:$0xf]
    %v6053 = vld [vmem:[#allocation3 + $0xa4] sm:$0xf]
    %v6054 = vld [vmem:[#allocation3 + $0xa8] sm:$0xf]
    %v6055 = vld [vmem:[#allocation3 + $0xac] sm:$0xf]
    %v6056 = vld [vmem:[#allocation3 + $0xb0] sm:$0xf]
    %v6057 = vld [vmem:[#allocation3 + $0xb4] sm:$0xf]
    %v6058 = vld [vmem:[#allocation3 + $0xb8] sm:$0xf]
    %v6059 = vld [vmem:[#allocation3 + $0xbc] sm:$0xf]
    %v6060 = vld [vmem:[#allocation3 + $0xc0] sm:$0xf]
    %v6061 = vld [vmem:[#allocation3 + $0xc4] sm:$0xf]
    %v6062 = vld [vmem:[#allocation3 + $0xc8] sm:$0xf]
    %v6063 = vld [vmem:[#allocation3 + $0xcc] sm:$0xf]
    %v6064 = vld [vmem:[#allocation3 + $0xd0] sm:$0xf]
    %v6065 = vld [vmem:[#allocation3 + $0xd4] sm:$0xf]
    %v6066 = vld [vmem:[#allocation3 + $0xd8] sm:$0xf]
    %v6067 = vld [vmem:[#allocation3 + $0xdc] sm:$0xf]
    %v6068 = vld [vmem:[#allocation3 + $0xe0] sm:$0xf]
    %v6069 = vld [vmem:[#allocation3 + $0xe4] sm:$0xf]
    %v6070 = vld [vmem:[#allocation3 + $0xe8] sm:$0xf]
    %v6071 = vld [vmem:[#allocation3 + $0xec] sm:$0xf]
    %v6072 = vld [vmem:[#allocation3 + $0xf0] sm:$0xf]
    %v6073 = vld [vmem:[#allocation3 + $0xf4] sm:$0xf]
    %v6074 = vld [vmem:[#allocation3 + $0xf8] sm:$0xf]
    %v6075 = vld [vmem:[#allocation3 + $0xfc] sm:$0xf]
    %v6076 = vld [vmem:[#allocation3 + $0x100] sm:$0xf]
    %v6077 = vld [vmem:[#allocation3 + $0x104] sm:$0xf]
    %v6078 = vld [vmem:[#allocation3 + $0x108] sm:$0xf]
    %v6079 = vld [vmem:[#allocation3 + $0x10c] sm:$0xf]
    %v6080 = vld [vmem:[#allocation3 + $0x110] sm:$0xf]
    %v6081 = vld [vmem:[#allocation3 + $0x114] sm:$0xf]
    %v6082 = vld [vmem:[#allocation3 + $0x118] sm:$0xf]
    %v6083 = vld [vmem:[#allocation3 + $0x11c] sm:$0xf]
    %v6084 = vld [vmem:[#allocation3 + $0x120] sm:$0xf]
    %v6085 = vld [vmem:[#allocation3 + $0x124] sm:$0xf]
    %v6086 = vld [vmem:[#allocation3 + $0x128] sm:$0xf]
    %v6087 = vld [vmem:[#allocation3 + $0x12c] sm:$0xf]
    %v6088 = vld [vmem:[#allocation3 + $0x130] sm:$0xf]
    %v6089 = vld [vmem:[#allocation3 + $0x134] sm:$0xf]
    %v6090 = vld [vmem:[#allocation3 + $0x138] sm:$0xf]
    %v6091 = vld [vmem:[#allocation3 + $0x13c] sm:$0xf]
    %v6092 = vld [vmem:[#allocation3 + $0x140] sm:$0xf]
    %v6093 = vld [vmem:[#allocation3 + $0x144] sm:$0xf]
    %v6094 = vld [vmem:[#allocation3 + $0x148] sm:$0xf]
    %v6095 = vld [vmem:[#allocation3 + $0x14c] sm:$0xf]
    %v6096 = vld [vmem:[#allocation3 + $0x150] sm:$0xf]
    %v6097 = vld [vmem:[#allocation3 + $0x154] sm:$0xf]
    %v6098 = vld [vmem:[#allocation3 + $0x158] sm:$0xf]
    %v6099 = vld [vmem:[#allocation3 + $0x15c] sm:$0xf]
    %v6100 = vld [vmem:[#allocation3 + $0x160] sm:$0xf]
    %v6101 = vld [vmem:[#allocation3 + $0x164] sm:$0xf]
    %v6102 = vld [vmem:[#allocation3 + $0x168] sm:$0xf]
    %v6103 = vld [vmem:[#allocation3 + $0x16c] sm:$0xf]
    %v6104 = vld [vmem:[#allocation3 + $0x170] sm:$0xf]
    %v6105 = vld [vmem:[#allocation3 + $0x174] sm:$0xf]
    %v6106 = vld [vmem:[#allocation3 + $0x178] sm:$0xf]
    %v6107 = vld [vmem:[#allocation3 + $0x17c] sm:$0xf]
    %v6108 = vld [vmem:[#allocation3 + $0x180] sm:$0xf]
    %v6109 = vld [vmem:[#allocation3 + $0x184] sm:$0xf]
    %v6110 = vld [vmem:[#allocation3 + $0x188] sm:$0xf]
    %v6111 = vld [vmem:[#allocation3 + $0x18c] sm:$0xf]
    %v6112 = vld [vmem:[#allocation3 + $0x190] sm:$0xf]
    %v6113 = vld [vmem:[#allocation3 + $0x194] sm:$0xf]
    %v6114 = vld [vmem:[#allocation3 + $0x198] sm:$0xf]
    %v6115 = vld [vmem:[#allocation3 + $0x19c] sm:$0xf]
    %v6116 = vld [vmem:[#allocation3 + $0x1a0] sm:$0xf]
    %v6117 = vld [vmem:[#allocation3 + $0x1a4] sm:$0xf]
    %v6118 = vld [vmem:[#allocation3 + $0x1a8] sm:$0xf]
    %v6119 = vld [vmem:[#allocation3 + $0x1ac] sm:$0xf]
    %v6120 = vld [vmem:[#allocation3 + $0x1b0] sm:$0xf]
    %v6121 = vld [vmem:[#allocation3 + $0x1b4] sm:$0xf]
    %v6122 = vld [vmem:[#allocation3 + $0x1b8] sm:$0xf]
    %v6123 = vld [vmem:[#allocation3 + $0x1bc] sm:$0xf]
    %v6124 = vld [vmem:[#allocation3 + $0x1c0] sm:$0xf]
    %v6125 = vld [vmem:[#allocation3 + $0x1c4] sm:$0xf]
    %v6126 = vld [vmem:[#allocation3 + $0x1c8] sm:$0xf]
    %v6127 = vld [vmem:[#allocation3 + $0x1cc] sm:$0xf]
    %v6128 = vld [vmem:[#allocation3 + $0x1d0] sm:$0xf]
    %v6129 = vld [vmem:[#allocation3 + $0x1d4] sm:$0xf]
    %v6130 = vld [vmem:[#allocation3 + $0x1d8] sm:$0xf]
    %v6131 = vld [vmem:[#allocation3 + $0x1dc] sm:$0xf]
    %v6132 = vld [vmem:[#allocation3 + $0x1e0] sm:$0xf]
    %v6133 = vld [vmem:[#allocation3 + $0x1e4] sm:$0xf]
    %v6134 = vld [vmem:[#allocation3 + $0x1e8] sm:$0xf]
    %v6135 = vld [vmem:[#allocation3 + $0x1ec] sm:$0xf]
    %v6136 = vld [vmem:[#allocation3 + $0x1f0] sm:$0xf]
    %v6137 = vld [vmem:[#allocation3 + $0x1f4] sm:$0xf]
    %v6138 = vld [vmem:[#allocation3 + $0x1f8] sm:$0xf]
    %v6139 = vld [vmem:[#allocation3 + $0x1fc] sm:$0xf]
    %v6140 = vld [vmem:[#allocation3 + $0x200] sm:$0xf]
    %v6141 = vld [vmem:[#allocation3 + $0x204] sm:$0xf]
    %v6142 = vld [vmem:[#allocation3 + $0x208] sm:$0xf]
    %v6143 = vld [vmem:[#allocation3 + $0x20c] sm:$0xf]
    %v6144 = vld [vmem:[#allocation3 + $0x210] sm:$0xf]
    %v6145 = vld [vmem:[#allocation3 + $0x214] sm:$0xf]
    %v6146 = vld [vmem:[#allocation3 + $0x218] sm:$0xf]
    %v6147 = vld [vmem:[#allocation3 + $0x21c] sm:$0xf]
    %v6148 = vld [vmem:[#allocation3 + $0x220] sm:$0xf]
    %v6149 = vld [vmem:[#allocation3 + $0x224] sm:$0xf]
    %v6150 = vld [vmem:[#allocation3 + $0x228] sm:$0xf]
    %v6151 = vld [vmem:[#allocation3 + $0x22c] sm:$0xf]
    %v6152 = vld [vmem:[#allocation3 + $0x230] sm:$0xf]
    %v6153 = vld [vmem:[#allocation3 + $0x234] sm:$0xf]
    %v6154 = vld [vmem:[#allocation3 + $0x238] sm:$0xf]
    %v6155 = vld [vmem:[#allocation3 + $0x23c] sm:$0xf]
    %v6156 = vld [vmem:[#allocation3 + $0x240] sm:$0xf]
    %v6157 = vld [vmem:[#allocation3 + $0x244] sm:$0xf]
    %v6158 = vld [vmem:[#allocation3 + $0x248] sm:$0xf]
    %v6159 = vld [vmem:[#allocation3 + $0x24c] sm:$0xf]
    %v6160 = vld [vmem:[#allocation3 + $0x250] sm:$0xf]
    %v6161 = vld [vmem:[#allocation3 + $0x254] sm:$0xf]
    %v6162 = vld [vmem:[#allocation3 + $0x258] sm:$0xf]
    %v6163 = vld [vmem:[#allocation3 + $0x25c] sm:$0xf]
    %v6164 = vld [vmem:[#allocation3 + $0x260] sm:$0xf]
    %v6165 = vld [vmem:[#allocation3 + $0x264] sm:$0xf]
    %v6166 = vld [vmem:[#allocation3 + $0x268] sm:$0xf]
    %v6167 = vld [vmem:[#allocation3 + $0x26c] sm:$0xf]
    %v6168 = vld [vmem:[#allocation3 + $0x270] sm:$0xf]
    %v6169 = vld [vmem:[#allocation3 + $0x274] sm:$0xf]
    %v6170 = vld [vmem:[#allocation3 + $0x278] sm:$0xf]
    %v6171 = vld [vmem:[#allocation3 + $0x27c] sm:$0xf]
    %v6172 = vld [vmem:[#allocation3 + $0x280] sm:$0xf]
    %v6173 = vld [vmem:[#allocation3 + $0x284] sm:$0xf]
    %v6174 = vld [vmem:[#allocation3 + $0x288] sm:$0xf]
    %v6175 = vld [vmem:[#allocation3 + $0x28c] sm:$0xf]
    %v6176 = vld [vmem:[#allocation3 + $0x290] sm:$0xf]
    %v6177 = vld [vmem:[#allocation3 + $0x294] sm:$0xf]
    %v6178 = vld [vmem:[#allocation3 + $0x298] sm:$0xf]
    %v6179 = vld [vmem:[#allocation3 + $0x29c] sm:$0xf]
    %v6180 = vld [vmem:[#allocation3 + $0x2a0] sm:$0xf]
    %v6181 = vld [vmem:[#allocation3 + $0x2a4] sm:$0xf]
    %v6182 = vld [vmem:[#allocation3 + $0x2a8] sm:$0xf]
    %v6183 = vld [vmem:[#allocation3 + $0x2ac] sm:$0xf]
    %v6184 = vld [vmem:[#allocation3 + $0x2b0] sm:$0xf]
    %v6185 = vld [vmem:[#allocation3 + $0x2b4] sm:$0xf]
    %v6186 = vld [vmem:[#allocation3 + $0x2b8] sm:$0xf]
    %v6187 = vld [vmem:[#allocation3 + $0x2bc] sm:$0xf]
    %v6188 = vld [vmem:[#allocation3 + $0x2c0] sm:$0xf]
    %v6189 = vld [vmem:[#allocation3 + $0x2c4] sm:$0xf]
    %v6190 = vld [vmem:[#allocation3 + $0x2c8] sm:$0xf]
    %v6191 = vld [vmem:[#allocation3 + $0x2cc] sm:$0xf]
    %v6192 = vld [vmem:[#allocation3 + $0x2d0] sm:$0xf]
    %v6193 = vld [vmem:[#allocation3 + $0x2d4] sm:$0xf]
    %v6194 = vld [vmem:[#allocation3 + $0x2d8] sm:$0xf]
    %v6195 = vld [vmem:[#allocation3 + $0x2dc] sm:$0xf]
    %v6196 = vld [vmem:[#allocation3 + $0x2e0] sm:$0xf]
    %v6197 = vld [vmem:[#allocation3 + $0x2e4] sm:$0xf]
    %v6198 = vld [vmem:[#allocation3 + $0x2e8] sm:$0xf]
    %v6199 = vld [vmem:[#allocation3 + $0x2ec] sm:$0xf]
    %v6200 = vld [vmem:[#allocation3 + $0x2f0] sm:$0xf]
    %v6201 = vld [vmem:[#allocation3 + $0x2f4] sm:$0xf]
    %v6202 = vld [vmem:[#allocation3 + $0x2f8] sm:$0xf]
    %v6203 = vld [vmem:[#allocation3 + $0x2fc] sm:$0xf]
    %v6204 = vld [vmem:[#allocation3 + $0x300] sm:$0xf]
    %v6205 = vld [vmem:[#allocation3 + $0x304] sm:$0xf]
    %v6206 = vld [vmem:[#allocation3 + $0x308] sm:$0xf]
    %v6207 = vld [vmem:[#allocation3 + $0x30c] sm:$0xf]
    %v6208 = vld [vmem:[#allocation3 + $0x310] sm:$0xf]
    %v6209 = vld [vmem:[#allocation3 + $0x314] sm:$0xf]
    %v6210 = vld [vmem:[#allocation3 + $0x318] sm:$0xf]
    %v6211 = vld [vmem:[#allocation3 + $0x31c] sm:$0xf]
    %v6212 = vld [vmem:[#allocation3 + $0x320] sm:$0xf]
    %v6213 = vld [vmem:[#allocation3 + $0x324] sm:$0xf]
    %v6214 = vld [vmem:[#allocation3 + $0x328] sm:$0xf]
    %v6215 = vld [vmem:[#allocation3 + $0x32c] sm:$0xf]
    %v6216 = vld [vmem:[#allocation3 + $0x330] sm:$0xf]
    %v6217 = vld [vmem:[#allocation3 + $0x334] sm:$0xf]
    %v6218 = vld [vmem:[#allocation3 + $0x338] sm:$0xf]
    %v6219 = vld [vmem:[#allocation3 + $0x33c] sm:$0xf]
    %v6220 = vld [vmem:[#allocation3 + $0x340] sm:$0xf]
    %v6221 = vld [vmem:[#allocation3 + $0x344] sm:$0xf]
    %v6222 = vld [vmem:[#allocation3 + $0x348] sm:$0xf]
    %v6223 = vld [vmem:[#allocation3 + $0x34c] sm:$0xf]
    %v6224 = vld [vmem:[#allocation3 + $0x350] sm:$0xf]
    %v6225 = vld [vmem:[#allocation3 + $0x354] sm:$0xf]
    %v6226 = vld [vmem:[#allocation3 + $0x358] sm:$0xf]
    %v6227 = vld [vmem:[#allocation3 + $0x35c] sm:$0xf]
    %v6228 = vld [vmem:[#allocation3 + $0x360] sm:$0xf]
    %v6229 = vld [vmem:[#allocation3 + $0x364] sm:$0xf]
    %v6230 = vld [vmem:[#allocation3 + $0x368] sm:$0xf]
    %v6231 = vld [vmem:[#allocation3 + $0x36c] sm:$0xf]
    %v6232 = vld [vmem:[#allocation3 + $0x370] sm:$0xf]
    %v6233 = vld [vmem:[#allocation3 + $0x374] sm:$0xf]
    %v6234 = vld [vmem:[#allocation3 + $0x378] sm:$0xf]
    %v6235 = vld [vmem:[#allocation3 + $0x37c] sm:$0xf]
    %v6236 = vld [vmem:[#allocation3 + $0x380] sm:$0xf]
    %v6237 = vld [vmem:[#allocation3 + $0x384] sm:$0xf]
    %v6238 = vld [vmem:[#allocation3 + $0x388] sm:$0xf]
    %v6239 = vld [vmem:[#allocation3 + $0x38c] sm:$0xf]
    %v6240 = vld [vmem:[#allocation3 + $0x390] sm:$0xf]
    %v6241 = vld [vmem:[#allocation3 + $0x394] sm:$0xf]
    %v6242 = vld [vmem:[#allocation3 + $0x398] sm:$0xf]
    %v6243 = vld [vmem:[#allocation3 + $0x39c] sm:$0xf]
    %v6244 = vld [vmem:[#allocation3 + $0x3a0] sm:$0xf]
    %v6245 = vld [vmem:[#allocation3 + $0x3a4] sm:$0xf]
    %v6246 = vld [vmem:[#allocation3 + $0x3a8] sm:$0xf]
    %v6247 = vld [vmem:[#allocation3 + $0x3ac] sm:$0xf]
    %v6248 = vld [vmem:[#allocation3 + $0x3b0] sm:$0xf]
    %v6249 = vld [vmem:[#allocation3 + $0x3b4] sm:$0xf]
    %v6250 = vld [vmem:[#allocation3 + $0x3b8] sm:$0xf]
    %v6251 = vld [vmem:[#allocation3 + $0x3bc] sm:$0xf]
    %v6252 = vld [vmem:[#allocation3 + $0x3c0] sm:$0xf]
    %v6253 = vld [vmem:[#allocation3 + $0x3c4] sm:$0xf]
    %v6254 = vld [vmem:[#allocation3 + $0x3c8] sm:$0xf]
    %v6255 = vld [vmem:[#allocation3 + $0x3cc] sm:$0xf]
    %v6256 = vld [vmem:[#allocation3 + $0x3d0] sm:$0xf]
    %v6257 = vld [vmem:[#allocation3 + $0x3d4] sm:$0xf]
    %v6258 = vld [vmem:[#allocation3 + $0x3d8] sm:$0xf]
    %v6259 = vld [vmem:[#allocation3 + $0x3dc] sm:$0xf]
    %v6260 = vld [vmem:[#allocation3 + $0x3e0] sm:$0xf]
    %v6261 = vld [vmem:[#allocation3 + $0x3e4] sm:$0xf]
    %v6262 = vld [vmem:[#allocation3 + $0x3e8] sm:$0xf]
    %v6263 = vld [vmem:[#allocation3 + $0x3ec] sm:$0xf]
    %v6264 = vld [vmem:[#allocation3 + $0x3f0] sm:$0xf]
    %v6265 = vld [vmem:[#allocation3 + $0x3f4] sm:$0xf]
    %v6266 = vld [vmem:[#allocation3 + $0x3f8] sm:$0xf]
    %v6267 = vld [vmem:[#allocation3 + $0x3fc] sm:$0xf]
    %v6268 = vpack.c.bf16 %v5992, %v5976
    %v6269 = vpack.c.bf16 %v5993, %v5977
    %v6270 = vpack.c.bf16 %v5994, %v5978
    %v6271 = vpack.c.bf16 %v5995, %v5979
    %v6272 = vpack.c.bf16 %v5996, %v5980
    %v6273 = vpack.c.bf16 %v5997, %v5981
    %v6274 = vpack.c.bf16 %v5998, %v5982
    %v6275 = vpack.c.bf16 %v5999, %v5983
    %v6276 = vpack.c.bf16 %v6000, %v5984
    %v6277 = vpack.c.bf16 %v6001, %v5985
    %v6278 = vpack.c.bf16 %v6002, %v5986
    %v6279 = vpack.c.bf16 %v6003, %v5987
    %v6280 = vpack.c.bf16 %v6004, %v5988
    %v6281 = vpack.c.bf16 %v6005, %v5989
    %v6282 = vpack.c.bf16 %v6006, %v5990
    %v6283 = vpack.c.bf16 %v6007, %v5991
    %v6284 = vld [vmem:[%s1 + $0x18] sm:$0x1]
    %v6285 = vperm.slane %v6284, 0
    %v6542 = vunpack.c.l.b16 %v6012
    %v6543 = vunpack.c.l.b16 %v6013
    %v6544 = vunpack.c.l.b16 %v6014
    %v6545 = vunpack.c.l.b16 %v6015
    %v6546 = vunpack.c.l.b16 %v6016
    %v6547 = vunpack.c.l.b16 %v6017
    %v6548 = vunpack.c.l.b16 %v6018
    %v6549 = vunpack.c.l.b16 %v6019
    %v6550 = vunpack.c.l.b16 %v6020
    %v6551 = vunpack.c.l.b16 %v6021
    %v6552 = vunpack.c.l.b16 %v6022
    %v6553 = vunpack.c.l.b16 %v6023
    %v6554 = vunpack.c.l.b16 %v6024
    %v6555 = vunpack.c.l.b16 %v6025
    %v6556 = vunpack.c.l.b16 %v6026
    %v6557 = vunpack.c.l.b16 %v6027
    %v6558 = vunpack.c.l.b16 %v6028
    %v6559 = vunpack.c.l.b16 %v6029
    %v6560 = vunpack.c.l.b16 %v6030
    %v6561 = vunpack.c.l.b16 %v6031
    %v6562 = vunpack.c.l.b16 %v6032
    %v6563 = vunpack.c.l.b16 %v6033
    %v6564 = vunpack.c.l.b16 %v6034
    %v6565 = vunpack.c.l.b16 %v6035
    %v6566 = vunpack.c.l.b16 %v6036
    %v6567 = vunpack.c.l.b16 %v6037
    %v6568 = vunpack.c.l.b16 %v6038
    %v6569 = vunpack.c.l.b16 %v6039
    %v6570 = vunpack.c.l.b16 %v6040
    %v6571 = vunpack.c.l.b16 %v6041
    %v6572 = vunpack.c.l.b16 %v6042
    %v6573 = vunpack.c.l.b16 %v6043
    %v6574 = vunpack.c.l.b16 %v6044
    %v6575 = vunpack.c.l.b16 %v6045
    %v6576 = vunpack.c.l.b16 %v6046
    %v6577 = vunpack.c.l.b16 %v6047
    %v6578 = vunpack.c.l.b16 %v6048
    %v6579 = vunpack.c.l.b16 %v6049
    %v6580 = vunpack.c.l.b16 %v6050
    %v6581 = vunpack.c.l.b16 %v6051
    %v6582 = vunpack.c.l.b16 %v6052
    %v6583 = vunpack.c.l.b16 %v6053
    %v6584 = vunpack.c.l.b16 %v6054
    %v6585 = vunpack.c.l.b16 %v6055
    %v6586 = vunpack.c.l.b16 %v6056
    %v6587 = vunpack.c.l.b16 %v6057
    %v6588 = vunpack.c.l.b16 %v6058
    %v6589 = vunpack.c.l.b16 %v6059
    %v6590 = vunpack.c.l.b16 %v6060
    %v6591 = vunpack.c.l.b16 %v6061
    %v6592 = vunpack.c.l.b16 %v6062
    %v6593 = vunpack.c.l.b16 %v6063
    %v6594 = vunpack.c.l.b16 %v6064
    %v6595 = vunpack.c.l.b16 %v6065
    %v6596 = vunpack.c.l.b16 %v6066
    %v6597 = vunpack.c.l.b16 %v6067
    %v6598 = vunpack.c.l.b16 %v6068
    %v6599 = vunpack.c.l.b16 %v6069
    %v6600 = vunpack.c.l.b16 %v6070
    %v6601 = vunpack.c.l.b16 %v6071
    %v6602 = vunpack.c.l.b16 %v6072
    %v6603 = vunpack.c.l.b16 %v6073
    %v6604 = vunpack.c.l.b16 %v6074
    %v6605 = vunpack.c.l.b16 %v6075
    %v6606 = vunpack.c.l.b16 %v6076
    %v6607 = vunpack.c.l.b16 %v6077
    %v6608 = vunpack.c.l.b16 %v6078
    %v6609 = vunpack.c.l.b16 %v6079
    %v6610 = vunpack.c.l.b16 %v6080
    %v6611 = vunpack.c.l.b16 %v6081
    %v6612 = vunpack.c.l.b16 %v6082
    %v6613 = vunpack.c.l.b16 %v6083
    %v6614 = vunpack.c.l.b16 %v6084
    %v6615 = vunpack.c.l.b16 %v6085
    %v6616 = vunpack.c.l.b16 %v6086
    %v6617 = vunpack.c.l.b16 %v6087
    %v6618 = vunpack.c.l.b16 %v6088
    %v6619 = vunpack.c.l.b16 %v6089
    %v6620 = vunpack.c.l.b16 %v6090
    %v6621 = vunpack.c.l.b16 %v6091
    %v6622 = vunpack.c.l.b16 %v6092
    %v6623 = vunpack.c.l.b16 %v6093
    %v6624 = vunpack.c.l.b16 %v6094
    %v6625 = vunpack.c.l.b16 %v6095
    %v6626 = vunpack.c.l.b16 %v6096
    %v6627 = vunpack.c.l.b16 %v6097
    %v6628 = vunpack.c.l.b16 %v6098
    %v6629 = vunpack.c.l.b16 %v6099
    %v6630 = vunpack.c.l.b16 %v6100
    %v6631 = vunpack.c.l.b16 %v6101
    %v6632 = vunpack.c.l.b16 %v6102
    %v6633 = vunpack.c.l.b16 %v6103
    %v6634 = vunpack.c.l.b16 %v6104
    %v6635 = vunpack.c.l.b16 %v6105
    %v6636 = vunpack.c.l.b16 %v6106
    %v6637 = vunpack.c.l.b16 %v6107
    %v6638 = vunpack.c.l.b16 %v6108
    %v6639 = vunpack.c.l.b16 %v6109
    %v6640 = vunpack.c.l.b16 %v6110
    %v6641 = vunpack.c.l.b16 %v6111
    %v6642 = vunpack.c.l.b16 %v6112
    %v6643 = vunpack.c.l.b16 %v6113
    %v6644 = vunpack.c.l.b16 %v6114
    %v6645 = vunpack.c.l.b16 %v6115
    %v6646 = vunpack.c.l.b16 %v6116
    %v6647 = vunpack.c.l.b16 %v6117
    %v6648 = vunpack.c.l.b16 %v6118
    %v6649 = vunpack.c.l.b16 %v6119
    %v6650 = vunpack.c.l.b16 %v6120
    %v6651 = vunpack.c.l.b16 %v6121
    %v6652 = vunpack.c.l.b16 %v6122
    %v6653 = vunpack.c.l.b16 %v6123
    %v6654 = vunpack.c.l.b16 %v6124
    %v6655 = vunpack.c.l.b16 %v6125
    %v6656 = vunpack.c.l.b16 %v6126
    %v6657 = vunpack.c.l.b16 %v6127
    %v6658 = vunpack.c.l.b16 %v6128
    %v6659 = vunpack.c.l.b16 %v6129
    %v6660 = vunpack.c.l.b16 %v6130
    %v6661 = vunpack.c.l.b16 %v6131
    %v6662 = vunpack.c.l.b16 %v6132
    %v6663 = vunpack.c.l.b16 %v6133
    %v6664 = vunpack.c.l.b16 %v6134
    %v6665 = vunpack.c.l.b16 %v6135
    %v6666 = vunpack.c.l.b16 %v6136
    %v6667 = vunpack.c.l.b16 %v6137
    %v6668 = vunpack.c.l.b16 %v6138
    %v6669 = vunpack.c.l.b16 %v6139
    %v6670 = vunpack.c.l.b16 %v6140
    %v6671 = vunpack.c.l.b16 %v6141
    %v6672 = vunpack.c.l.b16 %v6142
    %v6673 = vunpack.c.l.b16 %v6143
    %v6674 = vunpack.c.l.b16 %v6144
    %v6675 = vunpack.c.l.b16 %v6145
    %v6676 = vunpack.c.l.b16 %v6146
    %v6677 = vunpack.c.l.b16 %v6147
    %v6678 = vunpack.c.l.b16 %v6148
    %v6679 = vunpack.c.l.b16 %v6149
    %v6680 = vunpack.c.l.b16 %v6150
    %v6681 = vunpack.c.l.b16 %v6151
    %v6682 = vunpack.c.l.b16 %v6152
    %v6683 = vunpack.c.l.b16 %v6153
    %v6684 = vunpack.c.l.b16 %v6154
    %v6685 = vunpack.c.l.b16 %v6155
    %v6686 = vunpack.c.l.b16 %v6156
    %v6687 = vunpack.c.l.b16 %v6157
    %v6688 = vunpack.c.l.b16 %v6158
    %v6689 = vunpack.c.l.b16 %v6159
    %v6690 = vunpack.c.l.b16 %v6160
    %v6691 = vunpack.c.l.b16 %v6161
    %v6692 = vunpack.c.l.b16 %v6162
    %v6693 = vunpack.c.l.b16 %v6163
    %v6694 = vunpack.c.l.b16 %v6164
    %v6695 = vunpack.c.l.b16 %v6165
    %v6696 = vunpack.c.l.b16 %v6166
    %v6697 = vunpack.c.l.b16 %v6167
    %v6698 = vunpack.c.l.b16 %v6168
    %v6699 = vunpack.c.l.b16 %v6169
    %v6700 = vunpack.c.l.b16 %v6170
    %v6701 = vunpack.c.l.b16 %v6171
    %v6702 = vunpack.c.l.b16 %v6172
    %v6703 = vunpack.c.l.b16 %v6173
    %v6704 = vunpack.c.l.b16 %v6174
    %v6705 = vunpack.c.l.b16 %v6175
    %v6706 = vunpack.c.l.b16 %v6176
    %v6707 = vunpack.c.l.b16 %v6177
    %v6708 = vunpack.c.l.b16 %v6178
    %v6709 = vunpack.c.l.b16 %v6179
    %v6710 = vunpack.c.l.b16 %v6180
    %v6711 = vunpack.c.l.b16 %v6181
    %v6712 = vunpack.c.l.b16 %v6182
    %v6713 = vunpack.c.l.b16 %v6183
    %v6714 = vunpack.c.l.b16 %v6184
    %v6715 = vunpack.c.l.b16 %v6185
    %v6716 = vunpack.c.l.b16 %v6186
    %v6717 = vunpack.c.l.b16 %v6187
    %v6718 = vunpack.c.l.b16 %v6188
    %v6719 = vunpack.c.l.b16 %v6189
    %v6720 = vunpack.c.l.b16 %v6190
    %v6721 = vunpack.c.l.b16 %v6191
    %v6722 = vunpack.c.l.b16 %v6192
    %v6723 = vunpack.c.l.b16 %v6193
    %v6724 = vunpack.c.l.b16 %v6194
    %v6725 = vunpack.c.l.b16 %v6195
    %v6726 = vunpack.c.l.b16 %v6196
    %v6727 = vunpack.c.l.b16 %v6197
    %v6728 = vunpack.c.l.b16 %v6198
    %v6729 = vunpack.c.l.b16 %v6199
    %v6730 = vunpack.c.l.b16 %v6200
    %v6731 = vunpack.c.l.b16 %v6201
    %v6732 = vunpack.c.l.b16 %v6202
    %v6733 = vunpack.c.l.b16 %v6203
    %v6734 = vunpack.c.l.b16 %v6204
    %v6735 = vunpack.c.l.b16 %v6205
    %v6736 = vunpack.c.l.b16 %v6206
    %v6737 = vunpack.c.l.b16 %v6207
    %v6738 = vunpack.c.l.b16 %v6208
    %v6739 = vunpack.c.l.b16 %v6209
    %v6740 = vunpack.c.l.b16 %v6210
    %v6741 = vunpack.c.l.b16 %v6211
    %v6742 = vunpack.c.l.b16 %v6212
    %v6743 = vunpack.c.l.b16 %v6213
    %v6744 = vunpack.c.l.b16 %v6214
    %v6745 = vunpack.c.l.b16 %v6215
    %v6746 = vunpack.c.l.b16 %v6216
    %v6747 = vunpack.c.l.b16 %v6217
    %v6748 = vunpack.c.l.b16 %v6218
    %v6749 = vunpack.c.l.b16 %v6219
    %v6750 = vunpack.c.l.b16 %v6220
    %v6751 = vunpack.c.l.b16 %v6221
    %v6752 = vunpack.c.l.b16 %v6222
    %v6753 = vunpack.c.l.b16 %v6223
    %v6754 = vunpack.c.l.b16 %v6224
    %v6755 = vunpack.c.l.b16 %v6225
    %v6756 = vunpack.c.l.b16 %v6226
    %v6757 = vunpack.c.l.b16 %v6227
    %v6758 = vunpack.c.l.b16 %v6228
    %v6759 = vunpack.c.l.b16 %v6229
    %v6760 = vunpack.c.l.b16 %v6230
    %v6761 = vunpack.c.l.b16 %v6231
    %v6762 = vunpack.c.l.b16 %v6232
    %v6763 = vunpack.c.l.b16 %v6233
    %v6764 = vunpack.c.l.b16 %v6234
    %v6765 = vunpack.c.l.b16 %v6235
    %v6766 = vunpack.c.l.b16 %v6236
    %v6767 = vunpack.c.l.b16 %v6237
    %v6768 = vunpack.c.l.b16 %v6238
    %v6769 = vunpack.c.l.b16 %v6239
    %v6770 = vunpack.c.l.b16 %v6240
    %v6771 = vunpack.c.l.b16 %v6241
    %v6772 = vunpack.c.l.b16 %v6242
    %v6773 = vunpack.c.l.b16 %v6243
    %v6774 = vunpack.c.l.b16 %v6244
    %v6775 = vunpack.c.l.b16 %v6245
    %v6776 = vunpack.c.l.b16 %v6246
    %v6777 = vunpack.c.l.b16 %v6247
    %v6778 = vunpack.c.l.b16 %v6248
    %v6779 = vunpack.c.l.b16 %v6249
    %v6780 = vunpack.c.l.b16 %v6250
    %v6781 = vunpack.c.l.b16 %v6251
    %v6782 = vunpack.c.l.b16 %v6252
    %v6783 = vunpack.c.l.b16 %v6253
    %v6784 = vunpack.c.l.b16 %v6254
    %v6785 = vunpack.c.l.b16 %v6255
    %v6786 = vunpack.c.l.b16 %v6256
    %v6787 = vunpack.c.l.b16 %v6257
    %v6788 = vunpack.c.l.b16 %v6258
    %v6789 = vunpack.c.l.b16 %v6259
    %v6790 = vunpack.c.l.b16 %v6260
    %v6791 = vunpack.c.l.b16 %v6261
    %v6792 = vunpack.c.l.b16 %v6262
    %v6793 = vunpack.c.l.b16 %v6263
    %v6794 = vunpack.c.l.b16 %v6264
    %v6795 = vunpack.c.l.b16 %v6265
    %v6796 = vunpack.c.l.b16 %v6266
    %v6797 = vunpack.c.l.b16 %v6267
    %v6798 = vpack.c.b16 %v6543, %v6542
    %v6799 = vpack.c.b16 %v6545, %v6544
    %v6800 = vpack.c.b16 %v6547, %v6546
    %v6801 = vpack.c.b16 %v6549, %v6548
    %v6802 = vpack.c.b16 %v6551, %v6550
    %v6803 = vpack.c.b16 %v6553, %v6552
    %v6804 = vpack.c.b16 %v6555, %v6554
    %v6805 = vpack.c.b16 %v6557, %v6556
    %v6806 = vpack.c.b16 %v6559, %v6558
    %v6807 = vpack.c.b16 %v6561, %v6560
    %v6808 = vpack.c.b16 %v6563, %v6562
    %v6809 = vpack.c.b16 %v6565, %v6564
    %v6810 = vpack.c.b16 %v6567, %v6566
    %v6811 = vpack.c.b16 %v6569, %v6568
    %v6812 = vpack.c.b16 %v6571, %v6570
    %v6813 = vpack.c.b16 %v6573, %v6572
    %v6814 = vpack.c.b16 %v6575, %v6574
    %v6815 = vpack.c.b16 %v6577, %v6576
    %v6816 = vpack.c.b16 %v6579, %v6578
    %v6817 = vpack.c.b16 %v6581, %v6580
    %v6818 = vpack.c.b16 %v6583, %v6582
    %v6819 = vpack.c.b16 %v6585, %v6584
    %v6820 = vpack.c.b16 %v6587, %v6586
    %v6821 = vpack.c.b16 %v6589, %v6588
    %v6822 = vpack.c.b16 %v6591, %v6590
    %v6823 = vpack.c.b16 %v6593, %v6592
    %v6824 = vpack.c.b16 %v6595, %v6594
    %v6825 = vpack.c.b16 %v6597, %v6596
    %v6826 = vpack.c.b16 %v6599, %v6598
    %v6827 = vpack.c.b16 %v6601, %v6600
    %v6828 = vpack.c.b16 %v6603, %v6602
    %v6829 = vpack.c.b16 %v6605, %v6604
    %v6830 = vpack.c.b16 %v6607, %v6606
    %v6831 = vpack.c.b16 %v6609, %v6608
    %v6832 = vpack.c.b16 %v6611, %v6610
    %v6833 = vpack.c.b16 %v6613, %v6612
    %v6834 = vpack.c.b16 %v6615, %v6614
    %v6835 = vpack.c.b16 %v6617, %v6616
    %v6836 = vpack.c.b16 %v6619, %v6618
    %v6837 = vpack.c.b16 %v6621, %v6620
    %v6838 = vpack.c.b16 %v6623, %v6622
    %v6839 = vpack.c.b16 %v6625, %v6624
    %v6840 = vpack.c.b16 %v6627, %v6626
    %v6841 = vpack.c.b16 %v6629, %v6628
    %v6842 = vpack.c.b16 %v6631, %v6630
    %v6843 = vpack.c.b16 %v6633, %v6632
    %v6844 = vpack.c.b16 %v6635, %v6634
    %v6845 = vpack.c.b16 %v6637, %v6636
    %v6846 = vpack.c.b16 %v6639, %v6638
    %v6847 = vpack.c.b16 %v6641, %v6640
    %v6848 = vpack.c.b16 %v6643, %v6642
    %v6849 = vpack.c.b16 %v6645, %v6644
    %v6850 = vpack.c.b16 %v6647, %v6646
    %v6851 = vpack.c.b16 %v6649, %v6648
    %v6852 = vpack.c.b16 %v6651, %v6650
    %v6853 = vpack.c.b16 %v6653, %v6652
    %v6854 = vpack.c.b16 %v6655, %v6654
    %v6855 = vpack.c.b16 %v6657, %v6656
    %v6856 = vpack.c.b16 %v6659, %v6658
    %v6857 = vpack.c.b16 %v6661, %v6660
    %v6858 = vpack.c.b16 %v6663, %v6662
    %v6859 = vpack.c.b16 %v6665, %v6664
    %v6860 = vpack.c.b16 %v6667, %v6666
    %v6861 = vpack.c.b16 %v6669, %v6668
    %v6862 = vpack.c.b16 %v6671, %v6670
    %v6863 = vpack.c.b16 %v6673, %v6672
    %v6864 = vpack.c.b16 %v6675, %v6674
    %v6865 = vpack.c.b16 %v6677, %v6676
    %v6866 = vpack.c.b16 %v6679, %v6678
    %v6867 = vpack.c.b16 %v6681, %v6680
    %v6868 = vpack.c.b16 %v6683, %v6682
    %v6869 = vpack.c.b16 %v6685, %v6684
    %v6870 = vpack.c.b16 %v6687, %v6686
    %v6871 = vpack.c.b16 %v6689, %v6688
    %v6872 = vpack.c.b16 %v6691, %v6690
    %v6873 = vpack.c.b16 %v6693, %v6692
    %v6874 = vpack.c.b16 %v6695, %v6694
    %v6875 = vpack.c.b16 %v6697, %v6696
    %v6876 = vpack.c.b16 %v6699, %v6698
    %v6877 = vpack.c.b16 %v6701, %v6700
    %v6878 = vpack.c.b16 %v6703, %v6702
    %v6879 = vpack.c.b16 %v6705, %v6704
    %v6880 = vpack.c.b16 %v6707, %v6706
    %v6881 = vpack.c.b16 %v6709, %v6708
    %v6882 = vpack.c.b16 %v6711, %v6710
    %v6883 = vpack.c.b16 %v6713, %v6712
    %v6884 = vpack.c.b16 %v6715, %v6714
    %v6885 = vpack.c.b16 %v6717, %v6716
    %v6886 = vpack.c.b16 %v6719, %v6718
    %v6887 = vpack.c.b16 %v6721, %v6720
    %v6888 = vpack.c.b16 %v6723, %v6722
    %v6889 = vpack.c.b16 %v6725, %v6724
    %v6890 = vpack.c.b16 %v6727, %v6726
    %v6891 = vpack.c.b16 %v6729, %v6728
    %v6892 = vpack.c.b16 %v6731, %v6730
    %v6893 = vpack.c.b16 %v6733, %v6732
    %v6894 = vpack.c.b16 %v6735, %v6734
    %v6895 = vpack.c.b16 %v6737, %v6736
    %v6896 = vpack.c.b16 %v6739, %v6738
    %v6897 = vpack.c.b16 %v6741, %v6740
    %v6898 = vpack.c.b16 %v6743, %v6742
    %v6899 = vpack.c.b16 %v6745, %v6744
    %v6900 = vpack.c.b16 %v6747, %v6746
    %v6901 = vpack.c.b16 %v6749, %v6748
    %v6902 = vpack.c.b16 %v6751, %v6750
    %v6903 = vpack.c.b16 %v6753, %v6752
    %v6904 = vpack.c.b16 %v6755, %v6754
    %v6905 = vpack.c.b16 %v6757, %v6756
    %v6906 = vpack.c.b16 %v6759, %v6758
    %v6907 = vpack.c.b16 %v6761, %v6760
    %v6908 = vpack.c.b16 %v6763, %v6762
    %v6909 = vpack.c.b16 %v6765, %v6764
    %v6910 = vpack.c.b16 %v6767, %v6766
    %v6911 = vpack.c.b16 %v6769, %v6768
    %v6912 = vpack.c.b16 %v6771, %v6770
    %v6913 = vpack.c.b16 %v6773, %v6772
    %v6914 = vpack.c.b16 %v6775, %v6774
    %v6915 = vpack.c.b16 %v6777, %v6776
    %v6916 = vpack.c.b16 %v6779, %v6778
    %v6917 = vpack.c.b16 %v6781, %v6780
    %v6918 = vpack.c.b16 %v6783, %v6782
    %v6919 = vpack.c.b16 %v6785, %v6784
    %v6920 = vpack.c.b16 %v6787, %v6786
    %v6921 = vpack.c.b16 %v6789, %v6788
    %v6922 = vpack.c.b16 %v6791, %v6790
    %v6923 = vpack.c.b16 %v6793, %v6792
    %v6924 = vpack.c.b16 %v6795, %v6794
    %v6925 = vpack.c.b16 %v6797, %v6796
    %7054 = vmatpush.bf16.msra.mxu0 %v6805
    %7055 = vmatpush.bf16.msra.mxu0 %v6804
    %7056 = vmatpush.bf16.msra.mxu0 %v6803
    %7057 = vmatpush.bf16.msra.mxu0 %v6802
    %7058 = vmatpush.bf16.msra.mxu0 %v6801
    %7059 = vmatpush.bf16.msra.mxu0 %v6800
    %7060 = vmatpush.bf16.msra.mxu0 %v6799
    %7061 = vmatpush.bf16.msra.mxu0 %v6798
    %7062 = vmatmul.bf16.gmra.mxu0 %v6268
    %v7063 = vpop.f32.mrf.mxu0
    %v7064 = vadd.f32 %v6285, %v7063
    %v7065 = vpop.f32.mrf.mxu0
    %v7066 = vadd.f32 %v6285, %v7065
    %7067 = vdwg.mxu0
    %7068 = vmatpush.bf16.msra.mxu0 %v6813
    %7069 = vmatpush.bf16.msra.mxu0 %v6812
    %7070 = vmatpush.bf16.msra.mxu0 %v6811
    %7071 = vmatpush.bf16.msra.mxu0 %v6810
    %7072 = vmatpush.bf16.msra.mxu0 %v6809
    %7073 = vmatpush.bf16.msra.mxu0 %v6808
    %7074 = vmatpush.bf16.msra.mxu0 %v6807
    %7075 = vmatpush.bf16.msra.mxu0 %v6806
    %7076 = vmatmul.bf16.gmra.mxu0 %v6269
    %v7077 = vpop.f32.mrf.mxu0
    %v7078 = vadd.f32 %v7064, %v7077
    %v7079 = vpop.f32.mrf.mxu0
    %v7080 = vadd.f32 %v7066, %v7079
    %7081 = vdwg.mxu0
    %7082 = vmatpush.bf16.msra.mxu0 %v6821
    %7083 = vmatpush.bf16.msra.mxu0 %v6820
    %7084 = vmatpush.bf16.msra.mxu0 %v6819
    %7085 = vmatpush.bf16.msra.mxu0 %v6818
    %7086 = vmatpush.bf16.msra.mxu0 %v6817
    %7087 = vmatpush.bf16.msra.mxu0 %v6816
    %7088 = vmatpush.bf16.msra.mxu0 %v6815
    %7089 = vmatpush.bf16.msra.mxu0 %v6814
    %7090 = vmatmul.bf16.gmra.mxu0 %v6270
    %v7091 = vpop.f32.mrf.mxu0
    %v7092 = vadd.f32 %v7078, %v7091
    %v7093 = vpop.f32.mrf.mxu0
    %v7094 = vadd.f32 %v7080, %v7093
    %7095 = vdwg.mxu0
    %7096 = vmatpush.bf16.msra.mxu0 %v6829
    %7097 = vmatpush.bf16.msra.mxu0 %v6828
    %7098 = vmatpush.bf16.msra.mxu0 %v6827
    %7099 = vmatpush.bf16.msra.mxu0 %v6826
    %7100 = vmatpush.bf16.msra.mxu0 %v6825
    %7101 = vmatpush.bf16.msra.mxu0 %v6824
    %7102 = vmatpush.bf16.msra.mxu0 %v6823
    %7103 = vmatpush.bf16.msra.mxu0 %v6822
    %7104 = vmatmul.bf16.gmra.mxu0 %v6271
    %v7105 = vpop.f32.mrf.mxu0
    %v7106 = vadd.f32 %v7092, %v7105
    %v7107 = vpop.f32.mrf.mxu0
    %v7108 = vadd.f32 %v7094, %v7107
    %7109 = vdwg.mxu0
    %7110 = vmatpush.bf16.msra.mxu0 %v6837
    %7111 = vmatpush.bf16.msra.mxu0 %v6836
    %7112 = vmatpush.bf16.msra.mxu0 %v6835
    %7113 = vmatpush.bf16.msra.mxu0 %v6834
    %7114 = vmatpush.bf16.msra.mxu0 %v6833
    %7115 = vmatpush.bf16.msra.mxu0 %v6832
    %7116 = vmatpush.bf16.msra.mxu0 %v6831
    %7117 = vmatpush.bf16.msra.mxu0 %v6830
    %7118 = vmatmul.bf16.gmra.mxu0 %v6272
    %v7119 = vpop.f32.mrf.mxu0
    %v7120 = vadd.f32 %v7106, %v7119
    %v7121 = vpop.f32.mrf.mxu0
    %v7122 = vadd.f32 %v7108, %v7121
    %7123 = vdwg.mxu0
    %7124 = vmatpush.bf16.msra.mxu0 %v6845
    %7125 = vmatpush.bf16.msra.mxu0 %v6844
    %7126 = vmatpush.bf16.msra.mxu0 %v6843
    %7127 = vmatpush.bf16.msra.mxu0 %v6842
    %7128 = vmatpush.bf16.msra.mxu0 %v6841
    %7129 = vmatpush.bf16.msra.mxu0 %v6840
    %7130 = vmatpush.bf16.msra.mxu0 %v6839
    %7131 = vmatpush.bf16.msra.mxu0 %v6838
    %7132 = vmatmul.bf16.gmra.mxu0 %v6273
    %v7133 = vpop.f32.mrf.mxu0
    %v7134 = vadd.f32 %v7120, %v7133
    %v7135 = vpop.f32.mrf.mxu0
    %v7136 = vadd.f32 %v7122, %v7135
    %7137 = vdwg.mxu0
    %7138 = vmatpush.bf16.msra.mxu0 %v6853
    %7139 = vmatpush.bf16.msra.mxu0 %v6852
    %7140 = vmatpush.bf16.msra.mxu0 %v6851
    %7141 = vmatpush.bf16.msra.mxu0 %v6850
    %7142 = vmatpush.bf16.msra.mxu0 %v6849
    %7143 = vmatpush.bf16.msra.mxu0 %v6848
    %7144 = vmatpush.bf16.msra.mxu0 %v6847
    %7145 = vmatpush.bf16.msra.mxu0 %v6846
    %7146 = vmatmul.bf16.gmra.mxu0 %v6274
    %v7147 = vpop.f32.mrf.mxu0
    %v7148 = vadd.f32 %v7134, %v7147
    %v7149 = vpop.f32.mrf.mxu0
    %v7150 = vadd.f32 %v7136, %v7149
    %7151 = vdwg.mxu0
    %7152 = vmatpush.bf16.msra.mxu0 %v6861
    %7153 = vmatpush.bf16.msra.mxu0 %v6860
    %7154 = vmatpush.bf16.msra.mxu0 %v6859
    %7155 = vmatpush.bf16.msra.mxu0 %v6858
    %7156 = vmatpush.bf16.msra.mxu0 %v6857
    %7157 = vmatpush.bf16.msra.mxu0 %v6856
    %7158 = vmatpush.bf16.msra.mxu0 %v6855
    %7159 = vmatpush.bf16.msra.mxu0 %v6854
    %7160 = vmatmul.bf16.gmra.mxu0 %v6275
    %v7161 = vpop.f32.mrf.mxu0
    %v7162 = vadd.f32 %v7148, %v7161
    %v7163 = vpop.f32.mrf.mxu0
    %v7164 = vadd.f32 %v7150, %v7163
    %7165 = vdwg.mxu0
    %7166 = vmatpush.bf16.msra.mxu0 %v6869
    %7167 = vmatpush.bf16.msra.mxu0 %v6868
    %7168 = vmatpush.bf16.msra.mxu0 %v6867
    %7169 = vmatpush.bf16.msra.mxu0 %v6866
    %7170 = vmatpush.bf16.msra.mxu0 %v6865
    %7171 = vmatpush.bf16.msra.mxu0 %v6864
    %7172 = vmatpush.bf16.msra.mxu0 %v6863
    %7173 = vmatpush.bf16.msra.mxu0 %v6862
    %7174 = vmatmul.bf16.gmra.mxu0 %v6276
    %v7175 = vpop.f32.mrf.mxu0
    %v7176 = vadd.f32 %v7162, %v7175
    %v7177 = vpop.f32.mrf.mxu0
    %v7178 = vadd.f32 %v7164, %v7177
    %7179 = vdwg.mxu0
    %7180 = vmatpush.bf16.msra.mxu0 %v6877
    %7181 = vmatpush.bf16.msra.mxu0 %v6876
    %7182 = vmatpush.bf16.msra.mxu0 %v6875
    %7183 = vmatpush.bf16.msra.mxu0 %v6874
    %7184 = vmatpush.bf16.msra.mxu0 %v6873
    %7185 = vmatpush.bf16.msra.mxu0 %v6872
    %7186 = vmatpush.bf16.msra.mxu0 %v6871
    %7187 = vmatpush.bf16.msra.mxu0 %v6870
    %7188 = vmatmul.bf16.gmra.mxu0 %v6277
    %v7189 = vpop.f32.mrf.mxu0
    %v7190 = vadd.f32 %v7176, %v7189
    %v7191 = vpop.f32.mrf.mxu0
    %v7192 = vadd.f32 %v7178, %v7191
    %7193 = vdwg.mxu0
    %7194 = vmatpush.bf16.msra.mxu0 %v6885
    %7195 = vmatpush.bf16.msra.mxu0 %v6884
    %7196 = vmatpush.bf16.msra.mxu0 %v6883
    %7197 = vmatpush.bf16.msra.mxu0 %v6882
    %7198 = vmatpush.bf16.msra.mxu0 %v6881
    %7199 = vmatpush.bf16.msra.mxu0 %v6880
    %7200 = vmatpush.bf16.msra.mxu0 %v6879
    %7201 = vmatpush.bf16.msra.mxu0 %v6878
    %7202 = vmatmul.bf16.gmra.mxu0 %v6278
    %v7203 = vpop.f32.mrf.mxu0
    %v7204 = vadd.f32 %v7190, %v7203
    %v7205 = vpop.f32.mrf.mxu0
    %v7206 = vadd.f32 %v7192, %v7205
    %7207 = vdwg.mxu0
    %7208 = vmatpush.bf16.msra.mxu0 %v6893
    %7209 = vmatpush.bf16.msra.mxu0 %v6892
    %7210 = vmatpush.bf16.msra.mxu0 %v6891
    %7211 = vmatpush.bf16.msra.mxu0 %v6890
    %7212 = vmatpush.bf16.msra.mxu0 %v6889
    %7213 = vmatpush.bf16.msra.mxu0 %v6888
    %7214 = vmatpush.bf16.msra.mxu0 %v6887
    %7215 = vmatpush.bf16.msra.mxu0 %v6886
    %7216 = vmatmul.bf16.gmra.mxu0 %v6279
    %v7217 = vpop.f32.mrf.mxu0
    %v7218 = vadd.f32 %v7204, %v7217
    %v7219 = vpop.f32.mrf.mxu0
    %v7220 = vadd.f32 %v7206, %v7219
    %7221 = vdwg.mxu0
    %7222 = vmatpush.bf16.msra.mxu0 %v6901
    %7223 = vmatpush.bf16.msra.mxu0 %v6900
    %7224 = vmatpush.bf16.msra.mxu0 %v6899
    %7225 = vmatpush.bf16.msra.mxu0 %v6898
    %7226 = vmatpush.bf16.msra.mxu0 %v6897
    %7227 = vmatpush.bf16.msra.mxu0 %v6896
    %7228 = vmatpush.bf16.msra.mxu0 %v6895
    %7229 = vmatpush.bf16.msra.mxu0 %v6894
    %7230 = vmatmul.bf16.gmra.mxu0 %v6280
    %v7231 = vpop.f32.mrf.mxu0
    %v7232 = vadd.f32 %v7218, %v7231
    %v7233 = vpop.f32.mrf.mxu0
    %v7234 = vadd.f32 %v7220, %v7233
    %7235 = vdwg.mxu0
    %7236 = vmatpush.bf16.msra.mxu0 %v6909
    %7237 = vmatpush.bf16.msra.mxu0 %v6908
    %7238 = vmatpush.bf16.msra.mxu0 %v6907
    %7239 = vmatpush.bf16.msra.mxu0 %v6906
    %7240 = vmatpush.bf16.msra.mxu0 %v6905
    %7241 = vmatpush.bf16.msra.mxu0 %v6904
    %7242 = vmatpush.bf16.msra.mxu0 %v6903
    %7243 = vmatpush.bf16.msra.mxu0 %v6902
    %7244 = vmatmul.bf16.gmra.mxu0 %v6281
    %v7245 = vpop.f32.mrf.mxu0
    %v7246 = vadd.f32 %v7232, %v7245
    %v7247 = vpop.f32.mrf.mxu0
    %v7248 = vadd.f32 %v7234, %v7247
    %7249 = vdwg.mxu0
    %7250 = vmatpush.bf16.msra.mxu0 %v6917
    %7251 = vmatpush.bf16.msra.mxu0 %v6916
    %7252 = vmatpush.bf16.msra.mxu0 %v6915
    %7253 = vmatpush.bf16.msra.mxu0 %v6914
    %7254 = vmatpush.bf16.msra.mxu0 %v6913
    %7255 = vmatpush.bf16.msra.mxu0 %v6912
    %7256 = vmatpush.bf16.msra.mxu0 %v6911
    %7257 = vmatpush.bf16.msra.mxu0 %v6910
    %7258 = vmatmul.bf16.gmra.mxu0 %v6282
    %v7259 = vpop.f32.mrf.mxu0
    %v7260 = vadd.f32 %v7246, %v7259
    %v7261 = vpop.f32.mrf.mxu0
    %v7262 = vadd.f32 %v7248, %v7261
    %7263 = vdwg.mxu0
    %7264 = vmatpush.bf16.msra.mxu0 %v6925
    %7265 = vmatpush.bf16.msra.mxu0 %v6924
    %7266 = vmatpush.bf16.msra.mxu0 %v6923
    %7267 = vmatpush.bf16.msra.mxu0 %v6922
    %7268 = vmatpush.bf16.msra.mxu0 %v6921
    %7269 = vmatpush.bf16.msra.mxu0 %v6920
    %7270 = vmatpush.bf16.msra.mxu0 %v6919
    %7271 = vmatpush.bf16.msra.mxu0 %v6918
    %7272 = vmatmul.bf16.gmra.mxu0 %v6283
    %v7273 = vpop.f32.mrf.mxu0
    %v7274 = vadd.f32 %v7260, %v7273
    %v7275 = vpop.f32.mrf.mxu0
    %v7276 = vadd.f32 %v7262, %v7275
    %7277 = vdwg.mxu0
    %v7278 = vadd.f32 %v4943, %v7274
    %v7279 = vadd.f32 %v4944, %v7276
    %v7280 = vld [vmem:[%s1 + $0x19] sm:$0x1]
    %v7281 = vld [vmem:[%s1 + $0x1a] sm:$0x1]
    %7282 = vadd.xlane.f32.xlu0 %v7278
    %v7283 = vpop.xlane.xlu0 %7282
    %7284 = vadd.xlane.f32.xlu0 %v7279
    %v7285 = vpop.xlane.xlu0 %7284
    %v7286 = vmul.f32 %v7283, %v918
    %v7287 = vmul.f32 %v7285, %v918
    %v7288 = vsub.f32 %v7278, %v7286
    %v7289 = vsub.f32 %v7279, %v7287
    %v7290 = vmul.f32 %v7288, %v7288
    %v7291 = vmul.f32 %v7289, %v7289
    %7292 = vadd.xlane.f32.xlu0 %v7290
    %v7293 = vpop.xlane.xlu0 %7292
    %7294 = vadd.xlane.f32.xlu0 %v7291
    %v7295 = vpop.xlane.xlu0 %7294
    %v7296 = vmul.f32 %v7293, %v918
    %v7297 = vmul.f32 %v7295, %v918
    %v7298 = vadd.f32 %v7296, 1e-05
    %v7299 = vadd.f32 %v7297, 1e-05
    %v7300 = vrsqrt.pop %v7298
    %v7301 = vmul.f32 %v7300, %v7298
    %v7302 = vmul.f32 %v7301, %v7300
    %v7303 = vmul.f32 0.5, %v7302
    %v7304 = vsub.f32 1.5, %v7303
    %v7305 = vmul.f32 %v7300, %v7304
    %vm7306 = vweird.f32 %v7298
    %vm7307 = vweird.f32 %v7300
    %vm7308 = vmor %vm7306, %vm7307
    %v7309 = vsel %vm7308, %v7300, %v7305
    %v7310 = vrsqrt.pop %v7299
    %v7311 = vmul.f32 %v7310, %v7299
    %v7312 = vmul.f32 %v7311, %v7310
    %v7313 = vmul.f32 0.5, %v7312
    %v7314 = vsub.f32 1.5, %v7313
    %v7315 = vmul.f32 %v7310, %v7314
    %vm7316 = vweird.f32 %v7299
    %vm7317 = vweird.f32 %v7310
    %vm7318 = vmor %vm7316, %vm7317
    %v7319 = vsel %vm7318, %v7310, %v7315
    %v7320 = vmul.f32 %v7288, %v7309
    %v7321 = vmul.f32 %v7289, %v7319
    %v7322 = vperm.slane %v7280, 0
    %v7323 = vmul.f32 %v7320, %v7322
    %v7324 = vmul.f32 %v7321, %v7322
    %v7325 = vperm.slane %v7281, 0
    %v7326 = vadd.f32 %v7323, %v7325
    %v7327 = vadd.f32 %v7324, %v7325
    %v7328 = vld [vmem:[%s1 + $0x1b] sm:$0x1]
    %v7329 = vld [vmem:[%s1 + $0x1c] sm:$0x1]
    %7330 = vadd.xlane.f32.xlu0 %v7326
    %v7331 = vpop.xlane.xlu0 %7330
    %7332 = vadd.xlane.f32.xlu0 %v7327
    %v7333 = vpop.xlane.xlu0 %7332
    %v7334 = vmul.f32 %v7331, %v918
    %v7335 = vmul.f32 %v7333, %v918
    %v7336 = vsub.f32 %v7326, %v7334
    %v7337 = vsub.f32 %v7327, %v7335
    %v7338 = vmul.f32 %v7336, %v7336
    %v7339 = vmul.f32 %v7337, %v7337
    %7340 = vadd.xlane.f32.xlu0 %v7338
    %v7341 = vpop.xlane.xlu0 %7340
    %7342 = vadd.xlane.f32.xlu0 %v7339
    %v7343 = vpop.xlane.xlu0 %7342
    %v7344 = vmul.f32 %v7341, %v918
    %v7345 = vmul.f32 %v7343, %v918
    %v7346 = vadd.f32 %v7344, 1e-05
    %v7347 = vadd.f32 %v7345, 1e-05
    %v7348 = vrsqrt.pop %v7346
    %v7349 = vmul.f32 %v7348, %v7346
    %v7350 = vmul.f32 %v7349, %v7348
    %v7351 = vmul.f32 0.5, %v7350
    %v7352 = vsub.f32 1.5, %v7351
    %v7353 = vmul.f32 %v7348, %v7352
    %vm7354 = vweird.f32 %v7346
    %vm7355 = vweird.f32 %v7348
    %vm7356 = vmor %vm7354, %vm7355
    %v7357 = vsel %vm7356, %v7348, %v7353
    %v7358 = vrsqrt.pop %v7347
    %v7359 = vmul.f32 %v7358, %v7347
    %v7360 = vmul.f32 %v7359, %v7358
    %v7361 = vmul.f32 0.5, %v7360
    %v7362 = vsub.f32 1.5, %v7361
    %v7363 = vmul.f32 %v7358, %v7362
    %vm7364 = vweird.f32 %v7347
    %vm7365 = vweird.f32 %v7358
    %vm7366 = vmor %vm7364, %vm7365
    %v7367 = vsel %vm7366, %v7358, %v7363
    %v7368 = vmul.f32 %v7336, %v7357
    %v7369 = vmul.f32 %v7337, %v7367
    %v7370 = vperm.slane %v7328, 0
    %v7371 = vmul.f32 %v7368, %v7370
    %v7372 = vmul.f32 %v7369, %v7370
    %v7373 = vperm.slane %v7329, 0
    %v7374 = vadd.f32 %v7371, %v7373
    %v7375 = vadd.f32 %v7372, %v7373
    %v7377 = vsel %vm428, %v88, 0
    %7379 = vmatpush.msra.mxu0 0.0
    %7380 = vmatpush.msra.mxu0 0.0
    %7381 = vmatpush.msra.mxu0 0.0
    %7382 = vmatpush.msra.mxu0 0.0
    %7383 = vmatpush.msra.mxu0 0.0
    %7384 = vmatpush.msra.mxu0 0.0
    %7385 = vmatpush.msra.mxu0 0.0
    %7386 = vmatpush.msra.mxu0 0.0
    %7387 = vmatpush.msra.mxu0 0.0
    %7388 = vmatpush.msra.mxu0 0.0
    %7389 = vmatpush.msra.mxu0 0.0
    %7390 = vmatpush.msra.mxu0 0.0
    %7391 = vmatpush.msra.mxu0 0.0
    %7392 = vmatpush.msra.mxu0 0.0
    %7393 = vmatpush.msra.mxu0 %v7375
    %7394 = vmatpush.msra.mxu0 %v7374
    %7395 = vmatmul.f32.gmra.mxu0 %v7377
    %v7396 = vpop.f32.mrf.mxu0
    %v7397 = vadd.f32 0.0, %v7396
    %7398 = vdwg.mxu0
    %v7399 = vld [vmem:[#allocation2 + $0x60] sm:$0xf]
    %v7400 = vld [vmem:[#allocation2 + $0xc4] sm:$0xf]
    %v7401 = vld [vmem:[#allocation2 + $0x128] sm:$0xf]
    %v7402 = vld [vmem:[#allocation2 + $0x18c] sm:$0xf]
    %v7403 = vld [vmem:[#allocation2 + $0x1f0] sm:$0xf]
    %v7404 = vld [vmem:[#allocation2 + $0x254] sm:$0xf]
    %v7405 = vld [vmem:[#allocation2 + $0x2b8] sm:$0xf]
    %v7406 = vld [vmem:[#allocation2 + $0x31c] sm:$0xf]
    %v7407 = vld [vmem:[#allocation2 + $0x380] sm:$0xf]
    %v7408 = vld [vmem:[#allocation2 + $0x3e4] sm:$0xf]
    %v7409 = vld [vmem:[#allocation2 + $0x448] sm:$0xf]
    %v7410 = vld [vmem:[#allocation2 + $0x4ac] sm:$0xf]
    %v7411 = vld [vmem:[#allocation2 + $0x510] sm:$0xf]
    %v7412 = vld [vmem:[#allocation2 + $0x574] sm:$0xf]
    %v7413 = vld [vmem:[#allocation2 + $0x5d8] sm:$0xf]
    %v7414 = vld [vmem:[#allocation2 + $0x63c] sm:$0xf]
    %v7415 = vpack.c.bf16 %v7397, %v7397
    %v7416 = vld [vmem:[%s1 + $0x1d] sm:$0x1]
    %v7417 = vperm.slane %v7416, 0
    %v7434 = vunpack.c.l.b16 %v7399
    %v7435 = vunpack.c.l.b16 %v7400
    %v7436 = vunpack.c.l.b16 %v7401
    %v7437 = vunpack.c.l.b16 %v7402
    %v7438 = vunpack.c.l.b16 %v7403
    %v7439 = vunpack.c.l.b16 %v7404
    %v7440 = vunpack.c.l.b16 %v7405
    %v7441 = vunpack.c.l.b16 %v7406
    %v7442 = vunpack.c.l.b16 %v7407
    %v7443 = vunpack.c.l.b16 %v7408
    %v7444 = vunpack.c.l.b16 %v7409
    %v7445 = vunpack.c.l.b16 %v7410
    %v7446 = vunpack.c.l.b16 %v7411
    %v7447 = vunpack.c.l.b16 %v7412
    %v7448 = vunpack.c.l.b16 %v7413
    %v7449 = vunpack.c.l.b16 %v7414
    %v7450 = vpack.c.b16 %v7435, %v7434
    %v7451 = vpack.c.b16 %v7437, %v7436
    %v7452 = vpack.c.b16 %v7439, %v7438
    %v7453 = vpack.c.b16 %v7441, %v7440
    %v7454 = vpack.c.b16 %v7443, %v7442
    %v7455 = vpack.c.b16 %v7445, %v7444
    %v7456 = vpack.c.b16 %v7447, %v7446
    %v7457 = vpack.c.b16 %v7449, %v7448
    %7466 = vmatpush.bf16.msra.mxu0 %v7457
    %7467 = vmatpush.bf16.msra.mxu0 %v7456
    %7468 = vmatpush.bf16.msra.mxu0 %v7455
    %7469 = vmatpush.bf16.msra.mxu0 %v7454
    %7470 = vmatpush.bf16.msra.mxu0 %v7453
    %7471 = vmatpush.bf16.msra.mxu0 %v7452
    %7472 = vmatpush.bf16.msra.mxu0 %v7451
    %7473 = vmatpush.bf16.msra.mxu0 %v7450
    %7474 = vmatmul.bf16.gmra.mxu0 %v7415
    %v7475 = vpop.f32.mrf.mxu0
    %v7476 = vadd.f32 %v7417, %v7475
    %v7477 = vpop.f32.mrf.mxu0
    %7478 = vdwg.mxu0
    %7479 = vst [vmem:[%s7] sm:$0xff] %v7476
    // Predicated region
    $region38: #{transformer_forward.1} parent=1 // pred_check
      _
    $region39: #{transformer_forward.1} parent=1 // pred_check_branch
      %7481 = sbr.rel (0) target = $region41
    $region40: #{transformer_forward.1} parent=1 // pred_region
      _
    $region41: #{transformer_forward.1} parent=1 // pred_fallthru
      _
    // Predicated region
    $region42: #{transformer_forward.1} parent=1 // pred_check
      _
    $region43: #{transformer_forward.1} parent=1 // pred_check_branch
      %7483 = sbr.rel (0) target = $region45
    $region44: #{transformer_forward.1} parent=1 // pred_region
      _
    $region45: #{transformer_forward.1} parent=1 // pred_fallthru
      _
    %7484 = vsyncpa [#allocation6], 1
    %7485 = vsyncpa [#allocation8], 1
  %7486 = vsyncmov [#allocation4]
  %s7487 = vpop.sfrf %7486
  %p7488 = scmp.eq.s32.totalorder %s7487, 0
  %p7489 = pneg %p7488
  %7491 = shalt.err (%p7489)
  %s7492 = scalar_lea.sflag [#allocation4], 1
  %7493 = vsyncmov %s7492
  %s7494 = vpop.sfrf %7493
  %p7495 = scmp.eq.s32.totalorder %s7494, 0
  %p7496 = pneg %p7495
  %7498 = shalt.err (%p7496)

</llo_original>
